<compile_context>
chip_gen: v7x
topology: tpu7x:2x2x1
jax: 0.10.0
libtpu: 0.0.40
codegen_flags: <defaults>
</compile_context>

<pallas_src>
import functools

import jax
import jax.numpy as jnp
from jax.experimental import pallas as pl
from jax.experimental.pallas import tpu as pltpu

F32_HI = jax.lax.Precision.HIGHEST   # reference-only: keeps the f32 ref math exact


def _round_up(x, m):
    return (x + m - 1) // m * m


# --------------------------------------------------------------------------
# Tiled bf16 matmul (MXU) -- workhorse for every conv via im2col.
# --------------------------------------------------------------------------
def _matmul_kernel(a_ref, b_ref, o_ref, acc_ref, *, relu):
    @pl.when(pl.program_id(2) == 0)
    def _init():
        acc_ref[...] = jnp.zeros_like(acc_ref)

    acc_ref[...] += jnp.dot(a_ref[...], b_ref[...],
                            preferred_element_type=jnp.float32)

    @pl.when(pl.program_id(2) == pl.num_programs(2) - 1)
    def _store():
        r = acc_ref[...]
        if relu:
            r = jnp.maximum(r, 0.0)                      # relu fused into the conv
        o_ref[...] = r.astype(o_ref.dtype)


def matmul(a, b, *, relu=False):
    """(M, K) @ (K, N) -> (M, N); bf16 MXU inputs, f32 accumulation, K-tiled."""
    M, K = a.shape
    K2, N = b.shape
    assert K == K2
    tm = _round_up(M, 8) if M <= 512 else 256
    tk = _round_up(K, 128) if K <= 1024 else 512
    tn = _round_up(N, 128) if N <= 256 else 256
    Mp, Kp, Np = _round_up(M, tm), _round_up(K, tk), _round_up(N, tn)
    a_p = jnp.pad(a, ((0, Mp - M), (0, Kp - K))).astype(jnp.bfloat16)
    b_p = jnp.pad(b, ((0, Kp - K), (0, Np - N))).astype(jnp.bfloat16)

    out = pl.pallas_call(
        functools.partial(_matmul_kernel, relu=relu),
        out_shape=jax.ShapeDtypeStruct((Mp, Np), jnp.float32),
        grid=(Mp // tm, Np // tn, Kp // tk),
        in_specs=[pl.BlockSpec((tm, tk), lambda i, j, k: (i, k)),
                  pl.BlockSpec((tk, tn), lambda i, j, k: (k, j))],
        out_specs=pl.BlockSpec((tm, tn), lambda i, j, k: (i, j)),
        scratch_shapes=[pltpu.VMEM((tm, tn), jnp.float32)],
        cost_estimate=pl.CostEstimate(
            flops=2 * Mp * Kp * Np,
            transcendentals=0,
            bytes_accessed=2 * (Mp * Kp + Kp * Np) + 4 * Mp * Np),
        compiler_params=pltpu.CompilerParams(
            dimension_semantics=("parallel", "parallel", "arbitrary")),
    )(a_p, b_p)
    return out[:M, :N]


def _im2col_nhwc(x, kh, kw, stride, pad):
    """x: (B, H, W, C) -> patches (B*OH*OW, kh*kw*C); feature order (ki, kj, c)."""
    if pad:
        x = jnp.pad(x, ((0, 0), (pad, pad), (pad, pad), (0, 0)))
    B, H, W, C = x.shape
    oh = (H - kh) // stride + 1
    ow = (W - kw) // stride + 1
    cols = []
    for i in range(kh):
        for j in range(kw):
            cols.append(x[:, i:i + stride * oh:stride, j:j + stride * ow:stride, :])
    p = jnp.stack(cols, axis=3)                           # (B, oh, ow, kh*kw, C)
    return p.reshape(B * oh * ow, kh * kw * C), oh, ow


def conv2d_cl(x, w, *, stride=1, pad=0, relu=False):
    """Channel-last conv: x (B, H, W, C), w (OC, IC, KH, KW) -> (B, OH, OW, OC)."""
    B = x.shape[0]
    oc, ic, kh, kw = w.shape
    patches, oh, ow = _im2col_nhwc(x, kh, kw, stride, pad)
    wm = jnp.transpose(w, (2, 3, 1, 0)).reshape(kh * kw * ic, oc)
    y = matmul(patches, wm, relu=relu)                    # (B*oh*ow, oc) f32
    return y.reshape(B, oh, ow, oc)


# --------------------------------------------------------------------------
# CBAM block in channel-last layout; both kernels tiled over B ("parallel").
# --------------------------------------------------------------------------
def _cbam_channel_kernel(x_ref, w1_ref, w2_ref, chn_ref, pool_ref):
    # x: (1, HW, C); w1: (Cr, C); w2: (C, Cr)   (PyTorch nn.Linear layouts)
    x = x_ref[...]
    avg = jnp.mean(x, axis=1)                             # (1, C)
    mx = jnp.max(x, axis=1)                               # (1, C)
    p = jnp.concatenate([avg, mx], axis=0)                # (2, C) -> single MLP pass
    w1 = w1_ref[...]
    w2 = w2_ref[...]
    h = jnp.maximum(jnp.sum(p[:, None, :] * w1[None, :, :], axis=2), 0.0)  # (2, Cr)
    e = jnp.sum(h[:, None, :] * w2[None, :, :], axis=2)                    # (2, C)
    gate = jax.nn.sigmoid(e[0:1] + e[1:2])                # (1, C)
    scaled = x * gate[:, None, :]                         # (1, HW, C)
    chn_ref[...] = scaled
    # fused channel-wise mean / max map needed by the spatial branch
    pool_ref[:, :, 0:1] = jnp.mean(scaled, axis=2, keepdims=True)
    pool_ref[:, :, 1:2] = jnp.max(scaled, axis=2, keepdims=True)


def _spatial_gate_kernel(chn_ref, pat_ref, w_ref, o_ref, *, relu):
    # 7x7 spatial conv as a 98-tap weighted lane reduction (VPU/XLU, no MXU).
    logit = jnp.sum(pat_ref[...] * w_ref[...], axis=-1, keepdims=True)  # (1, HW, 1)
    y = chn_ref[...] * jax.nn.sigmoid(logit)              # broadcast over C lanes
    if relu:
        y = jnp.maximum(y, 0.0)                           # F.relu fused in
    o_ref[...] = y


def cbam_block_cl(x, w1, w2, w_spa, *, relu_after=False):
    """CBAM forward in channel-last layout.  x: (B, H, W, C) -> (B, H, W, C)."""
    B, H, W, C = x.shape
    HW = H * W
    Cr = w1.shape[0]
    x3 = x.reshape(B, HW, C)

    chn, pooled = pl.pallas_call(
        _cbam_channel_kernel,
        out_shape=(jax.ShapeDtypeStruct((B, HW, C), jnp.float32),
                   jax.ShapeDtypeStruct((B, HW, 2), jnp.float32)),
        grid=(B,),
        in_specs=[pl.BlockSpec((1, HW, C), lambda b: (b, 0, 0)),
                  pl.BlockSpec((Cr, C), lambda b: (0, 0)),
                  pl.BlockSpec((C, Cr), lambda b: (0, 0))],
        out_specs=(pl.BlockSpec((1, HW, C), lambda b: (b, 0, 0)),
                   pl.BlockSpec((1, HW, 2), lambda b: (b, 0, 0))),
        compiler_params=pltpu.CompilerParams(
            dimension_semantics=("parallel",)),
    )(x3, w1, w2)

    # 7x7 taps of the tiny 2-channel pooled map, built in XLA (cheap), consumed
    # by the fused spatial-gate kernel below.
    spa_patches, oh, ow = _im2col_nhwc(pooled.reshape(B, H, W, 2), 7, 7, 1, 3)
    assert (oh, ow) == (H, W)
    spa_patches = spa_patches.reshape(B, HW, 98)
    w_spa_flat = jnp.transpose(w_spa[0], (1, 2, 0)).reshape(1, 1, 98)  # (ki,kj,c)

    out = pl.pallas_call(
        functools.partial(_spatial_gate_kernel, relu=relu_after),
        out_shape=jax.ShapeDtypeStruct((B, HW, C), jnp.float32),
        grid=(B,),
        in_specs=[pl.BlockSpec((1, HW, C), lambda b: (b, 0, 0)),
                  pl.BlockSpec((1, HW, 98), lambda b: (b, 0, 0)),
                  pl.BlockSpec((1, 1, 98), lambda b: (0, 0, 0))],
        out_specs=pl.BlockSpec((1, HW, C), lambda b: (b, 0, 0)),
        compiler_params=pltpu.CompilerParams(
            dimension_semantics=("parallel",)),
    )(chn, spa_patches, w_spa_flat)
    return out.reshape(B, H, W, C)


# --------------------------------------------------------------------------
# Capsule layer: fused squash + u_hat projection + 3 routing iterations.
# Output capsule n is a "parallel" grid axis; in_units (lane axis) is padded
# to a 128-multiple with a masked routing softmax.
# --------------------------------------------------------------------------
def _capsule_kernel(u_ref, w_ref, v_ref, *, routings, valid_i):
    eps = 1e-8
    u = u_ref[...]                                        # (B, CH, Ip) f32
    B, CH, Ip = u_ref.shape
    _, _, D, _ = w_ref.shape                              # (1, CH, D, Ip)

    # squash(out) from CapsuleNet.forward (over the 16 primary-capsule channels)
    ssn = jnp.sum(u * u, axis=1, keepdims=True) + eps
    u = u * (jnp.sqrt(ssn) / (1.0 + ssn))

    # u_hat[b, d, i] = sum_c u[b, c, i] * W[i, n, c, d]   (in_units on lanes)
    u_hat = jnp.zeros((B, D, Ip), jnp.float32)
    for c in range(CH):                                   # CH = 16, static
        u_hat = u_hat + u[:, c:c + 1, :] * w_ref[0, c][None, :, :]

    # lane mask: zero-padded in_units are excluded from the routing softmax
    iota = jax.lax.broadcasted_iota(jnp.int32, (1, Ip), 1)
    mask_b = iota < valid_i
    mask_f = mask_b.astype(jnp.float32)

    b_log = jnp.zeros((B, Ip), jnp.float32)
    v = jnp.zeros((B, D), jnp.float32)
    for _ in range(routings):
        m = jnp.max(jnp.where(mask_b, b_log, -1e30), axis=-1, keepdims=True)
        e = jnp.exp(b_log - m) * mask_f
        coup = e / jnp.sum(e, axis=-1, keepdims=True)            # (B, Ip)
        s = jnp.sum(coup[:, None, :] * u_hat, axis=2)            # (B, D)
        ssn_s = jnp.sum(s * s, axis=1, keepdims=True) + eps
        v = s * (jnp.sqrt(ssn_s) / (1.0 + ssn_s))                # (B, D)
        sim = jnp.sum(u_hat * v[:, :, None], axis=1)             # (B, Ip)
        b_log = b_log + sim
    v_ref[...] = v[None, :, :]                            # single full-block store


def capsule_layer(u, W, *, routings=3):
    """u: (B, CH, I) (pre-squash); W: (I, N, CH, D) -> (B, N, D)."""
    B, CH, I = u.shape
    _, N, _, D = W.shape
    Ip = _round_up(I, 128)
    u_p = jnp.pad(u, ((0, 0), (0, 0), (0, Ip - I)))
    wt = jnp.pad(jnp.transpose(W, (1, 2, 3, 0)),          # (N, CH, D, I): I on lanes
                 ((0, 0), (0, 0), (0, 0), (0, Ip - I)))
    out = pl.pallas_call(
        functools.partial(_capsule_kernel, routings=routings, valid_i=I),
        out_shape=jax.ShapeDtypeStruct((N, B, D), jnp.float32),
        grid=(N,),
        in_specs=[pl.BlockSpec((B, CH, Ip), lambda n: (0, 0, 0)),
                  pl.BlockSpec((1, CH, D, Ip), lambda n: (n, 0, 0, 0))],
        out_specs=pl.BlockSpec((1, B, D), lambda n: (n, 0, 0)),
        compiler_params=pltpu.CompilerParams(
            dimension_semantics=("parallel",)),
    )(u_p, wt)
    return jnp.transpose(out, (1, 0, 2))                  # (B, N, D)


# --------------------------------------------------------------------------
# Full CapsuleNet forward (Pallas path)
# --------------------------------------------------------------------------
def capsule_net_forward(tokens, y_feat, params):
    B = tokens.shape[0]
    # TODO(synk): nn.Embedding is a data-dependent gather; done with XLA take.
    emb = jnp.take(params['embed'], tokens, axis=0)       # (B, L, E)
    x = emb[:, :, :, None]                                # (B, L, E, 1) channel-last
    y = y_feat[:, :, :, None].astype(emb.dtype)           # (B, Ly, E, 1)

    x = conv2d_cl(x, params['conv1_w'], stride=1)
    x = cbam_block_cl(x, params['cbam_w1'], params['cbam_w2'],
                      params['cbam_spa_w'], relu_after=True)
    x = conv2d_cl(x, params['conv2_w'], stride=2, relu=True)

    y = conv2d_cl(y, params['conv3_w'], stride=1)
    y = cbam_block_cl(y, params['cbam_w1'], params['cbam_w2'],
                      params['cbam_spa_w'], relu_after=True)
    y = conv2d_cl(y, params['conv4_w'], stride=2, relu=True)

    # Tiny NHWC->NCHW transpose of the final conv outputs only, so the PyTorch
    # out.view(B, 16, -1) element order is reproduced exactly.
    ux = jnp.transpose(x, (0, 3, 1, 2)).reshape(B, 16, -1)
    uy = jnp.transpose(y, (0, 3, 1, 2)).reshape(B, 16, -1)
    u = jnp.concatenate([ux, uy], axis=2)                 # (B, 16, I)
    return capsule_layer(u, params['caps_W'], routings=3) # (B, 2, 32)


# --------------------------------------------------------------------------
# Pure-JAX reference (convs use bf16 multiplicands / f32 accumulation to mirror
# the Pallas MXU path; everything else is exact f32 like the kernels).
# --------------------------------------------------------------------------
def _conv2d_ref(x, w, stride=1, pad=0):
    return jax.lax.conv_general_dilated(
        x.astype(jnp.bfloat16), w.astype(jnp.bfloat16),
        window_strides=(stride, stride),
        padding=[(pad, pad), (pad, pad)],
        dimension_numbers=('NCHW', 'OIHW', 'NCHW'),
        preferred_element_type=jnp.float32)


def _conv2d_ref_f32(x, w, stride=1, pad=0):
    return jax.lax.conv_general_dilated(
        x, w, window_strides=(stride, stride),
        padding=[(pad, pad), (pad, pad)],
        dimension_numbers=('NCHW', 'OIHW', 'NCHW'),
        precision=F32_HI)


def _squash_ref(x, axis):
    ssn = jnp.sum(x * x, axis=axis, keepdims=True) + 1e-8
    return x * (jnp.sqrt(ssn) / (1.0 + ssn))


def _cbam_ref(x, w1, w2, w_spa):
    avg = jnp.mean(x, axis=(2, 3))
    mx = jnp.max(x, axis=(2, 3))

    def mlp(p):
        h = jnp.maximum(jnp.matmul(p, w1.T, precision=F32_HI), 0.0)
        return jnp.matmul(h, w2.T, precision=F32_HI)

    gate = jax.nn.sigmoid(mlp(avg) + mlp(mx))[:, :, None, None]
    chn = x * gate
    cat = jnp.concatenate([jnp.mean(chn, axis=1, keepdims=True),
                           jnp.max(chn, axis=1, keepdims=True)], axis=1)
    spa = jax.nn.sigmoid(_conv2d_ref_f32(cat, w_spa, stride=1, pad=3))
    return chn * spa


def _capsule_ref(u_sq, W, routings=3):
    u_hat = jnp.einsum('bci,incd->bnid', u_sq, W, precision=F32_HI)  # (B, N, I, D)
    B, N, I, D = u_hat.shape
    b = jnp.zeros((B, N, 1, I), jnp.float32)
    v = None
    for _ in range(routings):
        m = jnp.max(b, axis=-1, keepdims=True)
        e = jnp.exp(b - m)
        c = e / jnp.sum(e, axis=-1, keepdims=True)
        s = jnp.matmul(c, u_hat, precision=F32_HI)[:, :, 0, :]       # (B, N, D)
        v = _squash_ref(s, axis=2)
        sim = jnp.einsum('bnid,bnd->bni', u_hat, v, precision=F32_HI)[:, :, None, :]
        b = b + sim
    return v                                                          # (B, N, D)


def _reference_forward(tokens, y_feat, p):
    B = tokens.shape[0]
    emb = p['embed'][tokens]
    out = emb[:, None, :, :]
    y = y_feat[:, None, :, :].astype(emb.dtype)
    out = _conv2d_ref(out, p['conv1_w'])
    out = jnp.maximum(_cbam_ref(out, p['cbam_w1'], p['cbam_w2'], p['cbam_spa_w']), 0.0)
    out = jnp.maximum(_conv2d_ref(out, p['conv2_w'], stride=2), 0.0)
    y = _conv2d_ref(y, p['conv3_w'])
    y = jnp.maximum(_cbam_ref(y, p['cbam_w1'], p['cbam_w2'], p['cbam_spa_w']), 0.0)
    y = jnp.maximum(_conv2d_ref(y, p['conv4_w'], stride=2), 0.0)
    u = jnp.concatenate([out.reshape(B, 16, -1), y.reshape(B, 16, -1)], axis=2)
    u = _squash_ref(u, axis=1)
    return _capsule_ref(u, p['caps_W'], routings=3)


# --------------------------------------------------------------------------
if __name__ == "__main__":
    key = jax.random.PRNGKey(0)
    ks = jax.random.split(key, 11)

    # Small shapes consistent with the module structure (scaled down from
    # fix_length=45 / 256 channels / in_units=2304 at full size).
    B = 2          # batch
    L = 21         # token sequence length
    LY = 21        # rows of the hand-crafted feature map (89 at full size)
    E = 20         # embed_size (matches the spec)
    V = 25         # vocab size
    C1 = 32        # conv1 / conv3 output channels (256 at full size)
    C2 = 32        # conv2 / conv4 output channels (256 at full size)
    RED = 16       # CBAM reduction
    NUM_CAPS, DIM_CAPS, IN_CH = 2, 32, 16

    tokens = jax.random.randint(ks[0], (B, L), 0, V, dtype=jnp.int32)
    # TODO(synk): stands in for featureGenera's host-side hand-crafted features.
    y_feat = jax.random.normal(ks[1], (B, LY, E), dtype=jnp.float32)

    def mk_w(k, shape, fan_in):
        return jax.random.normal(k, shape, dtype=jnp.float32) / jnp.sqrt(float(fan_in))

    # Conv output arithmetic -> capsule in_units.
    oh1, ow1 = L - 9 + 1, E - 9 + 1
    oh2, ow2 = (oh1 - 9) // 2 + 1, (ow1 - 9) // 2 + 1
    oh3, ow3 = LY - 8 + 1, E - 8 + 1
    oh4, ow4 = (oh3 - 8) // 2 + 1, (ow3 - 8) // 2 + 1
    in_units = (C2 * oh2 * ow2 + C2 * oh4 * ow4) // IN_CH

    params = dict(
        embed=mk_w(ks[2], (V, E), 1.0),
        conv1_w=mk_w(ks[3], (C1, 1, 9, 9), 81),
        conv3_w=mk_w(ks[4], (C1, 1, 8, 8), 64),
        conv2_w=mk_w(ks[5], (C2, C1, 9, 9), C1 * 81),
        conv4_w=mk_w(ks[6], (C2, C1, 8, 8), C1 * 64),
        cbam_w1=mk_w(ks[7], (C1 // RED, C1), C1),
        cbam_w2=mk_w(ks[8], (C1, C1 // RED), C1 // RED),
        cbam_spa_w=mk_w(ks[9], (1, 2, 7, 7), 98),
        caps_W=jax.random.normal(ks[10], (in_units, NUM_CAPS, IN_CH, DIM_CAPS),
                                 dtype=jnp.float32),
    )

    fwd = jax.jit(capsule_net_forward)
    out = jax.block_until_ready(fwd(tokens, y_feat, params))

    ref = _reference_forward(tokens, y_feat, params)
    assert out.shape == (B, NUM_CAPS, DIM_CAPS), out.shape
    err = float(jnp.max(jnp.abs(out - ref)))
    assert jnp.allclose(out, ref, atol=5e-3, rtol=5e-3), err

    print("KERNEL_OK")
</pallas_src>

<mosaic_0001>
module attributes {stable_mosaic.version = 11 : i64} {
  func.func @_matmul_kernel(%arg0: i32, %arg1: i32, %arg2: i32, %arg3: memref<312x128xbf16, #tpu.memory_space<vmem>>, %arg4: memref<128x128xbf16, #tpu.memory_space<vmem>>, %arg5: memref<312x128xf32, #tpu.memory_space<vmem>>, %arg6: memref<312x128xf32, #tpu.memory_space<vmem>>) attributes {dimension_semantics = [#tpu.dimension_semantics<parallel>, #tpu.dimension_semantics<parallel>, #tpu.dimension_semantics<arbitrary>], iteration_bounds = array<i64: 1, 1, 1>, scalar_prefetch = 0 : i64, scratch_operands = 1 : i64, tpu.core_type = #tpu.core_type<tc>, window_params = [{transform_indices = @transform_0, window_bounds = array<i64: 312, 128>}, {transform_indices = @transform_1, window_bounds = array<i64: 128, 128>}, {transform_indices = @transform_2, window_bounds = array<i64: 312, 128>}]} {
    %c0_i32 = arith.constant 0 : i32
    %0 = arith.cmpi eq, %arg2, %c0_i32 : i32
    %1 = arith.extui %0 : i1 to i32
    %c0_i32_0 = arith.constant 0 : i32
    %2 = arith.cmpi ne, %1, %c0_i32_0 : i32
    scf.if %2 {
      %cst_10 = arith.constant 0.000000e+00 : f32
      %12 = vector.broadcast %cst_10 : f32 to vector<312x128xf32>
      %c0_11 = arith.constant 0 : index
      %c0_12 = arith.constant 0 : index
      %13 = vector.load %arg6[%c0_11, %c0_12] : memref<312x128xf32, #tpu.memory_space<vmem>>, vector<312x128xf32>
      tpu.vector_store %arg6[%c0_11, %c0_12], %12 {strides = array<i32>} : memref<312x128xf32, #tpu.memory_space<vmem>>, vector<312x128xf32>,
    } else {
    }
    %c0 = arith.constant 0 : index
    %c0_1 = arith.constant 0 : index
    %3 = vector.load %arg6[%c0, %c0_1] : memref<312x128xf32, #tpu.memory_space<vmem>>, vector<312x128xf32>
    %c0_2 = arith.constant 0 : index
    %c0_3 = arith.constant 0 : index
    %4 = vector.load %arg3[%c0_2, %c0_3] : memref<312x128xbf16, #tpu.memory_space<vmem>>, vector<312x128xbf16>
    %c0_4 = arith.constant 0 : index
    %c0_5 = arith.constant 0 : index
    %5 = vector.load %arg4[%c0_4, %c0_5] : memref<128x128xbf16, #tpu.memory_space<vmem>>, vector<128x128xbf16>
    %cst = arith.constant dense<0.000000e+00> : vector<312x128xf32>
    %6 = tpu.matmul %4, %5, %cst {dimension_numbers = #tpu.dot_dimension_numbers<[1], [0], [0], [1], [0, 0, 1, 1], [], []>} : vector<312x128xbf16>, vector<128x128xbf16>, vector<312x128xf32> -> vector<312x128xf32>
    %7 = arith.addf %3, %6 : vector<312x128xf32>
    %c0_6 = arith.constant 0 : index
    %c0_7 = arith.constant 0 : index
    %8 = vector.load %arg6[%c0_6, %c0_7] : memref<312x128xf32, #tpu.memory_space<vmem>>, vector<312x128xf32>
    tpu.vector_store %arg6[%c0_6, %c0_7], %7 {strides = array<i32>} : memref<312x128xf32, #tpu.memory_space<vmem>>, vector<312x128xf32>,
    %c0_i32_8 = arith.constant 0 : i32
    %9 = arith.cmpi eq, %arg2, %c0_i32_8 : i32
    %10 = arith.extui %9 : i1 to i32
    %c0_i32_9 = arith.constant 0 : i32
    %11 = arith.cmpi ne, %10, %c0_i32_9 : i32
    scf.if %11 {
      %c0_10 = arith.constant 0 : index
      %c0_11 = arith.constant 0 : index
      %12 = vector.load %arg6[%c0_10, %c0_11] : memref<312x128xf32, #tpu.memory_space<vmem>>, vector<312x128xf32>
      %c0_12 = arith.constant 0 : index
      %c0_13 = arith.constant 0 : index
      %13 = vector.load %arg5[%c0_12, %c0_13] : memref<312x128xf32, #tpu.memory_space<vmem>>, vector<312x128xf32>
      tpu.vector_store %arg5[%c0_12, %c0_13], %12 {strides = array<i32>} : memref<312x128xf32, #tpu.memory_space<vmem>>, vector<312x128xf32>,
    } else {
    }
    return
  }
  func.func @transform_0(%arg0: i32, %arg1: i32, %arg2: i32) -> (i32, i32) {
    %c0_i32 = arith.constant 0 : i32
    return %arg0, %arg2 : i32, i32
  }
  func.func @transform_1(%arg0: i32, %arg1: i32, %arg2: i32) -> (i32, i32) {
    %c0_i32 = arith.constant 0 : i32
    return %arg2, %arg1 : i32, i32
  }
  func.func @transform_2(%arg0: i32, %arg1: i32, %arg2: i32) -> (i32, i32) {
    %c0_i32 = arith.constant 0 : i32
    return %arg0, %arg1 : i32, i32
  }
}

module attributes {stable_mosaic.version = 11 : i64} {
  func.func @_cbam_channel_kernel(%arg0: i32, %arg1: memref<1x156x32xf32, #tpu.memory_space<vmem>>, %arg2: memref<2x32xf32, #tpu.memory_space<vmem>>, %arg3: memref<32x2xf32, #tpu.memory_space<vmem>>, %arg4: memref<1x156x32xf32, #tpu.memory_space<vmem>>, %arg5: memref<1x156x2xf32, #tpu.memory_space<vmem>>) attributes {dimension_semantics = [#tpu.dimension_semantics<parallel>], iteration_bounds = array<i64: 2>, scalar_prefetch = 0 : i64, scratch_operands = 0 : i64, tpu.core_type = #tpu.core_type<tc>, window_params = [{transform_indices = @transform_0, window_bounds = array<i64: 1, 156, 32>}, {pipeline_mode = #tpu.pipeline_mode<synchronous>, transform_indices = @transform_1, window_bounds = array<i64: 2, 32>}, {pipeline_mode = #tpu.pipeline_mode<synchronous>, transform_indices = @transform_2, window_bounds = array<i64: 32, 2>}, {transform_indices = @transform_3, window_bounds = array<i64: 1, 156, 32>}, {transform_indices = @transform_4, window_bounds = array<i64: 1, 156, 2>}]} {
    %c0 = arith.constant 0 : index
    %c0_0 = arith.constant 0 : index
    %c0_1 = arith.constant 0 : index
    %0 = vector.load %arg1[%c0, %c0_0, %c0_1] : memref<1x156x32xf32, #tpu.memory_space<vmem>>, vector<1x156x32xf32>
    %cst = arith.constant dense<0.000000e+00> : vector<1x32xf32>
    %1 = vector.multi_reduction <add>, %0, %cst [1] : vector<1x156x32xf32> to vector<1x32xf32>
    %cst_2 = arith.constant 1.560000e+02 : f32
    %2 = vector.broadcast %cst_2 : f32 to vector<1x32xf32>
    %3 = arith.divf %1, %2 : vector<1x32xf32>
    %cst_3 = arith.constant dense<0xFF800000> : vector<1x32xf32>
    %4 = vector.multi_reduction <maximumf>, %0, %cst_3 [1] : vector<1x156x32xf32> to vector<1x32xf32>
    %5 = tpu.concatenate %3, %4 in 0 : vector<1x32xf32>, vector<1x32xf32> -> vector<2x32xf32>
    %c0_4 = arith.constant 0 : index
    %c0_5 = arith.constant 0 : index
    %6 = vector.load %arg2[%c0_4, %c0_5] : memref<2x32xf32, #tpu.memory_space<vmem>>, vector<2x32xf32>
    %c0_6 = arith.constant 0 : index
    %c0_7 = arith.constant 0 : index
    %7 = vector.load %arg3[%c0_6, %c0_7] : memref<32x2xf32, #tpu.memory_space<vmem>>, vector<32x2xf32>
    %8 = vector.shape_cast %5 : vector<2x32xf32> to vector<2x1x32xf32>
    %9 = vector.shape_cast %6 : vector<2x32xf32> to vector<1x2x32xf32>
    %10 = vector.broadcast %8 : vector<2x1x32xf32> to vector<2x2x32xf32>
    %11 = vector.broadcast %9 : vector<1x2x32xf32> to vector<2x2x32xf32>
    %12 = arith.mulf %10, %11 : vector<2x2x32xf32>
    %cst_8 = arith.constant dense<0.000000e+00> : vector<2x2xf32>
    %13 = vector.multi_reduction <add>, %12, %cst_8 [2] : vector<2x2x32xf32> to vector<2x2xf32>
    %cst_9 = arith.constant 0.000000e+00 : f32
    %14 = vector.broadcast %cst_9 : f32 to vector<2x2xf32>
    %15 = arith.maximumf %13, %14 : vector<2x2xf32>
    %16 = vector.shape_cast %15 : vector<2x2xf32> to vector<2x1x2xf32>
    %17 = vector.shape_cast %7 : vector<32x2xf32> to vector<1x32x2xf32>
    %18 = vector.broadcast %16 : vector<2x1x2xf32> to vector<2x32x2xf32>
    %19 = vector.broadcast %17 : vector<1x32x2xf32> to vector<2x32x2xf32>
    %20 = arith.mulf %18, %19 : vector<2x32x2xf32>
    %cst_10 = arith.constant dense<0.000000e+00> : vector<2x32xf32>
    %21 = vector.multi_reduction <add>, %20, %cst_10 [2] : vector<2x32x2xf32> to vector<2x32xf32>
    %22 = vector.extract_strided_slice %21 {offsets = [0, 0], sizes = [1, 32], strides = [1, 1]} : vector<2x32xf32> to vector<1x32xf32>
    %23 = vector.extract_strided_slice %21 {offsets = [1, 0], sizes = [1, 32], strides = [1, 1]} : vector<2x32xf32> to vector<1x32xf32>
    %24 = arith.addf %22, %23 : vector<1x32xf32>
    %25 = arith.negf %24 : vector<1x32xf32>
    %26 = math.exp %25 : vector<1x32xf32>
    %cst_11 = arith.constant 1.000000e+00 : f32
    %27 = vector.broadcast %cst_11 : f32 to vector<1x32xf32>
    %28 = arith.addf %27, %26 : vector<1x32xf32>
    %29 = arith.divf %27, %28 : vector<1x32xf32>
    %30 = vector.shape_cast %29 : vector<1x32xf32> to vector<1x1x32xf32>
    %31 = vector.broadcast %30 : vector<1x1x32xf32> to vector<1x156x32xf32>
    %32 = arith.mulf %0, %31 : vector<1x156x32xf32>
    %c0_12 = arith.constant 0 : index
    %c0_13 = arith.constant 0 : index
    %c0_14 = arith.constant 0 : index
    %33 = vector.load %arg4[%c0_12, %c0_13, %c0_14] : memref<1x156x32xf32, #tpu.memory_space<vmem>>, vector<1x156x32xf32>
    tpu.vector_store %arg4[%c0_12, %c0_13, %c0_14], %32 {strides = array<i32>} : memref<1x156x32xf32, #tpu.memory_space<vmem>>, vector<1x156x32xf32>,
    %cst_15 = arith.constant dense<0.000000e+00> : vector<1x156xf32>
    %34 = vector.multi_reduction <add>, %32, %cst_15 [2] : vector<1x156x32xf32> to vector<1x156xf32>
    %35 = vector.shape_cast %34 : vector<1x156xf32> to vector<1x156x1xf32>
    %cst_16 = arith.constant 3.200000e+01 : f32
    %36 = vector.broadcast %cst_16 : f32 to vector<1x156x1xf32>
    %37 = arith.divf %35, %36 : vector<1x156x1xf32>
    %c0_17 = arith.constant 0 : index
    %c0_18 = arith.constant 0 : index
    %c0_19 = arith.constant 0 : index
    %38 = vector.load %arg5[%c0_17, %c0_18, %c0_19] : memref<1x156x2xf32, #tpu.memory_space<vmem>>, vector<1x156x1xf32>
    tpu.vector_store %arg5[%c0_17, %c0_18, %c0_19], %37 {strides = array<i32>} : memref<1x156x2xf32, #tpu.memory_space<vmem>>, vector<1x156x1xf32>,
    %cst_20 = arith.constant dense<0xFF800000> : vector<1x156xf32>
    %39 = vector.multi_reduction <maximumf>, %32, %cst_20 [2] : vector<1x156x32xf32> to vector<1x156xf32>
    %40 = vector.shape_cast %39 : vector<1x156xf32> to vector<1x156x1xf32>
    %c0_21 = arith.constant 0 : index
    %c0_22 = arith.constant 0 : index
    %c1 = arith.constant 1 : index
    %41 = vector.load %arg5[%c0_21, %c0_22, %c1] : memref<1x156x2xf32, #tpu.memory_space<vmem>>, vector<1x156x1xf32>
    tpu.vector_store %arg5[%c0_21, %c0_22, %c1], %40 {strides = array<i32>} : memref<1x156x2xf32, #tpu.memory_space<vmem>>, vector<1x156x1xf32>,
    return
  }
  func.func @transform_0(%arg0: i32) -> (i32, i32, i32) {
    %c0_i32 = arith.constant 0 : i32
    %c0_i32_0 = arith.constant 0 : i32
    %c0_i32_1 = arith.constant 0 : i32
    return %arg0, %c0_i32, %c0_i32_0 : i32, i32, i32
  }
  func.func @transform_1(%arg0: i32) -> (i32, i32) {
    %c0_i32 = arith.constant 0 : i32
    %c0_i32_0 = arith.constant 0 : i32
    %c0_i32_1 = arith.constant 0 : i32
    return %c0_i32, %c0_i32_0 : i32, i32
  }
  func.func @transform_2(%arg0: i32) -> (i32, i32) {
    %c0_i32 = arith.constant 0 : i32
    %c0_i32_0 = arith.constant 0 : i32
    %c0_i32_1 = arith.constant 0 : i32
    return %c0_i32, %c0_i32_0 : i32, i32
  }
  func.func @transform_3(%arg0: i32) -> (i32, i32, i32) {
    %c0_i32 = arith.constant 0 : i32
    %c0_i32_0 = arith.constant 0 : i32
    %c0_i32_1 = arith.constant 0 : i32
    return %arg0, %c0_i32, %c0_i32_0 : i32, i32, i32
  }
  func.func @transform_4(%arg0: i32) -> (i32, i32, i32) {
    %c0_i32 = arith.constant 0 : i32
    %c0_i32_0 = arith.constant 0 : i32
    %c0_i32_1 = arith.constant 0 : i32
    return %arg0, %c0_i32, %c0_i32_0 : i32, i32, i32
  }
}

module attributes {stable_mosaic.version = 11 : i64} {
  func.func @_spatial_gate_kernel(%arg0: i32, %arg1: memref<1x156x32xf32, #tpu.memory_space<vmem>>, %arg2: memref<1x156x98xf32, #tpu.memory_space<vmem>>, %arg3: memref<1x1x98xf32, #tpu.memory_space<vmem>>, %arg4: memref<1x156x32xf32, #tpu.memory_space<vmem>>) attributes {dimension_semantics = [#tpu.dimension_semantics<parallel>], iteration_bounds = array<i64: 2>, scalar_prefetch = 0 : i64, scratch_operands = 0 : i64, tpu.core_type = #tpu.core_type<tc>, window_params = [{transform_indices = @transform_0, window_bounds = array<i64: 1, 156, 32>}, {transform_indices = @transform_1, window_bounds = array<i64: 1, 156, 98>}, {pipeline_mode = #tpu.pipeline_mode<synchronous>, transform_indices = @transform_2, window_bounds = array<i64: 1, 1, 98>}, {transform_indices = @transform_3, window_bounds = array<i64: 1, 156, 32>}]} {
    %c0 = arith.constant 0 : index
    %c0_0 = arith.constant 0 : index
    %c0_1 = arith.constant 0 : index
    %0 = vector.load %arg2[%c0, %c0_0, %c0_1] : memref<1x156x98xf32, #tpu.memory_space<vmem>>, vector<1x156x98xf32>
    %c0_2 = arith.constant 0 : index
    %c0_3 = arith.constant 0 : index
    %c0_4 = arith.constant 0 : index
    %1 = vector.load %arg3[%c0_2, %c0_3, %c0_4] : memref<1x1x98xf32, #tpu.memory_space<vmem>>, vector<1x1x98xf32>
    %2 = vector.broadcast %1 : vector<1x1x98xf32> to vector<1x156x98xf32>
    %3 = arith.mulf %0, %2 : vector<1x156x98xf32>
    %cst = arith.constant dense<0.000000e+00> : vector<1x156xf32>
    %4 = vector.multi_reduction <add>, %3, %cst [2] : vector<1x156x98xf32> to vector<1x156xf32>
    %5 = vector.shape_cast %4 : vector<1x156xf32> to vector<1x156x1xf32>
    %c0_5 = arith.constant 0 : index
    %c0_6 = arith.constant 0 : index
    %c0_7 = arith.constant 0 : index
    %6 = vector.load %arg1[%c0_5, %c0_6, %c0_7] : memref<1x156x32xf32, #tpu.memory_space<vmem>>, vector<1x156x32xf32>
    %7 = arith.negf %5 : vector<1x156x1xf32>
    %8 = math.exp %7 : vector<1x156x1xf32>
    %cst_8 = arith.constant 1.000000e+00 : f32
    %9 = vector.broadcast %cst_8 : f32 to vector<1x156x1xf32>
    %10 = arith.addf %9, %8 : vector<1x156x1xf32>
    %11 = arith.divf %9, %10 : vector<1x156x1xf32>
    %12 = vector.broadcast %11 : vector<1x156x1xf32> to vector<1x156x32xf32>
    %13 = arith.mulf %6, %12 : vector<1x156x32xf32>
    %cst_9 = arith.constant 0.000000e+00 : f32
    %14 = vector.broadcast %cst_9 : f32 to vector<1x156x32xf32>
    %15 = arith.maximumf %13, %14 : vector<1x156x32xf32>
    %c0_10 = arith.constant 0 : index
    %c0_11 = arith.constant 0 : index
    %c0_12 = arith.constant 0 : index
    %16 = vector.load %arg4[%c0_10, %c0_11, %c0_12] : memref<1x156x32xf32, #tpu.memory_space<vmem>>, vector<1x156x32xf32>
    tpu.vector_store %arg4[%c0_10, %c0_11, %c0_12], %15 {strides = array<i32>} : memref<1x156x32xf32, #tpu.memory_space<vmem>>, vector<1x156x32xf32>,
    return
  }
  func.func @transform_0(%arg0: i32) -> (i32, i32, i32) {
    %c0_i32 = arith.constant 0 : i32
    %c0_i32_0 = arith.constant 0 : i32
    %c0_i32_1 = arith.constant 0 : i32
    return %arg0, %c0_i32, %c0_i32_0 : i32, i32, i32
  }
  func.func @transform_1(%arg0: i32) -> (i32, i32, i32) {
    %c0_i32 = arith.constant 0 : i32
    %c0_i32_0 = arith.constant 0 : i32
    %c0_i32_1 = arith.constant 0 : i32
    return %arg0, %c0_i32, %c0_i32_0 : i32, i32, i32
  }
  func.func @transform_2(%arg0: i32) -> (i32, i32, i32) {
    %c0_i32 = arith.constant 0 : i32
    %c0_i32_0 = arith.constant 0 : i32
    %c0_i32_1 = arith.constant 0 : i32
    %c0_i32_2 = arith.constant 0 : i32
    return %c0_i32, %c0_i32_0, %c0_i32_1 : i32, i32, i32
  }
  func.func @transform_3(%arg0: i32) -> (i32, i32, i32) {
    %c0_i32 = arith.constant 0 : i32
    %c0_i32_0 = arith.constant 0 : i32
    %c0_i32_1 = arith.constant 0 : i32
    return %arg0, %c0_i32, %c0_i32_0 : i32, i32, i32
  }
}

module attributes {stable_mosaic.version = 11 : i64} {
  func.func @_matmul_kernel(%arg0: i32, %arg1: i32, %arg2: i32, %arg3: memref<16x512xbf16, #tpu.memory_space<vmem>>, %arg4: memref<512x128xbf16, #tpu.memory_space<vmem>>, %arg5: memref<16x128xf32, #tpu.memory_space<vmem>>, %arg6: memref<16x128xf32, #tpu.memory_space<vmem>>) attributes {dimension_semantics = [#tpu.dimension_semantics<parallel>, #tpu.dimension_semantics<parallel>, #tpu.dimension_semantics<arbitrary>], iteration_bounds = array<i64: 1, 1, 6>, scalar_prefetch = 0 : i64, scratch_operands = 1 : i64, tpu.core_type = #tpu.core_type<tc>, window_params = [{transform_indices = @transform_0, window_bounds = array<i64: 16, 512>}, {transform_indices = @transform_1, window_bounds = array<i64: 512, 128>}, {transform_indices = @transform_2, window_bounds = array<i64: 16, 128>}]} {
    %c0_i32 = arith.constant 0 : i32
    %0 = arith.cmpi eq, %arg2, %c0_i32 : i32
    %1 = arith.extui %0 : i1 to i32
    %c0_i32_0 = arith.constant 0 : i32
    %2 = arith.cmpi ne, %1, %c0_i32_0 : i32
    scf.if %2 {
      %cst_9 = arith.constant 0.000000e+00 : f32
      %12 = vector.broadcast %cst_9 : f32 to vector<16x128xf32>
      %c0_10 = arith.constant 0 : index
      %c0_11 = arith.constant 0 : index
      %13 = vector.load %arg6[%c0_10, %c0_11] : memref<16x128xf32, #tpu.memory_space<vmem>>, vector<16x128xf32>
      tpu.vector_store %arg6[%c0_10, %c0_11], %12 {strides = array<i32>} : memref<16x128xf32, #tpu.memory_space<vmem>>, vector<16x128xf32>,
    } else {
    }
    %c0 = arith.constant 0 : index
    %c0_1 = arith.constant 0 : index
    %3 = vector.load %arg6[%c0, %c0_1] : memref<16x128xf32, #tpu.memory_space<vmem>>, vector<16x128xf32>
    %c0_2 = arith.constant 0 : index
    %c0_3 = arith.constant 0 : index
    %4 = vector.load %arg3[%c0_2, %c0_3] : memref<16x512xbf16, #tpu.memory_space<vmem>>, vector<16x512xbf16>
    %c0_4 = arith.constant 0 : index
    %c0_5 = arith.constant 0 : index
    %5 = vector.load %arg4[%c0_4, %c0_5] : memref<512x128xbf16, #tpu.memory_space<vmem>>, vector<512x128xbf16>
    %cst = arith.constant dense<0.000000e+00> : vector<16x128xf32>
    %6 = tpu.matmul %4, %5, %cst {dimension_numbers = #tpu.dot_dimension_numbers<[1], [0], [0], [1], [0, 0, 1, 1], [], []>} : vector<16x512xbf16>, vector<512x128xbf16>, vector<16x128xf32> -> vector<16x128xf32>
    %7 = arith.addf %3, %6 : vector<16x128xf32>
    %c0_6 = arith.constant 0 : index
    %c0_7 = arith.constant 0 : index
    %8 = vector.load %arg6[%c0_6, %c0_7] : memref<16x128xf32, #tpu.memory_space<vmem>>, vector<16x128xf32>
    tpu.vector_store %arg6[%c0_6, %c0_7], %7 {strides = array<i32>} : memref<16x128xf32, #tpu.memory_space<vmem>>, vector<16x128xf32>,
    %c5_i32 = arith.constant 5 : i32
    %9 = arith.cmpi eq, %arg2, %c5_i32 : i32
    %10 = arith.extui %9 : i1 to i32
    %c0_i32_8 = arith.constant 0 : i32
    %11 = arith.cmpi ne, %10, %c0_i32_8 : i32
    scf.if %11 {
      %c0_9 = arith.constant 0 : index
      %c0_10 = arith.constant 0 : index
      %12 = vector.load %arg6[%c0_9, %c0_10] : memref<16x128xf32, #tpu.memory_space<vmem>>, vector<16x128xf32>
      %cst_11 = arith.constant 0.000000e+00 : f32
      %13 = vector.broadcast %cst_11 : f32 to vector<16x128xf32>
      %14 = arith.maximumf %12, %13 : vector<16x128xf32>
      %c0_12 = arith.constant 0 : index
      %c0_13 = arith.constant 0 : index
      %15 = vector.load %arg5[%c0_12, %c0_13] : memref<16x128xf32, #tpu.memory_space<vmem>>, vector<16x128xf32>
      tpu.vector_store %arg5[%c0_12, %c0_13], %14 {strides = array<i32>} : memref<16x128xf32, #tpu.memory_space<vmem>>, vector<16x128xf32>,
    } else {
    }
    return
  }
  func.func @transform_0(%arg0: i32, %arg1: i32, %arg2: i32) -> (i32, i32) {
    %c0_i32 = arith.constant 0 : i32
    return %arg0, %arg2 : i32, i32
  }
  func.func @transform_1(%arg0: i32, %arg1: i32, %arg2: i32) -> (i32, i32) {
    %c0_i32 = arith.constant 0 : i32
    return %arg2, %arg1 : i32, i32
  }
  func.func @transform_2(%arg0: i32, %arg1: i32, %arg2: i32) -> (i32, i32) {
    %c0_i32 = arith.constant 0 : i32
    return %arg0, %arg1 : i32, i32
  }
}

module attributes {stable_mosaic.version = 11 : i64} {
  func.func @_matmul_kernel(%arg0: i32, %arg1: i32, %arg2: i32, %arg3: memref<368x128xbf16, #tpu.memory_space<vmem>>, %arg4: memref<128x128xbf16, #tpu.memory_space<vmem>>, %arg5: memref<368x128xf32, #tpu.memory_space<vmem>>, %arg6: memref<368x128xf32, #tpu.memory_space<vmem>>) attributes {dimension_semantics = [#tpu.dimension_semantics<parallel>, #tpu.dimension_semantics<parallel>, #tpu.dimension_semantics<arbitrary>], iteration_bounds = array<i64: 1, 1, 1>, scalar_prefetch = 0 : i64, scratch_operands = 1 : i64, tpu.core_type = #tpu.core_type<tc>, window_params = [{transform_indices = @transform_0, window_bounds = array<i64: 368, 128>}, {transform_indices = @transform_1, window_bounds = array<i64: 128, 128>}, {transform_indices = @transform_2, window_bounds = array<i64: 368, 128>}]} {
    %c0_i32 = arith.constant 0 : i32
    %0 = arith.cmpi eq, %arg2, %c0_i32 : i32
    %1 = arith.extui %0 : i1 to i32
    %c0_i32_0 = arith.constant 0 : i32
    %2 = arith.cmpi ne, %1, %c0_i32_0 : i32
    scf.if %2 {
      %cst_10 = arith.constant 0.000000e+00 : f32
      %12 = vector.broadcast %cst_10 : f32 to vector<368x128xf32>
      %c0_11 = arith.constant 0 : index
      %c0_12 = arith.constant 0 : index
      %13 = vector.load %arg6[%c0_11, %c0_12] : memref<368x128xf32, #tpu.memory_space<vmem>>, vector<368x128xf32>
      tpu.vector_store %arg6[%c0_11, %c0_12], %12 {strides = array<i32>} : memref<368x128xf32, #tpu.memory_space<vmem>>, vector<368x128xf32>,
    } else {
    }
    %c0 = arith.constant 0 : index
    %c0_1 = arith.constant 0 : index
    %3 = vector.load %arg6[%c0, %c0_1] : memref<368x128xf32, #tpu.memory_space<vmem>>, vector<368x128xf32>
    %c0_2 = arith.constant 0 : index
    %c0_3 = arith.constant 0 : index
    %4 = vector.load %arg3[%c0_2, %c0_3] : memref<368x128xbf16, #tpu.memory_space<vmem>>, vector<368x128xbf16>
    %c0_4 = arith.constant 0 : index
    %c0_5 = arith.constant 0 : index
    %5 = vector.load %arg4[%c0_4, %c0_5] : memref<128x128xbf16, #tpu.memory_space<vmem>>, vector<128x128xbf16>
    %cst = arith.constant dense<0.000000e+00> : vector<368x128xf32>
    %6 = tpu.matmul %4, %5, %cst {dimension_numbers = #tpu.dot_dimension_numbers<[1], [0], [0], [1], [0, 0, 1, 1], [], []>} : vector<368x128xbf16>, vector<128x128xbf16>, vector<368x128xf32> -> vector<368x128xf32>
    %7 = arith.addf %3, %6 : vector<368x128xf32>
    %c0_6 = arith.constant 0 : index
    %c0_7 = arith.constant 0 : index
    %8 = vector.load %arg6[%c0_6, %c0_7] : memref<368x128xf32, #tpu.memory_space<vmem>>, vector<368x128xf32>
    tpu.vector_store %arg6[%c0_6, %c0_7], %7 {strides = array<i32>} : memref<368x128xf32, #tpu.memory_space<vmem>>, vector<368x128xf32>,
    %c0_i32_8 = arith.constant 0 : i32
    %9 = arith.cmpi eq, %arg2, %c0_i32_8 : i32
    %10 = arith.extui %9 : i1 to i32
    %c0_i32_9 = arith.constant 0 : i32
    %11 = arith.cmpi ne, %10, %c0_i32_9 : i32
    scf.if %11 {
      %c0_10 = arith.constant 0 : index
      %c0_11 = arith.constant 0 : index
      %12 = vector.load %arg6[%c0_10, %c0_11] : memref<368x128xf32, #tpu.memory_space<vmem>>, vector<368x128xf32>
      %c0_12 = arith.constant 0 : index
      %c0_13 = arith.constant 0 : index
      %13 = vector.load %arg5[%c0_12, %c0_13] : memref<368x128xf32, #tpu.memory_space<vmem>>, vector<368x128xf32>
      tpu.vector_store %arg5[%c0_12, %c0_13], %12 {strides = array<i32>} : memref<368x128xf32, #tpu.memory_space<vmem>>, vector<368x128xf32>,
    } else {
    }
    return
  }
  func.func @transform_0(%arg0: i32, %arg1: i32, %arg2: i32) -> (i32, i32) {
    %c0_i32 = arith.constant 0 : i32
    return %arg0, %arg2 : i32, i32
  }
  func.func @transform_1(%arg0: i32, %arg1: i32, %arg2: i32) -> (i32, i32) {
    %c0_i32 = arith.constant 0 : i32
    return %arg2, %arg1 : i32, i32
  }
  func.func @transform_2(%arg0: i32, %arg1: i32, %arg2: i32) -> (i32, i32) {
    %c0_i32 = arith.constant 0 : i32
    return %arg0, %arg1 : i32, i32
  }
}

module attributes {stable_mosaic.version = 11 : i64} {
  func.func @_cbam_channel_kernel(%arg0: i32, %arg1: memref<1x182x32xf32, #tpu.memory_space<vmem>>, %arg2: memref<2x32xf32, #tpu.memory_space<vmem>>, %arg3: memref<32x2xf32, #tpu.memory_space<vmem>>, %arg4: memref<1x182x32xf32, #tpu.memory_space<vmem>>, %arg5: memref<1x182x2xf32, #tpu.memory_space<vmem>>) attributes {dimension_semantics = [#tpu.dimension_semantics<parallel>], iteration_bounds = array<i64: 2>, scalar_prefetch = 0 : i64, scratch_operands = 0 : i64, tpu.core_type = #tpu.core_type<tc>, window_params = [{transform_indices = @transform_0, window_bounds = array<i64: 1, 182, 32>}, {pipeline_mode = #tpu.pipeline_mode<synchronous>, transform_indices = @transform_1, window_bounds = array<i64: 2, 32>}, {pipeline_mode = #tpu.pipeline_mode<synchronous>, transform_indices = @transform_2, window_bounds = array<i64: 32, 2>}, {transform_indices = @transform_3, window_bounds = array<i64: 1, 182, 32>}, {transform_indices = @transform_4, window_bounds = array<i64: 1, 182, 2>}]} {
    %c0 = arith.constant 0 : index
    %c0_0 = arith.constant 0 : index
    %c0_1 = arith.constant 0 : index
    %0 = vector.load %arg1[%c0, %c0_0, %c0_1] : memref<1x182x32xf32, #tpu.memory_space<vmem>>, vector<1x182x32xf32>
    %cst = arith.constant dense<0.000000e+00> : vector<1x32xf32>
    %1 = vector.multi_reduction <add>, %0, %cst [1] : vector<1x182x32xf32> to vector<1x32xf32>
    %cst_2 = arith.constant 1.820000e+02 : f32
    %2 = vector.broadcast %cst_2 : f32 to vector<1x32xf32>
    %3 = arith.divf %1, %2 : vector<1x32xf32>
    %cst_3 = arith.constant dense<0xFF800000> : vector<1x32xf32>
    %4 = vector.multi_reduction <maximumf>, %0, %cst_3 [1] : vector<1x182x32xf32> to vector<1x32xf32>
    %5 = tpu.concatenate %3, %4 in 0 : vector<1x32xf32>, vector<1x32xf32> -> vector<2x32xf32>
    %c0_4 = arith.constant 0 : index
    %c0_5 = arith.constant 0 : index
    %6 = vector.load %arg2[%c0_4, %c0_5] : memref<2x32xf32, #tpu.memory_space<vmem>>, vector<2x32xf32>
    %c0_6 = arith.constant 0 : index
    %c0_7 = arith.constant 0 : index
    %7 = vector.load %arg3[%c0_6, %c0_7] : memref<32x2xf32, #tpu.memory_space<vmem>>, vector<32x2xf32>
    %8 = vector.shape_cast %5 : vector<2x32xf32> to vector<2x1x32xf32>
    %9 = vector.shape_cast %6 : vector<2x32xf32> to vector<1x2x32xf32>
    %10 = vector.broadcast %8 : vector<2x1x32xf32> to vector<2x2x32xf32>
    %11 = vector.broadcast %9 : vector<1x2x32xf32> to vector<2x2x32xf32>
    %12 = arith.mulf %10, %11 : vector<2x2x32xf32>
    %cst_8 = arith.constant dense<0.000000e+00> : vector<2x2xf32>
    %13 = vector.multi_reduction <add>, %12, %cst_8 [2] : vector<2x2x32xf32> to vector<2x2xf32>
    %cst_9 = arith.constant 0.000000e+00 : f32
    %14 = vector.broadcast %cst_9 : f32 to vector<2x2xf32>
    %15 = arith.maximumf %13, %14 : vector<2x2xf32>
    %16 = vector.shape_cast %15 : vector<2x2xf32> to vector<2x1x2xf32>
    %17 = vector.shape_cast %7 : vector<32x2xf32> to vector<1x32x2xf32>
    %18 = vector.broadcast %16 : vector<2x1x2xf32> to vector<2x32x2xf32>
    %19 = vector.broadcast %17 : vector<1x32x2xf32> to vector<2x32x2xf32>
    %20 = arith.mulf %18, %19 : vector<2x32x2xf32>
    %cst_10 = arith.constant dense<0.000000e+00> : vector<2x32xf32>
    %21 = vector.multi_reduction <add>, %20, %cst_10 [2] : vector<2x32x2xf32> to vector<2x32xf32>
    %22 = vector.extract_strided_slice %21 {offsets = [0, 0], sizes = [1, 32], strides = [1, 1]} : vector<2x32xf32> to vector<1x32xf32>
    %23 = vector.extract_strided_slice %21 {offsets = [1, 0], sizes = [1, 32], strides = [1, 1]} : vector<2x32xf32> to vector<1x32xf32>
    %24 = arith.addf %22, %23 : vector<1x32xf32>
    %25 = arith.negf %24 : vector<1x32xf32>
    %26 = math.exp %25 : vector<1x32xf32>
    %cst_11 = arith.constant 1.000000e+00 : f32
    %27 = vector.broadcast %cst_11 : f32 to vector<1x32xf32>
    %28 = arith.addf %27, %26 : vector<1x32xf32>
    %29 = arith.divf %27, %28 : vector<1x32xf32>
    %30 = vector.shape_cast %29 : vector<1x32xf32> to vector<1x1x32xf32>
    %31 = vector.broadcast %30 : vector<1x1x32xf32> to vector<1x182x32xf32>
    %32 = arith.mulf %0, %31 : vector<1x182x32xf32>
    %c0_12 = arith.constant 0 : index
    %c0_13 = arith.constant 0 : index
    %c0_14 = arith.constant 0 : index
    %33 = vector.load %arg4[%c0_12, %c0_13, %c0_14] : memref<1x182x32xf32, #tpu.memory_space<vmem>>, vector<1x182x32xf32>
    tpu.vector_store %arg4[%c0_12, %c0_13, %c0_14], %32 {strides = array<i32>} : memref<1x182x32xf32, #tpu.memory_space<vmem>>, vector<1x182x32xf32>,
    %cst_15 = arith.constant dense<0.000000e+00> : vector<1x182xf32>
    %34 = vector.multi_reduction <add>, %32, %cst_15 [2] : vector<1x182x32xf32> to vector<1x182xf32>
    %35 = vector.shape_cast %34 : vector<1x182xf32> to vector<1x182x1xf32>
    %cst_16 = arith.constant 3.200000e+01 : f32
    %36 = vector.broadcast %cst_16 : f32 to vector<1x182x1xf32>
    %37 = arith.divf %35, %36 : vector<1x182x1xf32>
    %c0_17 = arith.constant 0 : index
    %c0_18 = arith.constant 0 : index
    %c0_19 = arith.constant 0 : index
    %38 = vector.load %arg5[%c0_17, %c0_18, %c0_19] : memref<1x182x2xf32, #tpu.memory_space<vmem>>, vector<1x182x1xf32>
    tpu.vector_store %arg5[%c0_17, %c0_18, %c0_19], %37 {strides = array<i32>} : memref<1x182x2xf32, #tpu.memory_space<vmem>>, vector<1x182x1xf32>,
    %cst_20 = arith.constant dense<0xFF800000> : vector<1x182xf32>
    %39 = vector.multi_reduction <maximumf>, %32, %cst_20 [2] : vector<1x182x32xf32> to vector<1x182xf32>
    %40 = vector.shape_cast %39 : vector<1x182xf32> to vector<1x182x1xf32>
    %c0_21 = arith.constant 0 : index
    %c0_22 = arith.constant 0 : index
    %c1 = arith.constant 1 : index
    %41 = vector.load %arg5[%c0_21, %c0_22, %c1] : memref<1x182x2xf32, #tpu.memory_space<vmem>>, vector<1x182x1xf32>
    tpu.vector_store %arg5[%c0_21, %c0_22, %c1], %40 {strides = array<i32>} : memref<1x182x2xf32, #tpu.memory_space<vmem>>, vector<1x182x1xf32>,
    return
  }
  func.func @transform_0(%arg0: i32) -> (i32, i32, i32) {
    %c0_i32 = arith.constant 0 : i32
    %c0_i32_0 = arith.constant 0 : i32
    %c0_i32_1 = arith.constant 0 : i32
    return %arg0, %c0_i32, %c0_i32_0 : i32, i32, i32
  }
  func.func @transform_1(%arg0: i32) -> (i32, i32) {
    %c0_i32 = arith.constant 0 : i32
    %c0_i32_0 = arith.constant 0 : i32
    %c0_i32_1 = arith.constant 0 : i32
    return %c0_i32, %c0_i32_0 : i32, i32
  }
  func.func @transform_2(%arg0: i32) -> (i32, i32) {
    %c0_i32 = arith.constant 0 : i32
    %c0_i32_0 = arith.constant 0 : i32
    %c0_i32_1 = arith.constant 0 : i32
    return %c0_i32, %c0_i32_0 : i32, i32
  }
  func.func @transform_3(%arg0: i32) -> (i32, i32, i32) {
    %c0_i32 = arith.constant 0 : i32
    %c0_i32_0 = arith.constant 0 : i32
    %c0_i32_1 = arith.constant 0 : i32
    return %arg0, %c0_i32, %c0_i32_0 : i32, i32, i32
  }
  func.func @transform_4(%arg0: i32) -> (i32, i32, i32) {
    %c0_i32 = arith.constant 0 : i32
    %c0_i32_0 = arith.constant 0 : i32
    %c0_i32_1 = arith.constant 0 : i32
    return %arg0, %c0_i32, %c0_i32_0 : i32, i32, i32
  }
}

module attributes {stable_mosaic.version = 11 : i64} {
  func.func @_spatial_gate_kernel(%arg0: i32, %arg1: memref<1x182x32xf32, #tpu.memory_space<vmem>>, %arg2: memref<1x182x98xf32, #tpu.memory_space<vmem>>, %arg3: memref<1x1x98xf32, #tpu.memory_space<vmem>>, %arg4: memref<1x182x32xf32, #tpu.memory_space<vmem>>) attributes {dimension_semantics = [#tpu.dimension_semantics<parallel>], iteration_bounds = array<i64: 2>, scalar_prefetch = 0 : i64, scratch_operands = 0 : i64, tpu.core_type = #tpu.core_type<tc>, window_params = [{transform_indices = @transform_0, window_bounds = array<i64: 1, 182, 32>}, {transform_indices = @transform_1, window_bounds = array<i64: 1, 182, 98>}, {pipeline_mode = #tpu.pipeline_mode<synchronous>, transform_indices = @transform_2, window_bounds = array<i64: 1, 1, 98>}, {transform_indices = @transform_3, window_bounds = array<i64: 1, 182, 32>}]} {
    %c0 = arith.constant 0 : index
    %c0_0 = arith.constant 0 : index
    %c0_1 = arith.constant 0 : index
    %0 = vector.load %arg2[%c0, %c0_0, %c0_1] : memref<1x182x98xf32, #tpu.memory_space<vmem>>, vector<1x182x98xf32>
    %c0_2 = arith.constant 0 : index
    %c0_3 = arith.constant 0 : index
    %c0_4 = arith.constant 0 : index
    %1 = vector.load %arg3[%c0_2, %c0_3, %c0_4] : memref<1x1x98xf32, #tpu.memory_space<vmem>>, vector<1x1x98xf32>
    %2 = vector.broadcast %1 : vector<1x1x98xf32> to vector<1x182x98xf32>
    %3 = arith.mulf %0, %2 : vector<1x182x98xf32>
    %cst = arith.constant dense<0.000000e+00> : vector<1x182xf32>
    %4 = vector.multi_reduction <add>, %3, %cst [2] : vector<1x182x98xf32> to vector<1x182xf32>
    %5 = vector.shape_cast %4 : vector<1x182xf32> to vector<1x182x1xf32>
    %c0_5 = arith.constant 0 : index
    %c0_6 = arith.constant 0 : index
    %c0_7 = arith.constant 0 : index
    %6 = vector.load %arg1[%c0_5, %c0_6, %c0_7] : memref<1x182x32xf32, #tpu.memory_space<vmem>>, vector<1x182x32xf32>
    %7 = arith.negf %5 : vector<1x182x1xf32>
    %8 = math.exp %7 : vector<1x182x1xf32>
    %cst_8 = arith.constant 1.000000e+00 : f32
    %9 = vector.broadcast %cst_8 : f32 to vector<1x182x1xf32>
    %10 = arith.addf %9, %8 : vector<1x182x1xf32>
    %11 = arith.divf %9, %10 : vector<1x182x1xf32>
    %12 = vector.broadcast %11 : vector<1x182x1xf32> to vector<1x182x32xf32>
    %13 = arith.mulf %6, %12 : vector<1x182x32xf32>
    %cst_9 = arith.constant 0.000000e+00 : f32
    %14 = vector.broadcast %cst_9 : f32 to vector<1x182x32xf32>
    %15 = arith.maximumf %13, %14 : vector<1x182x32xf32>
    %c0_10 = arith.constant 0 : index
    %c0_11 = arith.constant 0 : index
    %c0_12 = arith.constant 0 : index
    %16 = vector.load %arg4[%c0_10, %c0_11, %c0_12] : memref<1x182x32xf32, #tpu.memory_space<vmem>>, vector<1x182x32xf32>
    tpu.vector_store %arg4[%c0_10, %c0_11, %c0_12], %15 {strides = array<i32>} : memref<1x182x32xf32, #tpu.memory_space<vmem>>, vector<1x182x32xf32>,
    return
  }
  func.func @transform_0(%arg0: i32) -> (i32, i32, i32) {
    %c0_i32 = arith.constant 0 : i32
    %c0_i32_0 = arith.constant 0 : i32
    %c0_i32_1 = arith.constant 0 : i32
    return %arg0, %c0_i32, %c0_i32_0 : i32, i32, i32
  }
  func.func @transform_1(%arg0: i32) -> (i32, i32, i32) {
    %c0_i32 = arith.constant 0 : i32
    %c0_i32_0 = arith.constant 0 : i32
    %c0_i32_1 = arith.constant 0 : i32
    return %arg0, %c0_i32, %c0_i32_0 : i32, i32, i32
  }
  func.func @transform_2(%arg0: i32) -> (i32, i32, i32) {
    %c0_i32 = arith.constant 0 : i32
    %c0_i32_0 = arith.constant 0 : i32
    %c0_i32_1 = arith.constant 0 : i32
    %c0_i32_2 = arith.constant 0 : i32
    return %c0_i32, %c0_i32_0, %c0_i32_1 : i32, i32, i32
  }
  func.func @transform_3(%arg0: i32) -> (i32, i32, i32) {
    %c0_i32 = arith.constant 0 : i32
    %c0_i32_0 = arith.constant 0 : i32
    %c0_i32_1 = arith.constant 0 : i32
    return %arg0, %c0_i32, %c0_i32_0 : i32, i32, i32
  }
}

module attributes {stable_mosaic.version = 11 : i64} {
  func.func @_matmul_kernel(%arg0: i32, %arg1: i32, %arg2: i32, %arg3: memref<24x512xbf16, #tpu.memory_space<vmem>>, %arg4: memref<512x128xbf16, #tpu.memory_space<vmem>>, %arg5: memref<24x128xf32, #tpu.memory_space<vmem>>, %arg6: memref<24x128xf32, #tpu.memory_space<vmem>>) attributes {dimension_semantics = [#tpu.dimension_semantics<parallel>, #tpu.dimension_semantics<parallel>, #tpu.dimension_semantics<arbitrary>], iteration_bounds = array<i64: 1, 1, 4>, scalar_prefetch = 0 : i64, scratch_operands = 1 : i64, tpu.core_type = #tpu.core_type<tc>, window_params = [{transform_indices = @transform_0, window_bounds = array<i64: 24, 512>}, {transform_indices = @transform_1, window_bounds = array<i64: 512, 128>}, {transform_indices = @transform_2, window_bounds = array<i64: 24, 128>}]} {
    %c0_i32 = arith.constant 0 : i32
    %0 = arith.cmpi eq, %arg2, %c0_i32 : i32
    %1 = arith.extui %0 : i1 to i32
    %c0_i32_0 = arith.constant 0 : i32
    %2 = arith.cmpi ne, %1, %c0_i32_0 : i32
    scf.if %2 {
      %cst_9 = arith.constant 0.000000e+00 : f32
      %12 = vector.broadcast %cst_9 : f32 to vector<24x128xf32>
      %c0_10 = arith.constant 0 : index
      %c0_11 = arith.constant 0 : index
      %13 = vector.load %arg6[%c0_10, %c0_11] : memref<24x128xf32, #tpu.memory_space<vmem>>, vector<24x128xf32>
      tpu.vector_store %arg6[%c0_10, %c0_11], %12 {strides = array<i32>} : memref<24x128xf32, #tpu.memory_space<vmem>>, vector<24x128xf32>,
    } else {
    }
    %c0 = arith.constant 0 : index
    %c0_1 = arith.constant 0 : index
    %3 = vector.load %arg6[%c0, %c0_1] : memref<24x128xf32, #tpu.memory_space<vmem>>, vector<24x128xf32>
    %c0_2 = arith.constant 0 : index
    %c0_3 = arith.constant 0 : index
    %4 = vector.load %arg3[%c0_2, %c0_3] : memref<24x512xbf16, #tpu.memory_space<vmem>>, vector<24x512xbf16>
    %c0_4 = arith.constant 0 : index
    %c0_5 = arith.constant 0 : index
    %5 = vector.load %arg4[%c0_4, %c0_5] : memref<512x128xbf16, #tpu.memory_space<vmem>>, vector<512x128xbf16>
    %cst = arith.constant dense<0.000000e+00> : vector<24x128xf32>
    %6 = tpu.matmul %4, %5, %cst {dimension_numbers = #tpu.dot_dimension_numbers<[1], [0], [0], [1], [0, 0, 1, 1], [], []>} : vector<24x512xbf16>, vector<512x128xbf16>, vector<24x128xf32> -> vector<24x128xf32>
    %7 = arith.addf %3, %6 : vector<24x128xf32>
    %c0_6 = arith.constant 0 : index
    %c0_7 = arith.constant 0 : index
    %8 = vector.load %arg6[%c0_6, %c0_7] : memref<24x128xf32, #tpu.memory_space<vmem>>, vector<24x128xf32>
    tpu.vector_store %arg6[%c0_6, %c0_7], %7 {strides = array<i32>} : memref<24x128xf32, #tpu.memory_space<vmem>>, vector<24x128xf32>,
    %c3_i32 = arith.constant 3 : i32
    %9 = arith.cmpi eq, %arg2, %c3_i32 : i32
    %10 = arith.extui %9 : i1 to i32
    %c0_i32_8 = arith.constant 0 : i32
    %11 = arith.cmpi ne, %10, %c0_i32_8 : i32
    scf.if %11 {
      %c0_9 = arith.constant 0 : index
      %c0_10 = arith.constant 0 : index
      %12 = vector.load %arg6[%c0_9, %c0_10] : memref<24x128xf32, #tpu.memory_space<vmem>>, vector<24x128xf32>
      %cst_11 = arith.constant 0.000000e+00 : f32
      %13 = vector.broadcast %cst_11 : f32 to vector<24x128xf32>
      %14 = arith.maximumf %12, %13 : vector<24x128xf32>
      %c0_12 = arith.constant 0 : index
      %c0_13 = arith.constant 0 : index
      %15 = vector.load %arg5[%c0_12, %c0_13] : memref<24x128xf32, #tpu.memory_space<vmem>>, vector<24x128xf32>
      tpu.vector_store %arg5[%c0_12, %c0_13], %14 {strides = array<i32>} : memref<24x128xf32, #tpu.memory_space<vmem>>, vector<24x128xf32>,
    } else {
    }
    return
  }
  func.func @transform_0(%arg0: i32, %arg1: i32, %arg2: i32) -> (i32, i32) {
    %c0_i32 = arith.constant 0 : i32
    return %arg0, %arg2 : i32, i32
  }
  func.func @transform_1(%arg0: i32, %arg1: i32, %arg2: i32) -> (i32, i32) {
    %c0_i32 = arith.constant 0 : i32
    return %arg2, %arg1 : i32, i32
  }
  func.func @transform_2(%arg0: i32, %arg1: i32, %arg2: i32) -> (i32, i32) {
    %c0_i32 = arith.constant 0 : i32
    return %arg0, %arg1 : i32, i32
  }
}

module attributes {stable_mosaic.version = 11 : i64} {
  func.func @_capsule_kernel(%arg0: i32, %arg1: memref<2x16x128xf32, #tpu.memory_space<vmem>>, %arg2: memref<1x16x32x128xf32, #tpu.memory_space<vmem>>, %arg3: memref<1x2x32xf32, #tpu.memory_space<vmem>>) attributes {dimension_semantics = [#tpu.dimension_semantics<parallel>], iteration_bounds = array<i64: 2>, scalar_prefetch = 0 : i64, scratch_operands = 0 : i64, tpu.core_type = #tpu.core_type<tc>, window_params = [{pipeline_mode = #tpu.pipeline_mode<synchronous>, transform_indices = @transform_0, window_bounds = array<i64: 2, 16, 128>}, {transform_indices = @transform_1, window_bounds = array<i64: 1, 16, 32, 128>}, {transform_indices = @transform_2, window_bounds = array<i64: 1, 2, 32>}]} {
    %c0 = arith.constant 0 : index
    %c0_0 = arith.constant 0 : index
    %c0_1 = arith.constant 0 : index
    %0 = vector.load %arg1[%c0, %c0_0, %c0_1] : memref<2x16x128xf32, #tpu.memory_space<vmem>>, vector<2x16x128xf32>
    %1 = arith.mulf %0, %0 : vector<2x16x128xf32>
    %cst = arith.constant dense<0.000000e+00> : vector<2x128xf32>
    %2 = vector.multi_reduction <add>, %1, %cst [1] : vector<2x16x128xf32> to vector<2x128xf32>
    %3 = vector.shape_cast %2 : vector<2x128xf32> to vector<2x1x128xf32>
    %cst_2 = arith.constant 9.99999993E-9 : f32
    %4 = vector.broadcast %cst_2 : f32 to vector<2x1x128xf32>
    %5 = arith.addf %3, %4 : vector<2x1x128xf32>
    %6 = math.sqrt %5 : vector<2x1x128xf32>
    %cst_3 = arith.constant 1.000000e+00 : f32
    %7 = vector.broadcast %cst_3 : f32 to vector<2x1x128xf32>
    %8 = arith.addf %7, %5 : vector<2x1x128xf32>
    %9 = arith.divf %6, %8 : vector<2x1x128xf32>
    %10 = vector.broadcast %9 : vector<2x1x128xf32> to vector<2x16x128xf32>
    %11 = arith.mulf %0, %10 : vector<2x16x128xf32>
    %cst_4 = arith.constant 0.000000e+00 : f32
    %12 = vector.broadcast %cst_4 : f32 to vector<2x32x128xf32>
    %13 = vector.extract_strided_slice %11 {offsets = [0, 0, 0], sizes = [2, 1, 128], strides = [1, 1, 1]} : vector<2x16x128xf32> to vector<2x1x128xf32>
    %c0_5 = arith.constant 0 : index
    %c0_6 = arith.constant 0 : index
    %c0_7 = arith.constant 0 : index
    %c0_8 = arith.constant 0 : index
    %14 = vector.load %arg2[%c0_5, %c0_6, %c0_7, %c0_8] : memref<1x16x32x128xf32, #tpu.memory_space<vmem>>, vector<1x1x32x128xf32>
    %15 = vector.shape_cast %14 : vector<1x1x32x128xf32> to vector<32x128xf32>
    %16 = vector.shape_cast %15 : vector<32x128xf32> to vector<1x32x128xf32>
    %17 = vector.broadcast %13 : vector<2x1x128xf32> to vector<2x32x128xf32>
    %18 = vector.broadcast %16 : vector<1x32x128xf32> to vector<2x32x128xf32>
    %19 = arith.mulf %17, %18 : vector<2x32x128xf32>
    %20 = arith.addf %12, %19 : vector<2x32x128xf32>
    %21 = vector.extract_strided_slice %11 {offsets = [0, 1, 0], sizes = [2, 1, 128], strides = [1, 1, 1]} : vector<2x16x128xf32> to vector<2x1x128xf32>
    %c0_9 = arith.constant 0 : index
    %c1 = arith.constant 1 : index
    %c0_10 = arith.constant 0 : index
    %c0_11 = arith.constant 0 : index
    %22 = vector.load %arg2[%c0_9, %c1, %c0_10, %c0_11] : memref<1x16x32x128xf32, #tpu.memory_space<vmem>>, vector<1x1x32x128xf32>
    %23 = vector.shape_cast %22 : vector<1x1x32x128xf32> to vector<32x128xf32>
    %24 = vector.shape_cast %23 : vector<32x128xf32> to vector<1x32x128xf32>
    %25 = vector.broadcast %21 : vector<2x1x128xf32> to vector<2x32x128xf32>
    %26 = vector.broadcast %24 : vector<1x32x128xf32> to vector<2x32x128xf32>
    %27 = arith.mulf %25, %26 : vector<2x32x128xf32>
    %28 = arith.addf %20, %27 : vector<2x32x128xf32>
    %29 = vector.extract_strided_slice %11 {offsets = [0, 2, 0], sizes = [2, 1, 128], strides = [1, 1, 1]} : vector<2x16x128xf32> to vector<2x1x128xf32>
    %c0_12 = arith.constant 0 : index
    %c2 = arith.constant 2 : index
    %c0_13 = arith.constant 0 : index
    %c0_14 = arith.constant 0 : index
    %30 = vector.load %arg2[%c0_12, %c2, %c0_13, %c0_14] : memref<1x16x32x128xf32, #tpu.memory_space<vmem>>, vector<1x1x32x128xf32>
    %31 = vector.shape_cast %30 : vector<1x1x32x128xf32> to vector<32x128xf32>
    %32 = vector.shape_cast %31 : vector<32x128xf32> to vector<1x32x128xf32>
    %33 = vector.broadcast %29 : vector<2x1x128xf32> to vector<2x32x128xf32>
    %34 = vector.broadcast %32 : vector<1x32x128xf32> to vector<2x32x128xf32>
    %35 = arith.mulf %33, %34 : vector<2x32x128xf32>
    %36 = arith.addf %28, %35 : vector<2x32x128xf32>
    %37 = vector.extract_strided_slice %11 {offsets = [0, 3, 0], sizes = [2, 1, 128], strides = [1, 1, 1]} : vector<2x16x128xf32> to vector<2x1x128xf32>
    %c0_15 = arith.constant 0 : index
    %c3 = arith.constant 3 : index
    %c0_16 = arith.constant 0 : index
    %c0_17 = arith.constant 0 : index
    %38 = vector.load %arg2[%c0_15, %c3, %c0_16, %c0_17] : memref<1x16x32x128xf32, #tpu.memory_space<vmem>>, vector<1x1x32x128xf32>
    %39 = vector.shape_cast %38 : vector<1x1x32x128xf32> to vector<32x128xf32>
    %40 = vector.shape_cast %39 : vector<32x128xf32> to vector<1x32x128xf32>
    %41 = vector.broadcast %37 : vector<2x1x128xf32> to vector<2x32x128xf32>
    %42 = vector.broadcast %40 : vector<1x32x128xf32> to vector<2x32x128xf32>
    %43 = arith.mulf %41, %42 : vector<2x32x128xf32>
    %44 = arith.addf %36, %43 : vector<2x32x128xf32>
    %45 = vector.extract_strided_slice %11 {offsets = [0, 4, 0], sizes = [2, 1, 128], strides = [1, 1, 1]} : vector<2x16x128xf32> to vector<2x1x128xf32>
    %c0_18 = arith.constant 0 : index
    %c4 = arith.constant 4 : index
    %c0_19 = arith.constant 0 : index
    %c0_20 = arith.constant 0 : index
    %46 = vector.load %arg2[%c0_18, %c4, %c0_19, %c0_20] : memref<1x16x32x128xf32, #tpu.memory_space<vmem>>, vector<1x1x32x128xf32>
    %47 = vector.shape_cast %46 : vector<1x1x32x128xf32> to vector<32x128xf32>
    %48 = vector.shape_cast %47 : vector<32x128xf32> to vector<1x32x128xf32>
    %49 = vector.broadcast %45 : vector<2x1x128xf32> to vector<2x32x128xf32>
    %50 = vector.broadcast %48 : vector<1x32x128xf32> to vector<2x32x128xf32>
    %51 = arith.mulf %49, %50 : vector<2x32x128xf32>
    %52 = arith.addf %44, %51 : vector<2x32x128xf32>
    %53 = vector.extract_strided_slice %11 {offsets = [0, 5, 0], sizes = [2, 1, 128], strides = [1, 1, 1]} : vector<2x16x128xf32> to vector<2x1x128xf32>
    %c0_21 = arith.constant 0 : index
    %c5 = arith.constant 5 : index
    %c0_22 = arith.constant 0 : index
    %c0_23 = arith.constant 0 : index
    %54 = vector.load %arg2[%c0_21, %c5, %c0_22, %c0_23] : memref<1x16x32x128xf32, #tpu.memory_space<vmem>>, vector<1x1x32x128xf32>
    %55 = vector.shape_cast %54 : vector<1x1x32x128xf32> to vector<32x128xf32>
    %56 = vector.shape_cast %55 : vector<32x128xf32> to vector<1x32x128xf32>
    %57 = vector.broadcast %53 : vector<2x1x128xf32> to vector<2x32x128xf32>
    %58 = vector.broadcast %56 : vector<1x32x128xf32> to vector<2x32x128xf32>
    %59 = arith.mulf %57, %58 : vector<2x32x128xf32>
    %60 = arith.addf %52, %59 : vector<2x32x128xf32>
    %61 = vector.extract_strided_slice %11 {offsets = [0, 6, 0], sizes = [2, 1, 128], strides = [1, 1, 1]} : vector<2x16x128xf32> to vector<2x1x128xf32>
    %c0_24 = arith.constant 0 : index
    %c6 = arith.constant 6 : index
    %c0_25 = arith.constant 0 : index
    %c0_26 = arith.constant 0 : index
    %62 = vector.load %arg2[%c0_24, %c6, %c0_25, %c0_26] : memref<1x16x32x128xf32, #tpu.memory_space<vmem>>, vector<1x1x32x128xf32>
    %63 = vector.shape_cast %62 : vector<1x1x32x128xf32> to vector<32x128xf32>
    %64 = vector.shape_cast %63 : vector<32x128xf32> to vector<1x32x128xf32>
    %65 = vector.broadcast %61 : vector<2x1x128xf32> to vector<2x32x128xf32>
    %66 = vector.broadcast %64 : vector<1x32x128xf32> to vector<2x32x128xf32>
    %67 = arith.mulf %65, %66 : vector<2x32x128xf32>
    %68 = arith.addf %60, %67 : vector<2x32x128xf32>
    %69 = vector.extract_strided_slice %11 {offsets = [0, 7, 0], sizes = [2, 1, 128], strides = [1, 1, 1]} : vector<2x16x128xf32> to vector<2x1x128xf32>
    %c0_27 = arith.constant 0 : index
    %c7 = arith.constant 7 : index
    %c0_28 = arith.constant 0 : index
    %c0_29 = arith.constant 0 : index
    %70 = vector.load %arg2[%c0_27, %c7, %c0_28, %c0_29] : memref<1x16x32x128xf32, #tpu.memory_space<vmem>>, vector<1x1x32x128xf32>
    %71 = vector.shape_cast %70 : vector<1x1x32x128xf32> to vector<32x128xf32>
    %72 = vector.shape_cast %71 : vector<32x128xf32> to vector<1x32x128xf32>
    %73 = vector.broadcast %69 : vector<2x1x128xf32> to vector<2x32x128xf32>
    %74 = vector.broadcast %72 : vector<1x32x128xf32> to vector<2x32x128xf32>
    %75 = arith.mulf %73, %74 : vector<2x32x128xf32>
    %76 = arith.addf %68, %75 : vector<2x32x128xf32>
    %77 = vector.extract_strided_slice %11 {offsets = [0, 8, 0], sizes = [2, 1, 128], strides = [1, 1, 1]} : vector<2x16x128xf32> to vector<2x1x128xf32>
    %c0_30 = arith.constant 0 : index
    %c8 = arith.constant 8 : index
    %c0_31 = arith.constant 0 : index
    %c0_32 = arith.constant 0 : index
    %78 = vector.load %arg2[%c0_30, %c8, %c0_31, %c0_32] : memref<1x16x32x128xf32, #tpu.memory_space<vmem>>, vector<1x1x32x128xf32>
    %79 = vector.shape_cast %78 : vector<1x1x32x128xf32> to vector<32x128xf32>
    %80 = vector.shape_cast %79 : vector<32x128xf32> to vector<1x32x128xf32>
    %81 = vector.broadcast %77 : vector<2x1x128xf32> to vector<2x32x128xf32>
    %82 = vector.broadcast %80 : vector<1x32x128xf32> to vector<2x32x128xf32>
    %83 = arith.mulf %81, %82 : vector<2x32x128xf32>
    %84 = arith.addf %76, %83 : vector<2x32x128xf32>
    %85 = vector.extract_strided_slice %11 {offsets = [0, 9, 0], sizes = [2, 1, 128], strides = [1, 1, 1]} : vector<2x16x128xf32> to vector<2x1x128xf32>
    %c0_33 = arith.constant 0 : index
    %c9 = arith.constant 9 : index
    %c0_34 = arith.constant 0 : index
    %c0_35 = arith.constant 0 : index
    %86 = vector.load %arg2[%c0_33, %c9, %c0_34, %c0_35] : memref<1x16x32x128xf32, #tpu.memory_space<vmem>>, vector<1x1x32x128xf32>
    %87 = vector.shape_cast %86 : vector<1x1x32x128xf32> to vector<32x128xf32>
    %88 = vector.shape_cast %87 : vector<32x128xf32> to vector<1x32x128xf32>
    %89 = vector.broadcast %85 : vector<2x1x128xf32> to vector<2x32x128xf32>
    %90 = vector.broadcast %88 : vector<1x32x128xf32> to vector<2x32x128xf32>
    %91 = arith.mulf %89, %90 : vector<2x32x128xf32>
    %92 = arith.addf %84, %91 : vector<2x32x128xf32>
    %93 = vector.extract_strided_slice %11 {offsets = [0, 10, 0], sizes = [2, 1, 128], strides = [1, 1, 1]} : vector<2x16x128xf32> to vector<2x1x128xf32>
    %c0_36 = arith.constant 0 : index
    %c10 = arith.constant 10 : index
    %c0_37 = arith.constant 0 : index
    %c0_38 = arith.constant 0 : index
    %94 = vector.load %arg2[%c0_36, %c10, %c0_37, %c0_38] : memref<1x16x32x128xf32, #tpu.memory_space<vmem>>, vector<1x1x32x128xf32>
    %95 = vector.shape_cast %94 : vector<1x1x32x128xf32> to vector<32x128xf32>
    %96 = vector.shape_cast %95 : vector<32x128xf32> to vector<1x32x128xf32>
    %97 = vector.broadcast %93 : vector<2x1x128xf32> to vector<2x32x128xf32>
    %98 = vector.broadcast %96 : vector<1x32x128xf32> to vector<2x32x128xf32>
    %99 = arith.mulf %97, %98 : vector<2x32x128xf32>
    %100 = arith.addf %92, %99 : vector<2x32x128xf32>
    %101 = vector.extract_strided_slice %11 {offsets = [0, 11, 0], sizes = [2, 1, 128], strides = [1, 1, 1]} : vector<2x16x128xf32> to vector<2x1x128xf32>
    %c0_39 = arith.constant 0 : index
    %c11 = arith.constant 11 : index
    %c0_40 = arith.constant 0 : index
    %c0_41 = arith.constant 0 : index
    %102 = vector.load %arg2[%c0_39, %c11, %c0_40, %c0_41] : memref<1x16x32x128xf32, #tpu.memory_space<vmem>>, vector<1x1x32x128xf32>
    %103 = vector.shape_cast %102 : vector<1x1x32x128xf32> to vector<32x128xf32>
    %104 = vector.shape_cast %103 : vector<32x128xf32> to vector<1x32x128xf32>
    %105 = vector.broadcast %101 : vector<2x1x128xf32> to vector<2x32x128xf32>
    %106 = vector.broadcast %104 : vector<1x32x128xf32> to vector<2x32x128xf32>
    %107 = arith.mulf %105, %106 : vector<2x32x128xf32>
    %108 = arith.addf %100, %107 : vector<2x32x128xf32>
    %109 = vector.extract_strided_slice %11 {offsets = [0, 12, 0], sizes = [2, 1, 128], strides = [1, 1, 1]} : vector<2x16x128xf32> to vector<2x1x128xf32>
    %c0_42 = arith.constant 0 : index
    %c12 = arith.constant 12 : index
    %c0_43 = arith.constant 0 : index
    %c0_44 = arith.constant 0 : index
    %110 = vector.load %arg2[%c0_42, %c12, %c0_43, %c0_44] : memref<1x16x32x128xf32, #tpu.memory_space<vmem>>, vector<1x1x32x128xf32>
    %111 = vector.shape_cast %110 : vector<1x1x32x128xf32> to vector<32x128xf32>
    %112 = vector.shape_cast %111 : vector<32x128xf32> to vector<1x32x128xf32>
    %113 = vector.broadcast %109 : vector<2x1x128xf32> to vector<2x32x128xf32>
    %114 = vector.broadcast %112 : vector<1x32x128xf32> to vector<2x32x128xf32>
    %115 = arith.mulf %113, %114 : vector<2x32x128xf32>
    %116 = arith.addf %108, %115 : vector<2x32x128xf32>
    %117 = vector.extract_strided_slice %11 {offsets = [0, 13, 0], sizes = [2, 1, 128], strides = [1, 1, 1]} : vector<2x16x128xf32> to vector<2x1x128xf32>
    %c0_45 = arith.constant 0 : index
    %c13 = arith.constant 13 : index
    %c0_46 = arith.constant 0 : index
    %c0_47 = arith.constant 0 : index
    %118 = vector.load %arg2[%c0_45, %c13, %c0_46, %c0_47] : memref<1x16x32x128xf32, #tpu.memory_space<vmem>>, vector<1x1x32x128xf32>
    %119 = vector.shape_cast %118 : vector<1x1x32x128xf32> to vector<32x128xf32>
    %120 = vector.shape_cast %119 : vector<32x128xf32> to vector<1x32x128xf32>
    %121 = vector.broadcast %117 : vector<2x1x128xf32> to vector<2x32x128xf32>
    %122 = vector.broadcast %120 : vector<1x32x128xf32> to vector<2x32x128xf32>
    %123 = arith.mulf %121, %122 : vector<2x32x128xf32>
    %124 = arith.addf %116, %123 : vector<2x32x128xf32>
    %125 = vector.extract_strided_slice %11 {offsets = [0, 14, 0], sizes = [2, 1, 128], strides = [1, 1, 1]} : vector<2x16x128xf32> to vector<2x1x128xf32>
    %c0_48 = arith.constant 0 : index
    %c14 = arith.constant 14 : index
    %c0_49 = arith.constant 0 : index
    %c0_50 = arith.constant 0 : index
    %126 = vector.load %arg2[%c0_48, %c14, %c0_49, %c0_50] : memref<1x16x32x128xf32, #tpu.memory_space<vmem>>, vector<1x1x32x128xf32>
    %127 = vector.shape_cast %126 : vector<1x1x32x128xf32> to vector<32x128xf32>
    %128 = vector.shape_cast %127 : vector<32x128xf32> to vector<1x32x128xf32>
    %129 = vector.broadcast %125 : vector<2x1x128xf32> to vector<2x32x128xf32>
    %130 = vector.broadcast %128 : vector<1x32x128xf32> to vector<2x32x128xf32>
    %131 = arith.mulf %129, %130 : vector<2x32x128xf32>
    %132 = arith.addf %124, %131 : vector<2x32x128xf32>
    %133 = vector.extract_strided_slice %11 {offsets = [0, 15, 0], sizes = [2, 1, 128], strides = [1, 1, 1]} : vector<2x16x128xf32> to vector<2x1x128xf32>
    %c0_51 = arith.constant 0 : index
    %c15 = arith.constant 15 : index
    %c0_52 = arith.constant 0 : index
    %c0_53 = arith.constant 0 : index
    %134 = vector.load %arg2[%c0_51, %c15, %c0_52, %c0_53] : memref<1x16x32x128xf32, #tpu.memory_space<vmem>>, vector<1x1x32x128xf32>
    %135 = vector.shape_cast %134 : vector<1x1x32x128xf32> to vector<32x128xf32>
    %136 = vector.shape_cast %135 : vector<32x128xf32> to vector<1x32x128xf32>
    %137 = vector.broadcast %133 : vector<2x1x128xf32> to vector<2x32x128xf32>
    %138 = vector.broadcast %136 : vector<1x32x128xf32> to vector<2x32x128xf32>
    %139 = arith.mulf %137, %138 : vector<2x32x128xf32>
    %140 = arith.addf %132, %139 : vector<2x32x128xf32>
    %141 = tpu.iota {dimensions = array<i32: 1>} : vector<1x128xi32>
    %c36_i32 = arith.constant 36 : i32
    %142 = vector.broadcast %c36_i32 : i32 to vector<1x128xi32>
    %143 = arith.cmpi slt, %141, %142 : vector<1x128xi32>
    %144 = arith.extui %143 : vector<1x128xi1> to vector<1x128xi32>
    %145 = arith.sitofp %144 : vector<1x128xi32> to vector<1x128xf32>
    %cst_54 = arith.constant 0.000000e+00 : f32
    %146 = vector.broadcast %cst_54 : f32 to vector<2x128xf32>
    %cst_55 = arith.constant -1.000000e+30 : f32
    %147 = vector.shape_cast %143 : vector<1x128xi1> to vector<1x128xi1>
    %148 = vector.broadcast %147 : vector<1x128xi1> to vector<2x128xi1>
    %149 = vector.broadcast %cst_55 : f32 to vector<2x128xf32>
    %150 = arith.select %148, %146, %149 : vector<2x128xi1>, vector<2x128xf32>
    %cst_56 = arith.constant dense<0xFF800000> : vector<2xf32>
    %151 = vector.multi_reduction <maximumf>, %150, %cst_56 [1] : vector<2x128xf32> to vector<2xf32>
    %152 = vector.shape_cast %151 : vector<2xf32> to vector<2x1xf32>
    %153 = vector.broadcast %152 : vector<2x1xf32> to vector<2x128xf32>
    %154 = arith.subf %146, %153 : vector<2x128xf32>
    %155 = math.exp %154 : vector<2x128xf32>
    %156 = vector.broadcast %145 : vector<1x128xf32> to vector<2x128xf32>
    %157 = arith.mulf %155, %156 : vector<2x128xf32>
    %cst_57 = arith.constant dense<0.000000e+00> : vector<2xf32>
    %158 = vector.multi_reduction <add>, %157, %cst_57 [1] : vector<2x128xf32> to vector<2xf32>
    %159 = vector.shape_cast %158 : vector<2xf32> to vector<2x1xf32>
    %160 = vector.broadcast %159 : vector<2x1xf32> to vector<2x128xf32>
    %161 = arith.divf %157, %160 : vector<2x128xf32>
    %162 = vector.shape_cast %161 : vector<2x128xf32> to vector<2x1x128xf32>
    %163 = vector.broadcast %162 : vector<2x1x128xf32> to vector<2x32x128xf32>
    %164 = arith.mulf %163, %140 : vector<2x32x128xf32>
    %cst_58 = arith.constant dense<0.000000e+00> : vector<2x32xf32>
    %165 = vector.multi_reduction <add>, %164, %cst_58 [2] : vector<2x32x128xf32> to vector<2x32xf32>
    %166 = arith.mulf %165, %165 : vector<2x32xf32>
    %cst_59 = arith.constant dense<0.000000e+00> : vector<2xf32>
    %167 = vector.multi_reduction <add>, %166, %cst_59 [1] : vector<2x32xf32> to vector<2xf32>
    %168 = vector.shape_cast %167 : vector<2xf32> to vector<2x1xf32>
    %cst_60 = arith.constant 9.99999993E-9 : f32
    %169 = vector.broadcast %cst_60 : f32 to vector<2x1xf32>
    %170 = arith.addf %168, %169 : vector<2x1xf32>
    %171 = math.sqrt %170 : vector<2x1xf32>
    %cst_61 = arith.constant 1.000000e+00 : f32
    %172 = vector.broadcast %cst_61 : f32 to vector<2x1xf32>
    %173 = arith.addf %172, %170 : vector<2x1xf32>
    %174 = arith.divf %171, %173 : vector<2x1xf32>
    %175 = vector.broadcast %174 : vector<2x1xf32> to vector<2x32xf32>
    %176 = arith.mulf %165, %175 : vector<2x32xf32>
    %177 = vector.shape_cast %176 : vector<2x32xf32> to vector<2x32x1xf32>
    %178 = vector.broadcast %177 : vector<2x32x1xf32> to vector<2x32x128xf32>
    %179 = arith.mulf %140, %178 : vector<2x32x128xf32>
    %cst_62 = arith.constant dense<0.000000e+00> : vector<2x128xf32>
    %180 = vector.multi_reduction <add>, %179, %cst_62 [1] : vector<2x32x128xf32> to vector<2x128xf32>
    %181 = arith.addf %146, %180 : vector<2x128xf32>
    %cst_63 = arith.constant -1.000000e+30 : f32
    %182 = vector.shape_cast %143 : vector<1x128xi1> to vector<1x128xi1>
    %183 = vector.broadcast %182 : vector<1x128xi1> to vector<2x128xi1>
    %184 = vector.broadcast %cst_63 : f32 to vector<2x128xf32>
    %185 = arith.select %183, %181, %184 : vector<2x128xi1>, vector<2x128xf32>
    %cst_64 = arith.constant dense<0xFF800000> : vector<2xf32>
    %186 = vector.multi_reduction <maximumf>, %185, %cst_64 [1] : vector<2x128xf32> to vector<2xf32>
    %187 = vector.shape_cast %186 : vector<2xf32> to vector<2x1xf32>
    %188 = vector.broadcast %187 : vector<2x1xf32> to vector<2x128xf32>
    %189 = arith.subf %181, %188 : vector<2x128xf32>
    %190 = math.exp %189 : vector<2x128xf32>
    %191 = vector.broadcast %145 : vector<1x128xf32> to vector<2x128xf32>
    %192 = arith.mulf %190, %191 : vector<2x128xf32>
    %cst_65 = arith.constant dense<0.000000e+00> : vector<2xf32>
    %193 = vector.multi_reduction <add>, %192, %cst_65 [1] : vector<2x128xf32> to vector<2xf32>
    %194 = vector.shape_cast %193 : vector<2xf32> to vector<2x1xf32>
    %195 = vector.broadcast %194 : vector<2x1xf32> to vector<2x128xf32>
    %196 = arith.divf %192, %195 : vector<2x128xf32>
    %197 = vector.shape_cast %196 : vector<2x128xf32> to vector<2x1x128xf32>
    %198 = vector.broadcast %197 : vector<2x1x128xf32> to vector<2x32x128xf32>
    %199 = arith.mulf %198, %140 : vector<2x32x128xf32>
    %cst_66 = arith.constant dense<0.000000e+00> : vector<2x32xf32>
    %200 = vector.multi_reduction <add>, %199, %cst_66 [2] : vector<2x32x128xf32> to vector<2x32xf32>
    %201 = arith.mulf %200, %200 : vector<2x32xf32>
    %cst_67 = arith.constant dense<0.000000e+00> : vector<2xf32>
    %202 = vector.multi_reduction <add>, %201, %cst_67 [1] : vector<2x32xf32> to vector<2xf32>
    %203 = vector.shape_cast %202 : vector<2xf32> to vector<2x1xf32>
    %cst_68 = arith.constant 9.99999993E-9 : f32
    %204 = vector.broadcast %cst_68 : f32 to vector<2x1xf32>
    %205 = arith.addf %203, %204 : vector<2x1xf32>
    %206 = math.sqrt %205 : vector<2x1xf32>
    %cst_69 = arith.constant 1.000000e+00 : f32
    %207 = vector.broadcast %cst_69 : f32 to vector<2x1xf32>
    %208 = arith.addf %207, %205 : vector<2x1xf32>
    %209 = arith.divf %206, %208 : vector<2x1xf32>
    %210 = vector.broadcast %209 : vector<2x1xf32> to vector<2x32xf32>
    %211 = arith.mulf %200, %210 : vector<2x32xf32>
    %212 = vector.shape_cast %211 : vector<2x32xf32> to vector<2x32x1xf32>
    %213 = vector.broadcast %212 : vector<2x32x1xf32> to vector<2x32x128xf32>
    %214 = arith.mulf %140, %213 : vector<2x32x128xf32>
    %cst_70 = arith.constant dense<0.000000e+00> : vector<2x128xf32>
    %215 = vector.multi_reduction <add>, %214, %cst_70 [1] : vector<2x32x128xf32> to vector<2x128xf32>
    %216 = arith.addf %181, %215 : vector<2x128xf32>
    %cst_71 = arith.constant -1.000000e+30 : f32
    %217 = vector.shape_cast %143 : vector<1x128xi1> to vector<1x128xi1>
    %218 = vector.broadcast %217 : vector<1x128xi1> to vector<2x128xi1>
    %219 = vector.broadcast %cst_71 : f32 to vector<2x128xf32>
    %220 = arith.select %218, %216, %219 : vector<2x128xi1>, vector<2x128xf32>
    %cst_72 = arith.constant dense<0xFF800000> : vector<2xf32>
    %221 = vector.multi_reduction <maximumf>, %220, %cst_72 [1] : vector<2x128xf32> to vector<2xf32>
    %222 = vector.shape_cast %221 : vector<2xf32> to vector<2x1xf32>
    %223 = vector.broadcast %222 : vector<2x1xf32> to vector<2x128xf32>
    %224 = arith.subf %216, %223 : vector<2x128xf32>
    %225 = math.exp %224 : vector<2x128xf32>
    %226 = vector.broadcast %145 : vector<1x128xf32> to vector<2x128xf32>
    %227 = arith.mulf %225, %226 : vector<2x128xf32>
    %cst_73 = arith.constant dense<0.000000e+00> : vector<2xf32>
    %228 = vector.multi_reduction <add>, %227, %cst_73 [1] : vector<2x128xf32> to vector<2xf32>
    %229 = vector.shape_cast %228 : vector<2xf32> to vector<2x1xf32>
    %230 = vector.broadcast %229 : vector<2x1xf32> to vector<2x128xf32>
    %231 = arith.divf %227, %230 : vector<2x128xf32>
    %232 = vector.shape_cast %231 : vector<2x128xf32> to vector<2x1x128xf32>
    %233 = vector.broadcast %232 : vector<2x1x128xf32> to vector<2x32x128xf32>
    %234 = arith.mulf %233, %140 : vector<2x32x128xf32>
    %cst_74 = arith.constant dense<0.000000e+00> : vector<2x32xf32>
    %235 = vector.multi_reduction <add>, %234, %cst_74 [2] : vector<2x32x128xf32> to vector<2x32xf32>
    %236 = arith.mulf %235, %235 : vector<2x32xf32>
    %cst_75 = arith.constant dense<0.000000e+00> : vector<2xf32>
    %237 = vector.multi_reduction <add>, %236, %cst_75 [1] : vector<2x32xf32> to vector<2xf32>
    %238 = vector.shape_cast %237 : vector<2xf32> to vector<2x1xf32>
    %cst_76 = arith.constant 9.99999993E-9 : f32
    %239 = vector.broadcast %cst_76 : f32 to vector<2x1xf32>
    %240 = arith.addf %238, %239 : vector<2x1xf32>
    %241 = math.sqrt %240 : vector<2x1xf32>
    %cst_77 = arith.constant 1.000000e+00 : f32
    %242 = vector.broadcast %cst_77 : f32 to vector<2x1xf32>
    %243 = arith.addf %242, %240 : vector<2x1xf32>
    %244 = arith.divf %241, %243 : vector<2x1xf32>
    %245 = vector.broadcast %244 : vector<2x1xf32> to vector<2x32xf32>
    %246 = arith.mulf %235, %245 : vector<2x32xf32>
    %247 = vector.shape_cast %246 : vector<2x32xf32> to vector<1x2x32xf32>
    %c0_78 = arith.constant 0 : index
    %c0_79 = arith.constant 0 : index
    %c0_80 = arith.constant 0 : index
    %248 = vector.load %arg3[%c0_78, %c0_79, %c0_80] : memref<1x2x32xf32, #tpu.memory_space<vmem>>, vector<1x2x32xf32>
    tpu.vector_store %arg3[%c0_78, %c0_79, %c0_80], %247 {strides = array<i32>} : memref<1x2x32xf32, #tpu.memory_space<vmem>>, vector<1x2x32xf32>,
    return
  }
  func.func @transform_0(%arg0: i32) -> (i32, i32, i32) {
    %c0_i32 = arith.constant 0 : i32
    %c0_i32_0 = arith.constant 0 : i32
    %c0_i32_1 = arith.constant 0 : i32
    %c0_i32_2 = arith.constant 0 : i32
    return %c0_i32, %c0_i32_0, %c0_i32_1 : i32, i32, i32
  }
  func.func @transform_1(%arg0: i32) -> (i32, i32, i32, i32) {
    %c0_i32 = arith.constant 0 : i32
    %c0_i32_0 = arith.constant 0 : i32
    %c0_i32_1 = arith.constant 0 : i32
    %c0_i32_2 = arith.constant 0 : i32
    return %arg0, %c0_i32, %c0_i32_0, %c0_i32_1 : i32, i32, i32, i32
  }
  func.func @transform_2(%arg0: i32) -> (i32, i32, i32) {
    %c0_i32 = arith.constant 0 : i32
    %c0_i32_0 = arith.constant 0 : i32
    %c0_i32_1 = arith.constant 0 : i32
    return %arg0, %c0_i32, %c0_i32_0 : i32, i32, i32
  }
}

</mosaic_0001>

<llo_original>
// kernel: capsule_net_forward.9
$region0: #{capsule_net_forward.9}
  #allocation0 [shape = 'u32[]', space=smem, size = 0x4, offset = 0x4, fixed_abs, tag = 'smem constant byte address 0x4 - core index']
  #allocation1 [shape = 'u32[144,128]{1,0:T(1,128)}', space=vmem, size = 0x12000, scoped, tag = 'internal scratch']
  #allocation2 [shape = 'f32[312,128]{1,0:T(8,128)}', space=vmem, size = 0x27000, scoped, tag = 'scratch operand']
  %s0 = inlined_call_operand.vmem [shape: bf16[312,128], index: 0, kind: input, shape index: {}]
  %s1 = inlined_call_operand.vmem [shape: bf16[128,128], index: 1, kind: input, shape index: {}]
  %s2 = inlined_call_operand.vmem [shape: f32[312,128], index: 2, kind: output, shape index: {}]
  %s3 = sld [smem:[#allocation0]]
  $region26: #{capsule_net_forward.9} parent=0
    _
  %s5 = ssub.s32 1, %s3
  %s6 = scalar_select 0, %s5, %s3
  // Predicated region
  $region2: #{capsule_net_forward.9} parent=0 // pred_check
    _
  $region3: #{capsule_net_forward.9} parent=0 // pred_check_branch
    %8 = sbr.rel (0) target = $region5
  $region4: #{capsule_net_forward.9} parent=0 // pred_region
    _
  $region5: #{capsule_net_forward.9} parent=0 // pred_fallthru
    _
  // Predicated region
  $region6: #{capsule_net_forward.9} parent=0 // pred_check
    _
  $region7: #{capsule_net_forward.9} parent=0 // pred_check_branch
    %10 = sbr.rel (0) target = $region9
  $region8: #{capsule_net_forward.9} parent=0 // pred_region
    _
  $region9: #{capsule_net_forward.9} parent=0 // pred_fallthru
    _
  %p12 = scmp.eq.s32.totalorder 0, 0
  // Predicated region
  $region10: #{capsule_net_forward.9} parent=0 // pred_check
    %p13 = pneg %p12
  $region11: #{capsule_net_forward.9} parent=0 // pred_check_branch
    %15 = sbr.rel (%p13) target = $region13
  $region12: #{capsule_net_forward.9} parent=0 // pred_region
    %16 = vst [vmem:[#allocation2] sm:$0xff] 0.0
    %17 = vst [vmem:[#allocation2 + $0x8] sm:$0xff] 0.0
    %18 = vst [vmem:[#allocation2 + $0x10] sm:$0xff] 0.0
    %19 = vst [vmem:[#allocation2 + $0x18] sm:$0xff] 0.0
    %20 = vst [vmem:[#allocation2 + $0x20] sm:$0xff] 0.0
    %21 = vst [vmem:[#allocation2 + $0x28] sm:$0xff] 0.0
    %22 = vst [vmem:[#allocation2 + $0x30] sm:$0xff] 0.0
    %23 = vst [vmem:[#allocation2 + $0x38] sm:$0xff] 0.0
    %24 = vst [vmem:[#allocation2 + $0x40] sm:$0xff] 0.0
    %25 = vst [vmem:[#allocation2 + $0x48] sm:$0xff] 0.0
    %26 = vst [vmem:[#allocation2 + $0x50] sm:$0xff] 0.0
    %27 = vst [vmem:[#allocation2 + $0x58] sm:$0xff] 0.0
    %28 = vst [vmem:[#allocation2 + $0x60] sm:$0xff] 0.0
    %29 = vst [vmem:[#allocation2 + $0x68] sm:$0xff] 0.0
    %30 = vst [vmem:[#allocation2 + $0x70] sm:$0xff] 0.0
    %31 = vst [vmem:[#allocation2 + $0x78] sm:$0xff] 0.0
    %32 = vst [vmem:[#allocation2 + $0x80] sm:$0xff] 0.0
    %33 = vst [vmem:[#allocation2 + $0x88] sm:$0xff] 0.0
    %34 = vst [vmem:[#allocation2 + $0x90] sm:$0xff] 0.0
    %35 = vst [vmem:[#allocation2 + $0x98] sm:$0xff] 0.0
    %36 = vst [vmem:[#allocation2 + $0xa0] sm:$0xff] 0.0
    %37 = vst [vmem:[#allocation2 + $0xa8] sm:$0xff] 0.0
    %38 = vst [vmem:[#allocation2 + $0xb0] sm:$0xff] 0.0
    %39 = vst [vmem:[#allocation2 + $0xb8] sm:$0xff] 0.0
    %40 = vst [vmem:[#allocation2 + $0xc0] sm:$0xff] 0.0
    %41 = vst [vmem:[#allocation2 + $0xc8] sm:$0xff] 0.0
    %42 = vst [vmem:[#allocation2 + $0xd0] sm:$0xff] 0.0
    %43 = vst [vmem:[#allocation2 + $0xd8] sm:$0xff] 0.0
    %44 = vst [vmem:[#allocation2 + $0xe0] sm:$0xff] 0.0
    %45 = vst [vmem:[#allocation2 + $0xe8] sm:$0xff] 0.0
    %46 = vst [vmem:[#allocation2 + $0xf0] sm:$0xff] 0.0
    %47 = vst [vmem:[#allocation2 + $0xf8] sm:$0xff] 0.0
    %48 = vst [vmem:[#allocation2 + $0x100] sm:$0xff] 0.0
    %49 = vst [vmem:[#allocation2 + $0x108] sm:$0xff] 0.0
    %50 = vst [vmem:[#allocation2 + $0x110] sm:$0xff] 0.0
    %51 = vst [vmem:[#allocation2 + $0x118] sm:$0xff] 0.0
    %52 = vst [vmem:[#allocation2 + $0x120] sm:$0xff] 0.0
    %53 = vst [vmem:[#allocation2 + $0x128] sm:$0xff] 0.0
    %54 = vst [vmem:[#allocation2 + $0x130] sm:$0xff] 0.0
  $region13: #{capsule_net_forward.9} parent=0 // pred_fallthru
    _
  %v55 = vld [vmem:[#allocation2] sm:$0xff]
  %v56 = vld [vmem:[#allocation2 + $0x8] sm:$0xff]
  %v57 = vld [vmem:[#allocation2 + $0x10] sm:$0xff]
  %v58 = vld [vmem:[#allocation2 + $0x18] sm:$0xff]
  %v59 = vld [vmem:[#allocation2 + $0x20] sm:$0xff]
  %v60 = vld [vmem:[#allocation2 + $0x28] sm:$0xff]
  %v61 = vld [vmem:[#allocation2 + $0x30] sm:$0xff]
  %v62 = vld [vmem:[#allocation2 + $0x38] sm:$0xff]
  %v63 = vld [vmem:[#allocation2 + $0x40] sm:$0xff]
  %v64 = vld [vmem:[#allocation2 + $0x48] sm:$0xff]
  %v65 = vld [vmem:[#allocation2 + $0x50] sm:$0xff]
  %v66 = vld [vmem:[#allocation2 + $0x58] sm:$0xff]
  %v67 = vld [vmem:[#allocation2 + $0x60] sm:$0xff]
  %v68 = vld [vmem:[#allocation2 + $0x68] sm:$0xff]
  %v69 = vld [vmem:[#allocation2 + $0x70] sm:$0xff]
  %v70 = vld [vmem:[#allocation2 + $0x78] sm:$0xff]
  %v71 = vld [vmem:[#allocation2 + $0x80] sm:$0xff]
  %v72 = vld [vmem:[#allocation2 + $0x88] sm:$0xff]
  %v73 = vld [vmem:[#allocation2 + $0x90] sm:$0xff]
  %v74 = vld [vmem:[#allocation2 + $0x98] sm:$0xff]
  %v75 = vld [vmem:[#allocation2 + $0xa0] sm:$0xff]
  %v76 = vld [vmem:[#allocation2 + $0xa8] sm:$0xff]
  %v77 = vld [vmem:[#allocation2 + $0xb0] sm:$0xff]
  %v78 = vld [vmem:[#allocation2 + $0xb8] sm:$0xff]
  %v79 = vld [vmem:[#allocation2 + $0xc0] sm:$0xff]
  %v80 = vld [vmem:[#allocation2 + $0xc8] sm:$0xff]
  %v81 = vld [vmem:[#allocation2 + $0xd0] sm:$0xff]
  %v82 = vld [vmem:[#allocation2 + $0xd8] sm:$0xff]
  %v83 = vld [vmem:[#allocation2 + $0xe0] sm:$0xff]
  %v84 = vld [vmem:[#allocation2 + $0xe8] sm:$0xff]
  %v85 = vld [vmem:[#allocation2 + $0xf0] sm:$0xff]
  %v86 = vld [vmem:[#allocation2 + $0xf8] sm:$0xff]
  %v87 = vld [vmem:[#allocation2 + $0x100] sm:$0xff]
  %v88 = vld [vmem:[#allocation2 + $0x108] sm:$0xff]
  %v89 = vld [vmem:[#allocation2 + $0x110] sm:$0xff]
  %v90 = vld [vmem:[#allocation2 + $0x118] sm:$0xff]
  %v91 = vld [vmem:[#allocation2 + $0x120] sm:$0xff]
  %v92 = vld [vmem:[#allocation2 + $0x128] sm:$0xff]
  %v93 = vld [vmem:[#allocation2 + $0x130] sm:$0xff]
  %v94 = vld [vmem:[%s0] sm:$0xf]
  %v95 = vld [vmem:[%s0 + $0x4] sm:$0xf]
  %v96 = vld [vmem:[%s0 + $0x8] sm:$0xf]
  %v97 = vld [vmem:[%s0 + $0xc] sm:$0xf]
  %v98 = vld [vmem:[%s0 + $0x10] sm:$0xf]
  %v99 = vld [vmem:[%s0 + $0x14] sm:$0xf]
  %v100 = vld [vmem:[%s0 + $0x18] sm:$0xf]
  %v101 = vld [vmem:[%s0 + $0x1c] sm:$0xf]
  %v102 = vld [vmem:[%s0 + $0x20] sm:$0xf]
  %v103 = vld [vmem:[%s0 + $0x24] sm:$0xf]
  %v104 = vld [vmem:[%s0 + $0x28] sm:$0xf]
  %v105 = vld [vmem:[%s0 + $0x2c] sm:$0xf]
  %v106 = vld [vmem:[%s0 + $0x30] sm:$0xf]
  %v107 = vld [vmem:[%s0 + $0x34] sm:$0xf]
  %v108 = vld [vmem:[%s0 + $0x38] sm:$0xf]
  %v109 = vld [vmem:[%s0 + $0x3c] sm:$0xf]
  %v110 = vld [vmem:[%s0 + $0x40] sm:$0xf]
  %v111 = vld [vmem:[%s0 + $0x44] sm:$0xf]
  %v112 = vld [vmem:[%s0 + $0x48] sm:$0xf]
  %v113 = vld [vmem:[%s0 + $0x4c] sm:$0xf]
  %v114 = vld [vmem:[%s0 + $0x50] sm:$0xf]
  %v115 = vld [vmem:[%s0 + $0x54] sm:$0xf]
  %v116 = vld [vmem:[%s0 + $0x58] sm:$0xf]
  %v117 = vld [vmem:[%s0 + $0x5c] sm:$0xf]
  %v118 = vld [vmem:[%s0 + $0x60] sm:$0xf]
  %v119 = vld [vmem:[%s0 + $0x64] sm:$0xf]
  %v120 = vld [vmem:[%s0 + $0x68] sm:$0xf]
  %v121 = vld [vmem:[%s0 + $0x6c] sm:$0xf]
  %v122 = vld [vmem:[%s0 + $0x70] sm:$0xf]
  %v123 = vld [vmem:[%s0 + $0x74] sm:$0xf]
  %v124 = vld [vmem:[%s0 + $0x78] sm:$0xf]
  %v125 = vld [vmem:[%s0 + $0x7c] sm:$0xf]
  %v126 = vld [vmem:[%s0 + $0x80] sm:$0xf]
  %v127 = vld [vmem:[%s0 + $0x84] sm:$0xf]
  %v128 = vld [vmem:[%s0 + $0x88] sm:$0xf]
  %v129 = vld [vmem:[%s0 + $0x8c] sm:$0xf]
  %v130 = vld [vmem:[%s0 + $0x90] sm:$0xf]
  %v131 = vld [vmem:[%s0 + $0x94] sm:$0xf]
  %v132 = vld [vmem:[%s0 + $0x98] sm:$0xf]
  %v133 = vld [vmem:[%s1] sm:$0xf]
  %v134 = vld [vmem:[%s1 + $0x4] sm:$0xf]
  %v135 = vld [vmem:[%s1 + $0x8] sm:$0xf]
  %v136 = vld [vmem:[%s1 + $0xc] sm:$0xf]
  %v137 = vld [vmem:[%s1 + $0x10] sm:$0xf]
  %v138 = vld [vmem:[%s1 + $0x14] sm:$0xf]
  %v139 = vld [vmem:[%s1 + $0x18] sm:$0xf]
  %v140 = vld [vmem:[%s1 + $0x1c] sm:$0xf]
  %v141 = vld [vmem:[%s1 + $0x20] sm:$0xf]
  %v142 = vld [vmem:[%s1 + $0x24] sm:$0xf]
  %v143 = vld [vmem:[%s1 + $0x28] sm:$0xf]
  %v144 = vld [vmem:[%s1 + $0x2c] sm:$0xf]
  %v145 = vld [vmem:[%s1 + $0x30] sm:$0xf]
  %v146 = vld [vmem:[%s1 + $0x34] sm:$0xf]
  %v147 = vld [vmem:[%s1 + $0x38] sm:$0xf]
  %v148 = vld [vmem:[%s1 + $0x3c] sm:$0xf]
  %v188 = vunpack.c.l.b16 %v94
  %v189 = vunpack.c.l.b16 %v95
  %v190 = vunpack.c.l.b16 %v96
  %v191 = vunpack.c.l.b16 %v97
  %v192 = vunpack.c.l.b16 %v98
  %v193 = vunpack.c.l.b16 %v99
  %v194 = vunpack.c.l.b16 %v100
  %v195 = vunpack.c.l.b16 %v101
  %v196 = vunpack.c.l.b16 %v102
  %v197 = vunpack.c.l.b16 %v103
  %v198 = vunpack.c.l.b16 %v104
  %v199 = vunpack.c.l.b16 %v105
  %v200 = vunpack.c.l.b16 %v106
  %v201 = vunpack.c.l.b16 %v107
  %v202 = vunpack.c.l.b16 %v108
  %v203 = vunpack.c.l.b16 %v109
  %v204 = vunpack.c.l.b16 %v110
  %v205 = vunpack.c.l.b16 %v111
  %v206 = vunpack.c.l.b16 %v112
  %v207 = vunpack.c.l.b16 %v113
  %v208 = vunpack.c.l.b16 %v114
  %v209 = vunpack.c.l.b16 %v115
  %v210 = vunpack.c.l.b16 %v116
  %v211 = vunpack.c.l.b16 %v117
  %v212 = vunpack.c.l.b16 %v118
  %v213 = vunpack.c.l.b16 %v119
  %v214 = vunpack.c.l.b16 %v120
  %v215 = vunpack.c.l.b16 %v121
  %v216 = vunpack.c.l.b16 %v122
  %v217 = vunpack.c.l.b16 %v123
  %v218 = vunpack.c.l.b16 %v124
  %v219 = vunpack.c.l.b16 %v125
  %v220 = vunpack.c.l.b16 %v126
  %v221 = vunpack.c.l.b16 %v127
  %v222 = vunpack.c.l.b16 %v128
  %v223 = vunpack.c.l.b16 %v129
  %v224 = vunpack.c.l.b16 %v130
  %v225 = vunpack.c.l.b16 %v131
  %v226 = vunpack.c.l.b16 %v132
  %v227 = vpack.c.b16 %v189, %v188
  %v228 = vpack.c.b16 %v191, %v190
  %v229 = vpack.c.b16 %v193, %v192
  %v230 = vpack.c.b16 %v195, %v194
  %v231 = vpack.c.b16 %v197, %v196
  %v232 = vpack.c.b16 %v199, %v198
  %v233 = vpack.c.b16 %v201, %v200
  %v234 = vpack.c.b16 %v203, %v202
  %v235 = vpack.c.b16 %v205, %v204
  %v236 = vpack.c.b16 %v207, %v206
  %v237 = vpack.c.b16 %v209, %v208
  %v238 = vpack.c.b16 %v211, %v210
  %v239 = vpack.c.b16 %v213, %v212
  %v240 = vpack.c.b16 %v215, %v214
  %v241 = vpack.c.b16 %v217, %v216
  %v242 = vpack.c.b16 %v219, %v218
  %v243 = vpack.c.b16 %v221, %v220
  %v244 = vpack.c.b16 %v223, %v222
  %v245 = vpack.c.b16 %v225, %v224
  %v246 = vpack.c.b16 %v226, %v226
  %v283 = vunpack.c.l.b16 %v133
  %v284 = vunpack.c.l.b16 %v134
  %v285 = vunpack.c.l.b16 %v135
  %v286 = vunpack.c.l.b16 %v136
  %v287 = vunpack.c.l.b16 %v137
  %v288 = vunpack.c.l.b16 %v138
  %v289 = vunpack.c.l.b16 %v139
  %v290 = vunpack.c.l.b16 %v140
  %v291 = vunpack.c.l.b16 %v141
  %v292 = vunpack.c.l.b16 %v142
  %v293 = vunpack.c.l.b16 %v143
  %v294 = vunpack.c.l.b16 %v144
  %v295 = vunpack.c.l.b16 %v145
  %v296 = vunpack.c.l.b16 %v146
  %v297 = vunpack.c.l.b16 %v147
  %v298 = vunpack.c.l.b16 %v148
  %v299 = vpack.c.b16 %v284, %v283
  %v300 = vpack.c.b16 %v286, %v285
  %v301 = vpack.c.b16 %v288, %v287
  %v302 = vpack.c.b16 %v290, %v289
  %v303 = vpack.c.b16 %v292, %v291
  %v304 = vpack.c.b16 %v294, %v293
  %v305 = vpack.c.b16 %v296, %v295
  %v306 = vpack.c.b16 %v298, %v297
  %315 = vmatprep.subr.bf16.mxu0 0
  %316 = vmatpush1.bf16.msra.mxu0 %v299
  %317 = vmatprep.subr.bf16.mxu0 0
  %318 = vmatpush1.bf16.msra.mxu0 %v300
  %319 = vmatprep.subr.bf16.mxu0 0
  %320 = vmatpush1.bf16.msra.mxu0 %v301
  %321 = vmatprep.subr.bf16.mxu0 0
  %322 = vmatpush1.bf16.msra.mxu0 %v302
  %323 = vmatprep.subr.bf16.mxu0 0
  %324 = vmatpush1.bf16.msra.mxu0 %v303
  %325 = vmatprep.subr.bf16.mxu0 0
  %326 = vmatpush1.bf16.msra.mxu0 %v304
  %327 = vmatprep.subr.bf16.mxu0 0
  %328 = vmatpush1.bf16.msra.mxu0 %v305
  %329 = vmatprep.subr.bf16.mxu0 0
  %330 = vmatpush1.bf16.msra.mxu0 %v306
  %331 = vmatprep.subr.bf16.mxu0 0
  %332 = vmatpush1.bf16.msra.mxu0 0
  %333 = vmatprep.subr.bf16.mxu0 0
  %334 = vmatpush1.bf16.msra.mxu0 0
  %335 = vmatprep.subr.bf16.mxu0 0
  %336 = vmatpush1.bf16.msra.mxu0 0
  %337 = vmatprep.subr.bf16.mxu0 0
  %338 = vmatpush1.bf16.msra.mxu0 0
  %339 = vmatprep.subr.bf16.mxu0 0
  %340 = vmatpush1.bf16.msra.mxu0 0
  %341 = vmatprep.subr.bf16.mxu0 0
  %342 = vmatpush1.bf16.msra.mxu0 0
  %343 = vmatprep.subr.bf16.mxu0 0
  %344 = vmatpush1.bf16.msra.mxu0 0
  %345 = vmatprep.subr.bf16.mxu0 0
  %346 = vmatpush1.bf16.msra.mxu0 0
  %347 = vmatprep.mubr.bf16.mxu0 0
  %348 = vmatmul.mubr.bf16.gmra.mrb[0].mxu0 %v227
  %v349 = vpop.f32.mrb[0].mxu0
  %v350 = vadd.f32 0.0, %v349
  %v351 = vpop.f32.mrb[0].mxu0
  %v352 = vpop.f32.mrb[0].mxu0
  %v353 = vadd.f32 0.0, %v352
  %v354 = vpop.f32.mrb[0].mxu0
  %355 = vmatprep.mubr.bf16.mxu0 0
  %356 = vmatmul.mubr.bf16.gmra.mrb[0].mxu0 %v228
  %v357 = vpop.f32.mrb[0].mxu0
  %v358 = vadd.f32 0.0, %v357
  %v359 = vpop.f32.mrb[0].mxu0
  %v360 = vpop.f32.mrb[0].mxu0
  %v361 = vadd.f32 0.0, %v360
  %v362 = vpop.f32.mrb[0].mxu0
  %363 = vmatprep.mubr.bf16.mxu0 0
  %364 = vmatmul.mubr.bf16.gmra.mrb[0].mxu0 %v229
  %v365 = vpop.f32.mrb[0].mxu0
  %v366 = vadd.f32 0.0, %v365
  %v367 = vpop.f32.mrb[0].mxu0
  %v368 = vpop.f32.mrb[0].mxu0
  %v369 = vadd.f32 0.0, %v368
  %v370 = vpop.f32.mrb[0].mxu0
  %371 = vmatprep.mubr.bf16.mxu0 0
  %372 = vmatmul.mubr.bf16.gmra.mrb[0].mxu0 %v230
  %v373 = vpop.f32.mrb[0].mxu0
  %v374 = vadd.f32 0.0, %v373
  %v375 = vpop.f32.mrb[0].mxu0
  %v376 = vpop.f32.mrb[0].mxu0
  %v377 = vadd.f32 0.0, %v376
  %v378 = vpop.f32.mrb[0].mxu0
  %379 = vmatprep.mubr.bf16.mxu0 0
  %380 = vmatmul.mubr.bf16.gmra.mrb[0].mxu0 %v231
  %v381 = vpop.f32.mrb[0].mxu0
  %v382 = vadd.f32 0.0, %v381
  %v383 = vpop.f32.mrb[0].mxu0
  %v384 = vpop.f32.mrb[0].mxu0
  %v385 = vadd.f32 0.0, %v384
  %v386 = vpop.f32.mrb[0].mxu0
  %387 = vmatprep.mubr.bf16.mxu0 0
  %388 = vmatmul.mubr.bf16.gmra.mrb[0].mxu0 %v232
  %v389 = vpop.f32.mrb[0].mxu0
  %v390 = vadd.f32 0.0, %v389
  %v391 = vpop.f32.mrb[0].mxu0
  %v392 = vpop.f32.mrb[0].mxu0
  %v393 = vadd.f32 0.0, %v392
  %v394 = vpop.f32.mrb[0].mxu0
  %395 = vmatprep.mubr.bf16.mxu0 0
  %396 = vmatmul.mubr.bf16.gmra.mrb[0].mxu0 %v233
  %v397 = vpop.f32.mrb[0].mxu0
  %v398 = vadd.f32 0.0, %v397
  %v399 = vpop.f32.mrb[0].mxu0
  %v400 = vpop.f32.mrb[0].mxu0
  %v401 = vadd.f32 0.0, %v400
  %v402 = vpop.f32.mrb[0].mxu0
  %403 = vmatprep.mubr.bf16.mxu0 0
  %404 = vmatmul.mubr.bf16.gmra.mrb[0].mxu0 %v234
  %v405 = vpop.f32.mrb[0].mxu0
  %v406 = vadd.f32 0.0, %v405
  %v407 = vpop.f32.mrb[0].mxu0
  %v408 = vpop.f32.mrb[0].mxu0
  %v409 = vadd.f32 0.0, %v408
  %v410 = vpop.f32.mrb[0].mxu0
  %411 = vmatprep.mubr.bf16.mxu0 0
  %412 = vmatmul.mubr.bf16.gmra.mrb[0].mxu0 %v235
  %v413 = vpop.f32.mrb[0].mxu0
  %v414 = vadd.f32 0.0, %v413
  %v415 = vpop.f32.mrb[0].mxu0
  %v416 = vpop.f32.mrb[0].mxu0
  %v417 = vadd.f32 0.0, %v416
  %v418 = vpop.f32.mrb[0].mxu0
  %419 = vmatprep.mubr.bf16.mxu0 0
  %420 = vmatmul.mubr.bf16.gmra.mrb[0].mxu0 %v236
  %v421 = vpop.f32.mrb[0].mxu0
  %v422 = vadd.f32 0.0, %v421
  %v423 = vpop.f32.mrb[0].mxu0
  %v424 = vpop.f32.mrb[0].mxu0
  %v425 = vadd.f32 0.0, %v424
  %v426 = vpop.f32.mrb[0].mxu0
  %427 = vmatprep.mubr.bf16.mxu0 0
  %428 = vmatmul.mubr.bf16.gmra.mrb[0].mxu0 %v237
  %v429 = vpop.f32.mrb[0].mxu0
  %v430 = vadd.f32 0.0, %v429
  %v431 = vpop.f32.mrb[0].mxu0
  %v432 = vpop.f32.mrb[0].mxu0
  %v433 = vadd.f32 0.0, %v432
  %v434 = vpop.f32.mrb[0].mxu0
  %435 = vmatprep.mubr.bf16.mxu0 0
  %436 = vmatmul.mubr.bf16.gmra.mrb[0].mxu0 %v238
  %v437 = vpop.f32.mrb[0].mxu0
  %v438 = vadd.f32 0.0, %v437
  %v439 = vpop.f32.mrb[0].mxu0
  %v440 = vpop.f32.mrb[0].mxu0
  %v441 = vadd.f32 0.0, %v440
  %v442 = vpop.f32.mrb[0].mxu0
  %443 = vmatprep.mubr.bf16.mxu0 0
  %444 = vmatmul.mubr.bf16.gmra.mrb[0].mxu0 %v239
  %v445 = vpop.f32.mrb[0].mxu0
  %v446 = vadd.f32 0.0, %v445
  %v447 = vpop.f32.mrb[0].mxu0
  %v448 = vpop.f32.mrb[0].mxu0
  %v449 = vadd.f32 0.0, %v448
  %v450 = vpop.f32.mrb[0].mxu0
  %451 = vmatprep.mubr.bf16.mxu0 0
  %452 = vmatmul.mubr.bf16.gmra.mrb[0].mxu0 %v240
  %v453 = vpop.f32.mrb[0].mxu0
  %v454 = vadd.f32 0.0, %v453
  %v455 = vpop.f32.mrb[0].mxu0
  %v456 = vpop.f32.mrb[0].mxu0
  %v457 = vadd.f32 0.0, %v456
  %v458 = vpop.f32.mrb[0].mxu0
  %459 = vmatprep.mubr.bf16.mxu0 0
  %460 = vmatmul.mubr.bf16.gmra.mrb[0].mxu0 %v241
  %v461 = vpop.f32.mrb[0].mxu0
  %v462 = vadd.f32 0.0, %v461
  %v463 = vpop.f32.mrb[0].mxu0
  %v464 = vpop.f32.mrb[0].mxu0
  %v465 = vadd.f32 0.0, %v464
  %v466 = vpop.f32.mrb[0].mxu0
  %467 = vmatprep.mubr.bf16.mxu0 0
  %468 = vmatmul.mubr.bf16.gmra.mrb[0].mxu0 %v242
  %v469 = vpop.f32.mrb[0].mxu0
  %v470 = vadd.f32 0.0, %v469
  %v471 = vpop.f32.mrb[0].mxu0
  %v472 = vpop.f32.mrb[0].mxu0
  %v473 = vadd.f32 0.0, %v472
  %v474 = vpop.f32.mrb[0].mxu0
  %475 = vmatprep.mubr.bf16.mxu0 0
  %476 = vmatmul.mubr.bf16.gmra.mrb[0].mxu0 %v243
  %v477 = vpop.f32.mrb[0].mxu0
  %v478 = vadd.f32 0.0, %v477
  %v479 = vpop.f32.mrb[0].mxu0
  %v480 = vpop.f32.mrb[0].mxu0
  %v481 = vadd.f32 0.0, %v480
  %v482 = vpop.f32.mrb[0].mxu0
  %483 = vmatprep.mubr.bf16.mxu0 0
  %484 = vmatmul.mubr.bf16.gmra.mrb[0].mxu0 %v244
  %v485 = vpop.f32.mrb[0].mxu0
  %v486 = vadd.f32 0.0, %v485
  %v487 = vpop.f32.mrb[0].mxu0
  %v488 = vpop.f32.mrb[0].mxu0
  %v489 = vadd.f32 0.0, %v488
  %v490 = vpop.f32.mrb[0].mxu0
  %491 = vmatprep.mubr.bf16.mxu0 0
  %492 = vmatmul.mubr.bf16.gmra.mrb[0].mxu0 %v245
  %v493 = vpop.f32.mrb[0].mxu0
  %v494 = vadd.f32 0.0, %v493
  %v495 = vpop.f32.mrb[0].mxu0
  %v496 = vpop.f32.mrb[0].mxu0
  %v497 = vadd.f32 0.0, %v496
  %v498 = vpop.f32.mrb[0].mxu0
  %499 = vmatprep.mubr.bf16.mxu0 0
  %500 = vmatmul.mubr.bf16.gmra.mrb[0].mxu0 %v246
  %v501 = vpop.f32.mrb[0].mxu0
  %v502 = vadd.f32 0.0, %v501
  %v503 = vpop.f32.mrb[0].mxu0
  %v504 = vpop.f32.mrb[0].mxu0
  %v505 = vpop.f32.mrb[0].mxu0
  %506 = vdwg.mxu0
  %v507 = vadd.f32 %v55, %v350
  %v508 = vadd.f32 %v56, %v353
  %v509 = vadd.f32 %v57, %v358
  %v510 = vadd.f32 %v58, %v361
  %v511 = vadd.f32 %v59, %v366
  %v512 = vadd.f32 %v60, %v369
  %v513 = vadd.f32 %v61, %v374
  %v514 = vadd.f32 %v62, %v377
  %v515 = vadd.f32 %v63, %v382
  %v516 = vadd.f32 %v64, %v385
  %v517 = vadd.f32 %v65, %v390
  %v518 = vadd.f32 %v66, %v393
  %v519 = vadd.f32 %v67, %v398
  %v520 = vadd.f32 %v68, %v401
  %v521 = vadd.f32 %v69, %v406
  %v522 = vadd.f32 %v70, %v409
  %v523 = vadd.f32 %v71, %v414
  %v524 = vadd.f32 %v72, %v417
  %v525 = vadd.f32 %v73, %v422
  %v526 = vadd.f32 %v74, %v425
  %v527 = vadd.f32 %v75, %v430
  %v528 = vadd.f32 %v76, %v433
  %v529 = vadd.f32 %v77, %v438
  %v530 = vadd.f32 %v78, %v441
  %v531 = vadd.f32 %v79, %v446
  %v532 = vadd.f32 %v80, %v449
  %v533 = vadd.f32 %v81, %v454
  %v534 = vadd.f32 %v82, %v457
  %v535 = vadd.f32 %v83, %v462
  %v536 = vadd.f32 %v84, %v465
  %v537 = vadd.f32 %v85, %v470
  %v538 = vadd.f32 %v86, %v473
  %v539 = vadd.f32 %v87, %v478
  %v540 = vadd.f32 %v88, %v481
  %v541 = vadd.f32 %v89, %v486
  %v542 = vadd.f32 %v90, %v489
  %v543 = vadd.f32 %v91, %v494
  %v544 = vadd.f32 %v92, %v497
  %v545 = vadd.f32 %v93, %v502
  %546 = vst [vmem:[#allocation2] sm:$0xff] %v507
  %547 = vst [vmem:[#allocation2 + $0x8] sm:$0xff] %v508
  %548 = vst [vmem:[#allocation2 + $0x10] sm:$0xff] %v509
  %549 = vst [vmem:[#allocation2 + $0x18] sm:$0xff] %v510
  %550 = vst [vmem:[#allocation2 + $0x20] sm:$0xff] %v511
  %551 = vst [vmem:[#allocation2 + $0x28] sm:$0xff] %v512
  %552 = vst [vmem:[#allocation2 + $0x30] sm:$0xff] %v513
  %553 = vst [vmem:[#allocation2 + $0x38] sm:$0xff] %v514
  %554 = vst [vmem:[#allocation2 + $0x40] sm:$0xff] %v515
  %555 = vst [vmem:[#allocation2 + $0x48] sm:$0xff] %v516
  %556 = vst [vmem:[#allocation2 + $0x50] sm:$0xff] %v517
  %557 = vst [vmem:[#allocation2 + $0x58] sm:$0xff] %v518
  %558 = vst [vmem:[#allocation2 + $0x60] sm:$0xff] %v519
  %559 = vst [vmem:[#allocation2 + $0x68] sm:$0xff] %v520
  %560 = vst [vmem:[#allocation2 + $0x70] sm:$0xff] %v521
  %561 = vst [vmem:[#allocation2 + $0x78] sm:$0xff] %v522
  %562 = vst [vmem:[#allocation2 + $0x80] sm:$0xff] %v523
  %563 = vst [vmem:[#allocation2 + $0x88] sm:$0xff] %v524
  %564 = vst [vmem:[#allocation2 + $0x90] sm:$0xff] %v525
  %565 = vst [vmem:[#allocation2 + $0x98] sm:$0xff] %v526
  %566 = vst [vmem:[#allocation2 + $0xa0] sm:$0xff] %v527
  %567 = vst [vmem:[#allocation2 + $0xa8] sm:$0xff] %v528
  %568 = vst [vmem:[#allocation2 + $0xb0] sm:$0xff] %v529
  %569 = vst [vmem:[#allocation2 + $0xb8] sm:$0xff] %v530
  %570 = vst [vmem:[#allocation2 + $0xc0] sm:$0xff] %v531
  %571 = vst [vmem:[#allocation2 + $0xc8] sm:$0xff] %v532
  %572 = vst [vmem:[#allocation2 + $0xd0] sm:$0xff] %v533
  %573 = vst [vmem:[#allocation2 + $0xd8] sm:$0xff] %v534
  %574 = vst [vmem:[#allocation2 + $0xe0] sm:$0xff] %v535
  %575 = vst [vmem:[#allocation2 + $0xe8] sm:$0xff] %v536
  %576 = vst [vmem:[#allocation2 + $0xf0] sm:$0xff] %v537
  %577 = vst [vmem:[#allocation2 + $0xf8] sm:$0xff] %v538
  %578 = vst [vmem:[#allocation2 + $0x100] sm:$0xff] %v539
  %579 = vst [vmem:[#allocation2 + $0x108] sm:$0xff] %v540
  %580 = vst [vmem:[#allocation2 + $0x110] sm:$0xff] %v541
  %581 = vst [vmem:[#allocation2 + $0x118] sm:$0xff] %v542
  %582 = vst [vmem:[#allocation2 + $0x120] sm:$0xff] %v543
  %583 = vst [vmem:[#allocation2 + $0x128] sm:$0xff] %v544
  %584 = vst [vmem:[#allocation2 + $0x130] sm:$0xff] %v545
  // Predicated region
  $region14: #{capsule_net_forward.9} parent=0 // pred_check
    %p585 = pneg %p12
  $region15: #{capsule_net_forward.9} parent=0 // pred_check_branch
    %587 = sbr.rel (%p585) target = $region17
  $region16: #{capsule_net_forward.9} parent=0 // pred_region
    %v588 = vld [vmem:[#allocation2] sm:$0xff]
    %v589 = vld [vmem:[#allocation2 + $0x8] sm:$0xff]
    %v590 = vld [vmem:[#allocation2 + $0x10] sm:$0xff]
    %v591 = vld [vmem:[#allocation2 + $0x18] sm:$0xff]
    %v592 = vld [vmem:[#allocation2 + $0x20] sm:$0xff]
    %v593 = vld [vmem:[#allocation2 + $0x28] sm:$0xff]
    %v594 = vld [vmem:[#allocation2 + $0x30] sm:$0xff]
    %v595 = vld [vmem:[#allocation2 + $0x38] sm:$0xff]
    %v596 = vld [vmem:[#allocation2 + $0x40] sm:$0xff]
    %v597 = vld [vmem:[#allocation2 + $0x48] sm:$0xff]
    %v598 = vld [vmem:[#allocation2 + $0x50] sm:$0xff]
    %v599 = vld [vmem:[#allocation2 + $0x58] sm:$0xff]
    %v600 = vld [vmem:[#allocation2 + $0x60] sm:$0xff]
    %v601 = vld [vmem:[#allocation2 + $0x68] sm:$0xff]
    %v602 = vld [vmem:[#allocation2 + $0x70] sm:$0xff]
    %v603 = vld [vmem:[#allocation2 + $0x78] sm:$0xff]
    %v604 = vld [vmem:[#allocation2 + $0x80] sm:$0xff]
    %v605 = vld [vmem:[#allocation2 + $0x88] sm:$0xff]
    %v606 = vld [vmem:[#allocation2 + $0x90] sm:$0xff]
    %v607 = vld [vmem:[#allocation2 + $0x98] sm:$0xff]
    %v608 = vld [vmem:[#allocation2 + $0xa0] sm:$0xff]
    %v609 = vld [vmem:[#allocation2 + $0xa8] sm:$0xff]
    %v610 = vld [vmem:[#allocation2 + $0xb0] sm:$0xff]
    %v611 = vld [vmem:[#allocation2 + $0xb8] sm:$0xff]
    %v612 = vld [vmem:[#allocation2 + $0xc0] sm:$0xff]
    %v613 = vld [vmem:[#allocation2 + $0xc8] sm:$0xff]
    %v614 = vld [vmem:[#allocation2 + $0xd0] sm:$0xff]
    %v615 = vld [vmem:[#allocation2 + $0xd8] sm:$0xff]
    %v616 = vld [vmem:[#allocation2 + $0xe0] sm:$0xff]
    %v617 = vld [vmem:[#allocation2 + $0xe8] sm:$0xff]
    %v618 = vld [vmem:[#allocation2 + $0xf0] sm:$0xff]
    %v619 = vld [vmem:[#allocation2 + $0xf8] sm:$0xff]
    %v620 = vld [vmem:[#allocation2 + $0x100] sm:$0xff]
    %v621 = vld [vmem:[#allocation2 + $0x108] sm:$0xff]
    %v622 = vld [vmem:[#allocation2 + $0x110] sm:$0xff]
    %v623 = vld [vmem:[#allocation2 + $0x118] sm:$0xff]
    %v624 = vld [vmem:[#allocation2 + $0x120] sm:$0xff]
    %v625 = vld [vmem:[#allocation2 + $0x128] sm:$0xff]
    %v626 = vld [vmem:[#allocation2 + $0x130] sm:$0xff]
    %627 = vst [vmem:[%s2] sm:$0xff] %v588
    %628 = vst [vmem:[%s2 + $0x8] sm:$0xff] %v589
    %629 = vst [vmem:[%s2 + $0x10] sm:$0xff] %v590
    %630 = vst [vmem:[%s2 + $0x18] sm:$0xff] %v591
    %631 = vst [vmem:[%s2 + $0x20] sm:$0xff] %v592
    %632 = vst [vmem:[%s2 + $0x28] sm:$0xff] %v593
    %633 = vst [vmem:[%s2 + $0x30] sm:$0xff] %v594
    %634 = vst [vmem:[%s2 + $0x38] sm:$0xff] %v595
    %635 = vst [vmem:[%s2 + $0x40] sm:$0xff] %v596
    %636 = vst [vmem:[%s2 + $0x48] sm:$0xff] %v597
    %637 = vst [vmem:[%s2 + $0x50] sm:$0xff] %v598
    %638 = vst [vmem:[%s2 + $0x58] sm:$0xff] %v599
    %639 = vst [vmem:[%s2 + $0x60] sm:$0xff] %v600
    %640 = vst [vmem:[%s2 + $0x68] sm:$0xff] %v601
    %641 = vst [vmem:[%s2 + $0x70] sm:$0xff] %v602
    %642 = vst [vmem:[%s2 + $0x78] sm:$0xff] %v603
    %643 = vst [vmem:[%s2 + $0x80] sm:$0xff] %v604
    %644 = vst [vmem:[%s2 + $0x88] sm:$0xff] %v605
    %645 = vst [vmem:[%s2 + $0x90] sm:$0xff] %v606
    %646 = vst [vmem:[%s2 + $0x98] sm:$0xff] %v607
    %647 = vst [vmem:[%s2 + $0xa0] sm:$0xff] %v608
    %648 = vst [vmem:[%s2 + $0xa8] sm:$0xff] %v609
    %649 = vst [vmem:[%s2 + $0xb0] sm:$0xff] %v610
    %650 = vst [vmem:[%s2 + $0xb8] sm:$0xff] %v611
    %651 = vst [vmem:[%s2 + $0xc0] sm:$0xff] %v612
    %652 = vst [vmem:[%s2 + $0xc8] sm:$0xff] %v613
    %653 = vst [vmem:[%s2 + $0xd0] sm:$0xff] %v614
    %654 = vst [vmem:[%s2 + $0xd8] sm:$0xff] %v615
    %655 = vst [vmem:[%s2 + $0xe0] sm:$0xff] %v616
    %656 = vst [vmem:[%s2 + $0xe8] sm:$0xff] %v617
    %657 = vst [vmem:[%s2 + $0xf0] sm:$0xff] %v618
    %658 = vst [vmem:[%s2 + $0xf8] sm:$0xff] %v619
    %659 = vst [vmem:[%s2 + $0x100] sm:$0xff] %v620
    %660 = vst [vmem:[%s2 + $0x108] sm:$0xff] %v621
    %661 = vst [vmem:[%s2 + $0x110] sm:$0xff] %v622
    %662 = vst [vmem:[%s2 + $0x118] sm:$0xff] %v623
    %663 = vst [vmem:[%s2 + $0x120] sm:$0xff] %v624
    %664 = vst [vmem:[%s2 + $0x128] sm:$0xff] %v625
    %665 = vst [vmem:[%s2 + $0x130] sm:$0xff] %v626
  $region17: #{capsule_net_forward.9} parent=0 // pred_fallthru
    _
  // Predicated region
  $region18: #{capsule_net_forward.9} parent=0 // pred_check
    _
  $region19: #{capsule_net_forward.9} parent=0 // pred_check_branch
    %667 = sbr.rel (0) target = $region21
  $region20: #{capsule_net_forward.9} parent=0 // pred_region
    _
  $region21: #{capsule_net_forward.9} parent=0 // pred_fallthru
    _
  // Predicated region
  $region22: #{capsule_net_forward.9} parent=0 // pred_check
    _
  $region23: #{capsule_net_forward.9} parent=0 // pred_check_branch
    %669 = sbr.rel (0) target = $region25
  $region24: #{capsule_net_forward.9} parent=0 // pred_region
    _
  $region25: #{capsule_net_forward.9} parent=0 // pred_fallthru
    _

// kernel: capsule_net_forward.10
$region0: #{capsule_net_forward.10}
  #allocation0 [shape = 'u32[]', space=smem, size = 0x4, offset = 0x4, fixed_abs, tag = 'smem constant byte address 0x4 - core index']
  #allocation1 [shape = 'u32[144,128]{1,0:T(1,128)}', space=vmem, size = 0x12000, scoped, tag = 'internal scratch']
  %s0 = inlined_call_operand.vmem [shape: f32[2,156,32], index: 0, kind: input, shape index: {}]
  %s1 = inlined_call_operand.vmem [shape: f32[2,32], index: 1, kind: input, shape index: {}]
  %s2 = inlined_call_operand.vmem [shape: f32[32,2], index: 2, kind: input, shape index: {}]
  %s3 = inlined_call_operand.vmem [shape: f32[2,156,32], index: 3, kind: output, shape index: {0}]
  %s4 = inlined_call_operand.vmem [shape: f32[2,156,2], index: 4, kind: output, shape index: {1}]
  %5 = xla_tuple %s3, %s4
  %s6 = sld [smem:[#allocation0]]
  $region53: #{capsule_net_forward.10} parent=0
    _
  %s8 = ssub.s32 1, %s6
  %s9 = scalar_select 0, %s8, %s6
  loop: start=0, step=1, limit=4
  $region2: #{capsule_net_forward.10} parent=0 // loop_pre_header
    _
  $region3: #{capsule_net_forward.10} parent=0 // loop_header
    %s11 = sphi 0, %s15
    %p12 = scmp.ge.s32.totalorder %s11, 4
    %s21 = sphi 0, %s23
    %s24 = sphi 0, %s21
    %s25 = sphi 0, %s24
    %s41 = sphi 0, %s25
    %s45 = sphi 0, %s45
    %s47 = sphi 0, %s45
    %s48 = sphi 0, %s47
    %s62 = sphi 0, %s48
    %s66 = sphi 0, %s66
    %s68 = sphi 0, %s66
    %s69 = sphi 0, %s68
    %s83 = sphi 0, %s69
    %s89 = sphi 0, %s91
    %s92 = sphi 0, %s89
    %s93 = sphi 0, %s92
    %s109 = sphi 0, %s93
    %s115 = sphi 0, %s117
    %s118 = sphi 0, %s115
    %s119 = sphi 0, %s118
    %s135 = sphi 0, %s119
  $region4: #{capsule_net_forward.10} parent=0 // loop_header_branch
    %14 = sbr.rel (%p12) target = $region8
  $region5: #{capsule_net_forward.10} parent=0 // loop_body
    %s16 = ssub.s32 %s11, 1
    %s17 = ssub.s32 %s11, 2
    %s18 = sadd.s32 %s11, 1
    %s19 = ssub.s32 %s11, %s18
    %p20 = scmp.eq.s32.totalorder %s19, 0
    %s22 = sadd.s32 %s21, 1
    %s23 = scalar_select %p20, %s21, %s22
    %p26 = pneg %p20
    %p27 = scmp.eq.s32.totalorder %s11, 1
    %p28 = por %p26, %p27
    %p29 = scmp.ne.s32.totalorder %s21, %s24
    %p30 = scmp.eq.s32.totalorder %s11, 0
    %p31 = por %p29, %p30
    %p32 = scmp.ne.s32.totalorder %s21, %s24
    %p33 = scmp.eq.s32.totalorder %s16, 1
    %p34 = por %p32, %p33
    %p35 = scmp.ne.s32.totalorder %s24, %s25
    %p36 = scmp.eq.s32.totalorder %s16, 0
    %p37 = por %p35, %p36
    %p38 = scmp.ne.s32.totalorder %s24, %s25
    %p39 = scmp.eq.s32.totalorder %s17, 1
    %p40 = por %p38, %p39
    %p42 = scmp.ne.s32.totalorder %s25, %s41
    %p43 = scmp.eq.s32.totalorder %s17, 0
    %p44 = por %p42, %p43
    %s46 = sadd.s32 %s45, 1
    %p49 = scmp.eq.s32.totalorder %s11, 1
    %p50 = scmp.ne.s32.totalorder %s45, %s47
    %p51 = scmp.eq.s32.totalorder %s11, 0
    %p52 = por %p50, %p51
    %p53 = scmp.ne.s32.totalorder %s45, %s47
    %p54 = scmp.eq.s32.totalorder %s16, 1
    %p55 = por %p53, %p54
    %p56 = scmp.ne.s32.totalorder %s47, %s48
    %p57 = scmp.eq.s32.totalorder %s16, 0
    %p58 = por %p56, %p57
    %p59 = scmp.ne.s32.totalorder %s47, %s48
    %p60 = scmp.eq.s32.totalorder %s17, 1
    %p61 = por %p59, %p60
    %p63 = scmp.ne.s32.totalorder %s48, %s62
    %p64 = scmp.eq.s32.totalorder %s17, 0
    %p65 = por %p63, %p64
    %s67 = sadd.s32 %s66, 1
    %p70 = scmp.eq.s32.totalorder %s11, 1
    %p71 = scmp.ne.s32.totalorder %s66, %s68
    %p72 = scmp.eq.s32.totalorder %s11, 0
    %p73 = por %p71, %p72
    %p74 = scmp.ne.s32.totalorder %s66, %s68
    %p75 = scmp.eq.s32.totalorder %s16, 1
    %p76 = por %p74, %p75
    %p77 = scmp.ne.s32.totalorder %s68, %s69
    %p78 = scmp.eq.s32.totalorder %s16, 0
    %p79 = por %p77, %p78
    %p80 = scmp.ne.s32.totalorder %s68, %s69
    %p81 = scmp.eq.s32.totalorder %s17, 1
    %p82 = por %p80, %p81
    %p84 = scmp.ne.s32.totalorder %s69, %s83
    %p85 = scmp.eq.s32.totalorder %s17, 0
    %p86 = por %p84, %p85
    %s87 = ssub.s32 %s11, %s18
    %p88 = scmp.eq.s32.totalorder %s87, 0
    %s90 = sadd.s32 %s89, 1
    %s91 = scalar_select %p88, %s89, %s90
    %p94 = pneg %p88
    %p95 = scmp.eq.s32.totalorder %s11, 1
    %p96 = por %p94, %p95
    %p97 = scmp.ne.s32.totalorder %s89, %s92
    %p98 = scmp.eq.s32.totalorder %s11, 0
    %p99 = por %p97, %p98
    %p100 = scmp.ne.s32.totalorder %s89, %s92
    %p101 = scmp.eq.s32.totalorder %s16, 1
    %p102 = por %p100, %p101
    %p103 = scmp.ne.s32.totalorder %s92, %s93
    %p104 = scmp.eq.s32.totalorder %s16, 0
    %p105 = por %p103, %p104
    %p106 = scmp.ne.s32.totalorder %s92, %s93
    %p107 = scmp.eq.s32.totalorder %s17, 1
    %p108 = por %p106, %p107
    %p110 = scmp.ne.s32.totalorder %s93, %s109
    %p111 = scmp.eq.s32.totalorder %s17, 0
    %p112 = por %p110, %p111
    %s113 = ssub.s32 %s11, %s18
    %p114 = scmp.eq.s32.totalorder %s113, 0
    %s116 = sadd.s32 %s115, 1
    %s117 = scalar_select %p114, %s115, %s116
    %p120 = pneg %p114
    %p121 = scmp.eq.s32.totalorder %s11, 1
    %p122 = por %p120, %p121
    %p123 = scmp.ne.s32.totalorder %s115, %s118
    %p124 = scmp.eq.s32.totalorder %s11, 0
    %p125 = por %p123, %p124
    %p126 = scmp.ne.s32.totalorder %s115, %s118
    %p127 = scmp.eq.s32.totalorder %s16, 1
    %p128 = por %p126, %p127
    %p129 = scmp.ne.s32.totalorder %s118, %s119
    %p130 = scmp.eq.s32.totalorder %s16, 0
    %p131 = por %p129, %p130
    %p132 = scmp.ne.s32.totalorder %s118, %s119
    %p133 = scmp.eq.s32.totalorder %s17, 1
    %p134 = por %p132, %p133
    %p136 = scmp.ne.s32.totalorder %s119, %s135
    %p137 = scmp.eq.s32.totalorder %s17, 0
    %p138 = por %p136, %p137
    %p139 = scmp.le.s32.totalorder 1, %s11
    %p140 = scmp.lt.s32.totalorder %s11, 3
    %p141 = pnand %p139, %p140
    %p142 = pneg %p141
    // Predicated region
    $region9: #{capsule_net_forward.10} parent=5 // pred_check
      _
    $region10: #{capsule_net_forward.10} parent=5 // pred_check_branch
      %144 = sbr.rel (%p141) target = $region12
    $region11: #{capsule_net_forward.10} parent=5 // pred_region
      %s145 = ssub.s32 %s11, 1
      // Predicated region
      $region13: #{capsule_net_forward.10} parent=11 // pred_check
        %p146 = pneg %p58
      $region14: #{capsule_net_forward.10} parent=11 // pred_check_branch
        %148 = sbr.rel (%p146) target = $region16
      $region15: #{capsule_net_forward.10} parent=11 // pred_region
        _
      $region16: #{capsule_net_forward.10} parent=11 // pred_fallthru
        _
      // Predicated region
      $region17: #{capsule_net_forward.10} parent=11 // pred_check
        %p149 = pneg %p79
      $region18: #{capsule_net_forward.10} parent=11 // pred_check_branch
        %151 = sbr.rel (%p149) target = $region20
      $region19: #{capsule_net_forward.10} parent=11 // pred_region
        _
      $region20: #{capsule_net_forward.10} parent=11 // pred_fallthru
        _
    $region12: #{capsule_net_forward.10} parent=5 // pred_fallthru
      _
    %p152 = scmp.lt.s32.totalorder %s11, 2
    // Predicated region
    $region21: #{capsule_net_forward.10} parent=5 // pred_check
      %p153 = pneg %p152
    $region22: #{capsule_net_forward.10} parent=5 // pred_check_branch
      %155 = sbr.rel (%p153) target = $region24
    $region23: #{capsule_net_forward.10} parent=5 // pred_region
      // Predicated region
      $region25: #{capsule_net_forward.10} parent=23 // pred_check
        %p156 = pneg %p31
      $region26: #{capsule_net_forward.10} parent=23 // pred_check_branch
        %158 = sbr.rel (%p156) target = $region28
      $region27: #{capsule_net_forward.10} parent=23 // pred_region
        %p159 = scmp.lt.s32.totalorder %s11, 1
        %s160 = scalar_select %p159, %s11, 1
        %s161 = smul.addr %s160, 20
        %s162 = smul.addr %s161, 8
        %s163 = scalar_lea.vmem %s0, %s162
      $region28: #{capsule_net_forward.10} parent=23 // pred_fallthru
        _
    $region24: #{capsule_net_forward.10} parent=5 // pred_fallthru
      _
    %p164 = scmp.le.s32.totalorder 1, %s11
    %p165 = scmp.lt.s32.totalorder %s11, 3
    %p166 = pnand %p164, %p165
    %p167 = pneg %p166
    // Predicated region
    $region29: #{capsule_net_forward.10} parent=5 // pred_check
      _
    $region30: #{capsule_net_forward.10} parent=5 // pred_check_branch
      %169 = sbr.rel (%p166) target = $region32
    $region31: #{capsule_net_forward.10} parent=5 // pred_region
      %s170 = ssub.s32 %s11, 1
      %p171 = scmp.lt.s32.totalorder %s16, 1
      %s172 = scalar_select %p171, %s16, 1
      %s173 = smul.addr %s172, 20
      %s174 = smul.addr %s173, 8
      %s175 = scalar_lea.vmem %s0, %s174
      %p176 = pneg %p37
      %p177 = pneg %p34
      %p178 = pneg %p58
      %p179 = pneg %p55
      %p180 = pneg %p79
      %p181 = pneg %p76
      %p182 = pneg %p105
      %p183 = pneg %p102
      %p184 = scmp.lt.s32.totalorder %s16, 1
      %s185 = scalar_select %p184, %s16, 1
      %s186 = smul.addr %s185, 20
      %s187 = smul.addr %s186, 8
      %s188 = scalar_lea.vmem %s3, %s187
      %p189 = pneg %p131
      %p190 = pneg %p128
      %p191 = scmp.lt.s32.totalorder %s16, 1
      %s192 = scalar_select %p191, %s16, 1
      %s193 = smul.addr %s192, 20
      %s194 = smul.addr %s193, 8
      %s195 = scalar_lea.vmem %s4, %s194
      %p196 = scmp.lt.s32.totalorder %s16, 1
      %s197 = scalar_select %p196, %s16, 1
      %s198 = smul.addr %s197, 20
      %s199 = smul.addr %s198, 8
      %s200 = scalar_lea.vmem %s0, %s199
      %p201 = scmp.lt.s32.totalorder %s16, 1
      %s202 = scalar_select %p201, %s16, 1
      %s203 = smul.addr %s202, 20
      %s204 = smul.addr %s203, 8
      %s205 = scalar_lea.vmem %s3, %s204
      %p206 = scmp.lt.s32.totalorder %s16, 1
      %s207 = scalar_select %p206, %s16, 1
      %s208 = smul.addr %s207, 20
      %s209 = smul.addr %s208, 8
      %s210 = scalar_lea.vmem %s4, %s209
      %v211 = vld [vmem:[%s200] sm:$0xff]
      %v212 = vld [vmem:[%s200 + $0x8] sm:$0xff]
      %v213 = vld [vmem:[%s200 + $0x10] sm:$0xff]
      %v214 = vld [vmem:[%s200 + $0x18] sm:$0xff]
      %v215 = vld [vmem:[%s200 + $0x20] sm:$0xff]
      %v216 = vld [vmem:[%s200 + $0x28] sm:$0xff]
      %v217 = vld [vmem:[%s200 + $0x30] sm:$0xff]
      %v218 = vld [vmem:[%s200 + $0x38] sm:$0xff]
      %v219 = vld [vmem:[%s200 + $0x40] sm:$0xff]
      %v220 = vld [vmem:[%s200 + $0x48] sm:$0xff]
      %v221 = vld [vmem:[%s200 + $0x50] sm:$0xff]
      %v222 = vld [vmem:[%s200 + $0x58] sm:$0xff]
      %v223 = vld [vmem:[%s200 + $0x60] sm:$0xff]
      %v224 = vld [vmem:[%s200 + $0x68] sm:$0xff]
      %v225 = vld [vmem:[%s200 + $0x70] sm:$0xff]
      %v226 = vld [vmem:[%s200 + $0x78] sm:$0xff]
      %v227 = vld [vmem:[%s200 + $0x80] sm:$0xff]
      %v228 = vld [vmem:[%s200 + $0x88] sm:$0xff]
      %v229 = vld [vmem:[%s200 + $0x90] sm:$0xff]
      %v230 = vld [vmem:[%s200 + $0x98] sm:$0xf]
      %vm231 = vcmask 261120
      %v232 = vsel %vm231, %v211, 0.0
      %v233 = vsel %vm231, %v212, 0.0
      %v234 = vadd.f32 %v232, %v233
      %v235 = vsel %vm231, %v213, 0.0
      %v236 = vadd.f32 %v234, %v235
      %v237 = vsel %vm231, %v214, 0.0
      %v238 = vadd.f32 %v236, %v237
      %v239 = vsel %vm231, %v215, 0.0
      %v240 = vadd.f32 %v238, %v239
      %v241 = vsel %vm231, %v216, 0.0
      %v242 = vadd.f32 %v240, %v241
      %v243 = vsel %vm231, %v217, 0.0
      %v244 = vadd.f32 %v242, %v243
      %v245 = vsel %vm231, %v218, 0.0
      %v246 = vadd.f32 %v244, %v245
      %v247 = vsel %vm231, %v219, 0.0
      %v248 = vadd.f32 %v246, %v247
      %v249 = vsel %vm231, %v220, 0.0
      %v250 = vadd.f32 %v248, %v249
      %v251 = vsel %vm231, %v221, 0.0
      %v252 = vadd.f32 %v250, %v251
      %v253 = vsel %vm231, %v222, 0.0
      %v254 = vadd.f32 %v252, %v253
      %v255 = vsel %vm231, %v223, 0.0
      %v256 = vadd.f32 %v254, %v255
      %v257 = vsel %vm231, %v224, 0.0
      %v258 = vadd.f32 %v256, %v257
      %v259 = vsel %vm231, %v225, 0.0
      %v260 = vadd.f32 %v258, %v259
      %v261 = vsel %vm231, %v226, 0.0
      %v262 = vadd.f32 %v260, %v261
      %v263 = vsel %vm231, %v227, 0.0
      %v264 = vadd.f32 %v262, %v263
      %v265 = vsel %vm231, %v228, 0.0
      %v266 = vadd.f32 %v264, %v265
      %v267 = vsel %vm231, %v229, 0.0
      %v268 = vadd.f32 %v266, %v267
      %vm269 = vcmask 257024
      %v270 = vsel %vm269, %v230, 0.0
      %v271 = vadd.f32 %v268, %v270
      %v272 = vrot.slane %v271, 4
      %v273 = vadd.f32 %v271, %v272
      %v274 = vrot.slane %v273, 2
      %v275 = vadd.f32 %v273, %v274
      %v276 = vrot.slane %v275, 1
      %v277 = vadd.f32 %v275, %v276
      %v278 = vrcp.pop 156.0
      %v279 = vmul.f32 %v277, %v278
      %v280 = vsel %vm231, %v211, -inf
      %v281 = vsel %vm231, %v212, -inf
      %v282 = vsel %vm231, %v213, -inf
      %v283 = vsel %vm231, %v214, -inf
      %v284 = vsel %vm231, %v215, -inf
      %v285 = vmax.f32 %v280, %v284
      %v286 = vsel %vm231, %v216, -inf
      %v287 = vmax.f32 %v281, %v286
      %v288 = vsel %vm231, %v217, -inf
      %v289 = vmax.f32 %v282, %v288
      %v290 = vsel %vm231, %v218, -inf
      %v291 = vmax.f32 %v283, %v290
      %v292 = vsel %vm231, %v219, -inf
      %v293 = vmax.f32 %v285, %v292
      %v294 = vsel %vm231, %v220, -inf
      %v295 = vmax.f32 %v287, %v294
      %v296 = vsel %vm231, %v221, -inf
      %v297 = vmax.f32 %v289, %v296
      %v298 = vsel %vm231, %v222, -inf
      %v299 = vmax.f32 %v291, %v298
      %v300 = vsel %vm231, %v223, -inf
      %v301 = vmax.f32 %v293, %v300
      %v302 = vsel %vm231, %v224, -inf
      %v303 = vmax.f32 %v295, %v302
      %v304 = vsel %vm231, %v225, -inf
      %v305 = vmax.f32 %v297, %v304
      %v306 = vsel %vm231, %v226, -inf
      %v307 = vmax.f32 %v299, %v306
      %v308 = vsel %vm231, %v227, -inf
      %v309 = vmax.f32 %v301, %v308
      %v310 = vsel %vm231, %v228, -inf
      %v311 = vmax.f32 %v303, %v310
      %v312 = vsel %vm231, %v229, -inf
      %v313 = vmax.f32 %v305, %v312
      %v314 = vsel %vm269, %v230, -inf
      %v315 = vmax.f32 %v307, %v314
      %v316 = vmax.f32 %v309, %v311
      %v317 = vmax.f32 %v313, %v315
      %v318 = vmax.f32 %v316, %v317
      %v319 = vrot.slane %v318, 4
      %v320 = vmax.f32 %v318, %v319
      %v321 = vrot.slane %v320, 2
      %v322 = vmax.f32 %v320, %v321
      %v323 = vrot.slane %v322, 1
      %v324 = vmax.f32 %v322, %v323
      %vm325 = vcmask 1040384
      %v326 = vsel %vm325, %v279, %v324
      %v327 = vld [vmem:[%s1] sm:$0x3]
      %v328 = vld [vmem:[%s2] sm:$0xff]
      %v329 = vld [vmem:[%s2 + $0x8] sm:$0xff]
      %v330 = vld [vmem:[%s2 + $0x10] sm:$0xff]
      %v331 = vld [vmem:[%s2 + $0x18] sm:$0xff]
      %v334 = vunpack.c.l.s4 1966171168
      %v335 = vunpack.c.0.s8 %v334
      %v336 = vlaneseq
      %v337 = vshrl.u32 %v336, 7
      %v338 = vsub.s32 %v335, %v337
      %v339 = vrot.slane %v326, %v338
      %v340 = vcombine.high %v339, %v339
      %v342 = vunpack.c.l.s4 1966171168
      %v343 = vunpack.c.0.s8 %v342
      %v344 = vlaneseq
      %v345 = vshrl.u32 %v344, 7
      %v346 = vsub.s32 %v343, %v345
      %v347 = vrot.slane %v339, %v346
      %v349 = vunpack.c.l.s4 1966171168
      %v350 = vunpack.c.0.s8 %v349
      %v351 = vlaneseq
      %v352 = vshrl.u32 %v351, 7
      %v353 = vsub.s32 %v350, %v352
      %v354 = vrot.slane %v340, %v353
      %v355 = vlaneseq
      %v356 = vshrl.u32 %v355, 7
      %v357 = vsub.s32 0, %v356
      %v358 = vrot.slane %v347, %v357
      %v359 = vlaneseq
      %v360 = vshrl.u32 %v359, 7
      %v361 = vsub.s32 0, %v360
      %v362 = vrot.slane %v354, %v361
      %v365 = vmul.f32 %v358, %v327
      %v366 = vmul.f32 %v362, %v327
      %vm367 = vcmask 254976
      %v368 = vsel %vm367, %v365, 0.0
      %369 = vadd.xlane.f32.xlu0 %v368
      %v370 = vpop.xlane.xlu0 %369
      %v371 = vsel %vm367, %v366, 0.0
      %372 = vadd.xlane.f32.xlu0 %v371
      %v373 = vpop.xlane.xlu0 %372
      %v374 = vmax.f32 %v370, 0.0
      %v375 = vmax.f32 %v373, 0.0
      %v380 = vlaneseq
      %v381 = vshrl.u32 %v380, 7
      %v382 = vsub.s32 0, %v381
      %v383 = vrot.slane %v328, %v382
      %385 = vbcast.lane.b32.xlu0 %v383, 256
      %v386 = vpop.permute.xlu0 %385
      %v387 = vlaneseq
      %v388 = vshrl.u32 %v387, 7
      %v389 = vsub.s32 1, %v388
      %v390 = vrot.slane %v328, %v389
      %392 = vbcast.lane.b32.xlu0 %v390, 256
      %v393 = vpop.permute.xlu0 %392
      %v394 = vlaneseq
      %v395 = vshrl.u32 %v394, 7
      %v396 = vsub.s32 2, %v395
      %v397 = vrot.slane %v328, %v396
      %399 = vbcast.lane.b32.xlu0 %v397, 256
      %v400 = vpop.permute.xlu0 %399
      %v401 = vlaneseq
      %v402 = vshrl.u32 %v401, 7
      %v403 = vsub.s32 3, %v402
      %v404 = vrot.slane %v328, %v403
      %406 = vbcast.lane.b32.xlu0 %v404, 256
      %v407 = vpop.permute.xlu0 %406
      %v408 = vlaneseq
      %v409 = vshrl.u32 %v408, 7
      %v410 = vsub.s32 4, %v409
      %v411 = vrot.slane %v328, %v410
      %413 = vbcast.lane.b32.xlu0 %v411, 256
      %v414 = vpop.permute.xlu0 %413
      %v415 = vlaneseq
      %v416 = vshrl.u32 %v415, 7
      %v417 = vsub.s32 5, %v416
      %v418 = vrot.slane %v328, %v417
      %420 = vbcast.lane.b32.xlu0 %v418, 256
      %v421 = vpop.permute.xlu0 %420
      %v422 = vlaneseq
      %v423 = vshrl.u32 %v422, 7
      %v424 = vsub.s32 6, %v423
      %v425 = vrot.slane %v328, %v424
      %427 = vbcast.lane.b32.xlu0 %v425, 256
      %v428 = vpop.permute.xlu0 %427
      %v429 = vlaneseq
      %v430 = vshrl.u32 %v429, 7
      %v431 = vsub.s32 7, %v430
      %v432 = vrot.slane %v328, %v431
      %434 = vbcast.lane.b32.xlu0 %v432, 256
      %v435 = vpop.permute.xlu0 %434
      %v436 = vlaneseq
      %v437 = vshrl.u32 %v436, 7
      %v438 = vsub.s32 0, %v437
      %v439 = vrot.slane %v329, %v438
      %441 = vbcast.lane.b32.xlu0 %v439, 256
      %v442 = vpop.permute.xlu0 %441
      %v443 = vlaneseq
      %v444 = vshrl.u32 %v443, 7
      %v445 = vsub.s32 1, %v444
      %v446 = vrot.slane %v329, %v445
      %448 = vbcast.lane.b32.xlu0 %v446, 256
      %v449 = vpop.permute.xlu0 %448
      %v450 = vlaneseq
      %v451 = vshrl.u32 %v450, 7
      %v452 = vsub.s32 2, %v451
      %v453 = vrot.slane %v329, %v452
      %455 = vbcast.lane.b32.xlu0 %v453, 256
      %v456 = vpop.permute.xlu0 %455
      %v457 = vlaneseq
      %v458 = vshrl.u32 %v457, 7
      %v459 = vsub.s32 3, %v458
      %v460 = vrot.slane %v329, %v459
      %462 = vbcast.lane.b32.xlu0 %v460, 256
      %v463 = vpop.permute.xlu0 %462
      %v464 = vlaneseq
      %v465 = vshrl.u32 %v464, 7
      %v466 = vsub.s32 4, %v465
      %v467 = vrot.slane %v329, %v466
      %469 = vbcast.lane.b32.xlu0 %v467, 256
      %v470 = vpop.permute.xlu0 %469
      %v471 = vlaneseq
      %v472 = vshrl.u32 %v471, 7
      %v473 = vsub.s32 5, %v472
      %v474 = vrot.slane %v329, %v473
      %476 = vbcast.lane.b32.xlu0 %v474, 256
      %v477 = vpop.permute.xlu0 %476
      %v478 = vlaneseq
      %v479 = vshrl.u32 %v478, 7
      %v480 = vsub.s32 6, %v479
      %v481 = vrot.slane %v329, %v480
      %483 = vbcast.lane.b32.xlu0 %v481, 256
      %v484 = vpop.permute.xlu0 %483
      %v485 = vlaneseq
      %v486 = vshrl.u32 %v485, 7
      %v487 = vsub.s32 7, %v486
      %v488 = vrot.slane %v329, %v487
      %490 = vbcast.lane.b32.xlu0 %v488, 256
      %v491 = vpop.permute.xlu0 %490
      %v492 = vlaneseq
      %v493 = vshrl.u32 %v492, 7
      %v494 = vsub.s32 0, %v493
      %v495 = vrot.slane %v330, %v494
      %497 = vbcast.lane.b32.xlu0 %v495, 256
      %v498 = vpop.permute.xlu0 %497
      %v499 = vlaneseq
      %v500 = vshrl.u32 %v499, 7
      %v501 = vsub.s32 1, %v500
      %v502 = vrot.slane %v330, %v501
      %504 = vbcast.lane.b32.xlu0 %v502, 256
      %v505 = vpop.permute.xlu0 %504
      %v506 = vlaneseq
      %v507 = vshrl.u32 %v506, 7
      %v508 = vsub.s32 2, %v507
      %v509 = vrot.slane %v330, %v508
      %511 = vbcast.lane.b32.xlu0 %v509, 256
      %v512 = vpop.permute.xlu0 %511
      %v513 = vlaneseq
      %v514 = vshrl.u32 %v513, 7
      %v515 = vsub.s32 3, %v514
      %v516 = vrot.slane %v330, %v515
      %518 = vbcast.lane.b32.xlu0 %v516, 256
      %v519 = vpop.permute.xlu0 %518
      %v520 = vlaneseq
      %v521 = vshrl.u32 %v520, 7
      %v522 = vsub.s32 4, %v521
      %v523 = vrot.slane %v330, %v522
      %525 = vbcast.lane.b32.xlu0 %v523, 256
      %v526 = vpop.permute.xlu0 %525
      %v527 = vlaneseq
      %v528 = vshrl.u32 %v527, 7
      %v529 = vsub.s32 5, %v528
      %v530 = vrot.slane %v330, %v529
      %532 = vbcast.lane.b32.xlu0 %v530, 256
      %v533 = vpop.permute.xlu0 %532
      %v534 = vlaneseq
      %v535 = vshrl.u32 %v534, 7
      %v536 = vsub.s32 6, %v535
      %v537 = vrot.slane %v330, %v536
      %539 = vbcast.lane.b32.xlu0 %v537, 256
      %v540 = vpop.permute.xlu0 %539
      %v541 = vlaneseq
      %v542 = vshrl.u32 %v541, 7
      %v543 = vsub.s32 7, %v542
      %v544 = vrot.slane %v330, %v543
      %546 = vbcast.lane.b32.xlu0 %v544, 256
      %v547 = vpop.permute.xlu0 %546
      %v548 = vlaneseq
      %v549 = vshrl.u32 %v548, 7
      %v550 = vsub.s32 0, %v549
      %v551 = vrot.slane %v331, %v550
      %553 = vbcast.lane.b32.xlu0 %v551, 256
      %v554 = vpop.permute.xlu0 %553
      %v555 = vlaneseq
      %v556 = vshrl.u32 %v555, 7
      %v557 = vsub.s32 1, %v556
      %v558 = vrot.slane %v331, %v557
      %560 = vbcast.lane.b32.xlu0 %v558, 256
      %v561 = vpop.permute.xlu0 %560
      %v562 = vlaneseq
      %v563 = vshrl.u32 %v562, 7
      %v564 = vsub.s32 2, %v563
      %v565 = vrot.slane %v331, %v564
      %567 = vbcast.lane.b32.xlu0 %v565, 256
      %v568 = vpop.permute.xlu0 %567
      %v569 = vlaneseq
      %v570 = vshrl.u32 %v569, 7
      %v571 = vsub.s32 3, %v570
      %v572 = vrot.slane %v331, %v571
      %574 = vbcast.lane.b32.xlu0 %v572, 256
      %v575 = vpop.permute.xlu0 %574
      %v576 = vlaneseq
      %v577 = vshrl.u32 %v576, 7
      %v578 = vsub.s32 4, %v577
      %v579 = vrot.slane %v331, %v578
      %581 = vbcast.lane.b32.xlu0 %v579, 256
      %v582 = vpop.permute.xlu0 %581
      %v583 = vlaneseq
      %v584 = vshrl.u32 %v583, 7
      %v585 = vsub.s32 5, %v584
      %v586 = vrot.slane %v331, %v585
      %588 = vbcast.lane.b32.xlu0 %v586, 256
      %v589 = vpop.permute.xlu0 %588
      %v590 = vlaneseq
      %v591 = vshrl.u32 %v590, 7
      %v592 = vsub.s32 6, %v591
      %v593 = vrot.slane %v331, %v592
      %595 = vbcast.lane.b32.xlu0 %v593, 256
      %v596 = vpop.permute.xlu0 %595
      %v597 = vlaneseq
      %v598 = vshrl.u32 %v597, 7
      %v599 = vsub.s32 7, %v598
      %v600 = vrot.slane %v331, %v599
      %602 = vbcast.lane.b32.xlu0 %v600, 256
      %v603 = vpop.permute.xlu0 %602
      %v636 = vmul.f32 %v374, %v386
      %v637 = vmul.f32 %v374, %v393
      %v638 = vmul.f32 %v374, %v400
      %v639 = vmul.f32 %v374, %v407
      %v640 = vmul.f32 %v374, %v414
      %v641 = vmul.f32 %v374, %v421
      %v642 = vmul.f32 %v374, %v428
      %v643 = vmul.f32 %v374, %v435
      %v644 = vmul.f32 %v374, %v442
      %v645 = vmul.f32 %v374, %v449
      %v646 = vmul.f32 %v374, %v456
      %v647 = vmul.f32 %v374, %v463
      %v648 = vmul.f32 %v374, %v470
      %v649 = vmul.f32 %v374, %v477
      %v650 = vmul.f32 %v374, %v484
      %v651 = vmul.f32 %v374, %v491
      %v652 = vmul.f32 %v374, %v498
      %v653 = vmul.f32 %v374, %v505
      %v654 = vmul.f32 %v374, %v512
      %v655 = vmul.f32 %v374, %v519
      %v656 = vmul.f32 %v374, %v526
      %v657 = vmul.f32 %v374, %v533
      %v658 = vmul.f32 %v374, %v540
      %v659 = vmul.f32 %v374, %v547
      %v660 = vmul.f32 %v374, %v554
      %v661 = vmul.f32 %v374, %v561
      %v662 = vmul.f32 %v374, %v568
      %v663 = vmul.f32 %v374, %v575
      %v664 = vmul.f32 %v374, %v582
      %v665 = vmul.f32 %v374, %v589
      %v666 = vmul.f32 %v374, %v596
      %v667 = vmul.f32 %v374, %v603
      %v668 = vmul.f32 %v375, %v386
      %v669 = vmul.f32 %v375, %v393
      %v670 = vmul.f32 %v375, %v400
      %v671 = vmul.f32 %v375, %v407
      %v672 = vmul.f32 %v375, %v414
      %v673 = vmul.f32 %v375, %v421
      %v674 = vmul.f32 %v375, %v428
      %v675 = vmul.f32 %v375, %v435
      %v676 = vmul.f32 %v375, %v442
      %v677 = vmul.f32 %v375, %v449
      %v678 = vmul.f32 %v375, %v456
      %v679 = vmul.f32 %v375, %v463
      %v680 = vmul.f32 %v375, %v470
      %v681 = vmul.f32 %v375, %v477
      %v682 = vmul.f32 %v375, %v484
      %v683 = vmul.f32 %v375, %v491
      %v684 = vmul.f32 %v375, %v498
      %v685 = vmul.f32 %v375, %v505
      %v686 = vmul.f32 %v375, %v512
      %v687 = vmul.f32 %v375, %v519
      %v688 = vmul.f32 %v375, %v526
      %v689 = vmul.f32 %v375, %v533
      %v690 = vmul.f32 %v375, %v540
      %v691 = vmul.f32 %v375, %v547
      %v692 = vmul.f32 %v375, %v554
      %v693 = vmul.f32 %v375, %v561
      %v694 = vmul.f32 %v375, %v568
      %v695 = vmul.f32 %v375, %v575
      %v696 = vmul.f32 %v375, %v582
      %v697 = vmul.f32 %v375, %v589
      %v698 = vmul.f32 %v375, %v596
      %v699 = vmul.f32 %v375, %v603
      %764 = vset.pattern.permute.xlu0 0
      %765 = vperm.xlu0 %764, %v636
      %v766 = vpop.permute.xlu0 %765
      %767 = vset.pattern.permute.xlu0 0
      %768 = vperm.xlu0 %767, %v637
      %v769 = vpop.permute.xlu0 %768
      %770 = vset.pattern.permute.xlu0 0
      %771 = vperm.xlu0 %770, %v638
      %v772 = vpop.permute.xlu0 %771
      %773 = vset.pattern.permute.xlu0 0
      %774 = vperm.xlu0 %773, %v639
      %v775 = vpop.permute.xlu0 %774
      %776 = vset.pattern.permute.xlu0 0
      %777 = vperm.xlu0 %776, %v640
      %v778 = vpop.permute.xlu0 %777
      %779 = vset.pattern.permute.xlu0 0
      %780 = vperm.xlu0 %779, %v641
      %v781 = vpop.permute.xlu0 %780
      %782 = vset.pattern.permute.xlu0 0
      %783 = vperm.xlu0 %782, %v642
      %v784 = vpop.permute.xlu0 %783
      %785 = vset.pattern.permute.xlu0 0
      %786 = vperm.xlu0 %785, %v643
      %v787 = vpop.permute.xlu0 %786
      %788 = vset.pattern.permute.xlu0 0
      %789 = vperm.xlu0 %788, %v644
      %v790 = vpop.permute.xlu0 %789
      %791 = vset.pattern.permute.xlu0 0
      %792 = vperm.xlu0 %791, %v645
      %v793 = vpop.permute.xlu0 %792
      %794 = vset.pattern.permute.xlu0 0
      %795 = vperm.xlu0 %794, %v646
      %v796 = vpop.permute.xlu0 %795
      %797 = vset.pattern.permute.xlu0 0
      %798 = vperm.xlu0 %797, %v647
      %v799 = vpop.permute.xlu0 %798
      %800 = vset.pattern.permute.xlu0 0
      %801 = vperm.xlu0 %800, %v648
      %v802 = vpop.permute.xlu0 %801
      %803 = vset.pattern.permute.xlu0 0
      %804 = vperm.xlu0 %803, %v649
      %v805 = vpop.permute.xlu0 %804
      %806 = vset.pattern.permute.xlu0 0
      %807 = vperm.xlu0 %806, %v650
      %v808 = vpop.permute.xlu0 %807
      %809 = vset.pattern.permute.xlu0 0
      %810 = vperm.xlu0 %809, %v651
      %v811 = vpop.permute.xlu0 %810
      %812 = vset.pattern.permute.xlu0 0
      %813 = vperm.xlu0 %812, %v652
      %v814 = vpop.permute.xlu0 %813
      %815 = vset.pattern.permute.xlu0 0
      %816 = vperm.xlu0 %815, %v653
      %v817 = vpop.permute.xlu0 %816
      %818 = vset.pattern.permute.xlu0 0
      %819 = vperm.xlu0 %818, %v654
      %v820 = vpop.permute.xlu0 %819
      %821 = vset.pattern.permute.xlu0 0
      %822 = vperm.xlu0 %821, %v655
      %v823 = vpop.permute.xlu0 %822
      %824 = vset.pattern.permute.xlu0 0
      %825 = vperm.xlu0 %824, %v656
      %v826 = vpop.permute.xlu0 %825
      %827 = vset.pattern.permute.xlu0 0
      %828 = vperm.xlu0 %827, %v657
      %v829 = vpop.permute.xlu0 %828
      %830 = vset.pattern.permute.xlu0 0
      %831 = vperm.xlu0 %830, %v658
      %v832 = vpop.permute.xlu0 %831
      %833 = vset.pattern.permute.xlu0 0
      %834 = vperm.xlu0 %833, %v659
      %v835 = vpop.permute.xlu0 %834
      %836 = vset.pattern.permute.xlu0 0
      %837 = vperm.xlu0 %836, %v660
      %v838 = vpop.permute.xlu0 %837
      %839 = vset.pattern.permute.xlu0 0
      %840 = vperm.xlu0 %839, %v661
      %v841 = vpop.permute.xlu0 %840
      %842 = vset.pattern.permute.xlu0 0
      %843 = vperm.xlu0 %842, %v662
      %v844 = vpop.permute.xlu0 %843
      %845 = vset.pattern.permute.xlu0 0
      %846 = vperm.xlu0 %845, %v663
      %v847 = vpop.permute.xlu0 %846
      %848 = vset.pattern.permute.xlu0 0
      %849 = vperm.xlu0 %848, %v664
      %v850 = vpop.permute.xlu0 %849
      %851 = vset.pattern.permute.xlu0 0
      %852 = vperm.xlu0 %851, %v665
      %v853 = vpop.permute.xlu0 %852
      %854 = vset.pattern.permute.xlu0 0
      %855 = vperm.xlu0 %854, %v666
      %v856 = vpop.permute.xlu0 %855
      %857 = vset.pattern.permute.xlu0 0
      %858 = vperm.xlu0 %857, %v667
      %v859 = vpop.permute.xlu0 %858
      %860 = vset.pattern.permute.xlu0 0
      %861 = vperm.xlu0 %860, %v668
      %v862 = vpop.permute.xlu0 %861
      %863 = vset.pattern.permute.xlu0 0
      %864 = vperm.xlu0 %863, %v669
      %v865 = vpop.permute.xlu0 %864
      %866 = vset.pattern.permute.xlu0 0
      %867 = vperm.xlu0 %866, %v670
      %v868 = vpop.permute.xlu0 %867
      %869 = vset.pattern.permute.xlu0 0
      %870 = vperm.xlu0 %869, %v671
      %v871 = vpop.permute.xlu0 %870
      %872 = vset.pattern.permute.xlu0 0
      %873 = vperm.xlu0 %872, %v672
      %v874 = vpop.permute.xlu0 %873
      %875 = vset.pattern.permute.xlu0 0
      %876 = vperm.xlu0 %875, %v673
      %v877 = vpop.permute.xlu0 %876
      %878 = vset.pattern.permute.xlu0 0
      %879 = vperm.xlu0 %878, %v674
      %v880 = vpop.permute.xlu0 %879
      %881 = vset.pattern.permute.xlu0 0
      %882 = vperm.xlu0 %881, %v675
      %v883 = vpop.permute.xlu0 %882
      %884 = vset.pattern.permute.xlu0 0
      %885 = vperm.xlu0 %884, %v676
      %v886 = vpop.permute.xlu0 %885
      %887 = vset.pattern.permute.xlu0 0
      %888 = vperm.xlu0 %887, %v677
      %v889 = vpop.permute.xlu0 %888
      %890 = vset.pattern.permute.xlu0 0
      %891 = vperm.xlu0 %890, %v678
      %v892 = vpop.permute.xlu0 %891
      %893 = vset.pattern.permute.xlu0 0
      %894 = vperm.xlu0 %893, %v679
      %v895 = vpop.permute.xlu0 %894
      %896 = vset.pattern.permute.xlu0 0
      %897 = vperm.xlu0 %896, %v680
      %v898 = vpop.permute.xlu0 %897
      %899 = vset.pattern.permute.xlu0 0
      %900 = vperm.xlu0 %899, %v681
      %v901 = vpop.permute.xlu0 %900
      %902 = vset.pattern.permute.xlu0 0
      %903 = vperm.xlu0 %902, %v682
      %v904 = vpop.permute.xlu0 %903
      %905 = vset.pattern.permute.xlu0 0
      %906 = vperm.xlu0 %905, %v683
      %v907 = vpop.permute.xlu0 %906
      %908 = vset.pattern.permute.xlu0 0
      %909 = vperm.xlu0 %908, %v684
      %v910 = vpop.permute.xlu0 %909
      %911 = vset.pattern.permute.xlu0 0
      %912 = vperm.xlu0 %911, %v685
      %v913 = vpop.permute.xlu0 %912
      %914 = vset.pattern.permute.xlu0 0
      %915 = vperm.xlu0 %914, %v686
      %v916 = vpop.permute.xlu0 %915
      %917 = vset.pattern.permute.xlu0 0
      %918 = vperm.xlu0 %917, %v687
      %v919 = vpop.permute.xlu0 %918
      %920 = vset.pattern.permute.xlu0 0
      %921 = vperm.xlu0 %920, %v688
      %v922 = vpop.permute.xlu0 %921
      %923 = vset.pattern.permute.xlu0 0
      %924 = vperm.xlu0 %923, %v689
      %v925 = vpop.permute.xlu0 %924
      %926 = vset.pattern.permute.xlu0 0
      %927 = vperm.xlu0 %926, %v690
      %v928 = vpop.permute.xlu0 %927
      %929 = vset.pattern.permute.xlu0 0
      %930 = vperm.xlu0 %929, %v691
      %v931 = vpop.permute.xlu0 %930
      %932 = vset.pattern.permute.xlu0 0
      %933 = vperm.xlu0 %932, %v692
      %v934 = vpop.permute.xlu0 %933
      %935 = vset.pattern.permute.xlu0 0
      %936 = vperm.xlu0 %935, %v693
      %v937 = vpop.permute.xlu0 %936
      %938 = vset.pattern.permute.xlu0 0
      %939 = vperm.xlu0 %938, %v694
      %v940 = vpop.permute.xlu0 %939
      %941 = vset.pattern.permute.xlu0 0
      %942 = vperm.xlu0 %941, %v695
      %v943 = vpop.permute.xlu0 %942
      %944 = vset.pattern.permute.xlu0 0
      %945 = vperm.xlu0 %944, %v696
      %v946 = vpop.permute.xlu0 %945
      %947 = vset.pattern.permute.xlu0 0
      %948 = vperm.xlu0 %947, %v697
      %v949 = vpop.permute.xlu0 %948
      %950 = vset.pattern.permute.xlu0 0
      %951 = vperm.xlu0 %950, %v698
      %v952 = vpop.permute.xlu0 %951
      %953 = vset.pattern.permute.xlu0 0
      %954 = vperm.xlu0 %953, %v699
      %v955 = vpop.permute.xlu0 %954
      %v956 = vlaneseq
      %v957 = vand.u32 %v956, 127
      %v958 = vlaneseq
      %v959 = vshrl.u32 %v958, 7
      %v960 = vsub.s32 %v957, %v959
      %v961 = vrot.slane %v766, %v960
      %v962 = vlaneseq
      %v963 = vshrl.u32 %v962, 7
      %v964 = vsub.s32 %v957, %v963
      %v965 = vrot.slane %v769, %v964
      %v966 = vlaneseq
      %v967 = vshrl.u32 %v966, 7
      %v968 = vsub.s32 %v957, %v967
      %v969 = vrot.slane %v772, %v968
      %v970 = vlaneseq
      %v971 = vshrl.u32 %v970, 7
      %v972 = vsub.s32 %v957, %v971
      %v973 = vrot.slane %v775, %v972
      %v974 = vlaneseq
      %v975 = vshrl.u32 %v974, 7
      %v976 = vsub.s32 %v957, %v975
      %v977 = vrot.slane %v778, %v976
      %v978 = vlaneseq
      %v979 = vshrl.u32 %v978, 7
      %v980 = vsub.s32 %v957, %v979
      %v981 = vrot.slane %v781, %v980
      %v982 = vlaneseq
      %v983 = vshrl.u32 %v982, 7
      %v984 = vsub.s32 %v957, %v983
      %v985 = vrot.slane %v784, %v984
      %v986 = vlaneseq
      %v987 = vshrl.u32 %v986, 7
      %v988 = vsub.s32 %v957, %v987
      %v989 = vrot.slane %v787, %v988
      %v990 = vlaneseq
      %v991 = vshrl.u32 %v990, 7
      %v992 = vsub.s32 %v957, %v991
      %v993 = vrot.slane %v790, %v992
      %v994 = vlaneseq
      %v995 = vshrl.u32 %v994, 7
      %v996 = vsub.s32 %v957, %v995
      %v997 = vrot.slane %v793, %v996
      %v998 = vlaneseq
      %v999 = vshrl.u32 %v998, 7
      %v1000 = vsub.s32 %v957, %v999
      %v1001 = vrot.slane %v796, %v1000
      %v1002 = vlaneseq
      %v1003 = vshrl.u32 %v1002, 7
      %v1004 = vsub.s32 %v957, %v1003
      %v1005 = vrot.slane %v799, %v1004
      %v1006 = vlaneseq
      %v1007 = vshrl.u32 %v1006, 7
      %v1008 = vsub.s32 %v957, %v1007
      %v1009 = vrot.slane %v802, %v1008
      %v1010 = vlaneseq
      %v1011 = vshrl.u32 %v1010, 7
      %v1012 = vsub.s32 %v957, %v1011
      %v1013 = vrot.slane %v805, %v1012
      %v1014 = vlaneseq
      %v1015 = vshrl.u32 %v1014, 7
      %v1016 = vsub.s32 %v957, %v1015
      %v1017 = vrot.slane %v808, %v1016
      %v1018 = vlaneseq
      %v1019 = vshrl.u32 %v1018, 7
      %v1020 = vsub.s32 %v957, %v1019
      %v1021 = vrot.slane %v811, %v1020
      %v1022 = vlaneseq
      %v1023 = vshrl.u32 %v1022, 7
      %v1024 = vsub.s32 %v957, %v1023
      %v1025 = vrot.slane %v814, %v1024
      %v1026 = vlaneseq
      %v1027 = vshrl.u32 %v1026, 7
      %v1028 = vsub.s32 %v957, %v1027
      %v1029 = vrot.slane %v817, %v1028
      %v1030 = vlaneseq
      %v1031 = vshrl.u32 %v1030, 7
      %v1032 = vsub.s32 %v957, %v1031
      %v1033 = vrot.slane %v820, %v1032
      %v1034 = vlaneseq
      %v1035 = vshrl.u32 %v1034, 7
      %v1036 = vsub.s32 %v957, %v1035
      %v1037 = vrot.slane %v823, %v1036
      %v1038 = vlaneseq
      %v1039 = vshrl.u32 %v1038, 7
      %v1040 = vsub.s32 %v957, %v1039
      %v1041 = vrot.slane %v826, %v1040
      %v1042 = vlaneseq
      %v1043 = vshrl.u32 %v1042, 7
      %v1044 = vsub.s32 %v957, %v1043
      %v1045 = vrot.slane %v829, %v1044
      %v1046 = vlaneseq
      %v1047 = vshrl.u32 %v1046, 7
      %v1048 = vsub.s32 %v957, %v1047
      %v1049 = vrot.slane %v832, %v1048
      %v1050 = vlaneseq
      %v1051 = vshrl.u32 %v1050, 7
      %v1052 = vsub.s32 %v957, %v1051
      %v1053 = vrot.slane %v835, %v1052
      %v1054 = vlaneseq
      %v1055 = vshrl.u32 %v1054, 7
      %v1056 = vsub.s32 %v957, %v1055
      %v1057 = vrot.slane %v838, %v1056
      %v1058 = vlaneseq
      %v1059 = vshrl.u32 %v1058, 7
      %v1060 = vsub.s32 %v957, %v1059
      %v1061 = vrot.slane %v841, %v1060
      %v1062 = vlaneseq
      %v1063 = vshrl.u32 %v1062, 7
      %v1064 = vsub.s32 %v957, %v1063
      %v1065 = vrot.slane %v844, %v1064
      %v1066 = vlaneseq
      %v1067 = vshrl.u32 %v1066, 7
      %v1068 = vsub.s32 %v957, %v1067
      %v1069 = vrot.slane %v847, %v1068
      %v1070 = vlaneseq
      %v1071 = vshrl.u32 %v1070, 7
      %v1072 = vsub.s32 %v957, %v1071
      %v1073 = vrot.slane %v850, %v1072
      %v1074 = vlaneseq
      %v1075 = vshrl.u32 %v1074, 7
      %v1076 = vsub.s32 %v957, %v1075
      %v1077 = vrot.slane %v853, %v1076
      %v1078 = vlaneseq
      %v1079 = vshrl.u32 %v1078, 7
      %v1080 = vsub.s32 %v957, %v1079
      %v1081 = vrot.slane %v856, %v1080
      %v1082 = vlaneseq
      %v1083 = vshrl.u32 %v1082, 7
      %v1084 = vsub.s32 %v957, %v1083
      %v1085 = vrot.slane %v859, %v1084
      %v1086 = vlaneseq
      %v1087 = vshrl.u32 %v1086, 7
      %v1088 = vsub.s32 %v957, %v1087
      %v1089 = vrot.slane %v862, %v1088
      %v1090 = vlaneseq
      %v1091 = vshrl.u32 %v1090, 7
      %v1092 = vsub.s32 %v957, %v1091
      %v1093 = vrot.slane %v865, %v1092
      %v1094 = vlaneseq
      %v1095 = vshrl.u32 %v1094, 7
      %v1096 = vsub.s32 %v957, %v1095
      %v1097 = vrot.slane %v868, %v1096
      %v1098 = vlaneseq
      %v1099 = vshrl.u32 %v1098, 7
      %v1100 = vsub.s32 %v957, %v1099
      %v1101 = vrot.slane %v871, %v1100
      %v1102 = vlaneseq
      %v1103 = vshrl.u32 %v1102, 7
      %v1104 = vsub.s32 %v957, %v1103
      %v1105 = vrot.slane %v874, %v1104
      %v1106 = vlaneseq
      %v1107 = vshrl.u32 %v1106, 7
      %v1108 = vsub.s32 %v957, %v1107
      %v1109 = vrot.slane %v877, %v1108
      %v1110 = vlaneseq
      %v1111 = vshrl.u32 %v1110, 7
      %v1112 = vsub.s32 %v957, %v1111
      %v1113 = vrot.slane %v880, %v1112
      %v1114 = vlaneseq
      %v1115 = vshrl.u32 %v1114, 7
      %v1116 = vsub.s32 %v957, %v1115
      %v1117 = vrot.slane %v883, %v1116
      %v1118 = vlaneseq
      %v1119 = vshrl.u32 %v1118, 7
      %v1120 = vsub.s32 %v957, %v1119
      %v1121 = vrot.slane %v886, %v1120
      %v1122 = vlaneseq
      %v1123 = vshrl.u32 %v1122, 7
      %v1124 = vsub.s32 %v957, %v1123
      %v1125 = vrot.slane %v889, %v1124
      %v1126 = vlaneseq
      %v1127 = vshrl.u32 %v1126, 7
      %v1128 = vsub.s32 %v957, %v1127
      %v1129 = vrot.slane %v892, %v1128
      %v1130 = vlaneseq
      %v1131 = vshrl.u32 %v1130, 7
      %v1132 = vsub.s32 %v957, %v1131
      %v1133 = vrot.slane %v895, %v1132
      %v1134 = vlaneseq
      %v1135 = vshrl.u32 %v1134, 7
      %v1136 = vsub.s32 %v957, %v1135
      %v1137 = vrot.slane %v898, %v1136
      %v1138 = vlaneseq
      %v1139 = vshrl.u32 %v1138, 7
      %v1140 = vsub.s32 %v957, %v1139
      %v1141 = vrot.slane %v901, %v1140
      %v1142 = vlaneseq
      %v1143 = vshrl.u32 %v1142, 7
      %v1144 = vsub.s32 %v957, %v1143
      %v1145 = vrot.slane %v904, %v1144
      %v1146 = vlaneseq
      %v1147 = vshrl.u32 %v1146, 7
      %v1148 = vsub.s32 %v957, %v1147
      %v1149 = vrot.slane %v907, %v1148
      %v1150 = vlaneseq
      %v1151 = vshrl.u32 %v1150, 7
      %v1152 = vsub.s32 %v957, %v1151
      %v1153 = vrot.slane %v910, %v1152
      %v1154 = vlaneseq
      %v1155 = vshrl.u32 %v1154, 7
      %v1156 = vsub.s32 %v957, %v1155
      %v1157 = vrot.slane %v913, %v1156
      %v1158 = vlaneseq
      %v1159 = vshrl.u32 %v1158, 7
      %v1160 = vsub.s32 %v957, %v1159
      %v1161 = vrot.slane %v916, %v1160
      %v1162 = vlaneseq
      %v1163 = vshrl.u32 %v1162, 7
      %v1164 = vsub.s32 %v957, %v1163
      %v1165 = vrot.slane %v919, %v1164
      %v1166 = vlaneseq
      %v1167 = vshrl.u32 %v1166, 7
      %v1168 = vsub.s32 %v957, %v1167
      %v1169 = vrot.slane %v922, %v1168
      %v1170 = vlaneseq
      %v1171 = vshrl.u32 %v1170, 7
      %v1172 = vsub.s32 %v957, %v1171
      %v1173 = vrot.slane %v925, %v1172
      %v1174 = vlaneseq
      %v1175 = vshrl.u32 %v1174, 7
      %v1176 = vsub.s32 %v957, %v1175
      %v1177 = vrot.slane %v928, %v1176
      %v1178 = vlaneseq
      %v1179 = vshrl.u32 %v1178, 7
      %v1180 = vsub.s32 %v957, %v1179
      %v1181 = vrot.slane %v931, %v1180
      %v1182 = vlaneseq
      %v1183 = vshrl.u32 %v1182, 7
      %v1184 = vsub.s32 %v957, %v1183
      %v1185 = vrot.slane %v934, %v1184
      %v1186 = vlaneseq
      %v1187 = vshrl.u32 %v1186, 7
      %v1188 = vsub.s32 %v957, %v1187
      %v1189 = vrot.slane %v937, %v1188
      %v1190 = vlaneseq
      %v1191 = vshrl.u32 %v1190, 7
      %v1192 = vsub.s32 %v957, %v1191
      %v1193 = vrot.slane %v940, %v1192
      %v1194 = vlaneseq
      %v1195 = vshrl.u32 %v1194, 7
      %v1196 = vsub.s32 %v957, %v1195
      %v1197 = vrot.slane %v943, %v1196
      %v1198 = vlaneseq
      %v1199 = vshrl.u32 %v1198, 7
      %v1200 = vsub.s32 %v957, %v1199
      %v1201 = vrot.slane %v946, %v1200
      %v1202 = vlaneseq
      %v1203 = vshrl.u32 %v1202, 7
      %v1204 = vsub.s32 %v957, %v1203
      %v1205 = vrot.slane %v949, %v1204
      %v1206 = vlaneseq
      %v1207 = vshrl.u32 %v1206, 7
      %v1208 = vsub.s32 %v957, %v1207
      %v1209 = vrot.slane %v952, %v1208
      %v1210 = vlaneseq
      %v1211 = vshrl.u32 %v1210, 7
      %v1212 = vsub.s32 %v957, %v1211
      %v1213 = vrot.slane %v955, %v1212
      %vm1214 = vcmask 1041409
      %v1215 = vsel %vm1214, %v965, %v961
      %vm1216 = vcmask 1042434
      %v1217 = vsel %vm1216, %v969, %v1215
      %vm1218 = vcmask 1043459
      %v1219 = vsel %vm1218, %v973, %v1217
      %vm1220 = vcmask 1044484
      %v1221 = vsel %vm1220, %v977, %v1219
      %vm1222 = vcmask 1045509
      %v1223 = vsel %vm1222, %v981, %v1221
      %vm1224 = vcmask 1046534
      %v1225 = vsel %vm1224, %v985, %v1223
      %vm1226 = vcmask 1047559
      %v1227 = vsel %vm1226, %v989, %v1225
      %v1228 = vsel %vm1214, %v997, %v993
      %v1229 = vsel %vm1216, %v1001, %v1228
      %v1230 = vsel %vm1218, %v1005, %v1229
      %v1231 = vsel %vm1220, %v1009, %v1230
      %v1232 = vsel %vm1222, %v1013, %v1231
      %v1233 = vsel %vm1224, %v1017, %v1232
      %v1234 = vsel %vm1226, %v1021, %v1233
      %v1235 = vsel %vm1214, %v1029, %v1025
      %v1236 = vsel %vm1216, %v1033, %v1235
      %v1237 = vsel %vm1218, %v1037, %v1236
      %v1238 = vsel %vm1220, %v1041, %v1237
      %v1239 = vsel %vm1222, %v1045, %v1238
      %v1240 = vsel %vm1224, %v1049, %v1239
      %v1241 = vsel %vm1226, %v1053, %v1240
      %v1242 = vsel %vm1214, %v1061, %v1057
      %v1243 = vsel %vm1216, %v1065, %v1242
      %v1244 = vsel %vm1218, %v1069, %v1243
      %v1245 = vsel %vm1220, %v1073, %v1244
      %v1246 = vsel %vm1222, %v1077, %v1245
      %v1247 = vsel %vm1224, %v1081, %v1246
      %v1248 = vsel %vm1226, %v1085, %v1247
      %v1249 = vsel %vm1214, %v1093, %v1089
      %v1250 = vsel %vm1216, %v1097, %v1249
      %v1251 = vsel %vm1218, %v1101, %v1250
      %v1252 = vsel %vm1220, %v1105, %v1251
      %v1253 = vsel %vm1222, %v1109, %v1252
      %v1254 = vsel %vm1224, %v1113, %v1253
      %v1255 = vsel %vm1226, %v1117, %v1254
      %v1256 = vsel %vm1214, %v1125, %v1121
      %v1257 = vsel %vm1216, %v1129, %v1256
      %v1258 = vsel %vm1218, %v1133, %v1257
      %v1259 = vsel %vm1220, %v1137, %v1258
      %v1260 = vsel %vm1222, %v1141, %v1259
      %v1261 = vsel %vm1224, %v1145, %v1260
      %v1262 = vsel %vm1226, %v1149, %v1261
      %v1263 = vsel %vm1214, %v1157, %v1153
      %v1264 = vsel %vm1216, %v1161, %v1263
      %v1265 = vsel %vm1218, %v1165, %v1264
      %v1266 = vsel %vm1220, %v1169, %v1265
      %v1267 = vsel %vm1222, %v1173, %v1266
      %v1268 = vsel %vm1224, %v1177, %v1267
      %v1269 = vsel %vm1226, %v1181, %v1268
      %v1270 = vsel %vm1214, %v1189, %v1185
      %v1271 = vsel %vm1216, %v1193, %v1270
      %v1272 = vsel %vm1218, %v1197, %v1271
      %v1273 = vsel %vm1220, %v1201, %v1272
      %v1274 = vsel %vm1222, %v1205, %v1273
      %v1275 = vsel %vm1224, %v1209, %v1274
      %v1276 = vsel %vm1226, %v1213, %v1275
      %vm1285 = vcmask 15360
      %v1286 = vsel %vm1285, %v1227, 0.0
      %1287 = vadd.xlane.f32.xlu0 %v1286
      %v1288 = vpop.xlane.xlu0 %1287
      %v1289 = vsel %vm1285, %v1234, 0.0
      %1290 = vadd.xlane.f32.xlu0 %v1289
      %v1291 = vpop.xlane.xlu0 %1290
      %v1292 = vsel %vm1285, %v1241, 0.0
      %1293 = vadd.xlane.f32.xlu0 %v1292
      %v1294 = vpop.xlane.xlu0 %1293
      %v1295 = vsel %vm1285, %v1248, 0.0
      %1296 = vadd.xlane.f32.xlu0 %v1295
      %v1297 = vpop.xlane.xlu0 %1296
      %v1298 = vsel %vm1285, %v1255, 0.0
      %1299 = vadd.xlane.f32.xlu0 %v1298
      %v1300 = vpop.xlane.xlu0 %1299
      %v1301 = vsel %vm1285, %v1262, 0.0
      %1302 = vadd.xlane.f32.xlu0 %v1301
      %v1303 = vpop.xlane.xlu0 %1302
      %v1304 = vsel %vm1285, %v1269, 0.0
      %1305 = vadd.xlane.f32.xlu0 %v1304
      %v1306 = vpop.xlane.xlu0 %1305
      %v1307 = vsel %vm1285, %v1276, 0.0
      %1308 = vadd.xlane.f32.xlu0 %v1307
      %v1309 = vpop.xlane.xlu0 %1308
      %v1310 = vadd.f32 %v1288, %v1300
      %v1311 = vadd.f32 %v1291, %v1303
      %v1312 = vadd.f32 %v1294, %v1306
      %v1313 = vadd.f32 %v1297, %v1309
      %v1314 = vxor.u32 %v1310, 2147483648
      %v1315 = vxor.u32 %v1311, 2147483648
      %v1316 = vxor.u32 %v1312, 2147483648
      %v1317 = vxor.u32 %v1313, 2147483648
      %v1318 = vmul.f32 %v1314, 1.442695
      %v1319 = vpow.pop %v1318
      %v1320 = vmul.f32 %v1315, 1.442695
      %v1321 = vpow.pop %v1320
      %v1322 = vmul.f32 %v1316, 1.442695
      %v1323 = vpow.pop %v1322
      %v1324 = vmul.f32 %v1317, 1.442695
      %v1325 = vpow.pop %v1324
      %v1326 = vadd.f32 %v1319, 1.0
      %v1327 = vadd.f32 %v1321, 1.0
      %v1328 = vadd.f32 %v1323, 1.0
      %v1329 = vadd.f32 %v1325, 1.0
      %v1330 = vrcp.pop %v1326
      %v1331 = vmul.f32 1.0, %v1330
      %v1332 = vrcp.pop %v1327
      %v1333 = vmul.f32 1.0, %v1332
      %v1334 = vrcp.pop %v1328
      %v1335 = vmul.f32 1.0, %v1334
      %v1336 = vrcp.pop %v1329
      %v1337 = vmul.f32 1.0, %v1336
      %v1342 = vlaneseq
      %v1343 = vshrl.u32 %v1342, 7
      %v1344 = vsub.s32 %v957, %v1343
      %v1345 = vrot.slane %v1331, %v1344
      %v1346 = vadd.s32 %v957, 4294967288
      %v1347 = vlaneseq
      %v1348 = vshrl.u32 %v1347, 7
      %v1349 = vsub.s32 %v1346, %v1348
      %v1350 = vrot.slane %v1333, %v1349
      %vm1351 = vcmask 130112
      %v1352 = vsel %vm1351, %v1350, %v1345
      %v1353 = vadd.s32 %v957, 4294967280
      %v1354 = vlaneseq
      %v1355 = vshrl.u32 %v1354, 7
      %v1356 = vsub.s32 %v1353, %v1355
      %v1357 = vrot.slane %v1335, %v1356
      %vm1358 = vcmask 195712
      %v1359 = vsel %vm1358, %v1357, %v1352
      %v1360 = vadd.s32 %v957, 4294967272
      %v1361 = vlaneseq
      %v1362 = vshrl.u32 %v1361, 7
      %v1363 = vsub.s32 %v1360, %v1362
      %v1364 = vrot.slane %v1337, %v1363
      %vm1365 = vcmask 261312
      %v1366 = vsel %vm1365, %v1364, %v1359
      %v1367 = vsel %vm1216, %v1366, %v1366
      %v1368 = vsel %vm1218, %v1366, %v1367
      %v1369 = vsel %vm1220, %v1366, %v1368
      %v1370 = vsel %vm1222, %v1366, %v1369
      %v1371 = vsel %vm1224, %v1366, %v1370
      %v1372 = vsel %vm1226, %v1366, %v1371
      %v1375 = vmul.f32 %v211, %v1372
      %v1376 = vmul.f32 %v212, %v1372
      %v1377 = vmul.f32 %v213, %v1372
      %v1378 = vmul.f32 %v214, %v1372
      %v1379 = vmul.f32 %v215, %v1372
      %v1380 = vmul.f32 %v216, %v1372
      %v1381 = vmul.f32 %v217, %v1372
      %v1382 = vmul.f32 %v218, %v1372
      %v1383 = vmul.f32 %v219, %v1372
      %v1384 = vmul.f32 %v220, %v1372
      %v1385 = vmul.f32 %v221, %v1372
      %v1386 = vmul.f32 %v222, %v1372
      %v1387 = vmul.f32 %v223, %v1372
      %v1388 = vmul.f32 %v224, %v1372
      %v1389 = vmul.f32 %v225, %v1372
      %v1390 = vmul.f32 %v226, %v1372
      %v1391 = vmul.f32 %v227, %v1372
      %v1392 = vmul.f32 %v228, %v1372
      %v1393 = vmul.f32 %v229, %v1372
      %v1394 = vmul.f32 %v230, %v1368
      %1395 = vst.msk [vmem:[%s205] sm:$0xff] %vm231, %v1375
      %1396 = vst.msk [vmem:[%s205 + $0x8] sm:$0xff] %vm231, %v1376
      %1397 = vst.msk [vmem:[%s205 + $0x10] sm:$0xff] %vm231, %v1377
      %1398 = vst.msk [vmem:[%s205 + $0x18] sm:$0xff] %vm231, %v1378
      %1399 = vst.msk [vmem:[%s205 + $0x20] sm:$0xff] %vm231, %v1379
      %1400 = vst.msk [vmem:[%s205 + $0x28] sm:$0xff] %vm231, %v1380
      %1401 = vst.msk [vmem:[%s205 + $0x30] sm:$0xff] %vm231, %v1381
      %1402 = vst.msk [vmem:[%s205 + $0x38] sm:$0xff] %vm231, %v1382
      %1403 = vst.msk [vmem:[%s205 + $0x40] sm:$0xff] %vm231, %v1383
      %1404 = vst.msk [vmem:[%s205 + $0x48] sm:$0xff] %vm231, %v1384
      %1405 = vst.msk [vmem:[%s205 + $0x50] sm:$0xff] %vm231, %v1385
      %1406 = vst.msk [vmem:[%s205 + $0x58] sm:$0xff] %vm231, %v1386
      %1407 = vst.msk [vmem:[%s205 + $0x60] sm:$0xff] %vm231, %v1387
      %1408 = vst.msk [vmem:[%s205 + $0x68] sm:$0xff] %vm231, %v1388
      %1409 = vst.msk [vmem:[%s205 + $0x70] sm:$0xff] %vm231, %v1389
      %1410 = vst.msk [vmem:[%s205 + $0x78] sm:$0xff] %vm231, %v1390
      %1411 = vst.msk [vmem:[%s205 + $0x80] sm:$0xff] %vm231, %v1391
      %1412 = vst.msk [vmem:[%s205 + $0x88] sm:$0xff] %vm231, %v1392
      %1413 = vst.msk [vmem:[%s205 + $0x90] sm:$0xff] %vm231, %v1393
      %1414 = vst.msk [vmem:[%s205 + $0x98] sm:$0xf] %vm269, %v1394
      %v1415 = vsel %vm231, %v1375, 0.0
      %1416 = vadd.xlane.f32.xlu0 %v1415
      %v1417 = vpop.xlane.xlu0 %1416
      %v1418 = vsel %vm231, %v1376, 0.0
      %1419 = vadd.xlane.f32.xlu0 %v1418
      %v1420 = vpop.xlane.xlu0 %1419
      %v1421 = vsel %vm231, %v1377, 0.0
      %1422 = vadd.xlane.f32.xlu0 %v1421
      %v1423 = vpop.xlane.xlu0 %1422
      %v1424 = vsel %vm231, %v1378, 0.0
      %1425 = vadd.xlane.f32.xlu0 %v1424
      %v1426 = vpop.xlane.xlu0 %1425
      %v1427 = vsel %vm231, %v1379, 0.0
      %1428 = vadd.xlane.f32.xlu0 %v1427
      %v1429 = vpop.xlane.xlu0 %1428
      %v1430 = vsel %vm231, %v1380, 0.0
      %1431 = vadd.xlane.f32.xlu0 %v1430
      %v1432 = vpop.xlane.xlu0 %1431
      %v1433 = vsel %vm231, %v1381, 0.0
      %1434 = vadd.xlane.f32.xlu0 %v1433
      %v1435 = vpop.xlane.xlu0 %1434
      %v1436 = vsel %vm231, %v1382, 0.0
      %1437 = vadd.xlane.f32.xlu0 %v1436
      %v1438 = vpop.xlane.xlu0 %1437
      %v1439 = vsel %vm231, %v1383, 0.0
      %1440 = vadd.xlane.f32.xlu0 %v1439
      %v1441 = vpop.xlane.xlu0 %1440
      %v1442 = vsel %vm231, %v1384, 0.0
      %1443 = vadd.xlane.f32.xlu0 %v1442
      %v1444 = vpop.xlane.xlu0 %1443
      %v1445 = vsel %vm231, %v1385, 0.0
      %1446 = vadd.xlane.f32.xlu0 %v1445
      %v1447 = vpop.xlane.xlu0 %1446
      %v1448 = vsel %vm231, %v1386, 0.0
      %1449 = vadd.xlane.f32.xlu0 %v1448
      %v1450 = vpop.xlane.xlu0 %1449
      %v1451 = vsel %vm231, %v1387, 0.0
      %1452 = vadd.xlane.f32.xlu0 %v1451
      %v1453 = vpop.xlane.xlu0 %1452
      %v1454 = vsel %vm231, %v1388, 0.0
      %1455 = vadd.xlane.f32.xlu0 %v1454
      %v1456 = vpop.xlane.xlu0 %1455
      %v1457 = vsel %vm231, %v1389, 0.0
      %1458 = vadd.xlane.f32.xlu0 %v1457
      %v1459 = vpop.xlane.xlu0 %1458
      %v1460 = vsel %vm231, %v1390, 0.0
      %1461 = vadd.xlane.f32.xlu0 %v1460
      %v1462 = vpop.xlane.xlu0 %1461
      %v1463 = vsel %vm231, %v1391, 0.0
      %1464 = vadd.xlane.f32.xlu0 %v1463
      %v1465 = vpop.xlane.xlu0 %1464
      %v1466 = vsel %vm231, %v1392, 0.0
      %1467 = vadd.xlane.f32.xlu0 %v1466
      %v1468 = vpop.xlane.xlu0 %1467
      %v1469 = vsel %vm231, %v1393, 0.0
      %1470 = vadd.xlane.f32.xlu0 %v1469
      %v1471 = vpop.xlane.xlu0 %1470
      %v1472 = vsel %vm269, %v1394, 0.0
      %1473 = vadd.xlane.f32.xlu0 %v1472
      %v1474 = vpop.xlane.xlu0 %1473
      %v1475 = vrcp.pop 32.0
      %v1476 = vmul.f32 %v1417, %v1475
      %v1477 = vmul.f32 %v1420, %v1475
      %v1478 = vmul.f32 %v1423, %v1475
      %v1479 = vmul.f32 %v1426, %v1475
      %v1480 = vmul.f32 %v1429, %v1475
      %v1481 = vmul.f32 %v1432, %v1475
      %v1482 = vmul.f32 %v1435, %v1475
      %v1483 = vmul.f32 %v1438, %v1475
      %v1484 = vmul.f32 %v1441, %v1475
      %v1485 = vmul.f32 %v1444, %v1475
      %v1486 = vmul.f32 %v1447, %v1475
      %v1487 = vmul.f32 %v1450, %v1475
      %v1488 = vmul.f32 %v1453, %v1475
      %v1489 = vmul.f32 %v1456, %v1475
      %v1490 = vmul.f32 %v1459, %v1475
      %v1491 = vmul.f32 %v1462, %v1475
      %v1492 = vmul.f32 %v1465, %v1475
      %v1493 = vmul.f32 %v1468, %v1475
      %v1494 = vmul.f32 %v1471, %v1475
      %v1495 = vmul.f32 %v1474, %v1475
      %vm1496 = vcmask 7168
      %1497 = vst.msk [vmem:[%s210] sm:$0xff] %vm1496, %v1476
      %1498 = vst.msk [vmem:[%s210 + $0x8] sm:$0xff] %vm1496, %v1477
      %1499 = vst.msk [vmem:[%s210 + $0x10] sm:$0xff] %vm1496, %v1478
      %1500 = vst.msk [vmem:[%s210 + $0x18] sm:$0xff] %vm1496, %v1479
      %1501 = vst.msk [vmem:[%s210 + $0x20] sm:$0xff] %vm1496, %v1480
      %1502 = vst.msk [vmem:[%s210 + $0x28] sm:$0xff] %vm1496, %v1481
      %1503 = vst.msk [vmem:[%s210 + $0x30] sm:$0xff] %vm1496, %v1482
      %1504 = vst.msk [vmem:[%s210 + $0x38] sm:$0xff] %vm1496, %v1483
      %1505 = vst.msk [vmem:[%s210 + $0x40] sm:$0xff] %vm1496, %v1484
      %1506 = vst.msk [vmem:[%s210 + $0x48] sm:$0xff] %vm1496, %v1485
      %1507 = vst.msk [vmem:[%s210 + $0x50] sm:$0xff] %vm1496, %v1486
      %1508 = vst.msk [vmem:[%s210 + $0x58] sm:$0xff] %vm1496, %v1487
      %1509 = vst.msk [vmem:[%s210 + $0x60] sm:$0xff] %vm1496, %v1488
      %1510 = vst.msk [vmem:[%s210 + $0x68] sm:$0xff] %vm1496, %v1489
      %1511 = vst.msk [vmem:[%s210 + $0x70] sm:$0xff] %vm1496, %v1490
      %1512 = vst.msk [vmem:[%s210 + $0x78] sm:$0xff] %vm1496, %v1491
      %1513 = vst.msk [vmem:[%s210 + $0x80] sm:$0xff] %vm1496, %v1492
      %1514 = vst.msk [vmem:[%s210 + $0x88] sm:$0xff] %vm1496, %v1493
      %1515 = vst.msk [vmem:[%s210 + $0x90] sm:$0xff] %vm1496, %v1494
      %vm1516 = vcmask 3072
      %1517 = vst.msk [vmem:[%s210 + $0x98] sm:$0xf] %vm1516, %v1495
      %v1518 = vsel %vm231, %v1375, -inf
      %1519 = vmax.xlane.f32.xlu0 %v1518
      %v1520 = vpop.xlane.xlu0 %1519
      %v1521 = vsel %vm231, %v1376, -inf
      %1522 = vmax.xlane.f32.xlu0 %v1521
      %v1523 = vpop.xlane.xlu0 %1522
      %v1524 = vsel %vm231, %v1377, -inf
      %1525 = vmax.xlane.f32.xlu0 %v1524
      %v1526 = vpop.xlane.xlu0 %1525
      %v1527 = vsel %vm231, %v1378, -inf
      %1528 = vmax.xlane.f32.xlu0 %v1527
      %v1529 = vpop.xlane.xlu0 %1528
      %v1530 = vsel %vm231, %v1379, -inf
      %1531 = vmax.xlane.f32.xlu0 %v1530
      %v1532 = vpop.xlane.xlu0 %1531
      %v1533 = vsel %vm231, %v1380, -inf
      %1534 = vmax.xlane.f32.xlu0 %v1533
      %v1535 = vpop.xlane.xlu0 %1534
      %v1536 = vsel %vm231, %v1381, -inf
      %1537 = vmax.xlane.f32.xlu0 %v1536
      %v1538 = vpop.xlane.xlu0 %1537
      %v1539 = vsel %vm231, %v1382, -inf
      %1540 = vmax.xlane.f32.xlu0 %v1539
      %v1541 = vpop.xlane.xlu0 %1540
      %v1542 = vsel %vm231, %v1383, -inf
      %1543 = vmax.xlane.f32.xlu0 %v1542
      %v1544 = vpop.xlane.xlu0 %1543
      %v1545 = vsel %vm231, %v1384, -inf
      %1546 = vmax.xlane.f32.xlu0 %v1545
      %v1547 = vpop.xlane.xlu0 %1546
      %v1548 = vsel %vm231, %v1385, -inf
      %1549 = vmax.xlane.f32.xlu0 %v1548
      %v1550 = vpop.xlane.xlu0 %1549
      %v1551 = vsel %vm231, %v1386, -inf
      %1552 = vmax.xlane.f32.xlu0 %v1551
      %v1553 = vpop.xlane.xlu0 %1552
      %v1554 = vsel %vm231, %v1387, -inf
      %1555 = vmax.xlane.f32.xlu0 %v1554
      %v1556 = vpop.xlane.xlu0 %1555
      %v1557 = vsel %vm231, %v1388, -inf
      %1558 = vmax.xlane.f32.xlu0 %v1557
      %v1559 = vpop.xlane.xlu0 %1558
      %v1560 = vsel %vm231, %v1389, -inf
      %1561 = vmax.xlane.f32.xlu0 %v1560
      %v1562 = vpop.xlane.xlu0 %1561
      %v1563 = vsel %vm231, %v1390, -inf
      %1564 = vmax.xlane.f32.xlu0 %v1563
      %v1565 = vpop.xlane.xlu0 %1564
      %v1566 = vsel %vm231, %v1391, -inf
      %1567 = vmax.xlane.f32.xlu0 %v1566
      %v1568 = vpop.xlane.xlu0 %1567
      %v1569 = vsel %vm231, %v1392, -inf
      %1570 = vmax.xlane.f32.xlu0 %v1569
      %v1571 = vpop.xlane.xlu0 %1570
      %v1572 = vsel %vm231, %v1393, -inf
      %1573 = vmax.xlane.f32.xlu0 %v1572
      %v1574 = vpop.xlane.xlu0 %1573
      %v1575 = vsel %vm269, %v1394, -inf
      %1576 = vmax.xlane.f32.xlu0 %v1575
      %v1577 = vpop.xlane.xlu0 %1576
      %vm1578 = vcmask 15368
      %1579 = vst.msk [vmem:[%s210] sm:$0xff] %vm1578, %v1520
      %1580 = vst.msk [vmem:[%s210 + $0x8] sm:$0xff] %vm1578, %v1523
      %1581 = vst.msk [vmem:[%s210 + $0x10] sm:$0xff] %vm1578, %v1526
      %1582 = vst.msk [vmem:[%s210 + $0x18] sm:$0xff] %vm1578, %v1529
      %1583 = vst.msk [vmem:[%s210 + $0x20] sm:$0xff] %vm1578, %v1532
      %1584 = vst.msk [vmem:[%s210 + $0x28] sm:$0xff] %vm1578, %v1535
      %1585 = vst.msk [vmem:[%s210 + $0x30] sm:$0xff] %vm1578, %v1538
      %1586 = vst.msk [vmem:[%s210 + $0x38] sm:$0xff] %vm1578, %v1541
      %1587 = vst.msk [vmem:[%s210 + $0x40] sm:$0xff] %vm1578, %v1544
      %1588 = vst.msk [vmem:[%s210 + $0x48] sm:$0xff] %vm1578, %v1547
      %1589 = vst.msk [vmem:[%s210 + $0x50] sm:$0xff] %vm1578, %v1550
      %1590 = vst.msk [vmem:[%s210 + $0x58] sm:$0xff] %vm1578, %v1553
      %1591 = vst.msk [vmem:[%s210 + $0x60] sm:$0xff] %vm1578, %v1556
      %1592 = vst.msk [vmem:[%s210 + $0x68] sm:$0xff] %vm1578, %v1559
      %1593 = vst.msk [vmem:[%s210 + $0x70] sm:$0xff] %vm1578, %v1562
      %1594 = vst.msk [vmem:[%s210 + $0x78] sm:$0xff] %vm1578, %v1565
      %1595 = vst.msk [vmem:[%s210 + $0x80] sm:$0xff] %vm1578, %v1568
      %1596 = vst.msk [vmem:[%s210 + $0x88] sm:$0xff] %vm1578, %v1571
      %1597 = vst.msk [vmem:[%s210 + $0x90] sm:$0xff] %vm1578, %v1574
      %vm1598 = vcmask 11272
      %1599 = vst.msk [vmem:[%s210 + $0x98] sm:$0xf] %vm1598, %v1577
      %p1600 = scmp.lt.s32.totalorder %s16, 1
      %s1601 = scalar_select %p1600, %s16, 1
      %s1602 = smul.addr %s1601, 20
      %s1603 = smul.addr %s1602, 8
      %s1604 = scalar_lea.vmem %s3, %s1603
      %p1605 = scmp.lt.s32.totalorder %s16, 1
      %s1606 = scalar_select %p1605, %s16, 1
      %s1607 = smul.addr %s1606, 20
      %s1608 = smul.addr %s1607, 8
      %s1609 = scalar_lea.vmem %s4, %s1608
      // Predicated region
      $region33: #{capsule_net_forward.10} parent=31 // pred_check
        %p1610 = pneg %p102
      $region34: #{capsule_net_forward.10} parent=31 // pred_check_branch
        %1612 = sbr.rel (%p1610) target = $region36
      $region35: #{capsule_net_forward.10} parent=31 // pred_region
        _
      $region36: #{capsule_net_forward.10} parent=31 // pred_fallthru
        _
      // Predicated region
      $region37: #{capsule_net_forward.10} parent=31 // pred_check
        %p1613 = pneg %p128
      $region38: #{capsule_net_forward.10} parent=31 // pred_check_branch
        %1615 = sbr.rel (%p1613) target = $region40
      $region39: #{capsule_net_forward.10} parent=31 // pred_region
        _
      $region40: #{capsule_net_forward.10} parent=31 // pred_fallthru
        _
    $region32: #{capsule_net_forward.10} parent=5 // pred_fallthru
      _
    %p1616 = scmp.le.s32.totalorder 2, %s11
    // Predicated region
    $region41: #{capsule_net_forward.10} parent=5 // pred_check
      %p1617 = pneg %p1616
    $region42: #{capsule_net_forward.10} parent=5 // pred_check_branch
      %1619 = sbr.rel (%p1617) target = $region44
    $region43: #{capsule_net_forward.10} parent=5 // pred_region
      %s1620 = ssub.s32 %s11, 2
      // Predicated region
      $region45: #{capsule_net_forward.10} parent=43 // pred_check
        %p1621 = pneg %p108
      $region46: #{capsule_net_forward.10} parent=43 // pred_check_branch
        %1623 = sbr.rel (%p1621) target = $region48
      $region47: #{capsule_net_forward.10} parent=43 // pred_region
        %p1624 = scmp.lt.s32.totalorder %s17, 1
        %s1625 = scalar_select %p1624, %s17, 1
        %s1626 = smul.addr %s1625, 20
        %s1627 = smul.addr %s1626, 8
        %s1628 = scalar_lea.vmem %s3, %s1627
      $region48: #{capsule_net_forward.10} parent=43 // pred_fallthru
        _
      // Predicated region
      $region49: #{capsule_net_forward.10} parent=43 // pred_check
        %p1629 = pneg %p134
      $region50: #{capsule_net_forward.10} parent=43 // pred_check_branch
        %1631 = sbr.rel (%p1629) target = $region52
      $region51: #{capsule_net_forward.10} parent=43 // pred_region
        %p1632 = scmp.lt.s32.totalorder %s17, 1
        %s1633 = scalar_select %p1632, %s17, 1
        %s1634 = smul.addr %s1633, 20
        %s1635 = smul.addr %s1634, 8
        %s1636 = scalar_lea.vmem %s4, %s1635
      $region52: #{capsule_net_forward.10} parent=43 // pred_fallthru
        _
    $region44: #{capsule_net_forward.10} parent=5 // pred_fallthru
      _
  $region6: #{capsule_net_forward.10} parent=0 // loop_footer
    %s15 = sadd.s32 1, %s11
  $region7: #{capsule_net_forward.10} parent=0 // loop_footer_branch
    %10 = sbr.rel target = $region3
  $region8: #{capsule_net_forward.10} parent=0 // loop_exit
    _

// kernel: capsule_net_forward.11
$region0: #{capsule_net_forward.11}
  #allocation0 [shape = 'u32[]', space=smem, size = 0x4, offset = 0x4, fixed_abs, tag = 'smem constant byte address 0x4 - core index']
  #allocation1 [shape = 'u32[144,128]{1,0:T(1,128)}', space=vmem, size = 0x12000, scoped, tag = 'internal scratch']
  %s0 = inlined_call_operand.vmem [shape: f32[2,156,32], index: 0, kind: input, shape index: {}]
  %s1 = inlined_call_operand.vmem [shape: f32[2,156,98], index: 1, kind: input, shape index: {}]
  %s2 = inlined_call_operand.vmem [shape: f32[1,1,98], index: 2, kind: input, shape index: {}]
  %s3 = inlined_call_operand.vmem [shape: f32[2,156,32], index: 3, kind: output, shape index: {}]
  %s4 = sld [smem:[#allocation0]]
  $region45: #{capsule_net_forward.11} parent=0
    _
  %s6 = ssub.s32 1, %s4
  %s7 = scalar_select 0, %s6, %s4
  loop: start=0, step=1, limit=4
  $region2: #{capsule_net_forward.11} parent=0 // loop_pre_header
    _
  $region3: #{capsule_net_forward.11} parent=0 // loop_header
    %s9 = sphi 0, %s13
    %p10 = scmp.ge.s32.totalorder %s9, 4
    %s19 = sphi 0, %s21
    %s22 = sphi 0, %s19
    %s23 = sphi 0, %s22
    %s39 = sphi 0, %s23
    %s45 = sphi 0, %s47
    %s48 = sphi 0, %s45
    %s49 = sphi 0, %s48
    %s65 = sphi 0, %s49
    %s69 = sphi 0, %s69
    %s71 = sphi 0, %s69
    %s72 = sphi 0, %s71
    %s86 = sphi 0, %s72
    %s92 = sphi 0, %s94
    %s95 = sphi 0, %s92
    %s96 = sphi 0, %s95
    %s112 = sphi 0, %s96
  $region4: #{capsule_net_forward.11} parent=0 // loop_header_branch
    %12 = sbr.rel (%p10) target = $region8
  $region5: #{capsule_net_forward.11} parent=0 // loop_body
    %s14 = ssub.s32 %s9, 1
    %s15 = ssub.s32 %s9, 2
    %s16 = sadd.s32 %s9, 1
    %s17 = ssub.s32 %s9, %s16
    %p18 = scmp.eq.s32.totalorder %s17, 0
    %s20 = sadd.s32 %s19, 1
    %s21 = scalar_select %p18, %s19, %s20
    %p24 = pneg %p18
    %p25 = scmp.eq.s32.totalorder %s9, 1
    %p26 = por %p24, %p25
    %p27 = scmp.ne.s32.totalorder %s19, %s22
    %p28 = scmp.eq.s32.totalorder %s9, 0
    %p29 = por %p27, %p28
    %p30 = scmp.ne.s32.totalorder %s19, %s22
    %p31 = scmp.eq.s32.totalorder %s14, 1
    %p32 = por %p30, %p31
    %p33 = scmp.ne.s32.totalorder %s22, %s23
    %p34 = scmp.eq.s32.totalorder %s14, 0
    %p35 = por %p33, %p34
    %p36 = scmp.ne.s32.totalorder %s22, %s23
    %p37 = scmp.eq.s32.totalorder %s15, 1
    %p38 = por %p36, %p37
    %p40 = scmp.ne.s32.totalorder %s23, %s39
    %p41 = scmp.eq.s32.totalorder %s15, 0
    %p42 = por %p40, %p41
    %s43 = ssub.s32 %s9, %s16
    %p44 = scmp.eq.s32.totalorder %s43, 0
    %s46 = sadd.s32 %s45, 1
    %s47 = scalar_select %p44, %s45, %s46
    %p50 = pneg %p44
    %p51 = scmp.eq.s32.totalorder %s9, 1
    %p52 = por %p50, %p51
    %p53 = scmp.ne.s32.totalorder %s45, %s48
    %p54 = scmp.eq.s32.totalorder %s9, 0
    %p55 = por %p53, %p54
    %p56 = scmp.ne.s32.totalorder %s45, %s48
    %p57 = scmp.eq.s32.totalorder %s14, 1
    %p58 = por %p56, %p57
    %p59 = scmp.ne.s32.totalorder %s48, %s49
    %p60 = scmp.eq.s32.totalorder %s14, 0
    %p61 = por %p59, %p60
    %p62 = scmp.ne.s32.totalorder %s48, %s49
    %p63 = scmp.eq.s32.totalorder %s15, 1
    %p64 = por %p62, %p63
    %p66 = scmp.ne.s32.totalorder %s49, %s65
    %p67 = scmp.eq.s32.totalorder %s15, 0
    %p68 = por %p66, %p67
    %s70 = sadd.s32 %s69, 1
    %p73 = scmp.eq.s32.totalorder %s9, 1
    %p74 = scmp.ne.s32.totalorder %s69, %s71
    %p75 = scmp.eq.s32.totalorder %s9, 0
    %p76 = por %p74, %p75
    %p77 = scmp.ne.s32.totalorder %s69, %s71
    %p78 = scmp.eq.s32.totalorder %s14, 1
    %p79 = por %p77, %p78
    %p80 = scmp.ne.s32.totalorder %s71, %s72
    %p81 = scmp.eq.s32.totalorder %s14, 0
    %p82 = por %p80, %p81
    %p83 = scmp.ne.s32.totalorder %s71, %s72
    %p84 = scmp.eq.s32.totalorder %s15, 1
    %p85 = por %p83, %p84
    %p87 = scmp.ne.s32.totalorder %s72, %s86
    %p88 = scmp.eq.s32.totalorder %s15, 0
    %p89 = por %p87, %p88
    %s90 = ssub.s32 %s9, %s16
    %p91 = scmp.eq.s32.totalorder %s90, 0
    %s93 = sadd.s32 %s92, 1
    %s94 = scalar_select %p91, %s92, %s93
    %p97 = pneg %p91
    %p98 = scmp.eq.s32.totalorder %s9, 1
    %p99 = por %p97, %p98
    %p100 = scmp.ne.s32.totalorder %s92, %s95
    %p101 = scmp.eq.s32.totalorder %s9, 0
    %p102 = por %p100, %p101
    %p103 = scmp.ne.s32.totalorder %s92, %s95
    %p104 = scmp.eq.s32.totalorder %s14, 1
    %p105 = por %p103, %p104
    %p106 = scmp.ne.s32.totalorder %s95, %s96
    %p107 = scmp.eq.s32.totalorder %s14, 0
    %p108 = por %p106, %p107
    %p109 = scmp.ne.s32.totalorder %s95, %s96
    %p110 = scmp.eq.s32.totalorder %s15, 1
    %p111 = por %p109, %p110
    %p113 = scmp.ne.s32.totalorder %s96, %s112
    %p114 = scmp.eq.s32.totalorder %s15, 0
    %p115 = por %p113, %p114
    %p116 = scmp.le.s32.totalorder 1, %s9
    %p117 = scmp.lt.s32.totalorder %s9, 3
    %p118 = pnand %p116, %p117
    %p119 = pneg %p118
    // Predicated region
    $region9: #{capsule_net_forward.11} parent=5 // pred_check
      _
    $region10: #{capsule_net_forward.11} parent=5 // pred_check_branch
      %121 = sbr.rel (%p118) target = $region12
    $region11: #{capsule_net_forward.11} parent=5 // pred_region
      %s122 = ssub.s32 %s9, 1
      // Predicated region
      $region13: #{capsule_net_forward.11} parent=11 // pred_check
        %p123 = pneg %p82
      $region14: #{capsule_net_forward.11} parent=11 // pred_check_branch
        %125 = sbr.rel (%p123) target = $region16
      $region15: #{capsule_net_forward.11} parent=11 // pred_region
        _
      $region16: #{capsule_net_forward.11} parent=11 // pred_fallthru
        _
    $region12: #{capsule_net_forward.11} parent=5 // pred_fallthru
      _
    %p126 = scmp.lt.s32.totalorder %s9, 2
    // Predicated region
    $region17: #{capsule_net_forward.11} parent=5 // pred_check
      %p127 = pneg %p126
    $region18: #{capsule_net_forward.11} parent=5 // pred_check_branch
      %129 = sbr.rel (%p127) target = $region20
    $region19: #{capsule_net_forward.11} parent=5 // pred_region
      // Predicated region
      $region21: #{capsule_net_forward.11} parent=19 // pred_check
        %p130 = pneg %p29
      $region22: #{capsule_net_forward.11} parent=19 // pred_check_branch
        %132 = sbr.rel (%p130) target = $region24
      $region23: #{capsule_net_forward.11} parent=19 // pred_region
        %p133 = scmp.lt.s32.totalorder %s9, 1
        %s134 = scalar_select %p133, %s9, 1
        %s135 = smul.addr %s134, 20
        %s136 = smul.addr %s135, 8
        %s137 = scalar_lea.vmem %s0, %s136
      $region24: #{capsule_net_forward.11} parent=19 // pred_fallthru
        _
      // Predicated region
      $region25: #{capsule_net_forward.11} parent=19 // pred_check
        %p138 = pneg %p55
      $region26: #{capsule_net_forward.11} parent=19 // pred_check_branch
        %140 = sbr.rel (%p138) target = $region28
      $region27: #{capsule_net_forward.11} parent=19 // pred_region
        %p141 = scmp.lt.s32.totalorder %s9, 1
        %s142 = scalar_select %p141, %s9, 1
        %s143 = smul.addr %s142, 20
        %s144 = smul.addr %s143, 8
        %s145 = scalar_lea.vmem %s1, %s144
      $region28: #{capsule_net_forward.11} parent=19 // pred_fallthru
        _
    $region20: #{capsule_net_forward.11} parent=5 // pred_fallthru
      _
    %p146 = scmp.le.s32.totalorder 1, %s9
    %p147 = scmp.lt.s32.totalorder %s9, 3
    %p148 = pnand %p146, %p147
    %p149 = pneg %p148
    // Predicated region
    $region29: #{capsule_net_forward.11} parent=5 // pred_check
      _
    $region30: #{capsule_net_forward.11} parent=5 // pred_check_branch
      %151 = sbr.rel (%p148) target = $region32
    $region31: #{capsule_net_forward.11} parent=5 // pred_region
      %s152 = ssub.s32 %s9, 1
      %p153 = scmp.lt.s32.totalorder %s14, 1
      %s154 = scalar_select %p153, %s14, 1
      %s155 = smul.addr %s154, 20
      %s156 = smul.addr %s155, 8
      %s157 = scalar_lea.vmem %s0, %s156
      %p158 = pneg %p35
      %p159 = pneg %p32
      %p160 = scmp.lt.s32.totalorder %s14, 1
      %s161 = scalar_select %p160, %s14, 1
      %s162 = smul.addr %s161, 20
      %s163 = smul.addr %s162, 8
      %s164 = scalar_lea.vmem %s1, %s163
      %p165 = pneg %p61
      %p166 = pneg %p58
      %p167 = pneg %p82
      %p168 = pneg %p79
      %p169 = pneg %p108
      %p170 = pneg %p105
      %p171 = scmp.lt.s32.totalorder %s14, 1
      %s172 = scalar_select %p171, %s14, 1
      %s173 = smul.addr %s172, 20
      %s174 = smul.addr %s173, 8
      %s175 = scalar_lea.vmem %s3, %s174
      %p176 = scmp.lt.s32.totalorder %s14, 1
      %s177 = scalar_select %p176, %s14, 1
      %s178 = smul.addr %s177, 20
      %s179 = smul.addr %s178, 8
      %s180 = scalar_lea.vmem %s0, %s179
      %p181 = scmp.lt.s32.totalorder %s14, 1
      %s182 = scalar_select %p181, %s14, 1
      %s183 = smul.addr %s182, 20
      %s184 = smul.addr %s183, 8
      %s185 = scalar_lea.vmem %s1, %s184
      %p186 = scmp.lt.s32.totalorder %s14, 1
      %s187 = scalar_select %p186, %s14, 1
      %s188 = smul.addr %s187, 20
      %s189 = smul.addr %s188, 8
      %s190 = scalar_lea.vmem %s3, %s189
      %v191 = vld [vmem:[%s185] sm:$0xff]
      %v192 = vld [vmem:[%s185 + $0x8] sm:$0xff]
      %v193 = vld [vmem:[%s185 + $0x10] sm:$0xff]
      %v194 = vld [vmem:[%s185 + $0x18] sm:$0xff]
      %v195 = vld [vmem:[%s185 + $0x20] sm:$0xff]
      %v196 = vld [vmem:[%s185 + $0x28] sm:$0xff]
      %v197 = vld [vmem:[%s185 + $0x30] sm:$0xff]
      %v198 = vld [vmem:[%s185 + $0x38] sm:$0xff]
      %v199 = vld [vmem:[%s185 + $0x40] sm:$0xff]
      %v200 = vld [vmem:[%s185 + $0x48] sm:$0xff]
      %v201 = vld [vmem:[%s185 + $0x50] sm:$0xff]
      %v202 = vld [vmem:[%s185 + $0x58] sm:$0xff]
      %v203 = vld [vmem:[%s185 + $0x60] sm:$0xff]
      %v204 = vld [vmem:[%s185 + $0x68] sm:$0xff]
      %v205 = vld [vmem:[%s185 + $0x70] sm:$0xff]
      %v206 = vld [vmem:[%s185 + $0x78] sm:$0xff]
      %v207 = vld [vmem:[%s185 + $0x80] sm:$0xff]
      %v208 = vld [vmem:[%s185 + $0x88] sm:$0xff]
      %v209 = vld [vmem:[%s185 + $0x90] sm:$0xff]
      %v210 = vld [vmem:[%s185 + $0x98] sm:$0xf]
      %v211 = vld [vmem:[%s2] sm:$0x1]
      %v213 = vlaneseq
      %v214 = vshrl.u32 %v213, 7
      %v215 = vsub.s32 0, %v214
      %v216 = vrot.slane %v211, %v215
      %v218 = vmul.f32 %v191, %v216
      %v219 = vmul.f32 %v192, %v216
      %v220 = vmul.f32 %v193, %v216
      %v221 = vmul.f32 %v194, %v216
      %v222 = vmul.f32 %v195, %v216
      %v223 = vmul.f32 %v196, %v216
      %v224 = vmul.f32 %v197, %v216
      %v225 = vmul.f32 %v198, %v216
      %v226 = vmul.f32 %v199, %v216
      %v227 = vmul.f32 %v200, %v216
      %v228 = vmul.f32 %v201, %v216
      %v229 = vmul.f32 %v202, %v216
      %v230 = vmul.f32 %v203, %v216
      %v231 = vmul.f32 %v204, %v216
      %v232 = vmul.f32 %v205, %v216
      %v233 = vmul.f32 %v206, %v216
      %v234 = vmul.f32 %v207, %v216
      %v235 = vmul.f32 %v208, %v216
      %v236 = vmul.f32 %v209, %v216
      %v237 = vmul.f32 %v210, %v216
      %vm238 = vcmask 801792
      %v239 = vsel %vm238, %v218, 0.0
      %240 = vadd.xlane.f32.xlu0 %v239
      %v241 = vpop.xlane.xlu0 %240
      %v242 = vsel %vm238, %v219, 0.0
      %243 = vadd.xlane.f32.xlu0 %v242
      %v244 = vpop.xlane.xlu0 %243
      %v245 = vsel %vm238, %v220, 0.0
      %246 = vadd.xlane.f32.xlu0 %v245
      %v247 = vpop.xlane.xlu0 %246
      %v248 = vsel %vm238, %v221, 0.0
      %249 = vadd.xlane.f32.xlu0 %v248
      %v250 = vpop.xlane.xlu0 %249
      %v251 = vsel %vm238, %v222, 0.0
      %252 = vadd.xlane.f32.xlu0 %v251
      %v253 = vpop.xlane.xlu0 %252
      %v254 = vsel %vm238, %v223, 0.0
      %255 = vadd.xlane.f32.xlu0 %v254
      %v256 = vpop.xlane.xlu0 %255
      %v257 = vsel %vm238, %v224, 0.0
      %258 = vadd.xlane.f32.xlu0 %v257
      %v259 = vpop.xlane.xlu0 %258
      %v260 = vsel %vm238, %v225, 0.0
      %261 = vadd.xlane.f32.xlu0 %v260
      %v262 = vpop.xlane.xlu0 %261
      %v263 = vsel %vm238, %v226, 0.0
      %264 = vadd.xlane.f32.xlu0 %v263
      %v265 = vpop.xlane.xlu0 %264
      %v266 = vsel %vm238, %v227, 0.0
      %267 = vadd.xlane.f32.xlu0 %v266
      %v268 = vpop.xlane.xlu0 %267
      %v269 = vsel %vm238, %v228, 0.0
      %270 = vadd.xlane.f32.xlu0 %v269
      %v271 = vpop.xlane.xlu0 %270
      %v272 = vsel %vm238, %v229, 0.0
      %273 = vadd.xlane.f32.xlu0 %v272
      %v274 = vpop.xlane.xlu0 %273
      %v275 = vsel %vm238, %v230, 0.0
      %276 = vadd.xlane.f32.xlu0 %v275
      %v277 = vpop.xlane.xlu0 %276
      %v278 = vsel %vm238, %v231, 0.0
      %279 = vadd.xlane.f32.xlu0 %v278
      %v280 = vpop.xlane.xlu0 %279
      %v281 = vsel %vm238, %v232, 0.0
      %282 = vadd.xlane.f32.xlu0 %v281
      %v283 = vpop.xlane.xlu0 %282
      %v284 = vsel %vm238, %v233, 0.0
      %285 = vadd.xlane.f32.xlu0 %v284
      %v286 = vpop.xlane.xlu0 %285
      %v287 = vsel %vm238, %v234, 0.0
      %288 = vadd.xlane.f32.xlu0 %v287
      %v289 = vpop.xlane.xlu0 %288
      %v290 = vsel %vm238, %v235, 0.0
      %291 = vadd.xlane.f32.xlu0 %v290
      %v292 = vpop.xlane.xlu0 %291
      %v293 = vsel %vm238, %v236, 0.0
      %294 = vadd.xlane.f32.xlu0 %v293
      %v295 = vpop.xlane.xlu0 %294
      %vm296 = vcmask 797696
      %v297 = vsel %vm296, %v237, 0.0
      %298 = vadd.xlane.f32.xlu0 %v297
      %v299 = vpop.xlane.xlu0 %298
      %v300 = vld [vmem:[%s180] sm:$0xff]
      %v301 = vld [vmem:[%s180 + $0x8] sm:$0xff]
      %v302 = vld [vmem:[%s180 + $0x10] sm:$0xff]
      %v303 = vld [vmem:[%s180 + $0x18] sm:$0xff]
      %v304 = vld [vmem:[%s180 + $0x20] sm:$0xff]
      %v305 = vld [vmem:[%s180 + $0x28] sm:$0xff]
      %v306 = vld [vmem:[%s180 + $0x30] sm:$0xff]
      %v307 = vld [vmem:[%s180 + $0x38] sm:$0xff]
      %v308 = vld [vmem:[%s180 + $0x40] sm:$0xff]
      %v309 = vld [vmem:[%s180 + $0x48] sm:$0xff]
      %v310 = vld [vmem:[%s180 + $0x50] sm:$0xff]
      %v311 = vld [vmem:[%s180 + $0x58] sm:$0xff]
      %v312 = vld [vmem:[%s180 + $0x60] sm:$0xff]
      %v313 = vld [vmem:[%s180 + $0x68] sm:$0xff]
      %v314 = vld [vmem:[%s180 + $0x70] sm:$0xff]
      %v315 = vld [vmem:[%s180 + $0x78] sm:$0xff]
      %v316 = vld [vmem:[%s180 + $0x80] sm:$0xff]
      %v317 = vld [vmem:[%s180 + $0x88] sm:$0xff]
      %v318 = vld [vmem:[%s180 + $0x90] sm:$0xff]
      %v319 = vld [vmem:[%s180 + $0x98] sm:$0xf]
      %v320 = vxor.u32 %v241, 2147483648
      %v321 = vxor.u32 %v244, 2147483648
      %v322 = vxor.u32 %v247, 2147483648
      %v323 = vxor.u32 %v250, 2147483648
      %v324 = vxor.u32 %v253, 2147483648
      %v325 = vxor.u32 %v256, 2147483648
      %v326 = vxor.u32 %v259, 2147483648
      %v327 = vxor.u32 %v262, 2147483648
      %v328 = vxor.u32 %v265, 2147483648
      %v329 = vxor.u32 %v268, 2147483648
      %v330 = vxor.u32 %v271, 2147483648
      %v331 = vxor.u32 %v274, 2147483648
      %v332 = vxor.u32 %v277, 2147483648
      %v333 = vxor.u32 %v280, 2147483648
      %v334 = vxor.u32 %v283, 2147483648
      %v335 = vxor.u32 %v286, 2147483648
      %v336 = vxor.u32 %v289, 2147483648
      %v337 = vxor.u32 %v292, 2147483648
      %v338 = vxor.u32 %v295, 2147483648
      %v339 = vxor.u32 %v299, 2147483648
      %v340 = vmul.f32 %v320, 1.442695
      %v341 = vpow.pop %v340
      %v342 = vmul.f32 %v321, 1.442695
      %v343 = vpow.pop %v342
      %v344 = vmul.f32 %v322, 1.442695
      %v345 = vpow.pop %v344
      %v346 = vmul.f32 %v323, 1.442695
      %v347 = vpow.pop %v346
      %v348 = vmul.f32 %v324, 1.442695
      %v349 = vpow.pop %v348
      %v350 = vmul.f32 %v325, 1.442695
      %v351 = vpow.pop %v350
      %v352 = vmul.f32 %v326, 1.442695
      %v353 = vpow.pop %v352
      %v354 = vmul.f32 %v327, 1.442695
      %v355 = vpow.pop %v354
      %v356 = vmul.f32 %v328, 1.442695
      %v357 = vpow.pop %v356
      %v358 = vmul.f32 %v329, 1.442695
      %v359 = vpow.pop %v358
      %v360 = vmul.f32 %v330, 1.442695
      %v361 = vpow.pop %v360
      %v362 = vmul.f32 %v331, 1.442695
      %v363 = vpow.pop %v362
      %v364 = vmul.f32 %v332, 1.442695
      %v365 = vpow.pop %v364
      %v366 = vmul.f32 %v333, 1.442695
      %v367 = vpow.pop %v366
      %v368 = vmul.f32 %v334, 1.442695
      %v369 = vpow.pop %v368
      %v370 = vmul.f32 %v335, 1.442695
      %v371 = vpow.pop %v370
      %v372 = vmul.f32 %v336, 1.442695
      %v373 = vpow.pop %v372
      %v374 = vmul.f32 %v337, 1.442695
      %v375 = vpow.pop %v374
      %v376 = vmul.f32 %v338, 1.442695
      %v377 = vpow.pop %v376
      %v378 = vmul.f32 %v339, 1.442695
      %v379 = vpow.pop %v378
      %v380 = vadd.f32 %v341, 1.0
      %v381 = vadd.f32 %v343, 1.0
      %v382 = vadd.f32 %v345, 1.0
      %v383 = vadd.f32 %v347, 1.0
      %v384 = vadd.f32 %v349, 1.0
      %v385 = vadd.f32 %v351, 1.0
      %v386 = vadd.f32 %v353, 1.0
      %v387 = vadd.f32 %v355, 1.0
      %v388 = vadd.f32 %v357, 1.0
      %v389 = vadd.f32 %v359, 1.0
      %v390 = vadd.f32 %v361, 1.0
      %v391 = vadd.f32 %v363, 1.0
      %v392 = vadd.f32 %v365, 1.0
      %v393 = vadd.f32 %v367, 1.0
      %v394 = vadd.f32 %v369, 1.0
      %v395 = vadd.f32 %v371, 1.0
      %v396 = vadd.f32 %v373, 1.0
      %v397 = vadd.f32 %v375, 1.0
      %v398 = vadd.f32 %v377, 1.0
      %v399 = vadd.f32 %v379, 1.0
      %v400 = vrcp.pop %v380
      %v401 = vmul.f32 1.0, %v400
      %v402 = vrcp.pop %v381
      %v403 = vmul.f32 1.0, %v402
      %v404 = vrcp.pop %v382
      %v405 = vmul.f32 1.0, %v404
      %v406 = vrcp.pop %v383
      %v407 = vmul.f32 1.0, %v406
      %v408 = vrcp.pop %v384
      %v409 = vmul.f32 1.0, %v408
      %v410 = vrcp.pop %v385
      %v411 = vmul.f32 1.0, %v410
      %v412 = vrcp.pop %v386
      %v413 = vmul.f32 1.0, %v412
      %v414 = vrcp.pop %v387
      %v415 = vmul.f32 1.0, %v414
      %v416 = vrcp.pop %v388
      %v417 = vmul.f32 1.0, %v416
      %v418 = vrcp.pop %v389
      %v419 = vmul.f32 1.0, %v418
      %v420 = vrcp.pop %v390
      %v421 = vmul.f32 1.0, %v420
      %v422 = vrcp.pop %v391
      %v423 = vmul.f32 1.0, %v422
      %v424 = vrcp.pop %v392
      %v425 = vmul.f32 1.0, %v424
      %v426 = vrcp.pop %v393
      %v427 = vmul.f32 1.0, %v426
      %v428 = vrcp.pop %v394
      %v429 = vmul.f32 1.0, %v428
      %v430 = vrcp.pop %v395
      %v431 = vmul.f32 1.0, %v430
      %v432 = vrcp.pop %v396
      %v433 = vmul.f32 1.0, %v432
      %v434 = vrcp.pop %v397
      %v435 = vmul.f32 1.0, %v434
      %v436 = vrcp.pop %v398
      %v437 = vmul.f32 1.0, %v436
      %v438 = vrcp.pop %v399
      %v439 = vmul.f32 1.0, %v438
      %v440 = vmul.f32 %v300, %v401
      %v441 = vmul.f32 %v301, %v403
      %v442 = vmul.f32 %v302, %v405
      %v443 = vmul.f32 %v303, %v407
      %v444 = vmul.f32 %v304, %v409
      %v445 = vmul.f32 %v305, %v411
      %v446 = vmul.f32 %v306, %v413
      %v447 = vmul.f32 %v307, %v415
      %v448 = vmul.f32 %v308, %v417
      %v449 = vmul.f32 %v309, %v419
      %v450 = vmul.f32 %v310, %v421
      %v451 = vmul.f32 %v311, %v423
      %v452 = vmul.f32 %v312, %v425
      %v453 = vmul.f32 %v313, %v427
      %v454 = vmul.f32 %v314, %v429
      %v455 = vmul.f32 %v315, %v431
      %v456 = vmul.f32 %v316, %v433
      %v457 = vmul.f32 %v317, %v435
      %v458 = vmul.f32 %v318, %v437
      %v459 = vmul.f32 %v319, %v439
      %v460 = vmax.f32 %v440, 0.0
      %v461 = vmax.f32 %v441, 0.0
      %v462 = vmax.f32 %v442, 0.0
      %v463 = vmax.f32 %v443, 0.0
      %v464 = vmax.f32 %v444, 0.0
      %v465 = vmax.f32 %v445, 0.0
      %v466 = vmax.f32 %v446, 0.0
      %v467 = vmax.f32 %v447, 0.0
      %v468 = vmax.f32 %v448, 0.0
      %v469 = vmax.f32 %v449, 0.0
      %v470 = vmax.f32 %v450, 0.0
      %v471 = vmax.f32 %v451, 0.0
      %v472 = vmax.f32 %v452, 0.0
      %v473 = vmax.f32 %v453, 0.0
      %v474 = vmax.f32 %v454, 0.0
      %v475 = vmax.f32 %v455, 0.0
      %v476 = vmax.f32 %v456, 0.0
      %v477 = vmax.f32 %v457, 0.0
      %v478 = vmax.f32 %v458, 0.0
      %v479 = vmax.f32 %v459, 0.0
      %vm480 = vcmask 261120
      %481 = vst.msk [vmem:[%s190] sm:$0xff] %vm480, %v460
      %482 = vst.msk [vmem:[%s190 + $0x8] sm:$0xff] %vm480, %v461
      %483 = vst.msk [vmem:[%s190 + $0x10] sm:$0xff] %vm480, %v462
      %484 = vst.msk [vmem:[%s190 + $0x18] sm:$0xff] %vm480, %v463
      %485 = vst.msk [vmem:[%s190 + $0x20] sm:$0xff] %vm480, %v464
      %486 = vst.msk [vmem:[%s190 + $0x28] sm:$0xff] %vm480, %v465
      %487 = vst.msk [vmem:[%s190 + $0x30] sm:$0xff] %vm480, %v466
      %488 = vst.msk [vmem:[%s190 + $0x38] sm:$0xff] %vm480, %v467
      %489 = vst.msk [vmem:[%s190 + $0x40] sm:$0xff] %vm480, %v468
      %490 = vst.msk [vmem:[%s190 + $0x48] sm:$0xff] %vm480, %v469
      %491 = vst.msk [vmem:[%s190 + $0x50] sm:$0xff] %vm480, %v470
      %492 = vst.msk [vmem:[%s190 + $0x58] sm:$0xff] %vm480, %v471
      %493 = vst.msk [vmem:[%s190 + $0x60] sm:$0xff] %vm480, %v472
      %494 = vst.msk [vmem:[%s190 + $0x68] sm:$0xff] %vm480, %v473
      %495 = vst.msk [vmem:[%s190 + $0x70] sm:$0xff] %vm480, %v474
      %496 = vst.msk [vmem:[%s190 + $0x78] sm:$0xff] %vm480, %v475
      %497 = vst.msk [vmem:[%s190 + $0x80] sm:$0xff] %vm480, %v476
      %498 = vst.msk [vmem:[%s190 + $0x88] sm:$0xff] %vm480, %v477
      %499 = vst.msk [vmem:[%s190 + $0x90] sm:$0xff] %vm480, %v478
      %vm500 = vcmask 257024
      %501 = vst.msk [vmem:[%s190 + $0x98] sm:$0xf] %vm500, %v479
      %p502 = scmp.lt.s32.totalorder %s14, 1
      %s503 = scalar_select %p502, %s14, 1
      %s504 = smul.addr %s503, 20
      %s505 = smul.addr %s504, 8
      %s506 = scalar_lea.vmem %s3, %s505
      // Predicated region
      $region33: #{capsule_net_forward.11} parent=31 // pred_check
        %p507 = pneg %p105
      $region34: #{capsule_net_forward.11} parent=31 // pred_check_branch
        %509 = sbr.rel (%p507) target = $region36
      $region35: #{capsule_net_forward.11} parent=31 // pred_region
        _
      $region36: #{capsule_net_forward.11} parent=31 // pred_fallthru
        _
    $region32: #{capsule_net_forward.11} parent=5 // pred_fallthru
      _
    %p510 = scmp.le.s32.totalorder 2, %s9
    // Predicated region
    $region37: #{capsule_net_forward.11} parent=5 // pred_check
      %p511 = pneg %p510
    $region38: #{capsule_net_forward.11} parent=5 // pred_check_branch
      %513 = sbr.rel (%p511) target = $region40
    $region39: #{capsule_net_forward.11} parent=5 // pred_region
      %s514 = ssub.s32 %s9, 2
      // Predicated region
      $region41: #{capsule_net_forward.11} parent=39 // pred_check
        %p515 = pneg %p111
      $region42: #{capsule_net_forward.11} parent=39 // pred_check_branch
        %517 = sbr.rel (%p515) target = $region44
      $region43: #{capsule_net_forward.11} parent=39 // pred_region
        %p518 = scmp.lt.s32.totalorder %s15, 1
        %s519 = scalar_select %p518, %s15, 1
        %s520 = smul.addr %s519, 20
        %s521 = smul.addr %s520, 8
        %s522 = scalar_lea.vmem %s3, %s521
      $region44: #{capsule_net_forward.11} parent=39 // pred_fallthru
        _
    $region40: #{capsule_net_forward.11} parent=5 // pred_fallthru
      _
  $region6: #{capsule_net_forward.11} parent=0 // loop_footer
    %s13 = sadd.s32 1, %s9
  $region7: #{capsule_net_forward.11} parent=0 // loop_footer_branch
    %8 = sbr.rel target = $region3
  $region8: #{capsule_net_forward.11} parent=0 // loop_exit
    _

// kernel: capsule_net_forward.12
$region0: #{capsule_net_forward.12}
  #allocation0 [shape = 'u32[]', space=smem, size = 0x4, offset = 0x4, fixed_abs, tag = 'smem constant byte address 0x4 - core index']
  #allocation1 [shape = 'u32[144,128]{1,0:T(1,128)}', space=vmem, size = 0x12000, scoped, tag = 'internal scratch']
  #allocation2 [shape = 'f32[16,128]{1,0:T(8,128)}', space=vmem, size = 0x2000, scoped, tag = 'scratch operand']
  %s0 = inlined_call_operand.vmem [shape: bf16[16,3072], index: 0, kind: input, shape index: {}]
  %s1 = inlined_call_operand.vmem [shape: bf16[3072,128], index: 1, kind: input, shape index: {}]
  %s2 = inlined_call_operand.vmem [shape: f32[16,128], index: 2, kind: output, shape index: {}]
  %s3 = sld [smem:[#allocation0]]
  $region72: #{capsule_net_forward.12} parent=0
    _
  %s5 = ssub.s32 1, %s3
  %s6 = scalar_select 0, %s5, %s3
  $region1: #{capsule_net_forward.12} parent=0
    #allocation3 [shape = 'u8[32768]{0}', space=vmem, size = 0x8000, scoped, tag = 'input window, operand 0']
    loop: start=0, step=1, limit=8
    $region2: #{capsule_net_forward.12} parent=1 // loop_pre_header
      _
    $region3: #{capsule_net_forward.12} parent=1 // loop_header
      %s8 = sphi 0, %s12
      %p9 = scmp.ge.s32.totalorder %s8, 8
      %s15 = sphi 0, %s34
      %s16 = sphi 0, %s30
      %s17 = sphi 0, %s26
      %s18 = sphi 0, %s15
      %s19 = sphi 0, %s16
      %s20 = sphi 0, %s17
      %s21 = sphi 0, %s18
      %s22 = sphi 0, %s19
      %s23 = sphi 0, %s20
      %s39 = sphi 0, %s41
      %s42 = sphi 0, %s39
      %s43 = sphi 0, %s42
      %s59 = sphi 0, %s43
      %s67 = sphi 0, %s69
      %s70 = sphi 0, %s67
      %s71 = sphi 0, %s70
      %s87 = sphi 0, %s71
      %s95 = sphi 0, %s97
      %s98 = sphi 0, %s95
      %s99 = sphi 0, %s98
      %s115 = sphi 0, %s99
    $region4: #{capsule_net_forward.12} parent=1 // loop_header_branch
      %11 = sbr.rel (%p9) target = $region8
    $region5: #{capsule_net_forward.12} parent=1 // loop_body
      %s13 = ssub.s32 %s8, 1
      %s14 = ssub.s32 %s8, 2
      %s24 = sadd.s32 1, %s17
      %p25 = scmp.ge.s32.totalorder %s24, 6
      %s26 = scalar_select %p25, 0, %s24
      %s27 = sadd.s32 1, %s16
      %s28 = scalar_select %p25, %s27, %s16
      %p29 = scmp.ge.s32.totalorder %s28, 1
      %s30 = scalar_select %p29, 0, %s28
      %s31 = sadd.s32 1, %s15
      %s32 = scalar_select %p29, %s31, %s15
      %p33 = scmp.ge.s32.totalorder %s32, 1
      %s34 = scalar_select %p33, 0, %s32
      %s35 = ssub.s32 %s15, %s34
      %s36 = ssub.s32 %s17, %s26
      %s37 = sor.u32 %s35, %s36
      %p38 = scmp.eq.s32.totalorder %s37, 0
      %s40 = sadd.s32 %s39, 1
      %s41 = scalar_select %p38, %s39, %s40
      %p44 = pneg %p38
      %p45 = scmp.eq.s32.totalorder %s8, 5
      %p46 = por %p44, %p45
      %p47 = scmp.ne.s32.totalorder %s39, %s42
      %p48 = scmp.eq.s32.totalorder %s8, 0
      %p49 = por %p47, %p48
      %p50 = scmp.ne.s32.totalorder %s39, %s42
      %p51 = scmp.eq.s32.totalorder %s13, 5
      %p52 = por %p50, %p51
      %p53 = scmp.ne.s32.totalorder %s42, %s43
      %p54 = scmp.eq.s32.totalorder %s13, 0
      %p55 = por %p53, %p54
      %p56 = scmp.ne.s32.totalorder %s42, %s43
      %p57 = scmp.eq.s32.totalorder %s14, 5
      %p58 = por %p56, %p57
      %p60 = scmp.ne.s32.totalorder %s43, %s59
      %p61 = scmp.eq.s32.totalorder %s14, 0
      %p62 = por %p60, %p61
      %s63 = ssub.s32 %s17, %s26
      %s64 = ssub.s32 %s16, %s30
      %s65 = sor.u32 %s63, %s64
      %p66 = scmp.eq.s32.totalorder %s65, 0
      %s68 = sadd.s32 %s67, 1
      %s69 = scalar_select %p66, %s67, %s68
      %p72 = pneg %p66
      %p73 = scmp.eq.s32.totalorder %s8, 5
      %p74 = por %p72, %p73
      %p75 = scmp.ne.s32.totalorder %s67, %s70
      %p76 = scmp.eq.s32.totalorder %s8, 0
      %p77 = por %p75, %p76
      %p78 = scmp.ne.s32.totalorder %s67, %s70
      %p79 = scmp.eq.s32.totalorder %s13, 5
      %p80 = por %p78, %p79
      %p81 = scmp.ne.s32.totalorder %s70, %s71
      %p82 = scmp.eq.s32.totalorder %s13, 0
      %p83 = por %p81, %p82
      %p84 = scmp.ne.s32.totalorder %s70, %s71
      %p85 = scmp.eq.s32.totalorder %s14, 5
      %p86 = por %p84, %p85
      %p88 = scmp.ne.s32.totalorder %s71, %s87
      %p89 = scmp.eq.s32.totalorder %s14, 0
      %p90 = por %p88, %p89
      %s91 = ssub.s32 %s15, %s34
      %s92 = ssub.s32 %s16, %s30
      %s93 = sor.u32 %s91, %s92
      %p94 = scmp.eq.s32.totalorder %s93, 0
      %s96 = sadd.s32 %s95, 1
      %s97 = scalar_select %p94, %s95, %s96
      %p100 = pneg %p94
      %p101 = scmp.eq.s32.totalorder %s8, 5
      %p102 = por %p100, %p101
      %p103 = scmp.ne.s32.totalorder %s95, %s98
      %p104 = scmp.eq.s32.totalorder %s8, 0
      %p105 = por %p103, %p104
      %p106 = scmp.ne.s32.totalorder %s95, %s98
      %p107 = scmp.eq.s32.totalorder %s13, 5
      %p108 = por %p106, %p107
      %p109 = scmp.ne.s32.totalorder %s98, %s99
      %p110 = scmp.eq.s32.totalorder %s13, 0
      %p111 = por %p109, %p110
      %p112 = scmp.ne.s32.totalorder %s98, %s99
      %p113 = scmp.eq.s32.totalorder %s14, 5
      %p114 = por %p112, %p113
      %p116 = scmp.ne.s32.totalorder %s99, %s115
      %p117 = scmp.eq.s32.totalorder %s14, 0
      %p118 = por %p116, %p117
      %p119 = scmp.le.s32.totalorder 1, %s8
      %p120 = scmp.lt.s32.totalorder %s8, 7
      %p121 = pnand %p119, %p120
      %p122 = pneg %p121
      // Predicated region
      $region9: #{capsule_net_forward.12} parent=5 // pred_check
        _
      $region10: #{capsule_net_forward.12} parent=5 // pred_check_branch
        %124 = sbr.rel (%p121) target = $region12
      $region11: #{capsule_net_forward.12} parent=5 // pred_region
        %s125 = ssub.s32 %s8, 1
      $region12: #{capsule_net_forward.12} parent=5 // pred_fallthru
        _
      %p126 = scmp.lt.s32.totalorder %s8, 6
      // Predicated region
      $region13: #{capsule_net_forward.12} parent=5 // pred_check
        %p127 = pneg %p126
      $region14: #{capsule_net_forward.12} parent=5 // pred_check_branch
        %129 = sbr.rel (%p127) target = $region16
      $region15: #{capsule_net_forward.12} parent=5 // pred_region
        // Predicated region
        $region17: #{capsule_net_forward.12} parent=15 // pred_check
          %p130 = pneg %p49
        $region18: #{capsule_net_forward.12} parent=15 // pred_check_branch
          %132 = sbr.rel (%p130) target = $region20
        $region19: #{capsule_net_forward.12} parent=15 // pred_region
          %s133 = sand.u32 %s39, 1
          %s134 = sand.u32 %s39, 1
          %s135 = smul.addr %s134, 32
          %s136 = scalar_lea.vmem [#allocation3], %s135
          %s137 = smul.u32 2, %s15
          %s138 = smul.u32 4, %s17
          %s139 = smul.addr %s137, 24
          %s140 = sadd.s32 %s138, %s139
          %s141 = smul.addr %s140, 4
          %s142 = scalar_lea.vmem %s0, %s141
          // Predicated region
          $region21: #{capsule_net_forward.12} parent=19 // pred_check
            _
          $region22: #{capsule_net_forward.12} parent=19 // pred_check_branch
            %144 = sbr.rel (0) target = $region24
          $region23: #{capsule_net_forward.12} parent=19 // pred_region
            // Predicated region
            $region25: #{capsule_net_forward.12} parent=23 // pred_check
              _
            $region26: #{capsule_net_forward.12} parent=23 // pred_check_branch
              %146 = sbr.rel (0) target = $region28
            $region27: #{capsule_net_forward.12} parent=23 // pred_region
              loop: start=0, step=1, limit=1
              $region29: #{capsule_net_forward.12} parent=27 // loop_pre_header
                _
              $region30: #{capsule_net_forward.12} parent=27 // loop_header
                %s148 = sphi 0, %s152
                %p149 = scmp.ge.s32.totalorder %s148, 1
                %s153 = sphi %s142, %s142
                %s154 = sphi %s136, %s136
              $region31: #{capsule_net_forward.12} parent=27 // loop_header_branch
                %151 = sbr.rel (%p149) target = $region35
              $region32: #{capsule_net_forward.12} parent=27 // loop_body
                %v155 = vld [vmem:[%s153] sm:$0xff]
                %156 = vst [vmem:[%s154] sm:$0xff] %v155
                %v157 = vld [vmem:[%s153 + $0x8] sm:$0xff]
                %158 = vst [vmem:[%s154 + $0x8] sm:$0xff] %v157
                %v159 = vld [vmem:[%s153 + $0x60] sm:$0xff]
                %160 = vst [vmem:[%s154 + $0x10] sm:$0xff] %v159
                %v161 = vld [vmem:[%s153 + $0x68] sm:$0xff]
                %162 = vst [vmem:[%s154 + $0x18] sm:$0xff] %v161
              $region33: #{capsule_net_forward.12} parent=27 // loop_footer
                %s152 = sadd.s32 1, %s148
              $region34: #{capsule_net_forward.12} parent=27 // loop_footer_branch
                %147 = sbr.rel target = $region30
              $region35: #{capsule_net_forward.12} parent=27 // loop_exit
                _
            $region28: #{capsule_net_forward.12} parent=23 // pred_fallthru
              _
            // Predicated region
            $region36: #{capsule_net_forward.12} parent=23 // pred_check
              _
            $region37: #{capsule_net_forward.12} parent=23 // pred_check_branch
              %164 = sbr.rel target = $region39
            $region38: #{capsule_net_forward.12} parent=23 // pred_region
              _
            $region39: #{capsule_net_forward.12} parent=23 // pred_fallthru
              _
          $region24: #{capsule_net_forward.12} parent=19 // pred_fallthru
            _
          %165 = vnop
        $region20: #{capsule_net_forward.12} parent=15 // pred_fallthru
          _
        // Predicated region
        $region40: #{capsule_net_forward.12} parent=15 // pred_check
          %p166 = pneg %p77
        $region41: #{capsule_net_forward.12} parent=15 // pred_check_branch
          %168 = sbr.rel (%p166) target = $region43
        $region42: #{capsule_net_forward.12} parent=15 // pred_region
          %s169 = smul.u32 64, %s17
          %p170 = scmp.lt.s32.totalorder %s169, 383
          %s171 = scalar_select %p170, %s169, 383
          %p172 = scmp.lt.s32.totalorder %s16, 0
          %s173 = scalar_select %p172, %s16, 0
          %s174 = sadd.s32 %s173, %s171
          %s175 = smul.addr %s174, 4
          %s176 = scalar_lea.vmem %s1, %s175
          %s177 = smul.u32 64, %s17
        $region43: #{capsule_net_forward.12} parent=15 // pred_fallthru
          _
      $region16: #{capsule_net_forward.12} parent=5 // pred_fallthru
        _
      %p178 = scmp.le.s32.totalorder 1, %s8
      %p179 = scmp.lt.s32.totalorder %s8, 7
      %p180 = pnand %p178, %p179
      %p181 = pneg %p180
      // Predicated region
      $region44: #{capsule_net_forward.12} parent=5 // pred_check
        _
      $region45: #{capsule_net_forward.12} parent=5 // pred_check_branch
        %183 = sbr.rel (%p180) target = $region47
      $region46: #{capsule_net_forward.12} parent=5 // pred_region
        %s184 = ssub.s32 %s8, 1
        %s185 = sand.u32 %s42, 1
        %s186 = sand.u32 %s42, 1
        %s187 = smul.addr %s186, 32
        %s188 = scalar_lea.vmem [#allocation3], %s187
        // Predicated region
        $region48: #{capsule_net_forward.12} parent=46 // pred_check
          %p189 = pneg %p55
        $region49: #{capsule_net_forward.12} parent=46 // pred_check_branch
          %191 = sbr.rel (%p189) target = $region51
        $region50: #{capsule_net_forward.12} parent=46 // pred_region
          _
        $region51: #{capsule_net_forward.12} parent=46 // pred_fallthru
          _
        %s192 = sand.u32 %s42, 1
        %s193 = sand.u32 %s42, 1
        %s194 = smul.addr %s193, 32
        %s195 = scalar_lea.vmem [#allocation3], %s194
        %p196 = pneg %p55
        %p197 = pneg %p52
        %s198 = smul.u32 64, %s20
        %p199 = scmp.lt.s32.totalorder %s198, 383
        %s200 = scalar_select %p199, %s198, 383
        %p201 = scmp.lt.s32.totalorder %s19, 0
        %s202 = scalar_select %p201, %s19, 0
        %s203 = sadd.s32 %s202, %s200
        %s204 = smul.addr %s203, 4
        %s205 = scalar_lea.vmem %s1, %s204
        %p206 = pneg %p83
        %p207 = pneg %p80
        %p208 = pneg %p111
        %p209 = pneg %p108
        %s210 = smul.u32 2, %s18
        %p211 = scmp.lt.s32.totalorder %s210, 1
        %s212 = scalar_select %p211, %s210, 1
        %p213 = scmp.lt.s32.totalorder %s19, 0
        %s214 = scalar_select %p213, %s19, 0
        %s215 = sadd.s32 %s214, %s212
        %s216 = smul.addr %s215, 8
        %s217 = scalar_lea.vmem %s2, %s216
        %s218 = smul.u32 2, %s18
        %s219 = smul.u32 4, %s20
        %s220 = smul.u32 64, %s20
        %p221 = scmp.lt.s32.totalorder %s220, 383
        %s222 = scalar_select %p221, %s220, 383
        %p223 = scmp.lt.s32.totalorder %s19, 0
        %s224 = scalar_select %p223, %s19, 0
        %s225 = sadd.s32 %s224, %s222
        %s226 = smul.addr %s225, 4
        %s227 = scalar_lea.vmem %s1, %s226
        %s228 = smul.u32 64, %s20
        %s229 = smul.u32 2, %s18
        %p230 = scmp.lt.s32.totalorder %s229, 1
        %s231 = scalar_select %p230, %s229, 1
        %p232 = scmp.lt.s32.totalorder %s19, 0
        %s233 = scalar_select %p232, %s19, 0
        %s234 = sadd.s32 %s233, %s231
        %s235 = smul.addr %s234, 8
        %s236 = scalar_lea.vmem %s2, %s235
        %s237 = smul.u32 2, %s18
        %p239 = scmp.eq.s32.totalorder %s20, 0
        // Predicated region
        $region52: #{capsule_net_forward.12} parent=46 // pred_check
          %p240 = pneg %p239
        $region53: #{capsule_net_forward.12} parent=46 // pred_check_branch
          %242 = sbr.rel (%p240) target = $region55
        $region54: #{capsule_net_forward.12} parent=46 // pred_region
          %243 = vst [vmem:[#allocation2] sm:$0xff] 0.0
          %244 = vst [vmem:[#allocation2 + $0x8] sm:$0xff] 0.0
        $region55: #{capsule_net_forward.12} parent=46 // pred_fallthru
          _
        %v245 = vld [vmem:[#allocation2] sm:$0xff]
        %v246 = vld [vmem:[#allocation2 + $0x8] sm:$0xff]
        %v247 = vld [vmem:[%s188] sm:$0xff]
        %v248 = vld [vmem:[%s188 + $0x8] sm:$0xff]
        %v249 = vld [vmem:[%s188 + $0x10] sm:$0xff]
        %v250 = vld [vmem:[%s188 + $0x18] sm:$0xff]
        %v251 = vld [vmem:[%s227] sm:$0xf]
        %v252 = vld [vmem:[%s227 + $0x4] sm:$0xf]
        %v253 = vld [vmem:[%s227 + $0x8] sm:$0xf]
        %v254 = vld [vmem:[%s227 + $0xc] sm:$0xf]
        %v255 = vld [vmem:[%s227 + $0x10] sm:$0xf]
        %v256 = vld [vmem:[%s227 + $0x14] sm:$0xf]
        %v257 = vld [vmem:[%s227 + $0x18] sm:$0xf]
        %v258 = vld [vmem:[%s227 + $0x1c] sm:$0xf]
        %v259 = vld [vmem:[%s227 + $0x20] sm:$0xf]
        %v260 = vld [vmem:[%s227 + $0x24] sm:$0xf]
        %v261 = vld [vmem:[%s227 + $0x28] sm:$0xf]
        %v262 = vld [vmem:[%s227 + $0x2c] sm:$0xf]
        %v263 = vld [vmem:[%s227 + $0x30] sm:$0xf]
        %v264 = vld [vmem:[%s227 + $0x34] sm:$0xf]
        %v265 = vld [vmem:[%s227 + $0x38] sm:$0xf]
        %v266 = vld [vmem:[%s227 + $0x3c] sm:$0xf]
        %v267 = vld [vmem:[%s227 + $0x40] sm:$0xf]
        %v268 = vld [vmem:[%s227 + $0x44] sm:$0xf]
        %v269 = vld [vmem:[%s227 + $0x48] sm:$0xf]
        %v270 = vld [vmem:[%s227 + $0x4c] sm:$0xf]
        %v271 = vld [vmem:[%s227 + $0x50] sm:$0xf]
        %v272 = vld [vmem:[%s227 + $0x54] sm:$0xf]
        %v273 = vld [vmem:[%s227 + $0x58] sm:$0xf]
        %v274 = vld [vmem:[%s227 + $0x5c] sm:$0xf]
        %v275 = vld [vmem:[%s227 + $0x60] sm:$0xf]
        %v276 = vld [vmem:[%s227 + $0x64] sm:$0xf]
        %v277 = vld [vmem:[%s227 + $0x68] sm:$0xf]
        %v278 = vld [vmem:[%s227 + $0x6c] sm:$0xf]
        %v279 = vld [vmem:[%s227 + $0x70] sm:$0xf]
        %v280 = vld [vmem:[%s227 + $0x74] sm:$0xf]
        %v281 = vld [vmem:[%s227 + $0x78] sm:$0xf]
        %v282 = vld [vmem:[%s227 + $0x7c] sm:$0xf]
        %v283 = vld [vmem:[%s227 + $0x80] sm:$0xf]
        %v284 = vld [vmem:[%s227 + $0x84] sm:$0xf]
        %v285 = vld [vmem:[%s227 + $0x88] sm:$0xf]
        %v286 = vld [vmem:[%s227 + $0x8c] sm:$0xf]
        %v287 = vld [vmem:[%s227 + $0x90] sm:$0xf]
        %v288 = vld [vmem:[%s227 + $0x94] sm:$0xf]
        %v289 = vld [vmem:[%s227 + $0x98] sm:$0xf]
        %v290 = vld [vmem:[%s227 + $0x9c] sm:$0xf]
        %v291 = vld [vmem:[%s227 + $0xa0] sm:$0xf]
        %v292 = vld [vmem:[%s227 + $0xa4] sm:$0xf]
        %v293 = vld [vmem:[%s227 + $0xa8] sm:$0xf]
        %v294 = vld [vmem:[%s227 + $0xac] sm:$0xf]
        %v295 = vld [vmem:[%s227 + $0xb0] sm:$0xf]
        %v296 = vld [vmem:[%s227 + $0xb4] sm:$0xf]
        %v297 = vld [vmem:[%s227 + $0xb8] sm:$0xf]
        %v298 = vld [vmem:[%s227 + $0xbc] sm:$0xf]
        %v299 = vld [vmem:[%s227 + $0xc0] sm:$0xf]
        %v300 = vld [vmem:[%s227 + $0xc4] sm:$0xf]
        %v301 = vld [vmem:[%s227 + $0xc8] sm:$0xf]
        %v302 = vld [vmem:[%s227 + $0xcc] sm:$0xf]
        %v303 = vld [vmem:[%s227 + $0xd0] sm:$0xf]
        %v304 = vld [vmem:[%s227 + $0xd4] sm:$0xf]
        %v305 = vld [vmem:[%s227 + $0xd8] sm:$0xf]
        %v306 = vld [vmem:[%s227 + $0xdc] sm:$0xf]
        %v307 = vld [vmem:[%s227 + $0xe0] sm:$0xf]
        %v308 = vld [vmem:[%s227 + $0xe4] sm:$0xf]
        %v309 = vld [vmem:[%s227 + $0xe8] sm:$0xf]
        %v310 = vld [vmem:[%s227 + $0xec] sm:$0xf]
        %v311 = vld [vmem:[%s227 + $0xf0] sm:$0xf]
        %v312 = vld [vmem:[%s227 + $0xf4] sm:$0xf]
        %v313 = vld [vmem:[%s227 + $0xf8] sm:$0xf]
        %v314 = vld [vmem:[%s227 + $0xfc] sm:$0xf]
        %v319 = vunpack.c.l.b16 %v247
        %v320 = vunpack.c.h.b16 %v247
        %v321 = vunpack.c.l.b16 %v248
        %v322 = vunpack.c.h.b16 %v248
        %v323 = vunpack.c.l.b16 %v249
        %v324 = vunpack.c.h.b16 %v249
        %v325 = vunpack.c.l.b16 %v250
        %v326 = vunpack.c.h.b16 %v250
        %v327 = vpack.c.b16 %v323, %v319
        %v328 = vpack.c.b16 %v324, %v320
        %v329 = vpack.c.b16 %v325, %v321
        %v330 = vpack.c.b16 %v326, %v322
        %v399 = vunpack.c.l.b16 %v251
        %v400 = vunpack.c.l.b16 %v252
        %v401 = vunpack.c.l.b16 %v253
        %v402 = vunpack.c.l.b16 %v254
        %v403 = vunpack.c.l.b16 %v255
        %v404 = vunpack.c.l.b16 %v256
        %v405 = vunpack.c.l.b16 %v257
        %v406 = vunpack.c.l.b16 %v258
        %v407 = vunpack.c.l.b16 %v259
        %v408 = vunpack.c.l.b16 %v260
        %v409 = vunpack.c.l.b16 %v261
        %v410 = vunpack.c.l.b16 %v262
        %v411 = vunpack.c.l.b16 %v263
        %v412 = vunpack.c.l.b16 %v264
        %v413 = vunpack.c.l.b16 %v265
        %v414 = vunpack.c.l.b16 %v266
        %v415 = vunpack.c.l.b16 %v267
        %v416 = vunpack.c.l.b16 %v268
        %v417 = vunpack.c.l.b16 %v269
        %v418 = vunpack.c.l.b16 %v270
        %v419 = vunpack.c.l.b16 %v271
        %v420 = vunpack.c.l.b16 %v272
        %v421 = vunpack.c.l.b16 %v273
        %v422 = vunpack.c.l.b16 %v274
        %v423 = vunpack.c.l.b16 %v275
        %v424 = vunpack.c.l.b16 %v276
        %v425 = vunpack.c.l.b16 %v277
        %v426 = vunpack.c.l.b16 %v278
        %v427 = vunpack.c.l.b16 %v279
        %v428 = vunpack.c.l.b16 %v280
        %v429 = vunpack.c.l.b16 %v281
        %v430 = vunpack.c.l.b16 %v282
        %v431 = vunpack.c.l.b16 %v283
        %v432 = vunpack.c.l.b16 %v284
        %v433 = vunpack.c.l.b16 %v285
        %v434 = vunpack.c.l.b16 %v286
        %v435 = vunpack.c.l.b16 %v287
        %v436 = vunpack.c.l.b16 %v288
        %v437 = vunpack.c.l.b16 %v289
        %v438 = vunpack.c.l.b16 %v290
        %v439 = vunpack.c.l.b16 %v291
        %v440 = vunpack.c.l.b16 %v292
        %v441 = vunpack.c.l.b16 %v293
        %v442 = vunpack.c.l.b16 %v294
        %v443 = vunpack.c.l.b16 %v295
        %v444 = vunpack.c.l.b16 %v296
        %v445 = vunpack.c.l.b16 %v297
        %v446 = vunpack.c.l.b16 %v298
        %v447 = vunpack.c.l.b16 %v299
        %v448 = vunpack.c.l.b16 %v300
        %v449 = vunpack.c.l.b16 %v301
        %v450 = vunpack.c.l.b16 %v302
        %v451 = vunpack.c.l.b16 %v303
        %v452 = vunpack.c.l.b16 %v304
        %v453 = vunpack.c.l.b16 %v305
        %v454 = vunpack.c.l.b16 %v306
        %v455 = vunpack.c.l.b16 %v307
        %v456 = vunpack.c.l.b16 %v308
        %v457 = vunpack.c.l.b16 %v309
        %v458 = vunpack.c.l.b16 %v310
        %v459 = vunpack.c.l.b16 %v311
        %v460 = vunpack.c.l.b16 %v312
        %v461 = vunpack.c.l.b16 %v313
        %v462 = vunpack.c.l.b16 %v314
        %v463 = vpack.c.b16 %v400, %v399
        %v464 = vpack.c.b16 %v402, %v401
        %v465 = vpack.c.b16 %v404, %v403
        %v466 = vpack.c.b16 %v406, %v405
        %v467 = vpack.c.b16 %v408, %v407
        %v468 = vpack.c.b16 %v410, %v409
        %v469 = vpack.c.b16 %v412, %v411
        %v470 = vpack.c.b16 %v414, %v413
        %v471 = vpack.c.b16 %v416, %v415
        %v472 = vpack.c.b16 %v418, %v417
        %v473 = vpack.c.b16 %v420, %v419
        %v474 = vpack.c.b16 %v422, %v421
        %v475 = vpack.c.b16 %v424, %v423
        %v476 = vpack.c.b16 %v426, %v425
        %v477 = vpack.c.b16 %v428, %v427
        %v478 = vpack.c.b16 %v430, %v429
        %v479 = vpack.c.b16 %v432, %v431
        %v480 = vpack.c.b16 %v434, %v433
        %v481 = vpack.c.b16 %v436, %v435
        %v482 = vpack.c.b16 %v438, %v437
        %v483 = vpack.c.b16 %v440, %v439
        %v484 = vpack.c.b16 %v442, %v441
        %v485 = vpack.c.b16 %v444, %v443
        %v486 = vpack.c.b16 %v446, %v445
        %v487 = vpack.c.b16 %v448, %v447
        %v488 = vpack.c.b16 %v450, %v449
        %v489 = vpack.c.b16 %v452, %v451
        %v490 = vpack.c.b16 %v454, %v453
        %v491 = vpack.c.b16 %v456, %v455
        %v492 = vpack.c.b16 %v458, %v457
        %v493 = vpack.c.b16 %v460, %v459
        %v494 = vpack.c.b16 %v462, %v461
        %527 = vmatprep.subr.bf16.mxu0 0
        %528 = vmatpush1.bf16.msra.mxu0 %v463
        %529 = vmatprep.subr.bf16.mxu0 0
        %530 = vmatpush1.bf16.msra.mxu0 %v464
        %531 = vmatprep.subr.bf16.mxu0 0
        %532 = vmatpush1.bf16.msra.mxu0 %v465
        %533 = vmatprep.subr.bf16.mxu0 0
        %534 = vmatpush1.bf16.msra.mxu0 %v466
        %535 = vmatprep.subr.bf16.mxu0 0
        %536 = vmatpush1.bf16.msra.mxu0 %v467
        %537 = vmatprep.subr.bf16.mxu0 0
        %538 = vmatpush1.bf16.msra.mxu0 %v468
        %539 = vmatprep.subr.bf16.mxu0 0
        %540 = vmatpush1.bf16.msra.mxu0 %v469
        %541 = vmatprep.subr.bf16.mxu0 0
        %542 = vmatpush1.bf16.msra.mxu0 %v470
        %543 = vmatprep.subr.bf16.mxu0 0
        %544 = vmatpush1.bf16.msra.mxu0 %v471
        %545 = vmatprep.subr.bf16.mxu0 0
        %546 = vmatpush1.bf16.msra.mxu0 %v472
        %547 = vmatprep.subr.bf16.mxu0 0
        %548 = vmatpush1.bf16.msra.mxu0 %v473
        %549 = vmatprep.subr.bf16.mxu0 0
        %550 = vmatpush1.bf16.msra.mxu0 %v474
        %551 = vmatprep.subr.bf16.mxu0 0
        %552 = vmatpush1.bf16.msra.mxu0 %v475
        %553 = vmatprep.subr.bf16.mxu0 0
        %554 = vmatpush1.bf16.msra.mxu0 %v476
        %555 = vmatprep.subr.bf16.mxu0 0
        %556 = vmatpush1.bf16.msra.mxu0 %v477
        %557 = vmatprep.subr.bf16.mxu0 0
        %558 = vmatpush1.bf16.msra.mxu0 %v478
        %559 = vmatprep.mubr.bf16.mxu0 %v328
        %560 = vmatmul.mubr.bf16.gmra.mrb[0].mxu0 %v327
        %v561 = vpop.f32.mrb[0].mxu0
        %v562 = vadd.f32 0.0, %v561
        %v563 = vpop.f32.mrb[0].mxu0
        %v564 = vpop.f32.mrb[0].mxu0
        %v565 = vadd.f32 0.0, %v564
        %v566 = vpop.f32.mrb[0].mxu0
        %567 = vdwg.mxu0
        %568 = vmatprep.subr.bf16.mxu0 0
        %569 = vmatpush1.bf16.msra.mxu0 %v479
        %570 = vmatprep.subr.bf16.mxu0 0
        %571 = vmatpush1.bf16.msra.mxu0 %v480
        %572 = vmatprep.subr.bf16.mxu0 0
        %573 = vmatpush1.bf16.msra.mxu0 %v481
        %574 = vmatprep.subr.bf16.mxu0 0
        %575 = vmatpush1.bf16.msra.mxu0 %v482
        %576 = vmatprep.subr.bf16.mxu0 0
        %577 = vmatpush1.bf16.msra.mxu0 %v483
        %578 = vmatprep.subr.bf16.mxu0 0
        %579 = vmatpush1.bf16.msra.mxu0 %v484
        %580 = vmatprep.subr.bf16.mxu0 0
        %581 = vmatpush1.bf16.msra.mxu0 %v485
        %582 = vmatprep.subr.bf16.mxu0 0
        %583 = vmatpush1.bf16.msra.mxu0 %v486
        %584 = vmatprep.subr.bf16.mxu0 0
        %585 = vmatpush1.bf16.msra.mxu0 %v487
        %586 = vmatprep.subr.bf16.mxu0 0
        %587 = vmatpush1.bf16.msra.mxu0 %v488
        %588 = vmatprep.subr.bf16.mxu0 0
        %589 = vmatpush1.bf16.msra.mxu0 %v489
        %590 = vmatprep.subr.bf16.mxu0 0
        %591 = vmatpush1.bf16.msra.mxu0 %v490
        %592 = vmatprep.subr.bf16.mxu0 0
        %593 = vmatpush1.bf16.msra.mxu0 %v491
        %594 = vmatprep.subr.bf16.mxu0 0
        %595 = vmatpush1.bf16.msra.mxu0 %v492
        %596 = vmatprep.subr.bf16.mxu0 0
        %597 = vmatpush1.bf16.msra.mxu0 %v493
        %598 = vmatprep.subr.bf16.mxu0 0
        %599 = vmatpush1.bf16.msra.mxu0 %v494
        %600 = vmatprep.mubr.bf16.mxu0 %v330
        %601 = vmatmul.mubr.bf16.gmra.mrb[0].mxu0 %v329
        %v602 = vpop.f32.mrb[0].mxu0
        %v603 = vadd.f32 %v562, %v602
        %v604 = vpop.f32.mrb[0].mxu0
        %v605 = vpop.f32.mrb[0].mxu0
        %v606 = vadd.f32 %v565, %v605
        %v607 = vpop.f32.mrb[0].mxu0
        %608 = vdwg.mxu0
        %v609 = vadd.f32 %v245, %v603
        %v610 = vadd.f32 %v246, %v606
        %611 = vst [vmem:[#allocation2] sm:$0xff] %v609
        %612 = vst [vmem:[#allocation2 + $0x8] sm:$0xff] %v610
        %p613 = scmp.eq.s32.totalorder %s20, 5
        // Predicated region
        $region56: #{capsule_net_forward.12} parent=46 // pred_check
          %p614 = pneg %p613
        $region57: #{capsule_net_forward.12} parent=46 // pred_check_branch
          %616 = sbr.rel (%p614) target = $region59
        $region58: #{capsule_net_forward.12} parent=46 // pred_region
          %v617 = vld [vmem:[#allocation2] sm:$0xff]
          %v618 = vld [vmem:[#allocation2 + $0x8] sm:$0xff]
          %v619 = vmax.f32 %v617, 0.0
          %v620 = vmax.f32 %v618, 0.0
          %621 = vst [vmem:[%s236] sm:$0xff] %v619
          %622 = vst [vmem:[%s236 + $0x8] sm:$0xff] %v620
        $region59: #{capsule_net_forward.12} parent=46 // pred_fallthru
          _
        %s623 = smul.u32 2, %s18
        %p624 = scmp.lt.s32.totalorder %s623, 1
        %s625 = scalar_select %p624, %s623, 1
        %p626 = scmp.lt.s32.totalorder %s19, 0
        %s627 = scalar_select %p626, %s19, 0
        %s628 = sadd.s32 %s627, %s625
        %s629 = smul.addr %s628, 8
        %s630 = scalar_lea.vmem %s2, %s629
        // Predicated region
        $region60: #{capsule_net_forward.12} parent=46 // pred_check
          %p631 = pneg %p108
        $region61: #{capsule_net_forward.12} parent=46 // pred_check_branch
          %633 = sbr.rel (%p631) target = $region63
        $region62: #{capsule_net_forward.12} parent=46 // pred_region
          %s634 = smul.u32 2, %s18
        $region63: #{capsule_net_forward.12} parent=46 // pred_fallthru
          _
        // Predicated region
        $region64: #{capsule_net_forward.12} parent=46 // pred_check
          %p635 = pneg %p108
        $region65: #{capsule_net_forward.12} parent=46 // pred_check_branch
          %637 = sbr.rel (%p635) target = $region67
        $region66: #{capsule_net_forward.12} parent=46 // pred_region
          %s638 = smul.u32 2, %s18
          %p639 = scmp.lt.s32.totalorder %s638, 1
          %s640 = scalar_select %p639, %s638, 1
          %p641 = scmp.lt.s32.totalorder %s19, 0
          %s642 = scalar_select %p641, %s19, 0
          %s643 = sadd.s32 %s642, %s640
          %s644 = smul.addr %s643, 8
          %s645 = scalar_lea.vmem %s2, %s644
        $region67: #{capsule_net_forward.12} parent=46 // pred_fallthru
          _
      $region47: #{capsule_net_forward.12} parent=5 // pred_fallthru
        _
      %p646 = scmp.le.s32.totalorder 2, %s8
      // Predicated region
      $region68: #{capsule_net_forward.12} parent=5 // pred_check
        %p647 = pneg %p646
      $region69: #{capsule_net_forward.12} parent=5 // pred_check_branch
        %649 = sbr.rel (%p647) target = $region71
      $region70: #{capsule_net_forward.12} parent=5 // pred_region
        %s650 = ssub.s32 %s8, 2
      $region71: #{capsule_net_forward.12} parent=5 // pred_fallthru
        _
    $region6: #{capsule_net_forward.12} parent=1 // loop_footer
      %s12 = sadd.s32 1, %s8
    $region7: #{capsule_net_forward.12} parent=1 // loop_footer_branch
      %7 = sbr.rel target = $region3
    $region8: #{capsule_net_forward.12} parent=1 // loop_exit
      _

// kernel: capsule_net_forward.13
$region0: #{capsule_net_forward.13}
  #allocation0 [shape = 'u32[]', space=smem, size = 0x4, offset = 0x4, fixed_abs, tag = 'smem constant byte address 0x4 - core index']
  #allocation1 [shape = 'u32[144,128]{1,0:T(1,128)}', space=vmem, size = 0x12000, scoped, tag = 'internal scratch']
  #allocation2 [shape = 'f32[368,128]{1,0:T(8,128)}', space=vmem, size = 0x2e000, scoped, tag = 'scratch operand']
  %s0 = inlined_call_operand.vmem [shape: bf16[368,128], index: 0, kind: input, shape index: {}]
  %s1 = inlined_call_operand.vmem [shape: bf16[128,128], index: 1, kind: input, shape index: {}]
  %s2 = inlined_call_operand.vmem [shape: f32[368,128], index: 2, kind: output, shape index: {}]
  %s3 = sld [smem:[#allocation0]]
  $region26: #{capsule_net_forward.13} parent=0
    _
  %s5 = ssub.s32 1, %s3
  %s6 = scalar_select 0, %s5, %s3
  // Predicated region
  $region2: #{capsule_net_forward.13} parent=0 // pred_check
    _
  $region3: #{capsule_net_forward.13} parent=0 // pred_check_branch
    %8 = sbr.rel (0) target = $region5
  $region4: #{capsule_net_forward.13} parent=0 // pred_region
    _
  $region5: #{capsule_net_forward.13} parent=0 // pred_fallthru
    _
  // Predicated region
  $region6: #{capsule_net_forward.13} parent=0 // pred_check
    _
  $region7: #{capsule_net_forward.13} parent=0 // pred_check_branch
    %10 = sbr.rel (0) target = $region9
  $region8: #{capsule_net_forward.13} parent=0 // pred_region
    _
  $region9: #{capsule_net_forward.13} parent=0 // pred_fallthru
    _
  %p12 = scmp.eq.s32.totalorder 0, 0
  // Predicated region
  $region10: #{capsule_net_forward.13} parent=0 // pred_check
    %p13 = pneg %p12
  $region11: #{capsule_net_forward.13} parent=0 // pred_check_branch
    %15 = sbr.rel (%p13) target = $region13
  $region12: #{capsule_net_forward.13} parent=0 // pred_region
    %16 = vst [vmem:[#allocation2] sm:$0xff] 0.0
    %17 = vst [vmem:[#allocation2 + $0x8] sm:$0xff] 0.0
    %18 = vst [vmem:[#allocation2 + $0x10] sm:$0xff] 0.0
    %19 = vst [vmem:[#allocation2 + $0x18] sm:$0xff] 0.0
    %20 = vst [vmem:[#allocation2 + $0x20] sm:$0xff] 0.0
    %21 = vst [vmem:[#allocation2 + $0x28] sm:$0xff] 0.0
    %22 = vst [vmem:[#allocation2 + $0x30] sm:$0xff] 0.0
    %23 = vst [vmem:[#allocation2 + $0x38] sm:$0xff] 0.0
    %24 = vst [vmem:[#allocation2 + $0x40] sm:$0xff] 0.0
    %25 = vst [vmem:[#allocation2 + $0x48] sm:$0xff] 0.0
    %26 = vst [vmem:[#allocation2 + $0x50] sm:$0xff] 0.0
    %27 = vst [vmem:[#allocation2 + $0x58] sm:$0xff] 0.0
    %28 = vst [vmem:[#allocation2 + $0x60] sm:$0xff] 0.0
    %29 = vst [vmem:[#allocation2 + $0x68] sm:$0xff] 0.0
    %30 = vst [vmem:[#allocation2 + $0x70] sm:$0xff] 0.0
    %31 = vst [vmem:[#allocation2 + $0x78] sm:$0xff] 0.0
    %32 = vst [vmem:[#allocation2 + $0x80] sm:$0xff] 0.0
    %33 = vst [vmem:[#allocation2 + $0x88] sm:$0xff] 0.0
    %34 = vst [vmem:[#allocation2 + $0x90] sm:$0xff] 0.0
    %35 = vst [vmem:[#allocation2 + $0x98] sm:$0xff] 0.0
    %36 = vst [vmem:[#allocation2 + $0xa0] sm:$0xff] 0.0
    %37 = vst [vmem:[#allocation2 + $0xa8] sm:$0xff] 0.0
    %38 = vst [vmem:[#allocation2 + $0xb0] sm:$0xff] 0.0
    %39 = vst [vmem:[#allocation2 + $0xb8] sm:$0xff] 0.0
    %40 = vst [vmem:[#allocation2 + $0xc0] sm:$0xff] 0.0
    %41 = vst [vmem:[#allocation2 + $0xc8] sm:$0xff] 0.0
    %42 = vst [vmem:[#allocation2 + $0xd0] sm:$0xff] 0.0
    %43 = vst [vmem:[#allocation2 + $0xd8] sm:$0xff] 0.0
    %44 = vst [vmem:[#allocation2 + $0xe0] sm:$0xff] 0.0
    %45 = vst [vmem:[#allocation2 + $0xe8] sm:$0xff] 0.0
    %46 = vst [vmem:[#allocation2 + $0xf0] sm:$0xff] 0.0
    %47 = vst [vmem:[#allocation2 + $0xf8] sm:$0xff] 0.0
    %48 = vst [vmem:[#allocation2 + $0x100] sm:$0xff] 0.0
    %49 = vst [vmem:[#allocation2 + $0x108] sm:$0xff] 0.0
    %50 = vst [vmem:[#allocation2 + $0x110] sm:$0xff] 0.0
    %51 = vst [vmem:[#allocation2 + $0x118] sm:$0xff] 0.0
    %52 = vst [vmem:[#allocation2 + $0x120] sm:$0xff] 0.0
    %53 = vst [vmem:[#allocation2 + $0x128] sm:$0xff] 0.0
    %54 = vst [vmem:[#allocation2 + $0x130] sm:$0xff] 0.0
    %55 = vst [vmem:[#allocation2 + $0x138] sm:$0xff] 0.0
    %56 = vst [vmem:[#allocation2 + $0x140] sm:$0xff] 0.0
    %57 = vst [vmem:[#allocation2 + $0x148] sm:$0xff] 0.0
    %58 = vst [vmem:[#allocation2 + $0x150] sm:$0xff] 0.0
    %59 = vst [vmem:[#allocation2 + $0x158] sm:$0xff] 0.0
    %60 = vst [vmem:[#allocation2 + $0x160] sm:$0xff] 0.0
    %61 = vst [vmem:[#allocation2 + $0x168] sm:$0xff] 0.0
  $region13: #{capsule_net_forward.13} parent=0 // pred_fallthru
    _
  %v62 = vld [vmem:[#allocation2] sm:$0xff]
  %v63 = vld [vmem:[#allocation2 + $0x8] sm:$0xff]
  %v64 = vld [vmem:[#allocation2 + $0x10] sm:$0xff]
  %v65 = vld [vmem:[#allocation2 + $0x18] sm:$0xff]
  %v66 = vld [vmem:[#allocation2 + $0x20] sm:$0xff]
  %v67 = vld [vmem:[#allocation2 + $0x28] sm:$0xff]
  %v68 = vld [vmem:[#allocation2 + $0x30] sm:$0xff]
  %v69 = vld [vmem:[#allocation2 + $0x38] sm:$0xff]
  %v70 = vld [vmem:[#allocation2 + $0x40] sm:$0xff]
  %v71 = vld [vmem:[#allocation2 + $0x48] sm:$0xff]
  %v72 = vld [vmem:[#allocation2 + $0x50] sm:$0xff]
  %v73 = vld [vmem:[#allocation2 + $0x58] sm:$0xff]
  %v74 = vld [vmem:[#allocation2 + $0x60] sm:$0xff]
  %v75 = vld [vmem:[#allocation2 + $0x68] sm:$0xff]
  %v76 = vld [vmem:[#allocation2 + $0x70] sm:$0xff]
  %v77 = vld [vmem:[#allocation2 + $0x78] sm:$0xff]
  %v78 = vld [vmem:[#allocation2 + $0x80] sm:$0xff]
  %v79 = vld [vmem:[#allocation2 + $0x88] sm:$0xff]
  %v80 = vld [vmem:[#allocation2 + $0x90] sm:$0xff]
  %v81 = vld [vmem:[#allocation2 + $0x98] sm:$0xff]
  %v82 = vld [vmem:[#allocation2 + $0xa0] sm:$0xff]
  %v83 = vld [vmem:[#allocation2 + $0xa8] sm:$0xff]
  %v84 = vld [vmem:[#allocation2 + $0xb0] sm:$0xff]
  %v85 = vld [vmem:[#allocation2 + $0xb8] sm:$0xff]
  %v86 = vld [vmem:[#allocation2 + $0xc0] sm:$0xff]
  %v87 = vld [vmem:[#allocation2 + $0xc8] sm:$0xff]
  %v88 = vld [vmem:[#allocation2 + $0xd0] sm:$0xff]
  %v89 = vld [vmem:[#allocation2 + $0xd8] sm:$0xff]
  %v90 = vld [vmem:[#allocation2 + $0xe0] sm:$0xff]
  %v91 = vld [vmem:[#allocation2 + $0xe8] sm:$0xff]
  %v92 = vld [vmem:[#allocation2 + $0xf0] sm:$0xff]
  %v93 = vld [vmem:[#allocation2 + $0xf8] sm:$0xff]
  %v94 = vld [vmem:[#allocation2 + $0x100] sm:$0xff]
  %v95 = vld [vmem:[#allocation2 + $0x108] sm:$0xff]
  %v96 = vld [vmem:[#allocation2 + $0x110] sm:$0xff]
  %v97 = vld [vmem:[#allocation2 + $0x118] sm:$0xff]
  %v98 = vld [vmem:[#allocation2 + $0x120] sm:$0xff]
  %v99 = vld [vmem:[#allocation2 + $0x128] sm:$0xff]
  %v100 = vld [vmem:[#allocation2 + $0x130] sm:$0xff]
  %v101 = vld [vmem:[#allocation2 + $0x138] sm:$0xff]
  %v102 = vld [vmem:[#allocation2 + $0x140] sm:$0xff]
  %v103 = vld [vmem:[#allocation2 + $0x148] sm:$0xff]
  %v104 = vld [vmem:[#allocation2 + $0x150] sm:$0xff]
  %v105 = vld [vmem:[#allocation2 + $0x158] sm:$0xff]
  %v106 = vld [vmem:[#allocation2 + $0x160] sm:$0xff]
  %v107 = vld [vmem:[#allocation2 + $0x168] sm:$0xff]
  %v108 = vld [vmem:[%s0] sm:$0xf]
  %v109 = vld [vmem:[%s0 + $0x4] sm:$0xf]
  %v110 = vld [vmem:[%s0 + $0x8] sm:$0xf]
  %v111 = vld [vmem:[%s0 + $0xc] sm:$0xf]
  %v112 = vld [vmem:[%s0 + $0x10] sm:$0xf]
  %v113 = vld [vmem:[%s0 + $0x14] sm:$0xf]
  %v114 = vld [vmem:[%s0 + $0x18] sm:$0xf]
  %v115 = vld [vmem:[%s0 + $0x1c] sm:$0xf]
  %v116 = vld [vmem:[%s0 + $0x20] sm:$0xf]
  %v117 = vld [vmem:[%s0 + $0x24] sm:$0xf]
  %v118 = vld [vmem:[%s0 + $0x28] sm:$0xf]
  %v119 = vld [vmem:[%s0 + $0x2c] sm:$0xf]
  %v120 = vld [vmem:[%s0 + $0x30] sm:$0xf]
  %v121 = vld [vmem:[%s0 + $0x34] sm:$0xf]
  %v122 = vld [vmem:[%s0 + $0x38] sm:$0xf]
  %v123 = vld [vmem:[%s0 + $0x3c] sm:$0xf]
  %v124 = vld [vmem:[%s0 + $0x40] sm:$0xf]
  %v125 = vld [vmem:[%s0 + $0x44] sm:$0xf]
  %v126 = vld [vmem:[%s0 + $0x48] sm:$0xf]
  %v127 = vld [vmem:[%s0 + $0x4c] sm:$0xf]
  %v128 = vld [vmem:[%s0 + $0x50] sm:$0xf]
  %v129 = vld [vmem:[%s0 + $0x54] sm:$0xf]
  %v130 = vld [vmem:[%s0 + $0x58] sm:$0xf]
  %v131 = vld [vmem:[%s0 + $0x5c] sm:$0xf]
  %v132 = vld [vmem:[%s0 + $0x60] sm:$0xf]
  %v133 = vld [vmem:[%s0 + $0x64] sm:$0xf]
  %v134 = vld [vmem:[%s0 + $0x68] sm:$0xf]
  %v135 = vld [vmem:[%s0 + $0x6c] sm:$0xf]
  %v136 = vld [vmem:[%s0 + $0x70] sm:$0xf]
  %v137 = vld [vmem:[%s0 + $0x74] sm:$0xf]
  %v138 = vld [vmem:[%s0 + $0x78] sm:$0xf]
  %v139 = vld [vmem:[%s0 + $0x7c] sm:$0xf]
  %v140 = vld [vmem:[%s0 + $0x80] sm:$0xf]
  %v141 = vld [vmem:[%s0 + $0x84] sm:$0xf]
  %v142 = vld [vmem:[%s0 + $0x88] sm:$0xf]
  %v143 = vld [vmem:[%s0 + $0x8c] sm:$0xf]
  %v144 = vld [vmem:[%s0 + $0x90] sm:$0xf]
  %v145 = vld [vmem:[%s0 + $0x94] sm:$0xf]
  %v146 = vld [vmem:[%s0 + $0x98] sm:$0xf]
  %v147 = vld [vmem:[%s0 + $0x9c] sm:$0xf]
  %v148 = vld [vmem:[%s0 + $0xa0] sm:$0xf]
  %v149 = vld [vmem:[%s0 + $0xa4] sm:$0xf]
  %v150 = vld [vmem:[%s0 + $0xa8] sm:$0xf]
  %v151 = vld [vmem:[%s0 + $0xac] sm:$0xf]
  %v152 = vld [vmem:[%s0 + $0xb0] sm:$0xf]
  %v153 = vld [vmem:[%s0 + $0xb4] sm:$0xf]
  %v154 = vld [vmem:[%s1] sm:$0xf]
  %v155 = vld [vmem:[%s1 + $0x4] sm:$0xf]
  %v156 = vld [vmem:[%s1 + $0x8] sm:$0xf]
  %v157 = vld [vmem:[%s1 + $0xc] sm:$0xf]
  %v158 = vld [vmem:[%s1 + $0x10] sm:$0xf]
  %v159 = vld [vmem:[%s1 + $0x14] sm:$0xf]
  %v160 = vld [vmem:[%s1 + $0x18] sm:$0xf]
  %v161 = vld [vmem:[%s1 + $0x1c] sm:$0xf]
  %v162 = vld [vmem:[%s1 + $0x20] sm:$0xf]
  %v163 = vld [vmem:[%s1 + $0x24] sm:$0xf]
  %v164 = vld [vmem:[%s1 + $0x28] sm:$0xf]
  %v165 = vld [vmem:[%s1 + $0x2c] sm:$0xf]
  %v166 = vld [vmem:[%s1 + $0x30] sm:$0xf]
  %v167 = vld [vmem:[%s1 + $0x34] sm:$0xf]
  %v168 = vld [vmem:[%s1 + $0x38] sm:$0xf]
  %v169 = vld [vmem:[%s1 + $0x3c] sm:$0xf]
  %v216 = vunpack.c.l.b16 %v108
  %v217 = vunpack.c.l.b16 %v109
  %v218 = vunpack.c.l.b16 %v110
  %v219 = vunpack.c.l.b16 %v111
  %v220 = vunpack.c.l.b16 %v112
  %v221 = vunpack.c.l.b16 %v113
  %v222 = vunpack.c.l.b16 %v114
  %v223 = vunpack.c.l.b16 %v115
  %v224 = vunpack.c.l.b16 %v116
  %v225 = vunpack.c.l.b16 %v117
  %v226 = vunpack.c.l.b16 %v118
  %v227 = vunpack.c.l.b16 %v119
  %v228 = vunpack.c.l.b16 %v120
  %v229 = vunpack.c.l.b16 %v121
  %v230 = vunpack.c.l.b16 %v122
  %v231 = vunpack.c.l.b16 %v123
  %v232 = vunpack.c.l.b16 %v124
  %v233 = vunpack.c.l.b16 %v125
  %v234 = vunpack.c.l.b16 %v126
  %v235 = vunpack.c.l.b16 %v127
  %v236 = vunpack.c.l.b16 %v128
  %v237 = vunpack.c.l.b16 %v129
  %v238 = vunpack.c.l.b16 %v130
  %v239 = vunpack.c.l.b16 %v131
  %v240 = vunpack.c.l.b16 %v132
  %v241 = vunpack.c.l.b16 %v133
  %v242 = vunpack.c.l.b16 %v134
  %v243 = vunpack.c.l.b16 %v135
  %v244 = vunpack.c.l.b16 %v136
  %v245 = vunpack.c.l.b16 %v137
  %v246 = vunpack.c.l.b16 %v138
  %v247 = vunpack.c.l.b16 %v139
  %v248 = vunpack.c.l.b16 %v140
  %v249 = vunpack.c.l.b16 %v141
  %v250 = vunpack.c.l.b16 %v142
  %v251 = vunpack.c.l.b16 %v143
  %v252 = vunpack.c.l.b16 %v144
  %v253 = vunpack.c.l.b16 %v145
  %v254 = vunpack.c.l.b16 %v146
  %v255 = vunpack.c.l.b16 %v147
  %v256 = vunpack.c.l.b16 %v148
  %v257 = vunpack.c.l.b16 %v149
  %v258 = vunpack.c.l.b16 %v150
  %v259 = vunpack.c.l.b16 %v151
  %v260 = vunpack.c.l.b16 %v152
  %v261 = vunpack.c.l.b16 %v153
  %v262 = vpack.c.b16 %v217, %v216
  %v263 = vpack.c.b16 %v219, %v218
  %v264 = vpack.c.b16 %v221, %v220
  %v265 = vpack.c.b16 %v223, %v222
  %v266 = vpack.c.b16 %v225, %v224
  %v267 = vpack.c.b16 %v227, %v226
  %v268 = vpack.c.b16 %v229, %v228
  %v269 = vpack.c.b16 %v231, %v230
  %v270 = vpack.c.b16 %v233, %v232
  %v271 = vpack.c.b16 %v235, %v234
  %v272 = vpack.c.b16 %v237, %v236
  %v273 = vpack.c.b16 %v239, %v238
  %v274 = vpack.c.b16 %v241, %v240
  %v275 = vpack.c.b16 %v243, %v242
  %v276 = vpack.c.b16 %v245, %v244
  %v277 = vpack.c.b16 %v247, %v246
  %v278 = vpack.c.b16 %v249, %v248
  %v279 = vpack.c.b16 %v251, %v250
  %v280 = vpack.c.b16 %v253, %v252
  %v281 = vpack.c.b16 %v255, %v254
  %v282 = vpack.c.b16 %v257, %v256
  %v283 = vpack.c.b16 %v259, %v258
  %v284 = vpack.c.b16 %v261, %v260
  %v324 = vunpack.c.l.b16 %v154
  %v325 = vunpack.c.l.b16 %v155
  %v326 = vunpack.c.l.b16 %v156
  %v327 = vunpack.c.l.b16 %v157
  %v328 = vunpack.c.l.b16 %v158
  %v329 = vunpack.c.l.b16 %v159
  %v330 = vunpack.c.l.b16 %v160
  %v331 = vunpack.c.l.b16 %v161
  %v332 = vunpack.c.l.b16 %v162
  %v333 = vunpack.c.l.b16 %v163
  %v334 = vunpack.c.l.b16 %v164
  %v335 = vunpack.c.l.b16 %v165
  %v336 = vunpack.c.l.b16 %v166
  %v337 = vunpack.c.l.b16 %v167
  %v338 = vunpack.c.l.b16 %v168
  %v339 = vunpack.c.l.b16 %v169
  %v340 = vpack.c.b16 %v325, %v324
  %v341 = vpack.c.b16 %v327, %v326
  %v342 = vpack.c.b16 %v329, %v328
  %v343 = vpack.c.b16 %v331, %v330
  %v344 = vpack.c.b16 %v333, %v332
  %v345 = vpack.c.b16 %v335, %v334
  %v346 = vpack.c.b16 %v337, %v336
  %v347 = vpack.c.b16 %v339, %v338
  %356 = vmatprep.subr.bf16.mxu0 0
  %357 = vmatpush1.bf16.msra.mxu0 %v340
  %358 = vmatprep.subr.bf16.mxu0 0
  %359 = vmatpush1.bf16.msra.mxu0 %v341
  %360 = vmatprep.subr.bf16.mxu0 0
  %361 = vmatpush1.bf16.msra.mxu0 %v342
  %362 = vmatprep.subr.bf16.mxu0 0
  %363 = vmatpush1.bf16.msra.mxu0 %v343
  %364 = vmatprep.subr.bf16.mxu0 0
  %365 = vmatpush1.bf16.msra.mxu0 %v344
  %366 = vmatprep.subr.bf16.mxu0 0
  %367 = vmatpush1.bf16.msra.mxu0 %v345
  %368 = vmatprep.subr.bf16.mxu0 0
  %369 = vmatpush1.bf16.msra.mxu0 %v346
  %370 = vmatprep.subr.bf16.mxu0 0
  %371 = vmatpush1.bf16.msra.mxu0 %v347
  %372 = vmatprep.subr.bf16.mxu0 0
  %373 = vmatpush1.bf16.msra.mxu0 0
  %374 = vmatprep.subr.bf16.mxu0 0
  %375 = vmatpush1.bf16.msra.mxu0 0
  %376 = vmatprep.subr.bf16.mxu0 0
  %377 = vmatpush1.bf16.msra.mxu0 0
  %378 = vmatprep.subr.bf16.mxu0 0
  %379 = vmatpush1.bf16.msra.mxu0 0
  %380 = vmatprep.subr.bf16.mxu0 0
  %381 = vmatpush1.bf16.msra.mxu0 0
  %382 = vmatprep.subr.bf16.mxu0 0
  %383 = vmatpush1.bf16.msra.mxu0 0
  %384 = vmatprep.subr.bf16.mxu0 0
  %385 = vmatpush1.bf16.msra.mxu0 0
  %386 = vmatprep.subr.bf16.mxu0 0
  %387 = vmatpush1.bf16.msra.mxu0 0
  %388 = vmatprep.mubr.bf16.mxu0 0
  %389 = vmatmul.mubr.bf16.gmra.mrb[0].mxu0 %v262
  %v390 = vpop.f32.mrb[0].mxu0
  %v391 = vadd.f32 0.0, %v390
  %v392 = vpop.f32.mrb[0].mxu0
  %v393 = vpop.f32.mrb[0].mxu0
  %v394 = vadd.f32 0.0, %v393
  %v395 = vpop.f32.mrb[0].mxu0
  %396 = vmatprep.mubr.bf16.mxu0 0
  %397 = vmatmul.mubr.bf16.gmra.mrb[0].mxu0 %v263
  %v398 = vpop.f32.mrb[0].mxu0
  %v399 = vadd.f32 0.0, %v398
  %v400 = vpop.f32.mrb[0].mxu0
  %v401 = vpop.f32.mrb[0].mxu0
  %v402 = vadd.f32 0.0, %v401
  %v403 = vpop.f32.mrb[0].mxu0
  %404 = vmatprep.mubr.bf16.mxu0 0
  %405 = vmatmul.mubr.bf16.gmra.mrb[0].mxu0 %v264
  %v406 = vpop.f32.mrb[0].mxu0
  %v407 = vadd.f32 0.0, %v406
  %v408 = vpop.f32.mrb[0].mxu0
  %v409 = vpop.f32.mrb[0].mxu0
  %v410 = vadd.f32 0.0, %v409
  %v411 = vpop.f32.mrb[0].mxu0
  %412 = vmatprep.mubr.bf16.mxu0 0
  %413 = vmatmul.mubr.bf16.gmra.mrb[0].mxu0 %v265
  %v414 = vpop.f32.mrb[0].mxu0
  %v415 = vadd.f32 0.0, %v414
  %v416 = vpop.f32.mrb[0].mxu0
  %v417 = vpop.f32.mrb[0].mxu0
  %v418 = vadd.f32 0.0, %v417
  %v419 = vpop.f32.mrb[0].mxu0
  %420 = vmatprep.mubr.bf16.mxu0 0
  %421 = vmatmul.mubr.bf16.gmra.mrb[0].mxu0 %v266
  %v422 = vpop.f32.mrb[0].mxu0
  %v423 = vadd.f32 0.0, %v422
  %v424 = vpop.f32.mrb[0].mxu0
  %v425 = vpop.f32.mrb[0].mxu0
  %v426 = vadd.f32 0.0, %v425
  %v427 = vpop.f32.mrb[0].mxu0
  %428 = vmatprep.mubr.bf16.mxu0 0
  %429 = vmatmul.mubr.bf16.gmra.mrb[0].mxu0 %v267
  %v430 = vpop.f32.mrb[0].mxu0
  %v431 = vadd.f32 0.0, %v430
  %v432 = vpop.f32.mrb[0].mxu0
  %v433 = vpop.f32.mrb[0].mxu0
  %v434 = vadd.f32 0.0, %v433
  %v435 = vpop.f32.mrb[0].mxu0
  %436 = vmatprep.mubr.bf16.mxu0 0
  %437 = vmatmul.mubr.bf16.gmra.mrb[0].mxu0 %v268
  %v438 = vpop.f32.mrb[0].mxu0
  %v439 = vadd.f32 0.0, %v438
  %v440 = vpop.f32.mrb[0].mxu0
  %v441 = vpop.f32.mrb[0].mxu0
  %v442 = vadd.f32 0.0, %v441
  %v443 = vpop.f32.mrb[0].mxu0
  %444 = vmatprep.mubr.bf16.mxu0 0
  %445 = vmatmul.mubr.bf16.gmra.mrb[0].mxu0 %v269
  %v446 = vpop.f32.mrb[0].mxu0
  %v447 = vadd.f32 0.0, %v446
  %v448 = vpop.f32.mrb[0].mxu0
  %v449 = vpop.f32.mrb[0].mxu0
  %v450 = vadd.f32 0.0, %v449
  %v451 = vpop.f32.mrb[0].mxu0
  %452 = vmatprep.mubr.bf16.mxu0 0
  %453 = vmatmul.mubr.bf16.gmra.mrb[0].mxu0 %v270
  %v454 = vpop.f32.mrb[0].mxu0
  %v455 = vadd.f32 0.0, %v454
  %v456 = vpop.f32.mrb[0].mxu0
  %v457 = vpop.f32.mrb[0].mxu0
  %v458 = vadd.f32 0.0, %v457
  %v459 = vpop.f32.mrb[0].mxu0
  %460 = vmatprep.mubr.bf16.mxu0 0
  %461 = vmatmul.mubr.bf16.gmra.mrb[0].mxu0 %v271
  %v462 = vpop.f32.mrb[0].mxu0
  %v463 = vadd.f32 0.0, %v462
  %v464 = vpop.f32.mrb[0].mxu0
  %v465 = vpop.f32.mrb[0].mxu0
  %v466 = vadd.f32 0.0, %v465
  %v467 = vpop.f32.mrb[0].mxu0
  %468 = vmatprep.mubr.bf16.mxu0 0
  %469 = vmatmul.mubr.bf16.gmra.mrb[0].mxu0 %v272
  %v470 = vpop.f32.mrb[0].mxu0
  %v471 = vadd.f32 0.0, %v470
  %v472 = vpop.f32.mrb[0].mxu0
  %v473 = vpop.f32.mrb[0].mxu0
  %v474 = vadd.f32 0.0, %v473
  %v475 = vpop.f32.mrb[0].mxu0
  %476 = vmatprep.mubr.bf16.mxu0 0
  %477 = vmatmul.mubr.bf16.gmra.mrb[0].mxu0 %v273
  %v478 = vpop.f32.mrb[0].mxu0
  %v479 = vadd.f32 0.0, %v478
  %v480 = vpop.f32.mrb[0].mxu0
  %v481 = vpop.f32.mrb[0].mxu0
  %v482 = vadd.f32 0.0, %v481
  %v483 = vpop.f32.mrb[0].mxu0
  %484 = vmatprep.mubr.bf16.mxu0 0
  %485 = vmatmul.mubr.bf16.gmra.mrb[0].mxu0 %v274
  %v486 = vpop.f32.mrb[0].mxu0
  %v487 = vadd.f32 0.0, %v486
  %v488 = vpop.f32.mrb[0].mxu0
  %v489 = vpop.f32.mrb[0].mxu0
  %v490 = vadd.f32 0.0, %v489
  %v491 = vpop.f32.mrb[0].mxu0
  %492 = vmatprep.mubr.bf16.mxu0 0
  %493 = vmatmul.mubr.bf16.gmra.mrb[0].mxu0 %v275
  %v494 = vpop.f32.mrb[0].mxu0
  %v495 = vadd.f32 0.0, %v494
  %v496 = vpop.f32.mrb[0].mxu0
  %v497 = vpop.f32.mrb[0].mxu0
  %v498 = vadd.f32 0.0, %v497
  %v499 = vpop.f32.mrb[0].mxu0
  %500 = vmatprep.mubr.bf16.mxu0 0
  %501 = vmatmul.mubr.bf16.gmra.mrb[0].mxu0 %v276
  %v502 = vpop.f32.mrb[0].mxu0
  %v503 = vadd.f32 0.0, %v502
  %v504 = vpop.f32.mrb[0].mxu0
  %v505 = vpop.f32.mrb[0].mxu0
  %v506 = vadd.f32 0.0, %v505
  %v507 = vpop.f32.mrb[0].mxu0
  %508 = vmatprep.mubr.bf16.mxu0 0
  %509 = vmatmul.mubr.bf16.gmra.mrb[0].mxu0 %v277
  %v510 = vpop.f32.mrb[0].mxu0
  %v511 = vadd.f32 0.0, %v510
  %v512 = vpop.f32.mrb[0].mxu0
  %v513 = vpop.f32.mrb[0].mxu0
  %v514 = vadd.f32 0.0, %v513
  %v515 = vpop.f32.mrb[0].mxu0
  %516 = vmatprep.mubr.bf16.mxu0 0
  %517 = vmatmul.mubr.bf16.gmra.mrb[0].mxu0 %v278
  %v518 = vpop.f32.mrb[0].mxu0
  %v519 = vadd.f32 0.0, %v518
  %v520 = vpop.f32.mrb[0].mxu0
  %v521 = vpop.f32.mrb[0].mxu0
  %v522 = vadd.f32 0.0, %v521
  %v523 = vpop.f32.mrb[0].mxu0
  %524 = vmatprep.mubr.bf16.mxu0 0
  %525 = vmatmul.mubr.bf16.gmra.mrb[0].mxu0 %v279
  %v526 = vpop.f32.mrb[0].mxu0
  %v527 = vadd.f32 0.0, %v526
  %v528 = vpop.f32.mrb[0].mxu0
  %v529 = vpop.f32.mrb[0].mxu0
  %v530 = vadd.f32 0.0, %v529
  %v531 = vpop.f32.mrb[0].mxu0
  %532 = vmatprep.mubr.bf16.mxu0 0
  %533 = vmatmul.mubr.bf16.gmra.mrb[0].mxu0 %v280
  %v534 = vpop.f32.mrb[0].mxu0
  %v535 = vadd.f32 0.0, %v534
  %v536 = vpop.f32.mrb[0].mxu0
  %v537 = vpop.f32.mrb[0].mxu0
  %v538 = vadd.f32 0.0, %v537
  %v539 = vpop.f32.mrb[0].mxu0
  %540 = vmatprep.mubr.bf16.mxu0 0
  %541 = vmatmul.mubr.bf16.gmra.mrb[0].mxu0 %v281
  %v542 = vpop.f32.mrb[0].mxu0
  %v543 = vadd.f32 0.0, %v542
  %v544 = vpop.f32.mrb[0].mxu0
  %v545 = vpop.f32.mrb[0].mxu0
  %v546 = vadd.f32 0.0, %v545
  %v547 = vpop.f32.mrb[0].mxu0
  %548 = vmatprep.mubr.bf16.mxu0 0
  %549 = vmatmul.mubr.bf16.gmra.mrb[0].mxu0 %v282
  %v550 = vpop.f32.mrb[0].mxu0
  %v551 = vadd.f32 0.0, %v550
  %v552 = vpop.f32.mrb[0].mxu0
  %v553 = vpop.f32.mrb[0].mxu0
  %v554 = vadd.f32 0.0, %v553
  %v555 = vpop.f32.mrb[0].mxu0
  %556 = vmatprep.mubr.bf16.mxu0 0
  %557 = vmatmul.mubr.bf16.gmra.mrb[0].mxu0 %v283
  %v558 = vpop.f32.mrb[0].mxu0
  %v559 = vadd.f32 0.0, %v558
  %v560 = vpop.f32.mrb[0].mxu0
  %v561 = vpop.f32.mrb[0].mxu0
  %v562 = vadd.f32 0.0, %v561
  %v563 = vpop.f32.mrb[0].mxu0
  %564 = vmatprep.mubr.bf16.mxu0 0
  %565 = vmatmul.mubr.bf16.gmra.mrb[0].mxu0 %v284
  %v566 = vpop.f32.mrb[0].mxu0
  %v567 = vadd.f32 0.0, %v566
  %v568 = vpop.f32.mrb[0].mxu0
  %v569 = vpop.f32.mrb[0].mxu0
  %v570 = vadd.f32 0.0, %v569
  %v571 = vpop.f32.mrb[0].mxu0
  %572 = vdwg.mxu0
  %v573 = vadd.f32 %v62, %v391
  %v574 = vadd.f32 %v63, %v394
  %v575 = vadd.f32 %v64, %v399
  %v576 = vadd.f32 %v65, %v402
  %v577 = vadd.f32 %v66, %v407
  %v578 = vadd.f32 %v67, %v410
  %v579 = vadd.f32 %v68, %v415
  %v580 = vadd.f32 %v69, %v418
  %v581 = vadd.f32 %v70, %v423
  %v582 = vadd.f32 %v71, %v426
  %v583 = vadd.f32 %v72, %v431
  %v584 = vadd.f32 %v73, %v434
  %v585 = vadd.f32 %v74, %v439
  %v586 = vadd.f32 %v75, %v442
  %v587 = vadd.f32 %v76, %v447
  %v588 = vadd.f32 %v77, %v450
  %v589 = vadd.f32 %v78, %v455
  %v590 = vadd.f32 %v79, %v458
  %v591 = vadd.f32 %v80, %v463
  %v592 = vadd.f32 %v81, %v466
  %v593 = vadd.f32 %v82, %v471
  %v594 = vadd.f32 %v83, %v474
  %v595 = vadd.f32 %v84, %v479
  %v596 = vadd.f32 %v85, %v482
  %v597 = vadd.f32 %v86, %v487
  %v598 = vadd.f32 %v87, %v490
  %v599 = vadd.f32 %v88, %v495
  %v600 = vadd.f32 %v89, %v498
  %v601 = vadd.f32 %v90, %v503
  %v602 = vadd.f32 %v91, %v506
  %v603 = vadd.f32 %v92, %v511
  %v604 = vadd.f32 %v93, %v514
  %v605 = vadd.f32 %v94, %v519
  %v606 = vadd.f32 %v95, %v522
  %v607 = vadd.f32 %v96, %v527
  %v608 = vadd.f32 %v97, %v530
  %v609 = vadd.f32 %v98, %v535
  %v610 = vadd.f32 %v99, %v538
  %v611 = vadd.f32 %v100, %v543
  %v612 = vadd.f32 %v101, %v546
  %v613 = vadd.f32 %v102, %v551
  %v614 = vadd.f32 %v103, %v554
  %v615 = vadd.f32 %v104, %v559
  %v616 = vadd.f32 %v105, %v562
  %v617 = vadd.f32 %v106, %v567
  %v618 = vadd.f32 %v107, %v570
  %619 = vst [vmem:[#allocation2] sm:$0xff] %v573
  %620 = vst [vmem:[#allocation2 + $0x8] sm:$0xff] %v574
  %621 = vst [vmem:[#allocation2 + $0x10] sm:$0xff] %v575
  %622 = vst [vmem:[#allocation2 + $0x18] sm:$0xff] %v576
  %623 = vst [vmem:[#allocation2 + $0x20] sm:$0xff] %v577
  %624 = vst [vmem:[#allocation2 + $0x28] sm:$0xff] %v578
  %625 = vst [vmem:[#allocation2 + $0x30] sm:$0xff] %v579
  %626 = vst [vmem:[#allocation2 + $0x38] sm:$0xff] %v580
  %627 = vst [vmem:[#allocation2 + $0x40] sm:$0xff] %v581
  %628 = vst [vmem:[#allocation2 + $0x48] sm:$0xff] %v582
  %629 = vst [vmem:[#allocation2 + $0x50] sm:$0xff] %v583
  %630 = vst [vmem:[#allocation2 + $0x58] sm:$0xff] %v584
  %631 = vst [vmem:[#allocation2 + $0x60] sm:$0xff] %v585
  %632 = vst [vmem:[#allocation2 + $0x68] sm:$0xff] %v586
  %633 = vst [vmem:[#allocation2 + $0x70] sm:$0xff] %v587
  %634 = vst [vmem:[#allocation2 + $0x78] sm:$0xff] %v588
  %635 = vst [vmem:[#allocation2 + $0x80] sm:$0xff] %v589
  %636 = vst [vmem:[#allocation2 + $0x88] sm:$0xff] %v590
  %637 = vst [vmem:[#allocation2 + $0x90] sm:$0xff] %v591
  %638 = vst [vmem:[#allocation2 + $0x98] sm:$0xff] %v592
  %639 = vst [vmem:[#allocation2 + $0xa0] sm:$0xff] %v593
  %640 = vst [vmem:[#allocation2 + $0xa8] sm:$0xff] %v594
  %641 = vst [vmem:[#allocation2 + $0xb0] sm:$0xff] %v595
  %642 = vst [vmem:[#allocation2 + $0xb8] sm:$0xff] %v596
  %643 = vst [vmem:[#allocation2 + $0xc0] sm:$0xff] %v597
  %644 = vst [vmem:[#allocation2 + $0xc8] sm:$0xff] %v598
  %645 = vst [vmem:[#allocation2 + $0xd0] sm:$0xff] %v599
  %646 = vst [vmem:[#allocation2 + $0xd8] sm:$0xff] %v600
  %647 = vst [vmem:[#allocation2 + $0xe0] sm:$0xff] %v601
  %648 = vst [vmem:[#allocation2 + $0xe8] sm:$0xff] %v602
  %649 = vst [vmem:[#allocation2 + $0xf0] sm:$0xff] %v603
  %650 = vst [vmem:[#allocation2 + $0xf8] sm:$0xff] %v604
  %651 = vst [vmem:[#allocation2 + $0x100] sm:$0xff] %v605
  %652 = vst [vmem:[#allocation2 + $0x108] sm:$0xff] %v606
  %653 = vst [vmem:[#allocation2 + $0x110] sm:$0xff] %v607
  %654 = vst [vmem:[#allocation2 + $0x118] sm:$0xff] %v608
  %655 = vst [vmem:[#allocation2 + $0x120] sm:$0xff] %v609
  %656 = vst [vmem:[#allocation2 + $0x128] sm:$0xff] %v610
  %657 = vst [vmem:[#allocation2 + $0x130] sm:$0xff] %v611
  %658 = vst [vmem:[#allocation2 + $0x138] sm:$0xff] %v612
  %659 = vst [vmem:[#allocation2 + $0x140] sm:$0xff] %v613
  %660 = vst [vmem:[#allocation2 + $0x148] sm:$0xff] %v614
  %661 = vst [vmem:[#allocation2 + $0x150] sm:$0xff] %v615
  %662 = vst [vmem:[#allocation2 + $0x158] sm:$0xff] %v616
  %663 = vst [vmem:[#allocation2 + $0x160] sm:$0xff] %v617
  %664 = vst [vmem:[#allocation2 + $0x168] sm:$0xff] %v618
  // Predicated region
  $region14: #{capsule_net_forward.13} parent=0 // pred_check
    %p665 = pneg %p12
  $region15: #{capsule_net_forward.13} parent=0 // pred_check_branch
    %667 = sbr.rel (%p665) target = $region17
  $region16: #{capsule_net_forward.13} parent=0 // pred_region
    %v668 = vld [vmem:[#allocation2] sm:$0xff]
    %v669 = vld [vmem:[#allocation2 + $0x8] sm:$0xff]
    %v670 = vld [vmem:[#allocation2 + $0x10] sm:$0xff]
    %v671 = vld [vmem:[#allocation2 + $0x18] sm:$0xff]
    %v672 = vld [vmem:[#allocation2 + $0x20] sm:$0xff]
    %v673 = vld [vmem:[#allocation2 + $0x28] sm:$0xff]
    %v674 = vld [vmem:[#allocation2 + $0x30] sm:$0xff]
    %v675 = vld [vmem:[#allocation2 + $0x38] sm:$0xff]
    %v676 = vld [vmem:[#allocation2 + $0x40] sm:$0xff]
    %v677 = vld [vmem:[#allocation2 + $0x48] sm:$0xff]
    %v678 = vld [vmem:[#allocation2 + $0x50] sm:$0xff]
    %v679 = vld [vmem:[#allocation2 + $0x58] sm:$0xff]
    %v680 = vld [vmem:[#allocation2 + $0x60] sm:$0xff]
    %v681 = vld [vmem:[#allocation2 + $0x68] sm:$0xff]
    %v682 = vld [vmem:[#allocation2 + $0x70] sm:$0xff]
    %v683 = vld [vmem:[#allocation2 + $0x78] sm:$0xff]
    %v684 = vld [vmem:[#allocation2 + $0x80] sm:$0xff]
    %v685 = vld [vmem:[#allocation2 + $0x88] sm:$0xff]
    %v686 = vld [vmem:[#allocation2 + $0x90] sm:$0xff]
    %v687 = vld [vmem:[#allocation2 + $0x98] sm:$0xff]
    %v688 = vld [vmem:[#allocation2 + $0xa0] sm:$0xff]
    %v689 = vld [vmem:[#allocation2 + $0xa8] sm:$0xff]
    %v690 = vld [vmem:[#allocation2 + $0xb0] sm:$0xff]
    %v691 = vld [vmem:[#allocation2 + $0xb8] sm:$0xff]
    %v692 = vld [vmem:[#allocation2 + $0xc0] sm:$0xff]
    %v693 = vld [vmem:[#allocation2 + $0xc8] sm:$0xff]
    %v694 = vld [vmem:[#allocation2 + $0xd0] sm:$0xff]
    %v695 = vld [vmem:[#allocation2 + $0xd8] sm:$0xff]
    %v696 = vld [vmem:[#allocation2 + $0xe0] sm:$0xff]
    %v697 = vld [vmem:[#allocation2 + $0xe8] sm:$0xff]
    %v698 = vld [vmem:[#allocation2 + $0xf0] sm:$0xff]
    %v699 = vld [vmem:[#allocation2 + $0xf8] sm:$0xff]
    %v700 = vld [vmem:[#allocation2 + $0x100] sm:$0xff]
    %v701 = vld [vmem:[#allocation2 + $0x108] sm:$0xff]
    %v702 = vld [vmem:[#allocation2 + $0x110] sm:$0xff]
    %v703 = vld [vmem:[#allocation2 + $0x118] sm:$0xff]
    %v704 = vld [vmem:[#allocation2 + $0x120] sm:$0xff]
    %v705 = vld [vmem:[#allocation2 + $0x128] sm:$0xff]
    %v706 = vld [vmem:[#allocation2 + $0x130] sm:$0xff]
    %v707 = vld [vmem:[#allocation2 + $0x138] sm:$0xff]
    %v708 = vld [vmem:[#allocation2 + $0x140] sm:$0xff]
    %v709 = vld [vmem:[#allocation2 + $0x148] sm:$0xff]
    %v710 = vld [vmem:[#allocation2 + $0x150] sm:$0xff]
    %v711 = vld [vmem:[#allocation2 + $0x158] sm:$0xff]
    %v712 = vld [vmem:[#allocation2 + $0x160] sm:$0xff]
    %v713 = vld [vmem:[#allocation2 + $0x168] sm:$0xff]
    %714 = vst [vmem:[%s2] sm:$0xff] %v668
    %715 = vst [vmem:[%s2 + $0x8] sm:$0xff] %v669
    %716 = vst [vmem:[%s2 + $0x10] sm:$0xff] %v670
    %717 = vst [vmem:[%s2 + $0x18] sm:$0xff] %v671
    %718 = vst [vmem:[%s2 + $0x20] sm:$0xff] %v672
    %719 = vst [vmem:[%s2 + $0x28] sm:$0xff] %v673
    %720 = vst [vmem:[%s2 + $0x30] sm:$0xff] %v674
    %721 = vst [vmem:[%s2 + $0x38] sm:$0xff] %v675
    %722 = vst [vmem:[%s2 + $0x40] sm:$0xff] %v676
    %723 = vst [vmem:[%s2 + $0x48] sm:$0xff] %v677
    %724 = vst [vmem:[%s2 + $0x50] sm:$0xff] %v678
    %725 = vst [vmem:[%s2 + $0x58] sm:$0xff] %v679
    %726 = vst [vmem:[%s2 + $0x60] sm:$0xff] %v680
    %727 = vst [vmem:[%s2 + $0x68] sm:$0xff] %v681
    %728 = vst [vmem:[%s2 + $0x70] sm:$0xff] %v682
    %729 = vst [vmem:[%s2 + $0x78] sm:$0xff] %v683
    %730 = vst [vmem:[%s2 + $0x80] sm:$0xff] %v684
    %731 = vst [vmem:[%s2 + $0x88] sm:$0xff] %v685
    %732 = vst [vmem:[%s2 + $0x90] sm:$0xff] %v686
    %733 = vst [vmem:[%s2 + $0x98] sm:$0xff] %v687
    %734 = vst [vmem:[%s2 + $0xa0] sm:$0xff] %v688
    %735 = vst [vmem:[%s2 + $0xa8] sm:$0xff] %v689
    %736 = vst [vmem:[%s2 + $0xb0] sm:$0xff] %v690
    %737 = vst [vmem:[%s2 + $0xb8] sm:$0xff] %v691
    %738 = vst [vmem:[%s2 + $0xc0] sm:$0xff] %v692
    %739 = vst [vmem:[%s2 + $0xc8] sm:$0xff] %v693
    %740 = vst [vmem:[%s2 + $0xd0] sm:$0xff] %v694
    %741 = vst [vmem:[%s2 + $0xd8] sm:$0xff] %v695
    %742 = vst [vmem:[%s2 + $0xe0] sm:$0xff] %v696
    %743 = vst [vmem:[%s2 + $0xe8] sm:$0xff] %v697
    %744 = vst [vmem:[%s2 + $0xf0] sm:$0xff] %v698
    %745 = vst [vmem:[%s2 + $0xf8] sm:$0xff] %v699
    %746 = vst [vmem:[%s2 + $0x100] sm:$0xff] %v700
    %747 = vst [vmem:[%s2 + $0x108] sm:$0xff] %v701
    %748 = vst [vmem:[%s2 + $0x110] sm:$0xff] %v702
    %749 = vst [vmem:[%s2 + $0x118] sm:$0xff] %v703
    %750 = vst [vmem:[%s2 + $0x120] sm:$0xff] %v704
    %751 = vst [vmem:[%s2 + $0x128] sm:$0xff] %v705
    %752 = vst [vmem:[%s2 + $0x130] sm:$0xff] %v706
    %753 = vst [vmem:[%s2 + $0x138] sm:$0xff] %v707
    %754 = vst [vmem:[%s2 + $0x140] sm:$0xff] %v708
    %755 = vst [vmem:[%s2 + $0x148] sm:$0xff] %v709
    %756 = vst [vmem:[%s2 + $0x150] sm:$0xff] %v710
    %757 = vst [vmem:[%s2 + $0x158] sm:$0xff] %v711
    %758 = vst [vmem:[%s2 + $0x160] sm:$0xff] %v712
    %759 = vst [vmem:[%s2 + $0x168] sm:$0xff] %v713
  $region17: #{capsule_net_forward.13} parent=0 // pred_fallthru
    _
  // Predicated region
  $region18: #{capsule_net_forward.13} parent=0 // pred_check
    _
  $region19: #{capsule_net_forward.13} parent=0 // pred_check_branch
    %761 = sbr.rel (0) target = $region21
  $region20: #{capsule_net_forward.13} parent=0 // pred_region
    _
  $region21: #{capsule_net_forward.13} parent=0 // pred_fallthru
    _
  // Predicated region
  $region22: #{capsule_net_forward.13} parent=0 // pred_check
    _
  $region23: #{capsule_net_forward.13} parent=0 // pred_check_branch
    %763 = sbr.rel (0) target = $region25
  $region24: #{capsule_net_forward.13} parent=0 // pred_region
    _
  $region25: #{capsule_net_forward.13} parent=0 // pred_fallthru
    _

// kernel: capsule_net_forward.14
$region0: #{capsule_net_forward.14}
  #allocation0 [shape = 'u32[]', space=smem, size = 0x4, offset = 0x4, fixed_abs, tag = 'smem constant byte address 0x4 - core index']
  #allocation1 [shape = 'u32[144,128]{1,0:T(1,128)}', space=vmem, size = 0x12000, scoped, tag = 'internal scratch']
  %s0 = inlined_call_operand.vmem [shape: f32[2,182,32], index: 0, kind: input, shape index: {}]
  %s1 = inlined_call_operand.vmem [shape: f32[2,32], index: 1, kind: input, shape index: {}]
  %s2 = inlined_call_operand.vmem [shape: f32[32,2], index: 2, kind: input, shape index: {}]
  %s3 = inlined_call_operand.vmem [shape: f32[2,182,32], index: 3, kind: output, shape index: {0}]
  %s4 = inlined_call_operand.vmem [shape: f32[2,182,2], index: 4, kind: output, shape index: {1}]
  %5 = xla_tuple %s3, %s4
  %s6 = sld [smem:[#allocation0]]
  $region53: #{capsule_net_forward.14} parent=0
    _
  %s8 = ssub.s32 1, %s6
  %s9 = scalar_select 0, %s8, %s6
  loop: start=0, step=1, limit=4
  $region2: #{capsule_net_forward.14} parent=0 // loop_pre_header
    _
  $region3: #{capsule_net_forward.14} parent=0 // loop_header
    %s11 = sphi 0, %s15
    %p12 = scmp.ge.s32.totalorder %s11, 4
    %s21 = sphi 0, %s23
    %s24 = sphi 0, %s21
    %s25 = sphi 0, %s24
    %s41 = sphi 0, %s25
    %s45 = sphi 0, %s45
    %s47 = sphi 0, %s45
    %s48 = sphi 0, %s47
    %s62 = sphi 0, %s48
    %s66 = sphi 0, %s66
    %s68 = sphi 0, %s66
    %s69 = sphi 0, %s68
    %s83 = sphi 0, %s69
    %s89 = sphi 0, %s91
    %s92 = sphi 0, %s89
    %s93 = sphi 0, %s92
    %s109 = sphi 0, %s93
    %s115 = sphi 0, %s117
    %s118 = sphi 0, %s115
    %s119 = sphi 0, %s118
    %s135 = sphi 0, %s119
  $region4: #{capsule_net_forward.14} parent=0 // loop_header_branch
    %14 = sbr.rel (%p12) target = $region8
  $region5: #{capsule_net_forward.14} parent=0 // loop_body
    %s16 = ssub.s32 %s11, 1
    %s17 = ssub.s32 %s11, 2
    %s18 = sadd.s32 %s11, 1
    %s19 = ssub.s32 %s11, %s18
    %p20 = scmp.eq.s32.totalorder %s19, 0
    %s22 = sadd.s32 %s21, 1
    %s23 = scalar_select %p20, %s21, %s22
    %p26 = pneg %p20
    %p27 = scmp.eq.s32.totalorder %s11, 1
    %p28 = por %p26, %p27
    %p29 = scmp.ne.s32.totalorder %s21, %s24
    %p30 = scmp.eq.s32.totalorder %s11, 0
    %p31 = por %p29, %p30
    %p32 = scmp.ne.s32.totalorder %s21, %s24
    %p33 = scmp.eq.s32.totalorder %s16, 1
    %p34 = por %p32, %p33
    %p35 = scmp.ne.s32.totalorder %s24, %s25
    %p36 = scmp.eq.s32.totalorder %s16, 0
    %p37 = por %p35, %p36
    %p38 = scmp.ne.s32.totalorder %s24, %s25
    %p39 = scmp.eq.s32.totalorder %s17, 1
    %p40 = por %p38, %p39
    %p42 = scmp.ne.s32.totalorder %s25, %s41
    %p43 = scmp.eq.s32.totalorder %s17, 0
    %p44 = por %p42, %p43
    %s46 = sadd.s32 %s45, 1
    %p49 = scmp.eq.s32.totalorder %s11, 1
    %p50 = scmp.ne.s32.totalorder %s45, %s47
    %p51 = scmp.eq.s32.totalorder %s11, 0
    %p52 = por %p50, %p51
    %p53 = scmp.ne.s32.totalorder %s45, %s47
    %p54 = scmp.eq.s32.totalorder %s16, 1
    %p55 = por %p53, %p54
    %p56 = scmp.ne.s32.totalorder %s47, %s48
    %p57 = scmp.eq.s32.totalorder %s16, 0
    %p58 = por %p56, %p57
    %p59 = scmp.ne.s32.totalorder %s47, %s48
    %p60 = scmp.eq.s32.totalorder %s17, 1
    %p61 = por %p59, %p60
    %p63 = scmp.ne.s32.totalorder %s48, %s62
    %p64 = scmp.eq.s32.totalorder %s17, 0
    %p65 = por %p63, %p64
    %s67 = sadd.s32 %s66, 1
    %p70 = scmp.eq.s32.totalorder %s11, 1
    %p71 = scmp.ne.s32.totalorder %s66, %s68
    %p72 = scmp.eq.s32.totalorder %s11, 0
    %p73 = por %p71, %p72
    %p74 = scmp.ne.s32.totalorder %s66, %s68
    %p75 = scmp.eq.s32.totalorder %s16, 1
    %p76 = por %p74, %p75
    %p77 = scmp.ne.s32.totalorder %s68, %s69
    %p78 = scmp.eq.s32.totalorder %s16, 0
    %p79 = por %p77, %p78
    %p80 = scmp.ne.s32.totalorder %s68, %s69
    %p81 = scmp.eq.s32.totalorder %s17, 1
    %p82 = por %p80, %p81
    %p84 = scmp.ne.s32.totalorder %s69, %s83
    %p85 = scmp.eq.s32.totalorder %s17, 0
    %p86 = por %p84, %p85
    %s87 = ssub.s32 %s11, %s18
    %p88 = scmp.eq.s32.totalorder %s87, 0
    %s90 = sadd.s32 %s89, 1
    %s91 = scalar_select %p88, %s89, %s90
    %p94 = pneg %p88
    %p95 = scmp.eq.s32.totalorder %s11, 1
    %p96 = por %p94, %p95
    %p97 = scmp.ne.s32.totalorder %s89, %s92
    %p98 = scmp.eq.s32.totalorder %s11, 0
    %p99 = por %p97, %p98
    %p100 = scmp.ne.s32.totalorder %s89, %s92
    %p101 = scmp.eq.s32.totalorder %s16, 1
    %p102 = por %p100, %p101
    %p103 = scmp.ne.s32.totalorder %s92, %s93
    %p104 = scmp.eq.s32.totalorder %s16, 0
    %p105 = por %p103, %p104
    %p106 = scmp.ne.s32.totalorder %s92, %s93
    %p107 = scmp.eq.s32.totalorder %s17, 1
    %p108 = por %p106, %p107
    %p110 = scmp.ne.s32.totalorder %s93, %s109
    %p111 = scmp.eq.s32.totalorder %s17, 0
    %p112 = por %p110, %p111
    %s113 = ssub.s32 %s11, %s18
    %p114 = scmp.eq.s32.totalorder %s113, 0
    %s116 = sadd.s32 %s115, 1
    %s117 = scalar_select %p114, %s115, %s116
    %p120 = pneg %p114
    %p121 = scmp.eq.s32.totalorder %s11, 1
    %p122 = por %p120, %p121
    %p123 = scmp.ne.s32.totalorder %s115, %s118
    %p124 = scmp.eq.s32.totalorder %s11, 0
    %p125 = por %p123, %p124
    %p126 = scmp.ne.s32.totalorder %s115, %s118
    %p127 = scmp.eq.s32.totalorder %s16, 1
    %p128 = por %p126, %p127
    %p129 = scmp.ne.s32.totalorder %s118, %s119
    %p130 = scmp.eq.s32.totalorder %s16, 0
    %p131 = por %p129, %p130
    %p132 = scmp.ne.s32.totalorder %s118, %s119
    %p133 = scmp.eq.s32.totalorder %s17, 1
    %p134 = por %p132, %p133
    %p136 = scmp.ne.s32.totalorder %s119, %s135
    %p137 = scmp.eq.s32.totalorder %s17, 0
    %p138 = por %p136, %p137
    %p139 = scmp.le.s32.totalorder 1, %s11
    %p140 = scmp.lt.s32.totalorder %s11, 3
    %p141 = pnand %p139, %p140
    %p142 = pneg %p141
    // Predicated region
    $region9: #{capsule_net_forward.14} parent=5 // pred_check
      _
    $region10: #{capsule_net_forward.14} parent=5 // pred_check_branch
      %144 = sbr.rel (%p141) target = $region12
    $region11: #{capsule_net_forward.14} parent=5 // pred_region
      %s145 = ssub.s32 %s11, 1
      // Predicated region
      $region13: #{capsule_net_forward.14} parent=11 // pred_check
        %p146 = pneg %p58
      $region14: #{capsule_net_forward.14} parent=11 // pred_check_branch
        %148 = sbr.rel (%p146) target = $region16
      $region15: #{capsule_net_forward.14} parent=11 // pred_region
        _
      $region16: #{capsule_net_forward.14} parent=11 // pred_fallthru
        _
      // Predicated region
      $region17: #{capsule_net_forward.14} parent=11 // pred_check
        %p149 = pneg %p79
      $region18: #{capsule_net_forward.14} parent=11 // pred_check_branch
        %151 = sbr.rel (%p149) target = $region20
      $region19: #{capsule_net_forward.14} parent=11 // pred_region
        _
      $region20: #{capsule_net_forward.14} parent=11 // pred_fallthru
        _
    $region12: #{capsule_net_forward.14} parent=5 // pred_fallthru
      _
    %p152 = scmp.lt.s32.totalorder %s11, 2
    // Predicated region
    $region21: #{capsule_net_forward.14} parent=5 // pred_check
      %p153 = pneg %p152
    $region22: #{capsule_net_forward.14} parent=5 // pred_check_branch
      %155 = sbr.rel (%p153) target = $region24
    $region23: #{capsule_net_forward.14} parent=5 // pred_region
      // Predicated region
      $region25: #{capsule_net_forward.14} parent=23 // pred_check
        %p156 = pneg %p31
      $region26: #{capsule_net_forward.14} parent=23 // pred_check_branch
        %158 = sbr.rel (%p156) target = $region28
      $region27: #{capsule_net_forward.14} parent=23 // pred_region
        %p159 = scmp.lt.s32.totalorder %s11, 1
        %s160 = scalar_select %p159, %s11, 1
        %s161 = smul.addr %s160, 23
        %s162 = smul.addr %s161, 8
        %s163 = scalar_lea.vmem %s0, %s162
      $region28: #{capsule_net_forward.14} parent=23 // pred_fallthru
        _
    $region24: #{capsule_net_forward.14} parent=5 // pred_fallthru
      _
    %p164 = scmp.le.s32.totalorder 1, %s11
    %p165 = scmp.lt.s32.totalorder %s11, 3
    %p166 = pnand %p164, %p165
    %p167 = pneg %p166
    // Predicated region
    $region29: #{capsule_net_forward.14} parent=5 // pred_check
      _
    $region30: #{capsule_net_forward.14} parent=5 // pred_check_branch
      %169 = sbr.rel (%p166) target = $region32
    $region31: #{capsule_net_forward.14} parent=5 // pred_region
      %s170 = ssub.s32 %s11, 1
      %p171 = scmp.lt.s32.totalorder %s16, 1
      %s172 = scalar_select %p171, %s16, 1
      %s173 = smul.addr %s172, 23
      %s174 = smul.addr %s173, 8
      %s175 = scalar_lea.vmem %s0, %s174
      %p176 = pneg %p37
      %p177 = pneg %p34
      %p178 = pneg %p58
      %p179 = pneg %p55
      %p180 = pneg %p79
      %p181 = pneg %p76
      %p182 = pneg %p105
      %p183 = pneg %p102
      %p184 = scmp.lt.s32.totalorder %s16, 1
      %s185 = scalar_select %p184, %s16, 1
      %s186 = smul.addr %s185, 23
      %s187 = smul.addr %s186, 8
      %s188 = scalar_lea.vmem %s3, %s187
      %p189 = pneg %p131
      %p190 = pneg %p128
      %p191 = scmp.lt.s32.totalorder %s16, 1
      %s192 = scalar_select %p191, %s16, 1
      %s193 = smul.addr %s192, 23
      %s194 = smul.addr %s193, 8
      %s195 = scalar_lea.vmem %s4, %s194
      %p196 = scmp.lt.s32.totalorder %s16, 1
      %s197 = scalar_select %p196, %s16, 1
      %s198 = smul.addr %s197, 23
      %s199 = smul.addr %s198, 8
      %s200 = scalar_lea.vmem %s0, %s199
      %p201 = scmp.lt.s32.totalorder %s16, 1
      %s202 = scalar_select %p201, %s16, 1
      %s203 = smul.addr %s202, 23
      %s204 = smul.addr %s203, 8
      %s205 = scalar_lea.vmem %s3, %s204
      %p206 = scmp.lt.s32.totalorder %s16, 1
      %s207 = scalar_select %p206, %s16, 1
      %s208 = smul.addr %s207, 23
      %s209 = smul.addr %s208, 8
      %s210 = scalar_lea.vmem %s4, %s209
      %v211 = vld [vmem:[%s200] sm:$0xff]
      %v212 = vld [vmem:[%s200 + $0x8] sm:$0xff]
      %v213 = vld [vmem:[%s200 + $0x10] sm:$0xff]
      %v214 = vld [vmem:[%s200 + $0x18] sm:$0xff]
      %v215 = vld [vmem:[%s200 + $0x20] sm:$0xff]
      %v216 = vld [vmem:[%s200 + $0x28] sm:$0xff]
      %v217 = vld [vmem:[%s200 + $0x30] sm:$0xff]
      %v218 = vld [vmem:[%s200 + $0x38] sm:$0xff]
      %v219 = vld [vmem:[%s200 + $0x40] sm:$0xff]
      %v220 = vld [vmem:[%s200 + $0x48] sm:$0xff]
      %v221 = vld [vmem:[%s200 + $0x50] sm:$0xff]
      %v222 = vld [vmem:[%s200 + $0x58] sm:$0xff]
      %v223 = vld [vmem:[%s200 + $0x60] sm:$0xff]
      %v224 = vld [vmem:[%s200 + $0x68] sm:$0xff]
      %v225 = vld [vmem:[%s200 + $0x70] sm:$0xff]
      %v226 = vld [vmem:[%s200 + $0x78] sm:$0xff]
      %v227 = vld [vmem:[%s200 + $0x80] sm:$0xff]
      %v228 = vld [vmem:[%s200 + $0x88] sm:$0xff]
      %v229 = vld [vmem:[%s200 + $0x90] sm:$0xff]
      %v230 = vld [vmem:[%s200 + $0x98] sm:$0xff]
      %v231 = vld [vmem:[%s200 + $0xa0] sm:$0xff]
      %v232 = vld [vmem:[%s200 + $0xa8] sm:$0xff]
      %v233 = vld [vmem:[%s200 + $0xb0] sm:$0x3f]
      %vm234 = vcmask 261120
      %v235 = vsel %vm234, %v211, 0.0
      %v236 = vsel %vm234, %v212, 0.0
      %v237 = vadd.f32 %v235, %v236
      %v238 = vsel %vm234, %v213, 0.0
      %v239 = vadd.f32 %v237, %v238
      %v240 = vsel %vm234, %v214, 0.0
      %v241 = vadd.f32 %v239, %v240
      %v242 = vsel %vm234, %v215, 0.0
      %v243 = vadd.f32 %v241, %v242
      %v244 = vsel %vm234, %v216, 0.0
      %v245 = vadd.f32 %v243, %v244
      %v246 = vsel %vm234, %v217, 0.0
      %v247 = vadd.f32 %v245, %v246
      %v248 = vsel %vm234, %v218, 0.0
      %v249 = vadd.f32 %v247, %v248
      %v250 = vsel %vm234, %v219, 0.0
      %v251 = vadd.f32 %v249, %v250
      %v252 = vsel %vm234, %v220, 0.0
      %v253 = vadd.f32 %v251, %v252
      %v254 = vsel %vm234, %v221, 0.0
      %v255 = vadd.f32 %v253, %v254
      %v256 = vsel %vm234, %v222, 0.0
      %v257 = vadd.f32 %v255, %v256
      %v258 = vsel %vm234, %v223, 0.0
      %v259 = vadd.f32 %v257, %v258
      %v260 = vsel %vm234, %v224, 0.0
      %v261 = vadd.f32 %v259, %v260
      %v262 = vsel %vm234, %v225, 0.0
      %v263 = vadd.f32 %v261, %v262
      %v264 = vsel %vm234, %v226, 0.0
      %v265 = vadd.f32 %v263, %v264
      %v266 = vsel %vm234, %v227, 0.0
      %v267 = vadd.f32 %v265, %v266
      %v268 = vsel %vm234, %v228, 0.0
      %v269 = vadd.f32 %v267, %v268
      %v270 = vsel %vm234, %v229, 0.0
      %v271 = vadd.f32 %v269, %v270
      %v272 = vsel %vm234, %v230, 0.0
      %v273 = vadd.f32 %v271, %v272
      %v274 = vsel %vm234, %v231, 0.0
      %v275 = vadd.f32 %v273, %v274
      %v276 = vsel %vm234, %v232, 0.0
      %v277 = vadd.f32 %v275, %v276
      %vm278 = vcmask 259072
      %v279 = vsel %vm278, %v233, 0.0
      %v280 = vadd.f32 %v277, %v279
      %v281 = vrot.slane %v280, 4
      %v282 = vadd.f32 %v280, %v281
      %v283 = vrot.slane %v282, 2
      %v284 = vadd.f32 %v282, %v283
      %v285 = vrot.slane %v284, 1
      %v286 = vadd.f32 %v284, %v285
      %v287 = vrcp.pop 182.0
      %v288 = vmul.f32 %v286, %v287
      %v289 = vsel %vm234, %v211, -inf
      %v290 = vsel %vm234, %v212, -inf
      %v291 = vsel %vm234, %v213, -inf
      %v292 = vsel %vm234, %v214, -inf
      %v293 = vsel %vm234, %v215, -inf
      %v294 = vmax.f32 %v289, %v293
      %v295 = vsel %vm234, %v216, -inf
      %v296 = vmax.f32 %v290, %v295
      %v297 = vsel %vm234, %v217, -inf
      %v298 = vmax.f32 %v291, %v297
      %v299 = vsel %vm234, %v218, -inf
      %v300 = vmax.f32 %v292, %v299
      %v301 = vsel %vm234, %v219, -inf
      %v302 = vmax.f32 %v294, %v301
      %v303 = vsel %vm234, %v220, -inf
      %v304 = vmax.f32 %v296, %v303
      %v305 = vsel %vm234, %v221, -inf
      %v306 = vmax.f32 %v298, %v305
      %v307 = vsel %vm234, %v222, -inf
      %v308 = vmax.f32 %v300, %v307
      %v309 = vsel %vm234, %v223, -inf
      %v310 = vmax.f32 %v302, %v309
      %v311 = vsel %vm234, %v224, -inf
      %v312 = vmax.f32 %v304, %v311
      %v313 = vsel %vm234, %v225, -inf
      %v314 = vmax.f32 %v306, %v313
      %v315 = vsel %vm234, %v226, -inf
      %v316 = vmax.f32 %v308, %v315
      %v317 = vsel %vm234, %v227, -inf
      %v318 = vmax.f32 %v310, %v317
      %v319 = vsel %vm234, %v228, -inf
      %v320 = vmax.f32 %v312, %v319
      %v321 = vsel %vm234, %v229, -inf
      %v322 = vmax.f32 %v314, %v321
      %v323 = vsel %vm234, %v230, -inf
      %v324 = vmax.f32 %v316, %v323
      %v325 = vsel %vm234, %v231, -inf
      %v326 = vmax.f32 %v318, %v325
      %v327 = vsel %vm234, %v232, -inf
      %v328 = vmax.f32 %v320, %v327
      %v329 = vsel %vm278, %v233, -inf
      %v330 = vmax.f32 %v322, %v329
      %v331 = vmax.f32 %v326, %v328
      %v332 = vmax.f32 %v330, %v324
      %v333 = vmax.f32 %v331, %v332
      %v334 = vrot.slane %v333, 4
      %v335 = vmax.f32 %v333, %v334
      %v336 = vrot.slane %v335, 2
      %v337 = vmax.f32 %v335, %v336
      %v338 = vrot.slane %v337, 1
      %v339 = vmax.f32 %v337, %v338
      %vm340 = vcmask 1040384
      %v341 = vsel %vm340, %v288, %v339
      %v342 = vld [vmem:[%s1] sm:$0x3]
      %v343 = vld [vmem:[%s2] sm:$0xff]
      %v344 = vld [vmem:[%s2 + $0x8] sm:$0xff]
      %v345 = vld [vmem:[%s2 + $0x10] sm:$0xff]
      %v346 = vld [vmem:[%s2 + $0x18] sm:$0xff]
      %v349 = vunpack.c.l.s4 1966171168
      %v350 = vunpack.c.0.s8 %v349
      %v351 = vlaneseq
      %v352 = vshrl.u32 %v351, 7
      %v353 = vsub.s32 %v350, %v352
      %v354 = vrot.slane %v341, %v353
      %v355 = vcombine.high %v354, %v354
      %v357 = vunpack.c.l.s4 1966171168
      %v358 = vunpack.c.0.s8 %v357
      %v359 = vlaneseq
      %v360 = vshrl.u32 %v359, 7
      %v361 = vsub.s32 %v358, %v360
      %v362 = vrot.slane %v354, %v361
      %v364 = vunpack.c.l.s4 1966171168
      %v365 = vunpack.c.0.s8 %v364
      %v366 = vlaneseq
      %v367 = vshrl.u32 %v366, 7
      %v368 = vsub.s32 %v365, %v367
      %v369 = vrot.slane %v355, %v368
      %v370 = vlaneseq
      %v371 = vshrl.u32 %v370, 7
      %v372 = vsub.s32 0, %v371
      %v373 = vrot.slane %v362, %v372
      %v374 = vlaneseq
      %v375 = vshrl.u32 %v374, 7
      %v376 = vsub.s32 0, %v375
      %v377 = vrot.slane %v369, %v376
      %v380 = vmul.f32 %v373, %v342
      %v381 = vmul.f32 %v377, %v342
      %vm382 = vcmask 254976
      %v383 = vsel %vm382, %v380, 0.0
      %384 = vadd.xlane.f32.xlu0 %v383
      %v385 = vpop.xlane.xlu0 %384
      %v386 = vsel %vm382, %v381, 0.0
      %387 = vadd.xlane.f32.xlu0 %v386
      %v388 = vpop.xlane.xlu0 %387
      %v389 = vmax.f32 %v385, 0.0
      %v390 = vmax.f32 %v388, 0.0
      %v395 = vlaneseq
      %v396 = vshrl.u32 %v395, 7
      %v397 = vsub.s32 0, %v396
      %v398 = vrot.slane %v343, %v397
      %400 = vbcast.lane.b32.xlu0 %v398, 256
      %v401 = vpop.permute.xlu0 %400
      %v402 = vlaneseq
      %v403 = vshrl.u32 %v402, 7
      %v404 = vsub.s32 1, %v403
      %v405 = vrot.slane %v343, %v404
      %407 = vbcast.lane.b32.xlu0 %v405, 256
      %v408 = vpop.permute.xlu0 %407
      %v409 = vlaneseq
      %v410 = vshrl.u32 %v409, 7
      %v411 = vsub.s32 2, %v410
      %v412 = vrot.slane %v343, %v411
      %414 = vbcast.lane.b32.xlu0 %v412, 256
      %v415 = vpop.permute.xlu0 %414
      %v416 = vlaneseq
      %v417 = vshrl.u32 %v416, 7
      %v418 = vsub.s32 3, %v417
      %v419 = vrot.slane %v343, %v418
      %421 = vbcast.lane.b32.xlu0 %v419, 256
      %v422 = vpop.permute.xlu0 %421
      %v423 = vlaneseq
      %v424 = vshrl.u32 %v423, 7
      %v425 = vsub.s32 4, %v424
      %v426 = vrot.slane %v343, %v425
      %428 = vbcast.lane.b32.xlu0 %v426, 256
      %v429 = vpop.permute.xlu0 %428
      %v430 = vlaneseq
      %v431 = vshrl.u32 %v430, 7
      %v432 = vsub.s32 5, %v431
      %v433 = vrot.slane %v343, %v432
      %435 = vbcast.lane.b32.xlu0 %v433, 256
      %v436 = vpop.permute.xlu0 %435
      %v437 = vlaneseq
      %v438 = vshrl.u32 %v437, 7
      %v439 = vsub.s32 6, %v438
      %v440 = vrot.slane %v343, %v439
      %442 = vbcast.lane.b32.xlu0 %v440, 256
      %v443 = vpop.permute.xlu0 %442
      %v444 = vlaneseq
      %v445 = vshrl.u32 %v444, 7
      %v446 = vsub.s32 7, %v445
      %v447 = vrot.slane %v343, %v446
      %449 = vbcast.lane.b32.xlu0 %v447, 256
      %v450 = vpop.permute.xlu0 %449
      %v451 = vlaneseq
      %v452 = vshrl.u32 %v451, 7
      %v453 = vsub.s32 0, %v452
      %v454 = vrot.slane %v344, %v453
      %456 = vbcast.lane.b32.xlu0 %v454, 256
      %v457 = vpop.permute.xlu0 %456
      %v458 = vlaneseq
      %v459 = vshrl.u32 %v458, 7
      %v460 = vsub.s32 1, %v459
      %v461 = vrot.slane %v344, %v460
      %463 = vbcast.lane.b32.xlu0 %v461, 256
      %v464 = vpop.permute.xlu0 %463
      %v465 = vlaneseq
      %v466 = vshrl.u32 %v465, 7
      %v467 = vsub.s32 2, %v466
      %v468 = vrot.slane %v344, %v467
      %470 = vbcast.lane.b32.xlu0 %v468, 256
      %v471 = vpop.permute.xlu0 %470
      %v472 = vlaneseq
      %v473 = vshrl.u32 %v472, 7
      %v474 = vsub.s32 3, %v473
      %v475 = vrot.slane %v344, %v474
      %477 = vbcast.lane.b32.xlu0 %v475, 256
      %v478 = vpop.permute.xlu0 %477
      %v479 = vlaneseq
      %v480 = vshrl.u32 %v479, 7
      %v481 = vsub.s32 4, %v480
      %v482 = vrot.slane %v344, %v481
      %484 = vbcast.lane.b32.xlu0 %v482, 256
      %v485 = vpop.permute.xlu0 %484
      %v486 = vlaneseq
      %v487 = vshrl.u32 %v486, 7
      %v488 = vsub.s32 5, %v487
      %v489 = vrot.slane %v344, %v488
      %491 = vbcast.lane.b32.xlu0 %v489, 256
      %v492 = vpop.permute.xlu0 %491
      %v493 = vlaneseq
      %v494 = vshrl.u32 %v493, 7
      %v495 = vsub.s32 6, %v494
      %v496 = vrot.slane %v344, %v495
      %498 = vbcast.lane.b32.xlu0 %v496, 256
      %v499 = vpop.permute.xlu0 %498
      %v500 = vlaneseq
      %v501 = vshrl.u32 %v500, 7
      %v502 = vsub.s32 7, %v501
      %v503 = vrot.slane %v344, %v502
      %505 = vbcast.lane.b32.xlu0 %v503, 256
      %v506 = vpop.permute.xlu0 %505
      %v507 = vlaneseq
      %v508 = vshrl.u32 %v507, 7
      %v509 = vsub.s32 0, %v508
      %v510 = vrot.slane %v345, %v509
      %512 = vbcast.lane.b32.xlu0 %v510, 256
      %v513 = vpop.permute.xlu0 %512
      %v514 = vlaneseq
      %v515 = vshrl.u32 %v514, 7
      %v516 = vsub.s32 1, %v515
      %v517 = vrot.slane %v345, %v516
      %519 = vbcast.lane.b32.xlu0 %v517, 256
      %v520 = vpop.permute.xlu0 %519
      %v521 = vlaneseq
      %v522 = vshrl.u32 %v521, 7
      %v523 = vsub.s32 2, %v522
      %v524 = vrot.slane %v345, %v523
      %526 = vbcast.lane.b32.xlu0 %v524, 256
      %v527 = vpop.permute.xlu0 %526
      %v528 = vlaneseq
      %v529 = vshrl.u32 %v528, 7
      %v530 = vsub.s32 3, %v529
      %v531 = vrot.slane %v345, %v530
      %533 = vbcast.lane.b32.xlu0 %v531, 256
      %v534 = vpop.permute.xlu0 %533
      %v535 = vlaneseq
      %v536 = vshrl.u32 %v535, 7
      %v537 = vsub.s32 4, %v536
      %v538 = vrot.slane %v345, %v537
      %540 = vbcast.lane.b32.xlu0 %v538, 256
      %v541 = vpop.permute.xlu0 %540
      %v542 = vlaneseq
      %v543 = vshrl.u32 %v542, 7
      %v544 = vsub.s32 5, %v543
      %v545 = vrot.slane %v345, %v544
      %547 = vbcast.lane.b32.xlu0 %v545, 256
      %v548 = vpop.permute.xlu0 %547
      %v549 = vlaneseq
      %v550 = vshrl.u32 %v549, 7
      %v551 = vsub.s32 6, %v550
      %v552 = vrot.slane %v345, %v551
      %554 = vbcast.lane.b32.xlu0 %v552, 256
      %v555 = vpop.permute.xlu0 %554
      %v556 = vlaneseq
      %v557 = vshrl.u32 %v556, 7
      %v558 = vsub.s32 7, %v557
      %v559 = vrot.slane %v345, %v558
      %561 = vbcast.lane.b32.xlu0 %v559, 256
      %v562 = vpop.permute.xlu0 %561
      %v563 = vlaneseq
      %v564 = vshrl.u32 %v563, 7
      %v565 = vsub.s32 0, %v564
      %v566 = vrot.slane %v346, %v565
      %568 = vbcast.lane.b32.xlu0 %v566, 256
      %v569 = vpop.permute.xlu0 %568
      %v570 = vlaneseq
      %v571 = vshrl.u32 %v570, 7
      %v572 = vsub.s32 1, %v571
      %v573 = vrot.slane %v346, %v572
      %575 = vbcast.lane.b32.xlu0 %v573, 256
      %v576 = vpop.permute.xlu0 %575
      %v577 = vlaneseq
      %v578 = vshrl.u32 %v577, 7
      %v579 = vsub.s32 2, %v578
      %v580 = vrot.slane %v346, %v579
      %582 = vbcast.lane.b32.xlu0 %v580, 256
      %v583 = vpop.permute.xlu0 %582
      %v584 = vlaneseq
      %v585 = vshrl.u32 %v584, 7
      %v586 = vsub.s32 3, %v585
      %v587 = vrot.slane %v346, %v586
      %589 = vbcast.lane.b32.xlu0 %v587, 256
      %v590 = vpop.permute.xlu0 %589
      %v591 = vlaneseq
      %v592 = vshrl.u32 %v591, 7
      %v593 = vsub.s32 4, %v592
      %v594 = vrot.slane %v346, %v593
      %596 = vbcast.lane.b32.xlu0 %v594, 256
      %v597 = vpop.permute.xlu0 %596
      %v598 = vlaneseq
      %v599 = vshrl.u32 %v598, 7
      %v600 = vsub.s32 5, %v599
      %v601 = vrot.slane %v346, %v600
      %603 = vbcast.lane.b32.xlu0 %v601, 256
      %v604 = vpop.permute.xlu0 %603
      %v605 = vlaneseq
      %v606 = vshrl.u32 %v605, 7
      %v607 = vsub.s32 6, %v606
      %v608 = vrot.slane %v346, %v607
      %610 = vbcast.lane.b32.xlu0 %v608, 256
      %v611 = vpop.permute.xlu0 %610
      %v612 = vlaneseq
      %v613 = vshrl.u32 %v612, 7
      %v614 = vsub.s32 7, %v613
      %v615 = vrot.slane %v346, %v614
      %617 = vbcast.lane.b32.xlu0 %v615, 256
      %v618 = vpop.permute.xlu0 %617
      %v651 = vmul.f32 %v389, %v401
      %v652 = vmul.f32 %v389, %v408
      %v653 = vmul.f32 %v389, %v415
      %v654 = vmul.f32 %v389, %v422
      %v655 = vmul.f32 %v389, %v429
      %v656 = vmul.f32 %v389, %v436
      %v657 = vmul.f32 %v389, %v443
      %v658 = vmul.f32 %v389, %v450
      %v659 = vmul.f32 %v389, %v457
      %v660 = vmul.f32 %v389, %v464
      %v661 = vmul.f32 %v389, %v471
      %v662 = vmul.f32 %v389, %v478
      %v663 = vmul.f32 %v389, %v485
      %v664 = vmul.f32 %v389, %v492
      %v665 = vmul.f32 %v389, %v499
      %v666 = vmul.f32 %v389, %v506
      %v667 = vmul.f32 %v389, %v513
      %v668 = vmul.f32 %v389, %v520
      %v669 = vmul.f32 %v389, %v527
      %v670 = vmul.f32 %v389, %v534
      %v671 = vmul.f32 %v389, %v541
      %v672 = vmul.f32 %v389, %v548
      %v673 = vmul.f32 %v389, %v555
      %v674 = vmul.f32 %v389, %v562
      %v675 = vmul.f32 %v389, %v569
      %v676 = vmul.f32 %v389, %v576
      %v677 = vmul.f32 %v389, %v583
      %v678 = vmul.f32 %v389, %v590
      %v679 = vmul.f32 %v389, %v597
      %v680 = vmul.f32 %v389, %v604
      %v681 = vmul.f32 %v389, %v611
      %v682 = vmul.f32 %v389, %v618
      %v683 = vmul.f32 %v390, %v401
      %v684 = vmul.f32 %v390, %v408
      %v685 = vmul.f32 %v390, %v415
      %v686 = vmul.f32 %v390, %v422
      %v687 = vmul.f32 %v390, %v429
      %v688 = vmul.f32 %v390, %v436
      %v689 = vmul.f32 %v390, %v443
      %v690 = vmul.f32 %v390, %v450
      %v691 = vmul.f32 %v390, %v457
      %v692 = vmul.f32 %v390, %v464
      %v693 = vmul.f32 %v390, %v471
      %v694 = vmul.f32 %v390, %v478
      %v695 = vmul.f32 %v390, %v485
      %v696 = vmul.f32 %v390, %v492
      %v697 = vmul.f32 %v390, %v499
      %v698 = vmul.f32 %v390, %v506
      %v699 = vmul.f32 %v390, %v513
      %v700 = vmul.f32 %v390, %v520
      %v701 = vmul.f32 %v390, %v527
      %v702 = vmul.f32 %v390, %v534
      %v703 = vmul.f32 %v390, %v541
      %v704 = vmul.f32 %v390, %v548
      %v705 = vmul.f32 %v390, %v555
      %v706 = vmul.f32 %v390, %v562
      %v707 = vmul.f32 %v390, %v569
      %v708 = vmul.f32 %v390, %v576
      %v709 = vmul.f32 %v390, %v583
      %v710 = vmul.f32 %v390, %v590
      %v711 = vmul.f32 %v390, %v597
      %v712 = vmul.f32 %v390, %v604
      %v713 = vmul.f32 %v390, %v611
      %v714 = vmul.f32 %v390, %v618
      %779 = vset.pattern.permute.xlu0 0
      %780 = vperm.xlu0 %779, %v651
      %v781 = vpop.permute.xlu0 %780
      %782 = vset.pattern.permute.xlu0 0
      %783 = vperm.xlu0 %782, %v652
      %v784 = vpop.permute.xlu0 %783
      %785 = vset.pattern.permute.xlu0 0
      %786 = vperm.xlu0 %785, %v653
      %v787 = vpop.permute.xlu0 %786
      %788 = vset.pattern.permute.xlu0 0
      %789 = vperm.xlu0 %788, %v654
      %v790 = vpop.permute.xlu0 %789
      %791 = vset.pattern.permute.xlu0 0
      %792 = vperm.xlu0 %791, %v655
      %v793 = vpop.permute.xlu0 %792
      %794 = vset.pattern.permute.xlu0 0
      %795 = vperm.xlu0 %794, %v656
      %v796 = vpop.permute.xlu0 %795
      %797 = vset.pattern.permute.xlu0 0
      %798 = vperm.xlu0 %797, %v657
      %v799 = vpop.permute.xlu0 %798
      %800 = vset.pattern.permute.xlu0 0
      %801 = vperm.xlu0 %800, %v658
      %v802 = vpop.permute.xlu0 %801
      %803 = vset.pattern.permute.xlu0 0
      %804 = vperm.xlu0 %803, %v659
      %v805 = vpop.permute.xlu0 %804
      %806 = vset.pattern.permute.xlu0 0
      %807 = vperm.xlu0 %806, %v660
      %v808 = vpop.permute.xlu0 %807
      %809 = vset.pattern.permute.xlu0 0
      %810 = vperm.xlu0 %809, %v661
      %v811 = vpop.permute.xlu0 %810
      %812 = vset.pattern.permute.xlu0 0
      %813 = vperm.xlu0 %812, %v662
      %v814 = vpop.permute.xlu0 %813
      %815 = vset.pattern.permute.xlu0 0
      %816 = vperm.xlu0 %815, %v663
      %v817 = vpop.permute.xlu0 %816
      %818 = vset.pattern.permute.xlu0 0
      %819 = vperm.xlu0 %818, %v664
      %v820 = vpop.permute.xlu0 %819
      %821 = vset.pattern.permute.xlu0 0
      %822 = vperm.xlu0 %821, %v665
      %v823 = vpop.permute.xlu0 %822
      %824 = vset.pattern.permute.xlu0 0
      %825 = vperm.xlu0 %824, %v666
      %v826 = vpop.permute.xlu0 %825
      %827 = vset.pattern.permute.xlu0 0
      %828 = vperm.xlu0 %827, %v667
      %v829 = vpop.permute.xlu0 %828
      %830 = vset.pattern.permute.xlu0 0
      %831 = vperm.xlu0 %830, %v668
      %v832 = vpop.permute.xlu0 %831
      %833 = vset.pattern.permute.xlu0 0
      %834 = vperm.xlu0 %833, %v669
      %v835 = vpop.permute.xlu0 %834
      %836 = vset.pattern.permute.xlu0 0
      %837 = vperm.xlu0 %836, %v670
      %v838 = vpop.permute.xlu0 %837
      %839 = vset.pattern.permute.xlu0 0
      %840 = vperm.xlu0 %839, %v671
      %v841 = vpop.permute.xlu0 %840
      %842 = vset.pattern.permute.xlu0 0
      %843 = vperm.xlu0 %842, %v672
      %v844 = vpop.permute.xlu0 %843
      %845 = vset.pattern.permute.xlu0 0
      %846 = vperm.xlu0 %845, %v673
      %v847 = vpop.permute.xlu0 %846
      %848 = vset.pattern.permute.xlu0 0
      %849 = vperm.xlu0 %848, %v674
      %v850 = vpop.permute.xlu0 %849
      %851 = vset.pattern.permute.xlu0 0
      %852 = vperm.xlu0 %851, %v675
      %v853 = vpop.permute.xlu0 %852
      %854 = vset.pattern.permute.xlu0 0
      %855 = vperm.xlu0 %854, %v676
      %v856 = vpop.permute.xlu0 %855
      %857 = vset.pattern.permute.xlu0 0
      %858 = vperm.xlu0 %857, %v677
      %v859 = vpop.permute.xlu0 %858
      %860 = vset.pattern.permute.xlu0 0
      %861 = vperm.xlu0 %860, %v678
      %v862 = vpop.permute.xlu0 %861
      %863 = vset.pattern.permute.xlu0 0
      %864 = vperm.xlu0 %863, %v679
      %v865 = vpop.permute.xlu0 %864
      %866 = vset.pattern.permute.xlu0 0
      %867 = vperm.xlu0 %866, %v680
      %v868 = vpop.permute.xlu0 %867
      %869 = vset.pattern.permute.xlu0 0
      %870 = vperm.xlu0 %869, %v681
      %v871 = vpop.permute.xlu0 %870
      %872 = vset.pattern.permute.xlu0 0
      %873 = vperm.xlu0 %872, %v682
      %v874 = vpop.permute.xlu0 %873
      %875 = vset.pattern.permute.xlu0 0
      %876 = vperm.xlu0 %875, %v683
      %v877 = vpop.permute.xlu0 %876
      %878 = vset.pattern.permute.xlu0 0
      %879 = vperm.xlu0 %878, %v684
      %v880 = vpop.permute.xlu0 %879
      %881 = vset.pattern.permute.xlu0 0
      %882 = vperm.xlu0 %881, %v685
      %v883 = vpop.permute.xlu0 %882
      %884 = vset.pattern.permute.xlu0 0
      %885 = vperm.xlu0 %884, %v686
      %v886 = vpop.permute.xlu0 %885
      %887 = vset.pattern.permute.xlu0 0
      %888 = vperm.xlu0 %887, %v687
      %v889 = vpop.permute.xlu0 %888
      %890 = vset.pattern.permute.xlu0 0
      %891 = vperm.xlu0 %890, %v688
      %v892 = vpop.permute.xlu0 %891
      %893 = vset.pattern.permute.xlu0 0
      %894 = vperm.xlu0 %893, %v689
      %v895 = vpop.permute.xlu0 %894
      %896 = vset.pattern.permute.xlu0 0
      %897 = vperm.xlu0 %896, %v690
      %v898 = vpop.permute.xlu0 %897
      %899 = vset.pattern.permute.xlu0 0
      %900 = vperm.xlu0 %899, %v691
      %v901 = vpop.permute.xlu0 %900
      %902 = vset.pattern.permute.xlu0 0
      %903 = vperm.xlu0 %902, %v692
      %v904 = vpop.permute.xlu0 %903
      %905 = vset.pattern.permute.xlu0 0
      %906 = vperm.xlu0 %905, %v693
      %v907 = vpop.permute.xlu0 %906
      %908 = vset.pattern.permute.xlu0 0
      %909 = vperm.xlu0 %908, %v694
      %v910 = vpop.permute.xlu0 %909
      %911 = vset.pattern.permute.xlu0 0
      %912 = vperm.xlu0 %911, %v695
      %v913 = vpop.permute.xlu0 %912
      %914 = vset.pattern.permute.xlu0 0
      %915 = vperm.xlu0 %914, %v696
      %v916 = vpop.permute.xlu0 %915
      %917 = vset.pattern.permute.xlu0 0
      %918 = vperm.xlu0 %917, %v697
      %v919 = vpop.permute.xlu0 %918
      %920 = vset.pattern.permute.xlu0 0
      %921 = vperm.xlu0 %920, %v698
      %v922 = vpop.permute.xlu0 %921
      %923 = vset.pattern.permute.xlu0 0
      %924 = vperm.xlu0 %923, %v699
      %v925 = vpop.permute.xlu0 %924
      %926 = vset.pattern.permute.xlu0 0
      %927 = vperm.xlu0 %926, %v700
      %v928 = vpop.permute.xlu0 %927
      %929 = vset.pattern.permute.xlu0 0
      %930 = vperm.xlu0 %929, %v701
      %v931 = vpop.permute.xlu0 %930
      %932 = vset.pattern.permute.xlu0 0
      %933 = vperm.xlu0 %932, %v702
      %v934 = vpop.permute.xlu0 %933
      %935 = vset.pattern.permute.xlu0 0
      %936 = vperm.xlu0 %935, %v703
      %v937 = vpop.permute.xlu0 %936
      %938 = vset.pattern.permute.xlu0 0
      %939 = vperm.xlu0 %938, %v704
      %v940 = vpop.permute.xlu0 %939
      %941 = vset.pattern.permute.xlu0 0
      %942 = vperm.xlu0 %941, %v705
      %v943 = vpop.permute.xlu0 %942
      %944 = vset.pattern.permute.xlu0 0
      %945 = vperm.xlu0 %944, %v706
      %v946 = vpop.permute.xlu0 %945
      %947 = vset.pattern.permute.xlu0 0
      %948 = vperm.xlu0 %947, %v707
      %v949 = vpop.permute.xlu0 %948
      %950 = vset.pattern.permute.xlu0 0
      %951 = vperm.xlu0 %950, %v708
      %v952 = vpop.permute.xlu0 %951
      %953 = vset.pattern.permute.xlu0 0
      %954 = vperm.xlu0 %953, %v709
      %v955 = vpop.permute.xlu0 %954
      %956 = vset.pattern.permute.xlu0 0
      %957 = vperm.xlu0 %956, %v710
      %v958 = vpop.permute.xlu0 %957
      %959 = vset.pattern.permute.xlu0 0
      %960 = vperm.xlu0 %959, %v711
      %v961 = vpop.permute.xlu0 %960
      %962 = vset.pattern.permute.xlu0 0
      %963 = vperm.xlu0 %962, %v712
      %v964 = vpop.permute.xlu0 %963
      %965 = vset.pattern.permute.xlu0 0
      %966 = vperm.xlu0 %965, %v713
      %v967 = vpop.permute.xlu0 %966
      %968 = vset.pattern.permute.xlu0 0
      %969 = vperm.xlu0 %968, %v714
      %v970 = vpop.permute.xlu0 %969
      %v971 = vlaneseq
      %v972 = vand.u32 %v971, 127
      %v973 = vlaneseq
      %v974 = vshrl.u32 %v973, 7
      %v975 = vsub.s32 %v972, %v974
      %v976 = vrot.slane %v781, %v975
      %v977 = vlaneseq
      %v978 = vshrl.u32 %v977, 7
      %v979 = vsub.s32 %v972, %v978
      %v980 = vrot.slane %v784, %v979
      %v981 = vlaneseq
      %v982 = vshrl.u32 %v981, 7
      %v983 = vsub.s32 %v972, %v982
      %v984 = vrot.slane %v787, %v983
      %v985 = vlaneseq
      %v986 = vshrl.u32 %v985, 7
      %v987 = vsub.s32 %v972, %v986
      %v988 = vrot.slane %v790, %v987
      %v989 = vlaneseq
      %v990 = vshrl.u32 %v989, 7
      %v991 = vsub.s32 %v972, %v990
      %v992 = vrot.slane %v793, %v991
      %v993 = vlaneseq
      %v994 = vshrl.u32 %v993, 7
      %v995 = vsub.s32 %v972, %v994
      %v996 = vrot.slane %v796, %v995
      %v997 = vlaneseq
      %v998 = vshrl.u32 %v997, 7
      %v999 = vsub.s32 %v972, %v998
      %v1000 = vrot.slane %v799, %v999
      %v1001 = vlaneseq
      %v1002 = vshrl.u32 %v1001, 7
      %v1003 = vsub.s32 %v972, %v1002
      %v1004 = vrot.slane %v802, %v1003
      %v1005 = vlaneseq
      %v1006 = vshrl.u32 %v1005, 7
      %v1007 = vsub.s32 %v972, %v1006
      %v1008 = vrot.slane %v805, %v1007
      %v1009 = vlaneseq
      %v1010 = vshrl.u32 %v1009, 7
      %v1011 = vsub.s32 %v972, %v1010
      %v1012 = vrot.slane %v808, %v1011
      %v1013 = vlaneseq
      %v1014 = vshrl.u32 %v1013, 7
      %v1015 = vsub.s32 %v972, %v1014
      %v1016 = vrot.slane %v811, %v1015
      %v1017 = vlaneseq
      %v1018 = vshrl.u32 %v1017, 7
      %v1019 = vsub.s32 %v972, %v1018
      %v1020 = vrot.slane %v814, %v1019
      %v1021 = vlaneseq
      %v1022 = vshrl.u32 %v1021, 7
      %v1023 = vsub.s32 %v972, %v1022
      %v1024 = vrot.slane %v817, %v1023
      %v1025 = vlaneseq
      %v1026 = vshrl.u32 %v1025, 7
      %v1027 = vsub.s32 %v972, %v1026
      %v1028 = vrot.slane %v820, %v1027
      %v1029 = vlaneseq
      %v1030 = vshrl.u32 %v1029, 7
      %v1031 = vsub.s32 %v972, %v1030
      %v1032 = vrot.slane %v823, %v1031
      %v1033 = vlaneseq
      %v1034 = vshrl.u32 %v1033, 7
      %v1035 = vsub.s32 %v972, %v1034
      %v1036 = vrot.slane %v826, %v1035
      %v1037 = vlaneseq
      %v1038 = vshrl.u32 %v1037, 7
      %v1039 = vsub.s32 %v972, %v1038
      %v1040 = vrot.slane %v829, %v1039
      %v1041 = vlaneseq
      %v1042 = vshrl.u32 %v1041, 7
      %v1043 = vsub.s32 %v972, %v1042
      %v1044 = vrot.slane %v832, %v1043
      %v1045 = vlaneseq
      %v1046 = vshrl.u32 %v1045, 7
      %v1047 = vsub.s32 %v972, %v1046
      %v1048 = vrot.slane %v835, %v1047
      %v1049 = vlaneseq
      %v1050 = vshrl.u32 %v1049, 7
      %v1051 = vsub.s32 %v972, %v1050
      %v1052 = vrot.slane %v838, %v1051
      %v1053 = vlaneseq
      %v1054 = vshrl.u32 %v1053, 7
      %v1055 = vsub.s32 %v972, %v1054
      %v1056 = vrot.slane %v841, %v1055
      %v1057 = vlaneseq
      %v1058 = vshrl.u32 %v1057, 7
      %v1059 = vsub.s32 %v972, %v1058
      %v1060 = vrot.slane %v844, %v1059
      %v1061 = vlaneseq
      %v1062 = vshrl.u32 %v1061, 7
      %v1063 = vsub.s32 %v972, %v1062
      %v1064 = vrot.slane %v847, %v1063
      %v1065 = vlaneseq
      %v1066 = vshrl.u32 %v1065, 7
      %v1067 = vsub.s32 %v972, %v1066
      %v1068 = vrot.slane %v850, %v1067
      %v1069 = vlaneseq
      %v1070 = vshrl.u32 %v1069, 7
      %v1071 = vsub.s32 %v972, %v1070
      %v1072 = vrot.slane %v853, %v1071
      %v1073 = vlaneseq
      %v1074 = vshrl.u32 %v1073, 7
      %v1075 = vsub.s32 %v972, %v1074
      %v1076 = vrot.slane %v856, %v1075
      %v1077 = vlaneseq
      %v1078 = vshrl.u32 %v1077, 7
      %v1079 = vsub.s32 %v972, %v1078
      %v1080 = vrot.slane %v859, %v1079
      %v1081 = vlaneseq
      %v1082 = vshrl.u32 %v1081, 7
      %v1083 = vsub.s32 %v972, %v1082
      %v1084 = vrot.slane %v862, %v1083
      %v1085 = vlaneseq
      %v1086 = vshrl.u32 %v1085, 7
      %v1087 = vsub.s32 %v972, %v1086
      %v1088 = vrot.slane %v865, %v1087
      %v1089 = vlaneseq
      %v1090 = vshrl.u32 %v1089, 7
      %v1091 = vsub.s32 %v972, %v1090
      %v1092 = vrot.slane %v868, %v1091
      %v1093 = vlaneseq
      %v1094 = vshrl.u32 %v1093, 7
      %v1095 = vsub.s32 %v972, %v1094
      %v1096 = vrot.slane %v871, %v1095
      %v1097 = vlaneseq
      %v1098 = vshrl.u32 %v1097, 7
      %v1099 = vsub.s32 %v972, %v1098
      %v1100 = vrot.slane %v874, %v1099
      %v1101 = vlaneseq
      %v1102 = vshrl.u32 %v1101, 7
      %v1103 = vsub.s32 %v972, %v1102
      %v1104 = vrot.slane %v877, %v1103
      %v1105 = vlaneseq
      %v1106 = vshrl.u32 %v1105, 7
      %v1107 = vsub.s32 %v972, %v1106
      %v1108 = vrot.slane %v880, %v1107
      %v1109 = vlaneseq
      %v1110 = vshrl.u32 %v1109, 7
      %v1111 = vsub.s32 %v972, %v1110
      %v1112 = vrot.slane %v883, %v1111
      %v1113 = vlaneseq
      %v1114 = vshrl.u32 %v1113, 7
      %v1115 = vsub.s32 %v972, %v1114
      %v1116 = vrot.slane %v886, %v1115
      %v1117 = vlaneseq
      %v1118 = vshrl.u32 %v1117, 7
      %v1119 = vsub.s32 %v972, %v1118
      %v1120 = vrot.slane %v889, %v1119
      %v1121 = vlaneseq
      %v1122 = vshrl.u32 %v1121, 7
      %v1123 = vsub.s32 %v972, %v1122
      %v1124 = vrot.slane %v892, %v1123
      %v1125 = vlaneseq
      %v1126 = vshrl.u32 %v1125, 7
      %v1127 = vsub.s32 %v972, %v1126
      %v1128 = vrot.slane %v895, %v1127
      %v1129 = vlaneseq
      %v1130 = vshrl.u32 %v1129, 7
      %v1131 = vsub.s32 %v972, %v1130
      %v1132 = vrot.slane %v898, %v1131
      %v1133 = vlaneseq
      %v1134 = vshrl.u32 %v1133, 7
      %v1135 = vsub.s32 %v972, %v1134
      %v1136 = vrot.slane %v901, %v1135
      %v1137 = vlaneseq
      %v1138 = vshrl.u32 %v1137, 7
      %v1139 = vsub.s32 %v972, %v1138
      %v1140 = vrot.slane %v904, %v1139
      %v1141 = vlaneseq
      %v1142 = vshrl.u32 %v1141, 7
      %v1143 = vsub.s32 %v972, %v1142
      %v1144 = vrot.slane %v907, %v1143
      %v1145 = vlaneseq
      %v1146 = vshrl.u32 %v1145, 7
      %v1147 = vsub.s32 %v972, %v1146
      %v1148 = vrot.slane %v910, %v1147
      %v1149 = vlaneseq
      %v1150 = vshrl.u32 %v1149, 7
      %v1151 = vsub.s32 %v972, %v1150
      %v1152 = vrot.slane %v913, %v1151
      %v1153 = vlaneseq
      %v1154 = vshrl.u32 %v1153, 7
      %v1155 = vsub.s32 %v972, %v1154
      %v1156 = vrot.slane %v916, %v1155
      %v1157 = vlaneseq
      %v1158 = vshrl.u32 %v1157, 7
      %v1159 = vsub.s32 %v972, %v1158
      %v1160 = vrot.slane %v919, %v1159
      %v1161 = vlaneseq
      %v1162 = vshrl.u32 %v1161, 7
      %v1163 = vsub.s32 %v972, %v1162
      %v1164 = vrot.slane %v922, %v1163
      %v1165 = vlaneseq
      %v1166 = vshrl.u32 %v1165, 7
      %v1167 = vsub.s32 %v972, %v1166
      %v1168 = vrot.slane %v925, %v1167
      %v1169 = vlaneseq
      %v1170 = vshrl.u32 %v1169, 7
      %v1171 = vsub.s32 %v972, %v1170
      %v1172 = vrot.slane %v928, %v1171
      %v1173 = vlaneseq
      %v1174 = vshrl.u32 %v1173, 7
      %v1175 = vsub.s32 %v972, %v1174
      %v1176 = vrot.slane %v931, %v1175
      %v1177 = vlaneseq
      %v1178 = vshrl.u32 %v1177, 7
      %v1179 = vsub.s32 %v972, %v1178
      %v1180 = vrot.slane %v934, %v1179
      %v1181 = vlaneseq
      %v1182 = vshrl.u32 %v1181, 7
      %v1183 = vsub.s32 %v972, %v1182
      %v1184 = vrot.slane %v937, %v1183
      %v1185 = vlaneseq
      %v1186 = vshrl.u32 %v1185, 7
      %v1187 = vsub.s32 %v972, %v1186
      %v1188 = vrot.slane %v940, %v1187
      %v1189 = vlaneseq
      %v1190 = vshrl.u32 %v1189, 7
      %v1191 = vsub.s32 %v972, %v1190
      %v1192 = vrot.slane %v943, %v1191
      %v1193 = vlaneseq
      %v1194 = vshrl.u32 %v1193, 7
      %v1195 = vsub.s32 %v972, %v1194
      %v1196 = vrot.slane %v946, %v1195
      %v1197 = vlaneseq
      %v1198 = vshrl.u32 %v1197, 7
      %v1199 = vsub.s32 %v972, %v1198
      %v1200 = vrot.slane %v949, %v1199
      %v1201 = vlaneseq
      %v1202 = vshrl.u32 %v1201, 7
      %v1203 = vsub.s32 %v972, %v1202
      %v1204 = vrot.slane %v952, %v1203
      %v1205 = vlaneseq
      %v1206 = vshrl.u32 %v1205, 7
      %v1207 = vsub.s32 %v972, %v1206
      %v1208 = vrot.slane %v955, %v1207
      %v1209 = vlaneseq
      %v1210 = vshrl.u32 %v1209, 7
      %v1211 = vsub.s32 %v972, %v1210
      %v1212 = vrot.slane %v958, %v1211
      %v1213 = vlaneseq
      %v1214 = vshrl.u32 %v1213, 7
      %v1215 = vsub.s32 %v972, %v1214
      %v1216 = vrot.slane %v961, %v1215
      %v1217 = vlaneseq
      %v1218 = vshrl.u32 %v1217, 7
      %v1219 = vsub.s32 %v972, %v1218
      %v1220 = vrot.slane %v964, %v1219
      %v1221 = vlaneseq
      %v1222 = vshrl.u32 %v1221, 7
      %v1223 = vsub.s32 %v972, %v1222
      %v1224 = vrot.slane %v967, %v1223
      %v1225 = vlaneseq
      %v1226 = vshrl.u32 %v1225, 7
      %v1227 = vsub.s32 %v972, %v1226
      %v1228 = vrot.slane %v970, %v1227
      %vm1229 = vcmask 1041409
      %v1230 = vsel %vm1229, %v980, %v976
      %vm1231 = vcmask 1042434
      %v1232 = vsel %vm1231, %v984, %v1230
      %vm1233 = vcmask 1043459
      %v1234 = vsel %vm1233, %v988, %v1232
      %vm1235 = vcmask 1044484
      %v1236 = vsel %vm1235, %v992, %v1234
      %vm1237 = vcmask 1045509
      %v1238 = vsel %vm1237, %v996, %v1236
      %vm1239 = vcmask 1046534
      %v1240 = vsel %vm1239, %v1000, %v1238
      %vm1241 = vcmask 1047559
      %v1242 = vsel %vm1241, %v1004, %v1240
      %v1243 = vsel %vm1229, %v1012, %v1008
      %v1244 = vsel %vm1231, %v1016, %v1243
      %v1245 = vsel %vm1233, %v1020, %v1244
      %v1246 = vsel %vm1235, %v1024, %v1245
      %v1247 = vsel %vm1237, %v1028, %v1246
      %v1248 = vsel %vm1239, %v1032, %v1247
      %v1249 = vsel %vm1241, %v1036, %v1248
      %v1250 = vsel %vm1229, %v1044, %v1040
      %v1251 = vsel %vm1231, %v1048, %v1250
      %v1252 = vsel %vm1233, %v1052, %v1251
      %v1253 = vsel %vm1235, %v1056, %v1252
      %v1254 = vsel %vm1237, %v1060, %v1253
      %v1255 = vsel %vm1239, %v1064, %v1254
      %v1256 = vsel %vm1241, %v1068, %v1255
      %v1257 = vsel %vm1229, %v1076, %v1072
      %v1258 = vsel %vm1231, %v1080, %v1257
      %v1259 = vsel %vm1233, %v1084, %v1258
      %v1260 = vsel %vm1235, %v1088, %v1259
      %v1261 = vsel %vm1237, %v1092, %v1260
      %v1262 = vsel %vm1239, %v1096, %v1261
      %v1263 = vsel %vm1241, %v1100, %v1262
      %v1264 = vsel %vm1229, %v1108, %v1104
      %v1265 = vsel %vm1231, %v1112, %v1264
      %v1266 = vsel %vm1233, %v1116, %v1265
      %v1267 = vsel %vm1235, %v1120, %v1266
      %v1268 = vsel %vm1237, %v1124, %v1267
      %v1269 = vsel %vm1239, %v1128, %v1268
      %v1270 = vsel %vm1241, %v1132, %v1269
      %v1271 = vsel %vm1229, %v1140, %v1136
      %v1272 = vsel %vm1231, %v1144, %v1271
      %v1273 = vsel %vm1233, %v1148, %v1272
      %v1274 = vsel %vm1235, %v1152, %v1273
      %v1275 = vsel %vm1237, %v1156, %v1274
      %v1276 = vsel %vm1239, %v1160, %v1275
      %v1277 = vsel %vm1241, %v1164, %v1276
      %v1278 = vsel %vm1229, %v1172, %v1168
      %v1279 = vsel %vm1231, %v1176, %v1278
      %v1280 = vsel %vm1233, %v1180, %v1279
      %v1281 = vsel %vm1235, %v1184, %v1280
      %v1282 = vsel %vm1237, %v1188, %v1281
      %v1283 = vsel %vm1239, %v1192, %v1282
      %v1284 = vsel %vm1241, %v1196, %v1283
      %v1285 = vsel %vm1229, %v1204, %v1200
      %v1286 = vsel %vm1231, %v1208, %v1285
      %v1287 = vsel %vm1233, %v1212, %v1286
      %v1288 = vsel %vm1235, %v1216, %v1287
      %v1289 = vsel %vm1237, %v1220, %v1288
      %v1290 = vsel %vm1239, %v1224, %v1289
      %v1291 = vsel %vm1241, %v1228, %v1290
      %vm1300 = vcmask 15360
      %v1301 = vsel %vm1300, %v1242, 0.0
      %1302 = vadd.xlane.f32.xlu0 %v1301
      %v1303 = vpop.xlane.xlu0 %1302
      %v1304 = vsel %vm1300, %v1249, 0.0
      %1305 = vadd.xlane.f32.xlu0 %v1304
      %v1306 = vpop.xlane.xlu0 %1305
      %v1307 = vsel %vm1300, %v1256, 0.0
      %1308 = vadd.xlane.f32.xlu0 %v1307
      %v1309 = vpop.xlane.xlu0 %1308
      %v1310 = vsel %vm1300, %v1263, 0.0
      %1311 = vadd.xlane.f32.xlu0 %v1310
      %v1312 = vpop.xlane.xlu0 %1311
      %v1313 = vsel %vm1300, %v1270, 0.0
      %1314 = vadd.xlane.f32.xlu0 %v1313
      %v1315 = vpop.xlane.xlu0 %1314
      %v1316 = vsel %vm1300, %v1277, 0.0
      %1317 = vadd.xlane.f32.xlu0 %v1316
      %v1318 = vpop.xlane.xlu0 %1317
      %v1319 = vsel %vm1300, %v1284, 0.0
      %1320 = vadd.xlane.f32.xlu0 %v1319
      %v1321 = vpop.xlane.xlu0 %1320
      %v1322 = vsel %vm1300, %v1291, 0.0
      %1323 = vadd.xlane.f32.xlu0 %v1322
      %v1324 = vpop.xlane.xlu0 %1323
      %v1325 = vadd.f32 %v1303, %v1315
      %v1326 = vadd.f32 %v1306, %v1318
      %v1327 = vadd.f32 %v1309, %v1321
      %v1328 = vadd.f32 %v1312, %v1324
      %v1329 = vxor.u32 %v1325, 2147483648
      %v1330 = vxor.u32 %v1326, 2147483648
      %v1331 = vxor.u32 %v1327, 2147483648
      %v1332 = vxor.u32 %v1328, 2147483648
      %v1333 = vmul.f32 %v1329, 1.442695
      %v1334 = vpow.pop %v1333
      %v1335 = vmul.f32 %v1330, 1.442695
      %v1336 = vpow.pop %v1335
      %v1337 = vmul.f32 %v1331, 1.442695
      %v1338 = vpow.pop %v1337
      %v1339 = vmul.f32 %v1332, 1.442695
      %v1340 = vpow.pop %v1339
      %v1341 = vadd.f32 %v1334, 1.0
      %v1342 = vadd.f32 %v1336, 1.0
      %v1343 = vadd.f32 %v1338, 1.0
      %v1344 = vadd.f32 %v1340, 1.0
      %v1345 = vrcp.pop %v1341
      %v1346 = vmul.f32 1.0, %v1345
      %v1347 = vrcp.pop %v1342
      %v1348 = vmul.f32 1.0, %v1347
      %v1349 = vrcp.pop %v1343
      %v1350 = vmul.f32 1.0, %v1349
      %v1351 = vrcp.pop %v1344
      %v1352 = vmul.f32 1.0, %v1351
      %v1357 = vlaneseq
      %v1358 = vshrl.u32 %v1357, 7
      %v1359 = vsub.s32 %v972, %v1358
      %v1360 = vrot.slane %v1346, %v1359
      %v1361 = vadd.s32 %v972, 4294967288
      %v1362 = vlaneseq
      %v1363 = vshrl.u32 %v1362, 7
      %v1364 = vsub.s32 %v1361, %v1363
      %v1365 = vrot.slane %v1348, %v1364
      %vm1366 = vcmask 130112
      %v1367 = vsel %vm1366, %v1365, %v1360
      %v1368 = vadd.s32 %v972, 4294967280
      %v1369 = vlaneseq
      %v1370 = vshrl.u32 %v1369, 7
      %v1371 = vsub.s32 %v1368, %v1370
      %v1372 = vrot.slane %v1350, %v1371
      %vm1373 = vcmask 195712
      %v1374 = vsel %vm1373, %v1372, %v1367
      %v1375 = vadd.s32 %v972, 4294967272
      %v1376 = vlaneseq
      %v1377 = vshrl.u32 %v1376, 7
      %v1378 = vsub.s32 %v1375, %v1377
      %v1379 = vrot.slane %v1352, %v1378
      %vm1380 = vcmask 261312
      %v1381 = vsel %vm1380, %v1379, %v1374
      %v1382 = vsel %vm1231, %v1381, %v1381
      %v1383 = vsel %vm1233, %v1381, %v1382
      %v1384 = vsel %vm1235, %v1381, %v1383
      %v1385 = vsel %vm1237, %v1381, %v1384
      %v1386 = vsel %vm1239, %v1381, %v1385
      %v1387 = vsel %vm1241, %v1381, %v1386
      %v1390 = vmul.f32 %v211, %v1387
      %v1391 = vmul.f32 %v212, %v1387
      %v1392 = vmul.f32 %v213, %v1387
      %v1393 = vmul.f32 %v214, %v1387
      %v1394 = vmul.f32 %v215, %v1387
      %v1395 = vmul.f32 %v216, %v1387
      %v1396 = vmul.f32 %v217, %v1387
      %v1397 = vmul.f32 %v218, %v1387
      %v1398 = vmul.f32 %v219, %v1387
      %v1399 = vmul.f32 %v220, %v1387
      %v1400 = vmul.f32 %v221, %v1387
      %v1401 = vmul.f32 %v222, %v1387
      %v1402 = vmul.f32 %v223, %v1387
      %v1403 = vmul.f32 %v224, %v1387
      %v1404 = vmul.f32 %v225, %v1387
      %v1405 = vmul.f32 %v226, %v1387
      %v1406 = vmul.f32 %v227, %v1387
      %v1407 = vmul.f32 %v228, %v1387
      %v1408 = vmul.f32 %v229, %v1387
      %v1409 = vmul.f32 %v230, %v1387
      %v1410 = vmul.f32 %v231, %v1387
      %v1411 = vmul.f32 %v232, %v1387
      %v1412 = vmul.f32 %v233, %v1385
      %1413 = vst.msk [vmem:[%s205] sm:$0xff] %vm234, %v1390
      %1414 = vst.msk [vmem:[%s205 + $0x8] sm:$0xff] %vm234, %v1391
      %1415 = vst.msk [vmem:[%s205 + $0x10] sm:$0xff] %vm234, %v1392
      %1416 = vst.msk [vmem:[%s205 + $0x18] sm:$0xff] %vm234, %v1393
      %1417 = vst.msk [vmem:[%s205 + $0x20] sm:$0xff] %vm234, %v1394
      %1418 = vst.msk [vmem:[%s205 + $0x28] sm:$0xff] %vm234, %v1395
      %1419 = vst.msk [vmem:[%s205 + $0x30] sm:$0xff] %vm234, %v1396
      %1420 = vst.msk [vmem:[%s205 + $0x38] sm:$0xff] %vm234, %v1397
      %1421 = vst.msk [vmem:[%s205 + $0x40] sm:$0xff] %vm234, %v1398
      %1422 = vst.msk [vmem:[%s205 + $0x48] sm:$0xff] %vm234, %v1399
      %1423 = vst.msk [vmem:[%s205 + $0x50] sm:$0xff] %vm234, %v1400
      %1424 = vst.msk [vmem:[%s205 + $0x58] sm:$0xff] %vm234, %v1401
      %1425 = vst.msk [vmem:[%s205 + $0x60] sm:$0xff] %vm234, %v1402
      %1426 = vst.msk [vmem:[%s205 + $0x68] sm:$0xff] %vm234, %v1403
      %1427 = vst.msk [vmem:[%s205 + $0x70] sm:$0xff] %vm234, %v1404
      %1428 = vst.msk [vmem:[%s205 + $0x78] sm:$0xff] %vm234, %v1405
      %1429 = vst.msk [vmem:[%s205 + $0x80] sm:$0xff] %vm234, %v1406
      %1430 = vst.msk [vmem:[%s205 + $0x88] sm:$0xff] %vm234, %v1407
      %1431 = vst.msk [vmem:[%s205 + $0x90] sm:$0xff] %vm234, %v1408
      %1432 = vst.msk [vmem:[%s205 + $0x98] sm:$0xff] %vm234, %v1409
      %1433 = vst.msk [vmem:[%s205 + $0xa0] sm:$0xff] %vm234, %v1410
      %1434 = vst.msk [vmem:[%s205 + $0xa8] sm:$0xff] %vm234, %v1411
      %1435 = vst.msk [vmem:[%s205 + $0xb0] sm:$0x3f] %vm278, %v1412
      %v1436 = vsel %vm234, %v1390, 0.0
      %1437 = vadd.xlane.f32.xlu0 %v1436
      %v1438 = vpop.xlane.xlu0 %1437
      %v1439 = vsel %vm234, %v1391, 0.0
      %1440 = vadd.xlane.f32.xlu0 %v1439
      %v1441 = vpop.xlane.xlu0 %1440
      %v1442 = vsel %vm234, %v1392, 0.0
      %1443 = vadd.xlane.f32.xlu0 %v1442
      %v1444 = vpop.xlane.xlu0 %1443
      %v1445 = vsel %vm234, %v1393, 0.0
      %1446 = vadd.xlane.f32.xlu0 %v1445
      %v1447 = vpop.xlane.xlu0 %1446
      %v1448 = vsel %vm234, %v1394, 0.0
      %1449 = vadd.xlane.f32.xlu0 %v1448
      %v1450 = vpop.xlane.xlu0 %1449
      %v1451 = vsel %vm234, %v1395, 0.0
      %1452 = vadd.xlane.f32.xlu0 %v1451
      %v1453 = vpop.xlane.xlu0 %1452
      %v1454 = vsel %vm234, %v1396, 0.0
      %1455 = vadd.xlane.f32.xlu0 %v1454
      %v1456 = vpop.xlane.xlu0 %1455
      %v1457 = vsel %vm234, %v1397, 0.0
      %1458 = vadd.xlane.f32.xlu0 %v1457
      %v1459 = vpop.xlane.xlu0 %1458
      %v1460 = vsel %vm234, %v1398, 0.0
      %1461 = vadd.xlane.f32.xlu0 %v1460
      %v1462 = vpop.xlane.xlu0 %1461
      %v1463 = vsel %vm234, %v1399, 0.0
      %1464 = vadd.xlane.f32.xlu0 %v1463
      %v1465 = vpop.xlane.xlu0 %1464
      %v1466 = vsel %vm234, %v1400, 0.0
      %1467 = vadd.xlane.f32.xlu0 %v1466
      %v1468 = vpop.xlane.xlu0 %1467
      %v1469 = vsel %vm234, %v1401, 0.0
      %1470 = vadd.xlane.f32.xlu0 %v1469
      %v1471 = vpop.xlane.xlu0 %1470
      %v1472 = vsel %vm234, %v1402, 0.0
      %1473 = vadd.xlane.f32.xlu0 %v1472
      %v1474 = vpop.xlane.xlu0 %1473
      %v1475 = vsel %vm234, %v1403, 0.0
      %1476 = vadd.xlane.f32.xlu0 %v1475
      %v1477 = vpop.xlane.xlu0 %1476
      %v1478 = vsel %vm234, %v1404, 0.0
      %1479 = vadd.xlane.f32.xlu0 %v1478
      %v1480 = vpop.xlane.xlu0 %1479
      %v1481 = vsel %vm234, %v1405, 0.0
      %1482 = vadd.xlane.f32.xlu0 %v1481
      %v1483 = vpop.xlane.xlu0 %1482
      %v1484 = vsel %vm234, %v1406, 0.0
      %1485 = vadd.xlane.f32.xlu0 %v1484
      %v1486 = vpop.xlane.xlu0 %1485
      %v1487 = vsel %vm234, %v1407, 0.0
      %1488 = vadd.xlane.f32.xlu0 %v1487
      %v1489 = vpop.xlane.xlu0 %1488
      %v1490 = vsel %vm234, %v1408, 0.0
      %1491 = vadd.xlane.f32.xlu0 %v1490
      %v1492 = vpop.xlane.xlu0 %1491
      %v1493 = vsel %vm234, %v1409, 0.0
      %1494 = vadd.xlane.f32.xlu0 %v1493
      %v1495 = vpop.xlane.xlu0 %1494
      %v1496 = vsel %vm234, %v1410, 0.0
      %1497 = vadd.xlane.f32.xlu0 %v1496
      %v1498 = vpop.xlane.xlu0 %1497
      %v1499 = vsel %vm234, %v1411, 0.0
      %1500 = vadd.xlane.f32.xlu0 %v1499
      %v1501 = vpop.xlane.xlu0 %1500
      %v1502 = vsel %vm278, %v1412, 0.0
      %1503 = vadd.xlane.f32.xlu0 %v1502
      %v1504 = vpop.xlane.xlu0 %1503
      %v1505 = vrcp.pop 32.0
      %v1506 = vmul.f32 %v1438, %v1505
      %v1507 = vmul.f32 %v1441, %v1505
      %v1508 = vmul.f32 %v1444, %v1505
      %v1509 = vmul.f32 %v1447, %v1505
      %v1510 = vmul.f32 %v1450, %v1505
      %v1511 = vmul.f32 %v1453, %v1505
      %v1512 = vmul.f32 %v1456, %v1505
      %v1513 = vmul.f32 %v1459, %v1505
      %v1514 = vmul.f32 %v1462, %v1505
      %v1515 = vmul.f32 %v1465, %v1505
      %v1516 = vmul.f32 %v1468, %v1505
      %v1517 = vmul.f32 %v1471, %v1505
      %v1518 = vmul.f32 %v1474, %v1505
      %v1519 = vmul.f32 %v1477, %v1505
      %v1520 = vmul.f32 %v1480, %v1505
      %v1521 = vmul.f32 %v1483, %v1505
      %v1522 = vmul.f32 %v1486, %v1505
      %v1523 = vmul.f32 %v1489, %v1505
      %v1524 = vmul.f32 %v1492, %v1505
      %v1525 = vmul.f32 %v1495, %v1505
      %v1526 = vmul.f32 %v1498, %v1505
      %v1527 = vmul.f32 %v1501, %v1505
      %v1528 = vmul.f32 %v1504, %v1505
      %vm1529 = vcmask 7168
      %1530 = vst.msk [vmem:[%s210] sm:$0xff] %vm1529, %v1506
      %1531 = vst.msk [vmem:[%s210 + $0x8] sm:$0xff] %vm1529, %v1507
      %1532 = vst.msk [vmem:[%s210 + $0x10] sm:$0xff] %vm1529, %v1508
      %1533 = vst.msk [vmem:[%s210 + $0x18] sm:$0xff] %vm1529, %v1509
      %1534 = vst.msk [vmem:[%s210 + $0x20] sm:$0xff] %vm1529, %v1510
      %1535 = vst.msk [vmem:[%s210 + $0x28] sm:$0xff] %vm1529, %v1511
      %1536 = vst.msk [vmem:[%s210 + $0x30] sm:$0xff] %vm1529, %v1512
      %1537 = vst.msk [vmem:[%s210 + $0x38] sm:$0xff] %vm1529, %v1513
      %1538 = vst.msk [vmem:[%s210 + $0x40] sm:$0xff] %vm1529, %v1514
      %1539 = vst.msk [vmem:[%s210 + $0x48] sm:$0xff] %vm1529, %v1515
      %1540 = vst.msk [vmem:[%s210 + $0x50] sm:$0xff] %vm1529, %v1516
      %1541 = vst.msk [vmem:[%s210 + $0x58] sm:$0xff] %vm1529, %v1517
      %1542 = vst.msk [vmem:[%s210 + $0x60] sm:$0xff] %vm1529, %v1518
      %1543 = vst.msk [vmem:[%s210 + $0x68] sm:$0xff] %vm1529, %v1519
      %1544 = vst.msk [vmem:[%s210 + $0x70] sm:$0xff] %vm1529, %v1520
      %1545 = vst.msk [vmem:[%s210 + $0x78] sm:$0xff] %vm1529, %v1521
      %1546 = vst.msk [vmem:[%s210 + $0x80] sm:$0xff] %vm1529, %v1522
      %1547 = vst.msk [vmem:[%s210 + $0x88] sm:$0xff] %vm1529, %v1523
      %1548 = vst.msk [vmem:[%s210 + $0x90] sm:$0xff] %vm1529, %v1524
      %1549 = vst.msk [vmem:[%s210 + $0x98] sm:$0xff] %vm1529, %v1525
      %1550 = vst.msk [vmem:[%s210 + $0xa0] sm:$0xff] %vm1529, %v1526
      %1551 = vst.msk [vmem:[%s210 + $0xa8] sm:$0xff] %vm1529, %v1527
      %vm1552 = vcmask 5120
      %1553 = vst.msk [vmem:[%s210 + $0xb0] sm:$0x3f] %vm1552, %v1528
      %v1554 = vsel %vm234, %v1390, -inf
      %1555 = vmax.xlane.f32.xlu0 %v1554
      %v1556 = vpop.xlane.xlu0 %1555
      %v1557 = vsel %vm234, %v1391, -inf
      %1558 = vmax.xlane.f32.xlu0 %v1557
      %v1559 = vpop.xlane.xlu0 %1558
      %v1560 = vsel %vm234, %v1392, -inf
      %1561 = vmax.xlane.f32.xlu0 %v1560
      %v1562 = vpop.xlane.xlu0 %1561
      %v1563 = vsel %vm234, %v1393, -inf
      %1564 = vmax.xlane.f32.xlu0 %v1563
      %v1565 = vpop.xlane.xlu0 %1564
      %v1566 = vsel %vm234, %v1394, -inf
      %1567 = vmax.xlane.f32.xlu0 %v1566
      %v1568 = vpop.xlane.xlu0 %1567
      %v1569 = vsel %vm234, %v1395, -inf
      %1570 = vmax.xlane.f32.xlu0 %v1569
      %v1571 = vpop.xlane.xlu0 %1570
      %v1572 = vsel %vm234, %v1396, -inf
      %1573 = vmax.xlane.f32.xlu0 %v1572
      %v1574 = vpop.xlane.xlu0 %1573
      %v1575 = vsel %vm234, %v1397, -inf
      %1576 = vmax.xlane.f32.xlu0 %v1575
      %v1577 = vpop.xlane.xlu0 %1576
      %v1578 = vsel %vm234, %v1398, -inf
      %1579 = vmax.xlane.f32.xlu0 %v1578
      %v1580 = vpop.xlane.xlu0 %1579
      %v1581 = vsel %vm234, %v1399, -inf
      %1582 = vmax.xlane.f32.xlu0 %v1581
      %v1583 = vpop.xlane.xlu0 %1582
      %v1584 = vsel %vm234, %v1400, -inf
      %1585 = vmax.xlane.f32.xlu0 %v1584
      %v1586 = vpop.xlane.xlu0 %1585
      %v1587 = vsel %vm234, %v1401, -inf
      %1588 = vmax.xlane.f32.xlu0 %v1587
      %v1589 = vpop.xlane.xlu0 %1588
      %v1590 = vsel %vm234, %v1402, -inf
      %1591 = vmax.xlane.f32.xlu0 %v1590
      %v1592 = vpop.xlane.xlu0 %1591
      %v1593 = vsel %vm234, %v1403, -inf
      %1594 = vmax.xlane.f32.xlu0 %v1593
      %v1595 = vpop.xlane.xlu0 %1594
      %v1596 = vsel %vm234, %v1404, -inf
      %1597 = vmax.xlane.f32.xlu0 %v1596
      %v1598 = vpop.xlane.xlu0 %1597
      %v1599 = vsel %vm234, %v1405, -inf
      %1600 = vmax.xlane.f32.xlu0 %v1599
      %v1601 = vpop.xlane.xlu0 %1600
      %v1602 = vsel %vm234, %v1406, -inf
      %1603 = vmax.xlane.f32.xlu0 %v1602
      %v1604 = vpop.xlane.xlu0 %1603
      %v1605 = vsel %vm234, %v1407, -inf
      %1606 = vmax.xlane.f32.xlu0 %v1605
      %v1607 = vpop.xlane.xlu0 %1606
      %v1608 = vsel %vm234, %v1408, -inf
      %1609 = vmax.xlane.f32.xlu0 %v1608
      %v1610 = vpop.xlane.xlu0 %1609
      %v1611 = vsel %vm234, %v1409, -inf
      %1612 = vmax.xlane.f32.xlu0 %v1611
      %v1613 = vpop.xlane.xlu0 %1612
      %v1614 = vsel %vm234, %v1410, -inf
      %1615 = vmax.xlane.f32.xlu0 %v1614
      %v1616 = vpop.xlane.xlu0 %1615
      %v1617 = vsel %vm234, %v1411, -inf
      %1618 = vmax.xlane.f32.xlu0 %v1617
      %v1619 = vpop.xlane.xlu0 %1618
      %v1620 = vsel %vm278, %v1412, -inf
      %1621 = vmax.xlane.f32.xlu0 %v1620
      %v1622 = vpop.xlane.xlu0 %1621
      %vm1623 = vcmask 15368
      %1624 = vst.msk [vmem:[%s210] sm:$0xff] %vm1623, %v1556
      %1625 = vst.msk [vmem:[%s210 + $0x8] sm:$0xff] %vm1623, %v1559
      %1626 = vst.msk [vmem:[%s210 + $0x10] sm:$0xff] %vm1623, %v1562
      %1627 = vst.msk [vmem:[%s210 + $0x18] sm:$0xff] %vm1623, %v1565
      %1628 = vst.msk [vmem:[%s210 + $0x20] sm:$0xff] %vm1623, %v1568
      %1629 = vst.msk [vmem:[%s210 + $0x28] sm:$0xff] %vm1623, %v1571
      %1630 = vst.msk [vmem:[%s210 + $0x30] sm:$0xff] %vm1623, %v1574
      %1631 = vst.msk [vmem:[%s210 + $0x38] sm:$0xff] %vm1623, %v1577
      %1632 = vst.msk [vmem:[%s210 + $0x40] sm:$0xff] %vm1623, %v1580
      %1633 = vst.msk [vmem:[%s210 + $0x48] sm:$0xff] %vm1623, %v1583
      %1634 = vst.msk [vmem:[%s210 + $0x50] sm:$0xff] %vm1623, %v1586
      %1635 = vst.msk [vmem:[%s210 + $0x58] sm:$0xff] %vm1623, %v1589
      %1636 = vst.msk [vmem:[%s210 + $0x60] sm:$0xff] %vm1623, %v1592
      %1637 = vst.msk [vmem:[%s210 + $0x68] sm:$0xff] %vm1623, %v1595
      %1638 = vst.msk [vmem:[%s210 + $0x70] sm:$0xff] %vm1623, %v1598
      %1639 = vst.msk [vmem:[%s210 + $0x78] sm:$0xff] %vm1623, %v1601
      %1640 = vst.msk [vmem:[%s210 + $0x80] sm:$0xff] %vm1623, %v1604
      %1641 = vst.msk [vmem:[%s210 + $0x88] sm:$0xff] %vm1623, %v1607
      %1642 = vst.msk [vmem:[%s210 + $0x90] sm:$0xff] %vm1623, %v1610
      %1643 = vst.msk [vmem:[%s210 + $0x98] sm:$0xff] %vm1623, %v1613
      %1644 = vst.msk [vmem:[%s210 + $0xa0] sm:$0xff] %vm1623, %v1616
      %1645 = vst.msk [vmem:[%s210 + $0xa8] sm:$0xff] %vm1623, %v1619
      %vm1646 = vcmask 13320
      %1647 = vst.msk [vmem:[%s210 + $0xb0] sm:$0x3f] %vm1646, %v1622
      %p1648 = scmp.lt.s32.totalorder %s16, 1
      %s1649 = scalar_select %p1648, %s16, 1
      %s1650 = smul.addr %s1649, 23
      %s1651 = smul.addr %s1650, 8
      %s1652 = scalar_lea.vmem %s3, %s1651
      %p1653 = scmp.lt.s32.totalorder %s16, 1
      %s1654 = scalar_select %p1653, %s16, 1
      %s1655 = smul.addr %s1654, 23
      %s1656 = smul.addr %s1655, 8
      %s1657 = scalar_lea.vmem %s4, %s1656
      // Predicated region
      $region33: #{capsule_net_forward.14} parent=31 // pred_check
        %p1658 = pneg %p102
      $region34: #{capsule_net_forward.14} parent=31 // pred_check_branch
        %1660 = sbr.rel (%p1658) target = $region36
      $region35: #{capsule_net_forward.14} parent=31 // pred_region
        _
      $region36: #{capsule_net_forward.14} parent=31 // pred_fallthru
        _
      // Predicated region
      $region37: #{capsule_net_forward.14} parent=31 // pred_check
        %p1661 = pneg %p128
      $region38: #{capsule_net_forward.14} parent=31 // pred_check_branch
        %1663 = sbr.rel (%p1661) target = $region40
      $region39: #{capsule_net_forward.14} parent=31 // pred_region
        _
      $region40: #{capsule_net_forward.14} parent=31 // pred_fallthru
        _
    $region32: #{capsule_net_forward.14} parent=5 // pred_fallthru
      _
    %p1664 = scmp.le.s32.totalorder 2, %s11
    // Predicated region
    $region41: #{capsule_net_forward.14} parent=5 // pred_check
      %p1665 = pneg %p1664
    $region42: #{capsule_net_forward.14} parent=5 // pred_check_branch
      %1667 = sbr.rel (%p1665) target = $region44
    $region43: #{capsule_net_forward.14} parent=5 // pred_region
      %s1668 = ssub.s32 %s11, 2
      // Predicated region
      $region45: #{capsule_net_forward.14} parent=43 // pred_check
        %p1669 = pneg %p108
      $region46: #{capsule_net_forward.14} parent=43 // pred_check_branch
        %1671 = sbr.rel (%p1669) target = $region48
      $region47: #{capsule_net_forward.14} parent=43 // pred_region
        %p1672 = scmp.lt.s32.totalorder %s17, 1
        %s1673 = scalar_select %p1672, %s17, 1
        %s1674 = smul.addr %s1673, 23
        %s1675 = smul.addr %s1674, 8
        %s1676 = scalar_lea.vmem %s3, %s1675
      $region48: #{capsule_net_forward.14} parent=43 // pred_fallthru
        _
      // Predicated region
      $region49: #{capsule_net_forward.14} parent=43 // pred_check
        %p1677 = pneg %p134
      $region50: #{capsule_net_forward.14} parent=43 // pred_check_branch
        %1679 = sbr.rel (%p1677) target = $region52
      $region51: #{capsule_net_forward.14} parent=43 // pred_region
        %p1680 = scmp.lt.s32.totalorder %s17, 1
        %s1681 = scalar_select %p1680, %s17, 1
        %s1682 = smul.addr %s1681, 23
        %s1683 = smul.addr %s1682, 8
        %s1684 = scalar_lea.vmem %s4, %s1683
      $region52: #{capsule_net_forward.14} parent=43 // pred_fallthru
        _
    $region44: #{capsule_net_forward.14} parent=5 // pred_fallthru
      _
  $region6: #{capsule_net_forward.14} parent=0 // loop_footer
    %s15 = sadd.s32 1, %s11
  $region7: #{capsule_net_forward.14} parent=0 // loop_footer_branch
    %10 = sbr.rel target = $region3
  $region8: #{capsule_net_forward.14} parent=0 // loop_exit
    _

// kernel: capsule_net_forward.15
$region0: #{capsule_net_forward.15}
  #allocation0 [shape = 'u32[]', space=smem, size = 0x4, offset = 0x4, fixed_abs, tag = 'smem constant byte address 0x4 - core index']
  #allocation1 [shape = 'u32[144,128]{1,0:T(1,128)}', space=vmem, size = 0x12000, scoped, tag = 'internal scratch']
  %s0 = inlined_call_operand.vmem [shape: f32[2,182,32], index: 0, kind: input, shape index: {}]
  %s1 = inlined_call_operand.vmem [shape: f32[2,182,98], index: 1, kind: input, shape index: {}]
  %s2 = inlined_call_operand.vmem [shape: f32[1,1,98], index: 2, kind: input, shape index: {}]
  %s3 = inlined_call_operand.vmem [shape: f32[2,182,32], index: 3, kind: output, shape index: {}]
  %s4 = sld [smem:[#allocation0]]
  $region45: #{capsule_net_forward.15} parent=0
    _
  %s6 = ssub.s32 1, %s4
  %s7 = scalar_select 0, %s6, %s4
  loop: start=0, step=1, limit=4
  $region2: #{capsule_net_forward.15} parent=0 // loop_pre_header
    _
  $region3: #{capsule_net_forward.15} parent=0 // loop_header
    %s9 = sphi 0, %s13
    %p10 = scmp.ge.s32.totalorder %s9, 4
    %s19 = sphi 0, %s21
    %s22 = sphi 0, %s19
    %s23 = sphi 0, %s22
    %s39 = sphi 0, %s23
    %s45 = sphi 0, %s47
    %s48 = sphi 0, %s45
    %s49 = sphi 0, %s48
    %s65 = sphi 0, %s49
    %s69 = sphi 0, %s69
    %s71 = sphi 0, %s69
    %s72 = sphi 0, %s71
    %s86 = sphi 0, %s72
    %s92 = sphi 0, %s94
    %s95 = sphi 0, %s92
    %s96 = sphi 0, %s95
    %s112 = sphi 0, %s96
  $region4: #{capsule_net_forward.15} parent=0 // loop_header_branch
    %12 = sbr.rel (%p10) target = $region8
  $region5: #{capsule_net_forward.15} parent=0 // loop_body
    %s14 = ssub.s32 %s9, 1
    %s15 = ssub.s32 %s9, 2
    %s16 = sadd.s32 %s9, 1
    %s17 = ssub.s32 %s9, %s16
    %p18 = scmp.eq.s32.totalorder %s17, 0
    %s20 = sadd.s32 %s19, 1
    %s21 = scalar_select %p18, %s19, %s20
    %p24 = pneg %p18
    %p25 = scmp.eq.s32.totalorder %s9, 1
    %p26 = por %p24, %p25
    %p27 = scmp.ne.s32.totalorder %s19, %s22
    %p28 = scmp.eq.s32.totalorder %s9, 0
    %p29 = por %p27, %p28
    %p30 = scmp.ne.s32.totalorder %s19, %s22
    %p31 = scmp.eq.s32.totalorder %s14, 1
    %p32 = por %p30, %p31
    %p33 = scmp.ne.s32.totalorder %s22, %s23
    %p34 = scmp.eq.s32.totalorder %s14, 0
    %p35 = por %p33, %p34
    %p36 = scmp.ne.s32.totalorder %s22, %s23
    %p37 = scmp.eq.s32.totalorder %s15, 1
    %p38 = por %p36, %p37
    %p40 = scmp.ne.s32.totalorder %s23, %s39
    %p41 = scmp.eq.s32.totalorder %s15, 0
    %p42 = por %p40, %p41
    %s43 = ssub.s32 %s9, %s16
    %p44 = scmp.eq.s32.totalorder %s43, 0
    %s46 = sadd.s32 %s45, 1
    %s47 = scalar_select %p44, %s45, %s46
    %p50 = pneg %p44
    %p51 = scmp.eq.s32.totalorder %s9, 1
    %p52 = por %p50, %p51
    %p53 = scmp.ne.s32.totalorder %s45, %s48
    %p54 = scmp.eq.s32.totalorder %s9, 0
    %p55 = por %p53, %p54
    %p56 = scmp.ne.s32.totalorder %s45, %s48
    %p57 = scmp.eq.s32.totalorder %s14, 1
    %p58 = por %p56, %p57
    %p59 = scmp.ne.s32.totalorder %s48, %s49
    %p60 = scmp.eq.s32.totalorder %s14, 0
    %p61 = por %p59, %p60
    %p62 = scmp.ne.s32.totalorder %s48, %s49
    %p63 = scmp.eq.s32.totalorder %s15, 1
    %p64 = por %p62, %p63
    %p66 = scmp.ne.s32.totalorder %s49, %s65
    %p67 = scmp.eq.s32.totalorder %s15, 0
    %p68 = por %p66, %p67
    %s70 = sadd.s32 %s69, 1
    %p73 = scmp.eq.s32.totalorder %s9, 1
    %p74 = scmp.ne.s32.totalorder %s69, %s71
    %p75 = scmp.eq.s32.totalorder %s9, 0
    %p76 = por %p74, %p75
    %p77 = scmp.ne.s32.totalorder %s69, %s71
    %p78 = scmp.eq.s32.totalorder %s14, 1
    %p79 = por %p77, %p78
    %p80 = scmp.ne.s32.totalorder %s71, %s72
    %p81 = scmp.eq.s32.totalorder %s14, 0
    %p82 = por %p80, %p81
    %p83 = scmp.ne.s32.totalorder %s71, %s72
    %p84 = scmp.eq.s32.totalorder %s15, 1
    %p85 = por %p83, %p84
    %p87 = scmp.ne.s32.totalorder %s72, %s86
    %p88 = scmp.eq.s32.totalorder %s15, 0
    %p89 = por %p87, %p88
    %s90 = ssub.s32 %s9, %s16
    %p91 = scmp.eq.s32.totalorder %s90, 0
    %s93 = sadd.s32 %s92, 1
    %s94 = scalar_select %p91, %s92, %s93
    %p97 = pneg %p91
    %p98 = scmp.eq.s32.totalorder %s9, 1
    %p99 = por %p97, %p98
    %p100 = scmp.ne.s32.totalorder %s92, %s95
    %p101 = scmp.eq.s32.totalorder %s9, 0
    %p102 = por %p100, %p101
    %p103 = scmp.ne.s32.totalorder %s92, %s95
    %p104 = scmp.eq.s32.totalorder %s14, 1
    %p105 = por %p103, %p104
    %p106 = scmp.ne.s32.totalorder %s95, %s96
    %p107 = scmp.eq.s32.totalorder %s14, 0
    %p108 = por %p106, %p107
    %p109 = scmp.ne.s32.totalorder %s95, %s96
    %p110 = scmp.eq.s32.totalorder %s15, 1
    %p111 = por %p109, %p110
    %p113 = scmp.ne.s32.totalorder %s96, %s112
    %p114 = scmp.eq.s32.totalorder %s15, 0
    %p115 = por %p113, %p114
    %p116 = scmp.le.s32.totalorder 1, %s9
    %p117 = scmp.lt.s32.totalorder %s9, 3
    %p118 = pnand %p116, %p117
    %p119 = pneg %p118
    // Predicated region
    $region9: #{capsule_net_forward.15} parent=5 // pred_check
      _
    $region10: #{capsule_net_forward.15} parent=5 // pred_check_branch
      %121 = sbr.rel (%p118) target = $region12
    $region11: #{capsule_net_forward.15} parent=5 // pred_region
      %s122 = ssub.s32 %s9, 1
      // Predicated region
      $region13: #{capsule_net_forward.15} parent=11 // pred_check
        %p123 = pneg %p82
      $region14: #{capsule_net_forward.15} parent=11 // pred_check_branch
        %125 = sbr.rel (%p123) target = $region16
      $region15: #{capsule_net_forward.15} parent=11 // pred_region
        _
      $region16: #{capsule_net_forward.15} parent=11 // pred_fallthru
        _
    $region12: #{capsule_net_forward.15} parent=5 // pred_fallthru
      _
    %p126 = scmp.lt.s32.totalorder %s9, 2
    // Predicated region
    $region17: #{capsule_net_forward.15} parent=5 // pred_check
      %p127 = pneg %p126
    $region18: #{capsule_net_forward.15} parent=5 // pred_check_branch
      %129 = sbr.rel (%p127) target = $region20
    $region19: #{capsule_net_forward.15} parent=5 // pred_region
      // Predicated region
      $region21: #{capsule_net_forward.15} parent=19 // pred_check
        %p130 = pneg %p29
      $region22: #{capsule_net_forward.15} parent=19 // pred_check_branch
        %132 = sbr.rel (%p130) target = $region24
      $region23: #{capsule_net_forward.15} parent=19 // pred_region
        %p133 = scmp.lt.s32.totalorder %s9, 1
        %s134 = scalar_select %p133, %s9, 1
        %s135 = smul.addr %s134, 23
        %s136 = smul.addr %s135, 8
        %s137 = scalar_lea.vmem %s0, %s136
      $region24: #{capsule_net_forward.15} parent=19 // pred_fallthru
        _
      // Predicated region
      $region25: #{capsule_net_forward.15} parent=19 // pred_check
        %p138 = pneg %p55
      $region26: #{capsule_net_forward.15} parent=19 // pred_check_branch
        %140 = sbr.rel (%p138) target = $region28
      $region27: #{capsule_net_forward.15} parent=19 // pred_region
        %p141 = scmp.lt.s32.totalorder %s9, 1
        %s142 = scalar_select %p141, %s9, 1
        %s143 = smul.addr %s142, 23
        %s144 = smul.addr %s143, 8
        %s145 = scalar_lea.vmem %s1, %s144
      $region28: #{capsule_net_forward.15} parent=19 // pred_fallthru
        _
    $region20: #{capsule_net_forward.15} parent=5 // pred_fallthru
      _
    %p146 = scmp.le.s32.totalorder 1, %s9
    %p147 = scmp.lt.s32.totalorder %s9, 3
    %p148 = pnand %p146, %p147
    %p149 = pneg %p148
    // Predicated region
    $region29: #{capsule_net_forward.15} parent=5 // pred_check
      _
    $region30: #{capsule_net_forward.15} parent=5 // pred_check_branch
      %151 = sbr.rel (%p148) target = $region32
    $region31: #{capsule_net_forward.15} parent=5 // pred_region
      %s152 = ssub.s32 %s9, 1
      %p153 = scmp.lt.s32.totalorder %s14, 1
      %s154 = scalar_select %p153, %s14, 1
      %s155 = smul.addr %s154, 23
      %s156 = smul.addr %s155, 8
      %s157 = scalar_lea.vmem %s0, %s156
      %p158 = pneg %p35
      %p159 = pneg %p32
      %p160 = scmp.lt.s32.totalorder %s14, 1
      %s161 = scalar_select %p160, %s14, 1
      %s162 = smul.addr %s161, 23
      %s163 = smul.addr %s162, 8
      %s164 = scalar_lea.vmem %s1, %s163
      %p165 = pneg %p61
      %p166 = pneg %p58
      %p167 = pneg %p82
      %p168 = pneg %p79
      %p169 = pneg %p108
      %p170 = pneg %p105
      %p171 = scmp.lt.s32.totalorder %s14, 1
      %s172 = scalar_select %p171, %s14, 1
      %s173 = smul.addr %s172, 23
      %s174 = smul.addr %s173, 8
      %s175 = scalar_lea.vmem %s3, %s174
      %p176 = scmp.lt.s32.totalorder %s14, 1
      %s177 = scalar_select %p176, %s14, 1
      %s178 = smul.addr %s177, 23
      %s179 = smul.addr %s178, 8
      %s180 = scalar_lea.vmem %s0, %s179
      %p181 = scmp.lt.s32.totalorder %s14, 1
      %s182 = scalar_select %p181, %s14, 1
      %s183 = smul.addr %s182, 23
      %s184 = smul.addr %s183, 8
      %s185 = scalar_lea.vmem %s1, %s184
      %p186 = scmp.lt.s32.totalorder %s14, 1
      %s187 = scalar_select %p186, %s14, 1
      %s188 = smul.addr %s187, 23
      %s189 = smul.addr %s188, 8
      %s190 = scalar_lea.vmem %s3, %s189
      %v191 = vld [vmem:[%s185] sm:$0xff]
      %v192 = vld [vmem:[%s185 + $0x8] sm:$0xff]
      %v193 = vld [vmem:[%s185 + $0x10] sm:$0xff]
      %v194 = vld [vmem:[%s185 + $0x18] sm:$0xff]
      %v195 = vld [vmem:[%s185 + $0x20] sm:$0xff]
      %v196 = vld [vmem:[%s185 + $0x28] sm:$0xff]
      %v197 = vld [vmem:[%s185 + $0x30] sm:$0xff]
      %v198 = vld [vmem:[%s185 + $0x38] sm:$0xff]
      %v199 = vld [vmem:[%s185 + $0x40] sm:$0xff]
      %v200 = vld [vmem:[%s185 + $0x48] sm:$0xff]
      %v201 = vld [vmem:[%s185 + $0x50] sm:$0xff]
      %v202 = vld [vmem:[%s185 + $0x58] sm:$0xff]
      %v203 = vld [vmem:[%s185 + $0x60] sm:$0xff]
      %v204 = vld [vmem:[%s185 + $0x68] sm:$0xff]
      %v205 = vld [vmem:[%s185 + $0x70] sm:$0xff]
      %v206 = vld [vmem:[%s185 + $0x78] sm:$0xff]
      %v207 = vld [vmem:[%s185 + $0x80] sm:$0xff]
      %v208 = vld [vmem:[%s185 + $0x88] sm:$0xff]
      %v209 = vld [vmem:[%s185 + $0x90] sm:$0xff]
      %v210 = vld [vmem:[%s185 + $0x98] sm:$0xff]
      %v211 = vld [vmem:[%s185 + $0xa0] sm:$0xff]
      %v212 = vld [vmem:[%s185 + $0xa8] sm:$0xff]
      %v213 = vld [vmem:[%s185 + $0xb0] sm:$0x3f]
      %v214 = vld [vmem:[%s2] sm:$0x1]
      %v216 = vlaneseq
      %v217 = vshrl.u32 %v216, 7
      %v218 = vsub.s32 0, %v217
      %v219 = vrot.slane %v214, %v218
      %v221 = vmul.f32 %v191, %v219
      %v222 = vmul.f32 %v192, %v219
      %v223 = vmul.f32 %v193, %v219
      %v224 = vmul.f32 %v194, %v219
      %v225 = vmul.f32 %v195, %v219
      %v226 = vmul.f32 %v196, %v219
      %v227 = vmul.f32 %v197, %v219
      %v228 = vmul.f32 %v198, %v219
      %v229 = vmul.f32 %v199, %v219
      %v230 = vmul.f32 %v200, %v219
      %v231 = vmul.f32 %v201, %v219
      %v232 = vmul.f32 %v202, %v219
      %v233 = vmul.f32 %v203, %v219
      %v234 = vmul.f32 %v204, %v219
      %v235 = vmul.f32 %v205, %v219
      %v236 = vmul.f32 %v206, %v219
      %v237 = vmul.f32 %v207, %v219
      %v238 = vmul.f32 %v208, %v219
      %v239 = vmul.f32 %v209, %v219
      %v240 = vmul.f32 %v210, %v219
      %v241 = vmul.f32 %v211, %v219
      %v242 = vmul.f32 %v212, %v219
      %v243 = vmul.f32 %v213, %v219
      %vm244 = vcmask 801792
      %v245 = vsel %vm244, %v221, 0.0
      %246 = vadd.xlane.f32.xlu0 %v245
      %v247 = vpop.xlane.xlu0 %246
      %v248 = vsel %vm244, %v222, 0.0
      %249 = vadd.xlane.f32.xlu0 %v248
      %v250 = vpop.xlane.xlu0 %249
      %v251 = vsel %vm244, %v223, 0.0
      %252 = vadd.xlane.f32.xlu0 %v251
      %v253 = vpop.xlane.xlu0 %252
      %v254 = vsel %vm244, %v224, 0.0
      %255 = vadd.xlane.f32.xlu0 %v254
      %v256 = vpop.xlane.xlu0 %255
      %v257 = vsel %vm244, %v225, 0.0
      %258 = vadd.xlane.f32.xlu0 %v257
      %v259 = vpop.xlane.xlu0 %258
      %v260 = vsel %vm244, %v226, 0.0
      %261 = vadd.xlane.f32.xlu0 %v260
      %v262 = vpop.xlane.xlu0 %261
      %v263 = vsel %vm244, %v227, 0.0
      %264 = vadd.xlane.f32.xlu0 %v263
      %v265 = vpop.xlane.xlu0 %264
      %v266 = vsel %vm244, %v228, 0.0
      %267 = vadd.xlane.f32.xlu0 %v266
      %v268 = vpop.xlane.xlu0 %267
      %v269 = vsel %vm244, %v229, 0.0
      %270 = vadd.xlane.f32.xlu0 %v269
      %v271 = vpop.xlane.xlu0 %270
      %v272 = vsel %vm244, %v230, 0.0
      %273 = vadd.xlane.f32.xlu0 %v272
      %v274 = vpop.xlane.xlu0 %273
      %v275 = vsel %vm244, %v231, 0.0
      %276 = vadd.xlane.f32.xlu0 %v275
      %v277 = vpop.xlane.xlu0 %276
      %v278 = vsel %vm244, %v232, 0.0
      %279 = vadd.xlane.f32.xlu0 %v278
      %v280 = vpop.xlane.xlu0 %279
      %v281 = vsel %vm244, %v233, 0.0
      %282 = vadd.xlane.f32.xlu0 %v281
      %v283 = vpop.xlane.xlu0 %282
      %v284 = vsel %vm244, %v234, 0.0
      %285 = vadd.xlane.f32.xlu0 %v284
      %v286 = vpop.xlane.xlu0 %285
      %v287 = vsel %vm244, %v235, 0.0
      %288 = vadd.xlane.f32.xlu0 %v287
      %v289 = vpop.xlane.xlu0 %288
      %v290 = vsel %vm244, %v236, 0.0
      %291 = vadd.xlane.f32.xlu0 %v290
      %v292 = vpop.xlane.xlu0 %291
      %v293 = vsel %vm244, %v237, 0.0
      %294 = vadd.xlane.f32.xlu0 %v293
      %v295 = vpop.xlane.xlu0 %294
      %v296 = vsel %vm244, %v238, 0.0
      %297 = vadd.xlane.f32.xlu0 %v296
      %v298 = vpop.xlane.xlu0 %297
      %v299 = vsel %vm244, %v239, 0.0
      %300 = vadd.xlane.f32.xlu0 %v299
      %v301 = vpop.xlane.xlu0 %300
      %v302 = vsel %vm244, %v240, 0.0
      %303 = vadd.xlane.f32.xlu0 %v302
      %v304 = vpop.xlane.xlu0 %303
      %v305 = vsel %vm244, %v241, 0.0
      %306 = vadd.xlane.f32.xlu0 %v305
      %v307 = vpop.xlane.xlu0 %306
      %v308 = vsel %vm244, %v242, 0.0
      %309 = vadd.xlane.f32.xlu0 %v308
      %v310 = vpop.xlane.xlu0 %309
      %vm311 = vcmask 799744
      %v312 = vsel %vm311, %v243, 0.0
      %313 = vadd.xlane.f32.xlu0 %v312
      %v314 = vpop.xlane.xlu0 %313
      %v315 = vld [vmem:[%s180] sm:$0xff]
      %v316 = vld [vmem:[%s180 + $0x8] sm:$0xff]
      %v317 = vld [vmem:[%s180 + $0x10] sm:$0xff]
      %v318 = vld [vmem:[%s180 + $0x18] sm:$0xff]
      %v319 = vld [vmem:[%s180 + $0x20] sm:$0xff]
      %v320 = vld [vmem:[%s180 + $0x28] sm:$0xff]
      %v321 = vld [vmem:[%s180 + $0x30] sm:$0xff]
      %v322 = vld [vmem:[%s180 + $0x38] sm:$0xff]
      %v323 = vld [vmem:[%s180 + $0x40] sm:$0xff]
      %v324 = vld [vmem:[%s180 + $0x48] sm:$0xff]
      %v325 = vld [vmem:[%s180 + $0x50] sm:$0xff]
      %v326 = vld [vmem:[%s180 + $0x58] sm:$0xff]
      %v327 = vld [vmem:[%s180 + $0x60] sm:$0xff]
      %v328 = vld [vmem:[%s180 + $0x68] sm:$0xff]
      %v329 = vld [vmem:[%s180 + $0x70] sm:$0xff]
      %v330 = vld [vmem:[%s180 + $0x78] sm:$0xff]
      %v331 = vld [vmem:[%s180 + $0x80] sm:$0xff]
      %v332 = vld [vmem:[%s180 + $0x88] sm:$0xff]
      %v333 = vld [vmem:[%s180 + $0x90] sm:$0xff]
      %v334 = vld [vmem:[%s180 + $0x98] sm:$0xff]
      %v335 = vld [vmem:[%s180 + $0xa0] sm:$0xff]
      %v336 = vld [vmem:[%s180 + $0xa8] sm:$0xff]
      %v337 = vld [vmem:[%s180 + $0xb0] sm:$0x3f]
      %v338 = vxor.u32 %v247, 2147483648
      %v339 = vxor.u32 %v250, 2147483648
      %v340 = vxor.u32 %v253, 2147483648
      %v341 = vxor.u32 %v256, 2147483648
      %v342 = vxor.u32 %v259, 2147483648
      %v343 = vxor.u32 %v262, 2147483648
      %v344 = vxor.u32 %v265, 2147483648
      %v345 = vxor.u32 %v268, 2147483648
      %v346 = vxor.u32 %v271, 2147483648
      %v347 = vxor.u32 %v274, 2147483648
      %v348 = vxor.u32 %v277, 2147483648
      %v349 = vxor.u32 %v280, 2147483648
      %v350 = vxor.u32 %v283, 2147483648
      %v351 = vxor.u32 %v286, 2147483648
      %v352 = vxor.u32 %v289, 2147483648
      %v353 = vxor.u32 %v292, 2147483648
      %v354 = vxor.u32 %v295, 2147483648
      %v355 = vxor.u32 %v298, 2147483648
      %v356 = vxor.u32 %v301, 2147483648
      %v357 = vxor.u32 %v304, 2147483648
      %v358 = vxor.u32 %v307, 2147483648
      %v359 = vxor.u32 %v310, 2147483648
      %v360 = vxor.u32 %v314, 2147483648
      %v361 = vmul.f32 %v338, 1.442695
      %v362 = vpow.pop %v361
      %v363 = vmul.f32 %v339, 1.442695
      %v364 = vpow.pop %v363
      %v365 = vmul.f32 %v340, 1.442695
      %v366 = vpow.pop %v365
      %v367 = vmul.f32 %v341, 1.442695
      %v368 = vpow.pop %v367
      %v369 = vmul.f32 %v342, 1.442695
      %v370 = vpow.pop %v369
      %v371 = vmul.f32 %v343, 1.442695
      %v372 = vpow.pop %v371
      %v373 = vmul.f32 %v344, 1.442695
      %v374 = vpow.pop %v373
      %v375 = vmul.f32 %v345, 1.442695
      %v376 = vpow.pop %v375
      %v377 = vmul.f32 %v346, 1.442695
      %v378 = vpow.pop %v377
      %v379 = vmul.f32 %v347, 1.442695
      %v380 = vpow.pop %v379
      %v381 = vmul.f32 %v348, 1.442695
      %v382 = vpow.pop %v381
      %v383 = vmul.f32 %v349, 1.442695
      %v384 = vpow.pop %v383
      %v385 = vmul.f32 %v350, 1.442695
      %v386 = vpow.pop %v385
      %v387 = vmul.f32 %v351, 1.442695
      %v388 = vpow.pop %v387
      %v389 = vmul.f32 %v352, 1.442695
      %v390 = vpow.pop %v389
      %v391 = vmul.f32 %v353, 1.442695
      %v392 = vpow.pop %v391
      %v393 = vmul.f32 %v354, 1.442695
      %v394 = vpow.pop %v393
      %v395 = vmul.f32 %v355, 1.442695
      %v396 = vpow.pop %v395
      %v397 = vmul.f32 %v356, 1.442695
      %v398 = vpow.pop %v397
      %v399 = vmul.f32 %v357, 1.442695
      %v400 = vpow.pop %v399
      %v401 = vmul.f32 %v358, 1.442695
      %v402 = vpow.pop %v401
      %v403 = vmul.f32 %v359, 1.442695
      %v404 = vpow.pop %v403
      %v405 = vmul.f32 %v360, 1.442695
      %v406 = vpow.pop %v405
      %v407 = vadd.f32 %v362, 1.0
      %v408 = vadd.f32 %v364, 1.0
      %v409 = vadd.f32 %v366, 1.0
      %v410 = vadd.f32 %v368, 1.0
      %v411 = vadd.f32 %v370, 1.0
      %v412 = vadd.f32 %v372, 1.0
      %v413 = vadd.f32 %v374, 1.0
      %v414 = vadd.f32 %v376, 1.0
      %v415 = vadd.f32 %v378, 1.0
      %v416 = vadd.f32 %v380, 1.0
      %v417 = vadd.f32 %v382, 1.0
      %v418 = vadd.f32 %v384, 1.0
      %v419 = vadd.f32 %v386, 1.0
      %v420 = vadd.f32 %v388, 1.0
      %v421 = vadd.f32 %v390, 1.0
      %v422 = vadd.f32 %v392, 1.0
      %v423 = vadd.f32 %v394, 1.0
      %v424 = vadd.f32 %v396, 1.0
      %v425 = vadd.f32 %v398, 1.0
      %v426 = vadd.f32 %v400, 1.0
      %v427 = vadd.f32 %v402, 1.0
      %v428 = vadd.f32 %v404, 1.0
      %v429 = vadd.f32 %v406, 1.0
      %v430 = vrcp.pop %v407
      %v431 = vmul.f32 1.0, %v430
      %v432 = vrcp.pop %v408
      %v433 = vmul.f32 1.0, %v432
      %v434 = vrcp.pop %v409
      %v435 = vmul.f32 1.0, %v434
      %v436 = vrcp.pop %v410
      %v437 = vmul.f32 1.0, %v436
      %v438 = vrcp.pop %v411
      %v439 = vmul.f32 1.0, %v438
      %v440 = vrcp.pop %v412
      %v441 = vmul.f32 1.0, %v440
      %v442 = vrcp.pop %v413
      %v443 = vmul.f32 1.0, %v442
      %v444 = vrcp.pop %v414
      %v445 = vmul.f32 1.0, %v444
      %v446 = vrcp.pop %v415
      %v447 = vmul.f32 1.0, %v446
      %v448 = vrcp.pop %v416
      %v449 = vmul.f32 1.0, %v448
      %v450 = vrcp.pop %v417
      %v451 = vmul.f32 1.0, %v450
      %v452 = vrcp.pop %v418
      %v453 = vmul.f32 1.0, %v452
      %v454 = vrcp.pop %v419
      %v455 = vmul.f32 1.0, %v454
      %v456 = vrcp.pop %v420
      %v457 = vmul.f32 1.0, %v456
      %v458 = vrcp.pop %v421
      %v459 = vmul.f32 1.0, %v458
      %v460 = vrcp.pop %v422
      %v461 = vmul.f32 1.0, %v460
      %v462 = vrcp.pop %v423
      %v463 = vmul.f32 1.0, %v462
      %v464 = vrcp.pop %v424
      %v465 = vmul.f32 1.0, %v464
      %v466 = vrcp.pop %v425
      %v467 = vmul.f32 1.0, %v466
      %v468 = vrcp.pop %v426
      %v469 = vmul.f32 1.0, %v468
      %v470 = vrcp.pop %v427
      %v471 = vmul.f32 1.0, %v470
      %v472 = vrcp.pop %v428
      %v473 = vmul.f32 1.0, %v472
      %v474 = vrcp.pop %v429
      %v475 = vmul.f32 1.0, %v474
      %v476 = vmul.f32 %v315, %v431
      %v477 = vmul.f32 %v316, %v433
      %v478 = vmul.f32 %v317, %v435
      %v479 = vmul.f32 %v318, %v437
      %v480 = vmul.f32 %v319, %v439
      %v481 = vmul.f32 %v320, %v441
      %v482 = vmul.f32 %v321, %v443
      %v483 = vmul.f32 %v322, %v445
      %v484 = vmul.f32 %v323, %v447
      %v485 = vmul.f32 %v324, %v449
      %v486 = vmul.f32 %v325, %v451
      %v487 = vmul.f32 %v326, %v453
      %v488 = vmul.f32 %v327, %v455
      %v489 = vmul.f32 %v328, %v457
      %v490 = vmul.f32 %v329, %v459
      %v491 = vmul.f32 %v330, %v461
      %v492 = vmul.f32 %v331, %v463
      %v493 = vmul.f32 %v332, %v465
      %v494 = vmul.f32 %v333, %v467
      %v495 = vmul.f32 %v334, %v469
      %v496 = vmul.f32 %v335, %v471
      %v497 = vmul.f32 %v336, %v473
      %v498 = vmul.f32 %v337, %v475
      %v499 = vmax.f32 %v476, 0.0
      %v500 = vmax.f32 %v477, 0.0
      %v501 = vmax.f32 %v478, 0.0
      %v502 = vmax.f32 %v479, 0.0
      %v503 = vmax.f32 %v480, 0.0
      %v504 = vmax.f32 %v481, 0.0
      %v505 = vmax.f32 %v482, 0.0
      %v506 = vmax.f32 %v483, 0.0
      %v507 = vmax.f32 %v484, 0.0
      %v508 = vmax.f32 %v485, 0.0
      %v509 = vmax.f32 %v486, 0.0
      %v510 = vmax.f32 %v487, 0.0
      %v511 = vmax.f32 %v488, 0.0
      %v512 = vmax.f32 %v489, 0.0
      %v513 = vmax.f32 %v490, 0.0
      %v514 = vmax.f32 %v491, 0.0
      %v515 = vmax.f32 %v492, 0.0
      %v516 = vmax.f32 %v493, 0.0
      %v517 = vmax.f32 %v494, 0.0
      %v518 = vmax.f32 %v495, 0.0
      %v519 = vmax.f32 %v496, 0.0
      %v520 = vmax.f32 %v497, 0.0
      %v521 = vmax.f32 %v498, 0.0
      %vm522 = vcmask 261120
      %523 = vst.msk [vmem:[%s190] sm:$0xff] %vm522, %v499
      %524 = vst.msk [vmem:[%s190 + $0x8] sm:$0xff] %vm522, %v500
      %525 = vst.msk [vmem:[%s190 + $0x10] sm:$0xff] %vm522, %v501
      %526 = vst.msk [vmem:[%s190 + $0x18] sm:$0xff] %vm522, %v502
      %527 = vst.msk [vmem:[%s190 + $0x20] sm:$0xff] %vm522, %v503
      %528 = vst.msk [vmem:[%s190 + $0x28] sm:$0xff] %vm522, %v504
      %529 = vst.msk [vmem:[%s190 + $0x30] sm:$0xff] %vm522, %v505
      %530 = vst.msk [vmem:[%s190 + $0x38] sm:$0xff] %vm522, %v506
      %531 = vst.msk [vmem:[%s190 + $0x40] sm:$0xff] %vm522, %v507
      %532 = vst.msk [vmem:[%s190 + $0x48] sm:$0xff] %vm522, %v508
      %533 = vst.msk [vmem:[%s190 + $0x50] sm:$0xff] %vm522, %v509
      %534 = vst.msk [vmem:[%s190 + $0x58] sm:$0xff] %vm522, %v510
      %535 = vst.msk [vmem:[%s190 + $0x60] sm:$0xff] %vm522, %v511
      %536 = vst.msk [vmem:[%s190 + $0x68] sm:$0xff] %vm522, %v512
      %537 = vst.msk [vmem:[%s190 + $0x70] sm:$0xff] %vm522, %v513
      %538 = vst.msk [vmem:[%s190 + $0x78] sm:$0xff] %vm522, %v514
      %539 = vst.msk [vmem:[%s190 + $0x80] sm:$0xff] %vm522, %v515
      %540 = vst.msk [vmem:[%s190 + $0x88] sm:$0xff] %vm522, %v516
      %541 = vst.msk [vmem:[%s190 + $0x90] sm:$0xff] %vm522, %v517
      %542 = vst.msk [vmem:[%s190 + $0x98] sm:$0xff] %vm522, %v518
      %543 = vst.msk [vmem:[%s190 + $0xa0] sm:$0xff] %vm522, %v519
      %544 = vst.msk [vmem:[%s190 + $0xa8] sm:$0xff] %vm522, %v520
      %vm545 = vcmask 259072
      %546 = vst.msk [vmem:[%s190 + $0xb0] sm:$0x3f] %vm545, %v521
      %p547 = scmp.lt.s32.totalorder %s14, 1
      %s548 = scalar_select %p547, %s14, 1
      %s549 = smul.addr %s548, 23
      %s550 = smul.addr %s549, 8
      %s551 = scalar_lea.vmem %s3, %s550
      // Predicated region
      $region33: #{capsule_net_forward.15} parent=31 // pred_check
        %p552 = pneg %p105
      $region34: #{capsule_net_forward.15} parent=31 // pred_check_branch
        %554 = sbr.rel (%p552) target = $region36
      $region35: #{capsule_net_forward.15} parent=31 // pred_region
        _
      $region36: #{capsule_net_forward.15} parent=31 // pred_fallthru
        _
    $region32: #{capsule_net_forward.15} parent=5 // pred_fallthru
      _
    %p555 = scmp.le.s32.totalorder 2, %s9
    // Predicated region
    $region37: #{capsule_net_forward.15} parent=5 // pred_check
      %p556 = pneg %p555
    $region38: #{capsule_net_forward.15} parent=5 // pred_check_branch
      %558 = sbr.rel (%p556) target = $region40
    $region39: #{capsule_net_forward.15} parent=5 // pred_region
      %s559 = ssub.s32 %s9, 2
      // Predicated region
      $region41: #{capsule_net_forward.15} parent=39 // pred_check
        %p560 = pneg %p111
      $region42: #{capsule_net_forward.15} parent=39 // pred_check_branch
        %562 = sbr.rel (%p560) target = $region44
      $region43: #{capsule_net_forward.15} parent=39 // pred_region
        %p563 = scmp.lt.s32.totalorder %s15, 1
        %s564 = scalar_select %p563, %s15, 1
        %s565 = smul.addr %s564, 23
        %s566 = smul.addr %s565, 8
        %s567 = scalar_lea.vmem %s3, %s566
      $region44: #{capsule_net_forward.15} parent=39 // pred_fallthru
        _
    $region40: #{capsule_net_forward.15} parent=5 // pred_fallthru
      _
  $region6: #{capsule_net_forward.15} parent=0 // loop_footer
    %s13 = sadd.s32 1, %s9
  $region7: #{capsule_net_forward.15} parent=0 // loop_footer_branch
    %8 = sbr.rel target = $region3
  $region8: #{capsule_net_forward.15} parent=0 // loop_exit
    _

// kernel: capsule_net_forward.16
$region0: #{capsule_net_forward.16}
  #allocation0 [shape = 'u32[]', space=smem, size = 0x4, offset = 0x4, fixed_abs, tag = 'smem constant byte address 0x4 - core index']
  #allocation1 [shape = 'u32[144,128]{1,0:T(1,128)}', space=vmem, size = 0x12000, scoped, tag = 'internal scratch']
  #allocation2 [shape = 'f32[24,128]{1,0:T(8,128)}', space=vmem, size = 0x3000, scoped, tag = 'scratch operand']
  %s0 = inlined_call_operand.vmem [shape: bf16[24,2048], index: 0, kind: input, shape index: {}]
  %s1 = inlined_call_operand.vmem [shape: bf16[2048,128], index: 1, kind: input, shape index: {}]
  %s2 = inlined_call_operand.vmem [shape: f32[24,128], index: 2, kind: output, shape index: {}]
  %s3 = sld [smem:[#allocation0]]
  $region72: #{capsule_net_forward.16} parent=0
    _
  %s5 = ssub.s32 1, %s3
  %s6 = scalar_select 0, %s5, %s3
  $region1: #{capsule_net_forward.16} parent=0
    #allocation3 [shape = 'u8[49152]{0}', space=vmem, size = 0xc000, scoped, tag = 'input window, operand 0']
    loop: start=0, step=1, limit=6
    $region2: #{capsule_net_forward.16} parent=1 // loop_pre_header
      _
    $region3: #{capsule_net_forward.16} parent=1 // loop_header
      %s8 = sphi 0, %s12
      %p9 = scmp.ge.s32.totalorder %s8, 6
      %s15 = sphi 0, %s34
      %s16 = sphi 0, %s30
      %s17 = sphi 0, %s26
      %s18 = sphi 0, %s15
      %s19 = sphi 0, %s16
      %s20 = sphi 0, %s17
      %s21 = sphi 0, %s18
      %s22 = sphi 0, %s19
      %s23 = sphi 0, %s20
      %s39 = sphi 0, %s41
      %s42 = sphi 0, %s39
      %s43 = sphi 0, %s42
      %s59 = sphi 0, %s43
      %s67 = sphi 0, %s69
      %s70 = sphi 0, %s67
      %s71 = sphi 0, %s70
      %s87 = sphi 0, %s71
      %s95 = sphi 0, %s97
      %s98 = sphi 0, %s95
      %s99 = sphi 0, %s98
      %s115 = sphi 0, %s99
    $region4: #{capsule_net_forward.16} parent=1 // loop_header_branch
      %11 = sbr.rel (%p9) target = $region8
    $region5: #{capsule_net_forward.16} parent=1 // loop_body
      %s13 = ssub.s32 %s8, 1
      %s14 = ssub.s32 %s8, 2
      %s24 = sadd.s32 1, %s17
      %p25 = scmp.ge.s32.totalorder %s24, 4
      %s26 = scalar_select %p25, 0, %s24
      %s27 = sadd.s32 1, %s16
      %s28 = scalar_select %p25, %s27, %s16
      %p29 = scmp.ge.s32.totalorder %s28, 1
      %s30 = scalar_select %p29, 0, %s28
      %s31 = sadd.s32 1, %s15
      %s32 = scalar_select %p29, %s31, %s15
      %p33 = scmp.ge.s32.totalorder %s32, 1
      %s34 = scalar_select %p33, 0, %s32
      %s35 = ssub.s32 %s15, %s34
      %s36 = ssub.s32 %s17, %s26
      %s37 = sor.u32 %s35, %s36
      %p38 = scmp.eq.s32.totalorder %s37, 0
      %s40 = sadd.s32 %s39, 1
      %s41 = scalar_select %p38, %s39, %s40
      %p44 = pneg %p38
      %p45 = scmp.eq.s32.totalorder %s8, 3
      %p46 = por %p44, %p45
      %p47 = scmp.ne.s32.totalorder %s39, %s42
      %p48 = scmp.eq.s32.totalorder %s8, 0
      %p49 = por %p47, %p48
      %p50 = scmp.ne.s32.totalorder %s39, %s42
      %p51 = scmp.eq.s32.totalorder %s13, 3
      %p52 = por %p50, %p51
      %p53 = scmp.ne.s32.totalorder %s42, %s43
      %p54 = scmp.eq.s32.totalorder %s13, 0
      %p55 = por %p53, %p54
      %p56 = scmp.ne.s32.totalorder %s42, %s43
      %p57 = scmp.eq.s32.totalorder %s14, 3
      %p58 = por %p56, %p57
      %p60 = scmp.ne.s32.totalorder %s43, %s59
      %p61 = scmp.eq.s32.totalorder %s14, 0
      %p62 = por %p60, %p61
      %s63 = ssub.s32 %s17, %s26
      %s64 = ssub.s32 %s16, %s30
      %s65 = sor.u32 %s63, %s64
      %p66 = scmp.eq.s32.totalorder %s65, 0
      %s68 = sadd.s32 %s67, 1
      %s69 = scalar_select %p66, %s67, %s68
      %p72 = pneg %p66
      %p73 = scmp.eq.s32.totalorder %s8, 3
      %p74 = por %p72, %p73
      %p75 = scmp.ne.s32.totalorder %s67, %s70
      %p76 = scmp.eq.s32.totalorder %s8, 0
      %p77 = por %p75, %p76
      %p78 = scmp.ne.s32.totalorder %s67, %s70
      %p79 = scmp.eq.s32.totalorder %s13, 3
      %p80 = por %p78, %p79
      %p81 = scmp.ne.s32.totalorder %s70, %s71
      %p82 = scmp.eq.s32.totalorder %s13, 0
      %p83 = por %p81, %p82
      %p84 = scmp.ne.s32.totalorder %s70, %s71
      %p85 = scmp.eq.s32.totalorder %s14, 3
      %p86 = por %p84, %p85
      %p88 = scmp.ne.s32.totalorder %s71, %s87
      %p89 = scmp.eq.s32.totalorder %s14, 0
      %p90 = por %p88, %p89
      %s91 = ssub.s32 %s15, %s34
      %s92 = ssub.s32 %s16, %s30
      %s93 = sor.u32 %s91, %s92
      %p94 = scmp.eq.s32.totalorder %s93, 0
      %s96 = sadd.s32 %s95, 1
      %s97 = scalar_select %p94, %s95, %s96
      %p100 = pneg %p94
      %p101 = scmp.eq.s32.totalorder %s8, 3
      %p102 = por %p100, %p101
      %p103 = scmp.ne.s32.totalorder %s95, %s98
      %p104 = scmp.eq.s32.totalorder %s8, 0
      %p105 = por %p103, %p104
      %p106 = scmp.ne.s32.totalorder %s95, %s98
      %p107 = scmp.eq.s32.totalorder %s13, 3
      %p108 = por %p106, %p107
      %p109 = scmp.ne.s32.totalorder %s98, %s99
      %p110 = scmp.eq.s32.totalorder %s13, 0
      %p111 = por %p109, %p110
      %p112 = scmp.ne.s32.totalorder %s98, %s99
      %p113 = scmp.eq.s32.totalorder %s14, 3
      %p114 = por %p112, %p113
      %p116 = scmp.ne.s32.totalorder %s99, %s115
      %p117 = scmp.eq.s32.totalorder %s14, 0
      %p118 = por %p116, %p117
      %p119 = scmp.le.s32.totalorder 1, %s8
      %p120 = scmp.lt.s32.totalorder %s8, 5
      %p121 = pnand %p119, %p120
      %p122 = pneg %p121
      // Predicated region
      $region9: #{capsule_net_forward.16} parent=5 // pred_check
        _
      $region10: #{capsule_net_forward.16} parent=5 // pred_check_branch
        %124 = sbr.rel (%p121) target = $region12
      $region11: #{capsule_net_forward.16} parent=5 // pred_region
        %s125 = ssub.s32 %s8, 1
      $region12: #{capsule_net_forward.16} parent=5 // pred_fallthru
        _
      %p126 = scmp.lt.s32.totalorder %s8, 4
      // Predicated region
      $region13: #{capsule_net_forward.16} parent=5 // pred_check
        %p127 = pneg %p126
      $region14: #{capsule_net_forward.16} parent=5 // pred_check_branch
        %129 = sbr.rel (%p127) target = $region16
      $region15: #{capsule_net_forward.16} parent=5 // pred_region
        // Predicated region
        $region17: #{capsule_net_forward.16} parent=15 // pred_check
          %p130 = pneg %p49
        $region18: #{capsule_net_forward.16} parent=15 // pred_check_branch
          %132 = sbr.rel (%p130) target = $region20
        $region19: #{capsule_net_forward.16} parent=15 // pred_region
          %s133 = sand.u32 %s39, 1
          %s134 = sand.u32 %s39, 1
          %s135 = smul.addr %s134, 48
          %s136 = scalar_lea.vmem [#allocation3], %s135
          %s137 = smul.u32 3, %s15
          %s138 = smul.u32 4, %s17
          %s139 = smul.addr %s137, 16
          %s140 = sadd.s32 %s138, %s139
          %s141 = smul.addr %s140, 4
          %s142 = scalar_lea.vmem %s0, %s141
          // Predicated region
          $region21: #{capsule_net_forward.16} parent=19 // pred_check
            _
          $region22: #{capsule_net_forward.16} parent=19 // pred_check_branch
            %144 = sbr.rel (0) target = $region24
          $region23: #{capsule_net_forward.16} parent=19 // pred_region
            // Predicated region
            $region25: #{capsule_net_forward.16} parent=23 // pred_check
              _
            $region26: #{capsule_net_forward.16} parent=23 // pred_check_branch
              %146 = sbr.rel (0) target = $region28
            $region27: #{capsule_net_forward.16} parent=23 // pred_region
              loop: start=0, step=1, limit=1
              $region29: #{capsule_net_forward.16} parent=27 // loop_pre_header
                _
              $region30: #{capsule_net_forward.16} parent=27 // loop_header
                %s148 = sphi 0, %s152
                %p149 = scmp.ge.s32.totalorder %s148, 1
                %s153 = sphi %s142, %s142
                %s154 = sphi %s136, %s136
              $region31: #{capsule_net_forward.16} parent=27 // loop_header_branch
                %151 = sbr.rel (%p149) target = $region35
              $region32: #{capsule_net_forward.16} parent=27 // loop_body
                %v155 = vld [vmem:[%s153] sm:$0xff]
                %156 = vst [vmem:[%s154] sm:$0xff] %v155
                %v157 = vld [vmem:[%s153 + $0x8] sm:$0xff]
                %158 = vst [vmem:[%s154 + $0x8] sm:$0xff] %v157
                %v159 = vld [vmem:[%s153 + $0x40] sm:$0xff]
                %160 = vst [vmem:[%s154 + $0x10] sm:$0xff] %v159
                %v161 = vld [vmem:[%s153 + $0x48] sm:$0xff]
                %162 = vst [vmem:[%s154 + $0x18] sm:$0xff] %v161
                %v163 = vld [vmem:[%s153 + $0x80] sm:$0xff]
                %164 = vst [vmem:[%s154 + $0x20] sm:$0xff] %v163
                %v165 = vld [vmem:[%s153 + $0x88] sm:$0xff]
                %166 = vst [vmem:[%s154 + $0x28] sm:$0xff] %v165
              $region33: #{capsule_net_forward.16} parent=27 // loop_footer
                %s152 = sadd.s32 1, %s148
              $region34: #{capsule_net_forward.16} parent=27 // loop_footer_branch
                %147 = sbr.rel target = $region30
              $region35: #{capsule_net_forward.16} parent=27 // loop_exit
                _
            $region28: #{capsule_net_forward.16} parent=23 // pred_fallthru
              _
            // Predicated region
            $region36: #{capsule_net_forward.16} parent=23 // pred_check
              _
            $region37: #{capsule_net_forward.16} parent=23 // pred_check_branch
              %168 = sbr.rel target = $region39
            $region38: #{capsule_net_forward.16} parent=23 // pred_region
              _
            $region39: #{capsule_net_forward.16} parent=23 // pred_fallthru
              _
          $region24: #{capsule_net_forward.16} parent=19 // pred_fallthru
            _
          %169 = vnop
        $region20: #{capsule_net_forward.16} parent=15 // pred_fallthru
          _
        // Predicated region
        $region40: #{capsule_net_forward.16} parent=15 // pred_check
          %p170 = pneg %p77
        $region41: #{capsule_net_forward.16} parent=15 // pred_check_branch
          %172 = sbr.rel (%p170) target = $region43
        $region42: #{capsule_net_forward.16} parent=15 // pred_region
          %s173 = smul.u32 64, %s17
          %p174 = scmp.lt.s32.totalorder %s173, 255
          %s175 = scalar_select %p174, %s173, 255
          %p176 = scmp.lt.s32.totalorder %s16, 0
          %s177 = scalar_select %p176, %s16, 0
          %s178 = sadd.s32 %s177, %s175
          %s179 = smul.addr %s178, 4
          %s180 = scalar_lea.vmem %s1, %s179
          %s181 = smul.u32 64, %s17
        $region43: #{capsule_net_forward.16} parent=15 // pred_fallthru
          _
      $region16: #{capsule_net_forward.16} parent=5 // pred_fallthru
        _
      %p182 = scmp.le.s32.totalorder 1, %s8
      %p183 = scmp.lt.s32.totalorder %s8, 5
      %p184 = pnand %p182, %p183
      %p185 = pneg %p184
      // Predicated region
      $region44: #{capsule_net_forward.16} parent=5 // pred_check
        _
      $region45: #{capsule_net_forward.16} parent=5 // pred_check_branch
        %187 = sbr.rel (%p184) target = $region47
      $region46: #{capsule_net_forward.16} parent=5 // pred_region
        %s188 = ssub.s32 %s8, 1
        %s189 = sand.u32 %s42, 1
        %s190 = sand.u32 %s42, 1
        %s191 = smul.addr %s190, 48
        %s192 = scalar_lea.vmem [#allocation3], %s191
        // Predicated region
        $region48: #{capsule_net_forward.16} parent=46 // pred_check
          %p193 = pneg %p55
        $region49: #{capsule_net_forward.16} parent=46 // pred_check_branch
          %195 = sbr.rel (%p193) target = $region51
        $region50: #{capsule_net_forward.16} parent=46 // pred_region
          _
        $region51: #{capsule_net_forward.16} parent=46 // pred_fallthru
          _
        %s196 = sand.u32 %s42, 1
        %s197 = sand.u32 %s42, 1
        %s198 = smul.addr %s197, 48
        %s199 = scalar_lea.vmem [#allocation3], %s198
        %p200 = pneg %p55
        %p201 = pneg %p52
        %s202 = smul.u32 64, %s20
        %p203 = scmp.lt.s32.totalorder %s202, 255
        %s204 = scalar_select %p203, %s202, 255
        %p205 = scmp.lt.s32.totalorder %s19, 0
        %s206 = scalar_select %p205, %s19, 0
        %s207 = sadd.s32 %s206, %s204
        %s208 = smul.addr %s207, 4
        %s209 = scalar_lea.vmem %s1, %s208
        %p210 = pneg %p83
        %p211 = pneg %p80
        %p212 = pneg %p111
        %p213 = pneg %p108
        %s214 = smul.u32 3, %s18
        %p215 = scmp.lt.s32.totalorder %s214, 2
        %s216 = scalar_select %p215, %s214, 2
        %p217 = scmp.lt.s32.totalorder %s19, 0
        %s218 = scalar_select %p217, %s19, 0
        %s219 = sadd.s32 %s218, %s216
        %s220 = smul.addr %s219, 8
        %s221 = scalar_lea.vmem %s2, %s220
        %s222 = smul.u32 3, %s18
        %s223 = smul.u32 4, %s20
        %s224 = smul.u32 64, %s20
        %p225 = scmp.lt.s32.totalorder %s224, 255
        %s226 = scalar_select %p225, %s224, 255
        %p227 = scmp.lt.s32.totalorder %s19, 0
        %s228 = scalar_select %p227, %s19, 0
        %s229 = sadd.s32 %s228, %s226
        %s230 = smul.addr %s229, 4
        %s231 = scalar_lea.vmem %s1, %s230
        %s232 = smul.u32 64, %s20
        %s233 = smul.u32 3, %s18
        %p234 = scmp.lt.s32.totalorder %s233, 2
        %s235 = scalar_select %p234, %s233, 2
        %p236 = scmp.lt.s32.totalorder %s19, 0
        %s237 = scalar_select %p236, %s19, 0
        %s238 = sadd.s32 %s237, %s235
        %s239 = smul.addr %s238, 8
        %s240 = scalar_lea.vmem %s2, %s239
        %s241 = smul.u32 3, %s18
        %p243 = scmp.eq.s32.totalorder %s20, 0
        // Predicated region
        $region52: #{capsule_net_forward.16} parent=46 // pred_check
          %p244 = pneg %p243
        $region53: #{capsule_net_forward.16} parent=46 // pred_check_branch
          %246 = sbr.rel (%p244) target = $region55
        $region54: #{capsule_net_forward.16} parent=46 // pred_region
          %247 = vst [vmem:[#allocation2] sm:$0xff] 0.0
          %248 = vst [vmem:[#allocation2 + $0x8] sm:$0xff] 0.0
          %249 = vst [vmem:[#allocation2 + $0x10] sm:$0xff] 0.0
        $region55: #{capsule_net_forward.16} parent=46 // pred_fallthru
          _
        %v250 = vld [vmem:[#allocation2] sm:$0xff]
        %v251 = vld [vmem:[#allocation2 + $0x8] sm:$0xff]
        %v252 = vld [vmem:[#allocation2 + $0x10] sm:$0xff]
        %v253 = vld [vmem:[%s192] sm:$0xff]
        %v254 = vld [vmem:[%s192 + $0x8] sm:$0xff]
        %v255 = vld [vmem:[%s192 + $0x10] sm:$0xff]
        %v256 = vld [vmem:[%s192 + $0x18] sm:$0xff]
        %v257 = vld [vmem:[%s192 + $0x20] sm:$0xff]
        %v258 = vld [vmem:[%s192 + $0x28] sm:$0xff]
        %v259 = vld [vmem:[%s231] sm:$0xf]
        %v260 = vld [vmem:[%s231 + $0x4] sm:$0xf]
        %v261 = vld [vmem:[%s231 + $0x8] sm:$0xf]
        %v262 = vld [vmem:[%s231 + $0xc] sm:$0xf]
        %v263 = vld [vmem:[%s231 + $0x10] sm:$0xf]
        %v264 = vld [vmem:[%s231 + $0x14] sm:$0xf]
        %v265 = vld [vmem:[%s231 + $0x18] sm:$0xf]
        %v266 = vld [vmem:[%s231 + $0x1c] sm:$0xf]
        %v267 = vld [vmem:[%s231 + $0x20] sm:$0xf]
        %v268 = vld [vmem:[%s231 + $0x24] sm:$0xf]
        %v269 = vld [vmem:[%s231 + $0x28] sm:$0xf]
        %v270 = vld [vmem:[%s231 + $0x2c] sm:$0xf]
        %v271 = vld [vmem:[%s231 + $0x30] sm:$0xf]
        %v272 = vld [vmem:[%s231 + $0x34] sm:$0xf]
        %v273 = vld [vmem:[%s231 + $0x38] sm:$0xf]
        %v274 = vld [vmem:[%s231 + $0x3c] sm:$0xf]
        %v275 = vld [vmem:[%s231 + $0x40] sm:$0xf]
        %v276 = vld [vmem:[%s231 + $0x44] sm:$0xf]
        %v277 = vld [vmem:[%s231 + $0x48] sm:$0xf]
        %v278 = vld [vmem:[%s231 + $0x4c] sm:$0xf]
        %v279 = vld [vmem:[%s231 + $0x50] sm:$0xf]
        %v280 = vld [vmem:[%s231 + $0x54] sm:$0xf]
        %v281 = vld [vmem:[%s231 + $0x58] sm:$0xf]
        %v282 = vld [vmem:[%s231 + $0x5c] sm:$0xf]
        %v283 = vld [vmem:[%s231 + $0x60] sm:$0xf]
        %v284 = vld [vmem:[%s231 + $0x64] sm:$0xf]
        %v285 = vld [vmem:[%s231 + $0x68] sm:$0xf]
        %v286 = vld [vmem:[%s231 + $0x6c] sm:$0xf]
        %v287 = vld [vmem:[%s231 + $0x70] sm:$0xf]
        %v288 = vld [vmem:[%s231 + $0x74] sm:$0xf]
        %v289 = vld [vmem:[%s231 + $0x78] sm:$0xf]
        %v290 = vld [vmem:[%s231 + $0x7c] sm:$0xf]
        %v291 = vld [vmem:[%s231 + $0x80] sm:$0xf]
        %v292 = vld [vmem:[%s231 + $0x84] sm:$0xf]
        %v293 = vld [vmem:[%s231 + $0x88] sm:$0xf]
        %v294 = vld [vmem:[%s231 + $0x8c] sm:$0xf]
        %v295 = vld [vmem:[%s231 + $0x90] sm:$0xf]
        %v296 = vld [vmem:[%s231 + $0x94] sm:$0xf]
        %v297 = vld [vmem:[%s231 + $0x98] sm:$0xf]
        %v298 = vld [vmem:[%s231 + $0x9c] sm:$0xf]
        %v299 = vld [vmem:[%s231 + $0xa0] sm:$0xf]
        %v300 = vld [vmem:[%s231 + $0xa4] sm:$0xf]
        %v301 = vld [vmem:[%s231 + $0xa8] sm:$0xf]
        %v302 = vld [vmem:[%s231 + $0xac] sm:$0xf]
        %v303 = vld [vmem:[%s231 + $0xb0] sm:$0xf]
        %v304 = vld [vmem:[%s231 + $0xb4] sm:$0xf]
        %v305 = vld [vmem:[%s231 + $0xb8] sm:$0xf]
        %v306 = vld [vmem:[%s231 + $0xbc] sm:$0xf]
        %v307 = vld [vmem:[%s231 + $0xc0] sm:$0xf]
        %v308 = vld [vmem:[%s231 + $0xc4] sm:$0xf]
        %v309 = vld [vmem:[%s231 + $0xc8] sm:$0xf]
        %v310 = vld [vmem:[%s231 + $0xcc] sm:$0xf]
        %v311 = vld [vmem:[%s231 + $0xd0] sm:$0xf]
        %v312 = vld [vmem:[%s231 + $0xd4] sm:$0xf]
        %v313 = vld [vmem:[%s231 + $0xd8] sm:$0xf]
        %v314 = vld [vmem:[%s231 + $0xdc] sm:$0xf]
        %v315 = vld [vmem:[%s231 + $0xe0] sm:$0xf]
        %v316 = vld [vmem:[%s231 + $0xe4] sm:$0xf]
        %v317 = vld [vmem:[%s231 + $0xe8] sm:$0xf]
        %v318 = vld [vmem:[%s231 + $0xec] sm:$0xf]
        %v319 = vld [vmem:[%s231 + $0xf0] sm:$0xf]
        %v320 = vld [vmem:[%s231 + $0xf4] sm:$0xf]
        %v321 = vld [vmem:[%s231 + $0xf8] sm:$0xf]
        %v322 = vld [vmem:[%s231 + $0xfc] sm:$0xf]
        %v329 = vunpack.c.l.b16 %v253
        %v330 = vunpack.c.h.b16 %v253
        %v331 = vunpack.c.l.b16 %v254
        %v332 = vunpack.c.h.b16 %v254
        %v333 = vunpack.c.l.b16 %v255
        %v334 = vunpack.c.h.b16 %v255
        %v335 = vunpack.c.l.b16 %v256
        %v336 = vunpack.c.h.b16 %v256
        %v337 = vunpack.c.l.b16 %v257
        %v338 = vunpack.c.h.b16 %v257
        %v339 = vunpack.c.l.b16 %v258
        %v340 = vunpack.c.h.b16 %v258
        %v341 = vpack.c.b16 %v333, %v329
        %v342 = vpack.c.b16 %v334, %v330
        %v343 = vpack.c.b16 %v335, %v331
        %v344 = vpack.c.b16 %v336, %v332
        %v345 = vpack.c.b16 %v337, %v337
        %v346 = vpack.c.b16 %v338, %v338
        %v347 = vpack.c.b16 %v339, %v339
        %v348 = vpack.c.b16 %v340, %v340
        %v421 = vunpack.c.l.b16 %v259
        %v422 = vunpack.c.l.b16 %v260
        %v423 = vunpack.c.l.b16 %v261
        %v424 = vunpack.c.l.b16 %v262
        %v425 = vunpack.c.l.b16 %v263
        %v426 = vunpack.c.l.b16 %v264
        %v427 = vunpack.c.l.b16 %v265
        %v428 = vunpack.c.l.b16 %v266
        %v429 = vunpack.c.l.b16 %v267
        %v430 = vunpack.c.l.b16 %v268
        %v431 = vunpack.c.l.b16 %v269
        %v432 = vunpack.c.l.b16 %v270
        %v433 = vunpack.c.l.b16 %v271
        %v434 = vunpack.c.l.b16 %v272
        %v435 = vunpack.c.l.b16 %v273
        %v436 = vunpack.c.l.b16 %v274
        %v437 = vunpack.c.l.b16 %v275
        %v438 = vunpack.c.l.b16 %v276
        %v439 = vunpack.c.l.b16 %v277
        %v440 = vunpack.c.l.b16 %v278
        %v441 = vunpack.c.l.b16 %v279
        %v442 = vunpack.c.l.b16 %v280
        %v443 = vunpack.c.l.b16 %v281
        %v444 = vunpack.c.l.b16 %v282
        %v445 = vunpack.c.l.b16 %v283
        %v446 = vunpack.c.l.b16 %v284
        %v447 = vunpack.c.l.b16 %v285
        %v448 = vunpack.c.l.b16 %v286
        %v449 = vunpack.c.l.b16 %v287
        %v450 = vunpack.c.l.b16 %v288
        %v451 = vunpack.c.l.b16 %v289
        %v452 = vunpack.c.l.b16 %v290
        %v453 = vunpack.c.l.b16 %v291
        %v454 = vunpack.c.l.b16 %v292
        %v455 = vunpack.c.l.b16 %v293
        %v456 = vunpack.c.l.b16 %v294
        %v457 = vunpack.c.l.b16 %v295
        %v458 = vunpack.c.l.b16 %v296
        %v459 = vunpack.c.l.b16 %v297
        %v460 = vunpack.c.l.b16 %v298
        %v461 = vunpack.c.l.b16 %v299
        %v462 = vunpack.c.l.b16 %v300
        %v463 = vunpack.c.l.b16 %v301
        %v464 = vunpack.c.l.b16 %v302
        %v465 = vunpack.c.l.b16 %v303
        %v466 = vunpack.c.l.b16 %v304
        %v467 = vunpack.c.l.b16 %v305
        %v468 = vunpack.c.l.b16 %v306
        %v469 = vunpack.c.l.b16 %v307
        %v470 = vunpack.c.l.b16 %v308
        %v471 = vunpack.c.l.b16 %v309
        %v472 = vunpack.c.l.b16 %v310
        %v473 = vunpack.c.l.b16 %v311
        %v474 = vunpack.c.l.b16 %v312
        %v475 = vunpack.c.l.b16 %v313
        %v476 = vunpack.c.l.b16 %v314
        %v477 = vunpack.c.l.b16 %v315
        %v478 = vunpack.c.l.b16 %v316
        %v479 = vunpack.c.l.b16 %v317
        %v480 = vunpack.c.l.b16 %v318
        %v481 = vunpack.c.l.b16 %v319
        %v482 = vunpack.c.l.b16 %v320
        %v483 = vunpack.c.l.b16 %v321
        %v484 = vunpack.c.l.b16 %v322
        %v485 = vpack.c.b16 %v422, %v421
        %v486 = vpack.c.b16 %v424, %v423
        %v487 = vpack.c.b16 %v426, %v425
        %v488 = vpack.c.b16 %v428, %v427
        %v489 = vpack.c.b16 %v430, %v429
        %v490 = vpack.c.b16 %v432, %v431
        %v491 = vpack.c.b16 %v434, %v433
        %v492 = vpack.c.b16 %v436, %v435
        %v493 = vpack.c.b16 %v438, %v437
        %v494 = vpack.c.b16 %v440, %v439
        %v495 = vpack.c.b16 %v442, %v441
        %v496 = vpack.c.b16 %v444, %v443
        %v497 = vpack.c.b16 %v446, %v445
        %v498 = vpack.c.b16 %v448, %v447
        %v499 = vpack.c.b16 %v450, %v449
        %v500 = vpack.c.b16 %v452, %v451
        %v501 = vpack.c.b16 %v454, %v453
        %v502 = vpack.c.b16 %v456, %v455
        %v503 = vpack.c.b16 %v458, %v457
        %v504 = vpack.c.b16 %v460, %v459
        %v505 = vpack.c.b16 %v462, %v461
        %v506 = vpack.c.b16 %v464, %v463
        %v507 = vpack.c.b16 %v466, %v465
        %v508 = vpack.c.b16 %v468, %v467
        %v509 = vpack.c.b16 %v470, %v469
        %v510 = vpack.c.b16 %v472, %v471
        %v511 = vpack.c.b16 %v474, %v473
        %v512 = vpack.c.b16 %v476, %v475
        %v513 = vpack.c.b16 %v478, %v477
        %v514 = vpack.c.b16 %v480, %v479
        %v515 = vpack.c.b16 %v482, %v481
        %v516 = vpack.c.b16 %v484, %v483
        %549 = vmatprep.subr.bf16.mxu0 0
        %550 = vmatpush1.bf16.msra.mxu0 %v485
        %551 = vmatprep.subr.bf16.mxu0 0
        %552 = vmatpush1.bf16.msra.mxu0 %v486
        %553 = vmatprep.subr.bf16.mxu0 0
        %554 = vmatpush1.bf16.msra.mxu0 %v487
        %555 = vmatprep.subr.bf16.mxu0 0
        %556 = vmatpush1.bf16.msra.mxu0 %v488
        %557 = vmatprep.subr.bf16.mxu0 0
        %558 = vmatpush1.bf16.msra.mxu0 %v489
        %559 = vmatprep.subr.bf16.mxu0 0
        %560 = vmatpush1.bf16.msra.mxu0 %v490
        %561 = vmatprep.subr.bf16.mxu0 0
        %562 = vmatpush1.bf16.msra.mxu0 %v491
        %563 = vmatprep.subr.bf16.mxu0 0
        %564 = vmatpush1.bf16.msra.mxu0 %v492
        %565 = vmatprep.subr.bf16.mxu0 0
        %566 = vmatpush1.bf16.msra.mxu0 %v493
        %567 = vmatprep.subr.bf16.mxu0 0
        %568 = vmatpush1.bf16.msra.mxu0 %v494
        %569 = vmatprep.subr.bf16.mxu0 0
        %570 = vmatpush1.bf16.msra.mxu0 %v495
        %571 = vmatprep.subr.bf16.mxu0 0
        %572 = vmatpush1.bf16.msra.mxu0 %v496
        %573 = vmatprep.subr.bf16.mxu0 0
        %574 = vmatpush1.bf16.msra.mxu0 %v497
        %575 = vmatprep.subr.bf16.mxu0 0
        %576 = vmatpush1.bf16.msra.mxu0 %v498
        %577 = vmatprep.subr.bf16.mxu0 0
        %578 = vmatpush1.bf16.msra.mxu0 %v499
        %579 = vmatprep.subr.bf16.mxu0 0
        %580 = vmatpush1.bf16.msra.mxu0 %v500
        %581 = vmatprep.mubr.bf16.mxu0 %v342
        %582 = vmatmul.mubr.bf16.gmra.mrb[0].mxu0 %v341
        %v583 = vpop.f32.mrb[0].mxu0
        %v584 = vadd.f32 0.0, %v583
        %v585 = vpop.f32.mrb[0].mxu0
        %v586 = vpop.f32.mrb[0].mxu0
        %v587 = vadd.f32 0.0, %v586
        %v588 = vpop.f32.mrb[0].mxu0
        %589 = vmatprep.mubr.bf16.mxu0 %v346
        %590 = vmatmul.mubr.bf16.gmra.mrb[0].mxu0 %v345
        %v591 = vpop.f32.mrb[0].mxu0
        %v592 = vadd.f32 0.0, %v591
        %v593 = vpop.f32.mrb[0].mxu0
        %v594 = vpop.f32.mrb[0].mxu0
        %v595 = vpop.f32.mrb[0].mxu0
        %596 = vdwg.mxu0
        %597 = vmatprep.subr.bf16.mxu0 0
        %598 = vmatpush1.bf16.msra.mxu0 %v501
        %599 = vmatprep.subr.bf16.mxu0 0
        %600 = vmatpush1.bf16.msra.mxu0 %v502
        %601 = vmatprep.subr.bf16.mxu0 0
        %602 = vmatpush1.bf16.msra.mxu0 %v503
        %603 = vmatprep.subr.bf16.mxu0 0
        %604 = vmatpush1.bf16.msra.mxu0 %v504
        %605 = vmatprep.subr.bf16.mxu0 0
        %606 = vmatpush1.bf16.msra.mxu0 %v505
        %607 = vmatprep.subr.bf16.mxu0 0
        %608 = vmatpush1.bf16.msra.mxu0 %v506
        %609 = vmatprep.subr.bf16.mxu0 0
        %610 = vmatpush1.bf16.msra.mxu0 %v507
        %611 = vmatprep.subr.bf16.mxu0 0
        %612 = vmatpush1.bf16.msra.mxu0 %v508
        %613 = vmatprep.subr.bf16.mxu0 0
        %614 = vmatpush1.bf16.msra.mxu0 %v509
        %615 = vmatprep.subr.bf16.mxu0 0
        %616 = vmatpush1.bf16.msra.mxu0 %v510
        %617 = vmatprep.subr.bf16.mxu0 0
        %618 = vmatpush1.bf16.msra.mxu0 %v511
        %619 = vmatprep.subr.bf16.mxu0 0
        %620 = vmatpush1.bf16.msra.mxu0 %v512
        %621 = vmatprep.subr.bf16.mxu0 0
        %622 = vmatpush1.bf16.msra.mxu0 %v513
        %623 = vmatprep.subr.bf16.mxu0 0
        %624 = vmatpush1.bf16.msra.mxu0 %v514
        %625 = vmatprep.subr.bf16.mxu0 0
        %626 = vmatpush1.bf16.msra.mxu0 %v515
        %627 = vmatprep.subr.bf16.mxu0 0
        %628 = vmatpush1.bf16.msra.mxu0 %v516
        %629 = vmatprep.mubr.bf16.mxu0 %v344
        %630 = vmatmul.mubr.bf16.gmra.mrb[0].mxu0 %v343
        %v631 = vpop.f32.mrb[0].mxu0
        %v632 = vadd.f32 %v584, %v631
        %v633 = vpop.f32.mrb[0].mxu0
        %v634 = vpop.f32.mrb[0].mxu0
        %v635 = vadd.f32 %v587, %v634
        %v636 = vpop.f32.mrb[0].mxu0
        %637 = vmatprep.mubr.bf16.mxu0 %v348
        %638 = vmatmul.mubr.bf16.gmra.mrb[0].mxu0 %v347
        %v639 = vpop.f32.mrb[0].mxu0
        %v640 = vadd.f32 %v592, %v639
        %v641 = vpop.f32.mrb[0].mxu0
        %v642 = vpop.f32.mrb[0].mxu0
        %v643 = vpop.f32.mrb[0].mxu0
        %644 = vdwg.mxu0
        %v645 = vadd.f32 %v250, %v632
        %v646 = vadd.f32 %v251, %v635
        %v647 = vadd.f32 %v252, %v640
        %648 = vst [vmem:[#allocation2] sm:$0xff] %v645
        %649 = vst [vmem:[#allocation2 + $0x8] sm:$0xff] %v646
        %650 = vst [vmem:[#allocation2 + $0x10] sm:$0xff] %v647
        %p651 = scmp.eq.s32.totalorder %s20, 3
        // Predicated region
        $region56: #{capsule_net_forward.16} parent=46 // pred_check
          %p652 = pneg %p651
        $region57: #{capsule_net_forward.16} parent=46 // pred_check_branch
          %654 = sbr.rel (%p652) target = $region59
        $region58: #{capsule_net_forward.16} parent=46 // pred_region
          %v655 = vld [vmem:[#allocation2] sm:$0xff]
          %v656 = vld [vmem:[#allocation2 + $0x8] sm:$0xff]
          %v657 = vld [vmem:[#allocation2 + $0x10] sm:$0xff]
          %v658 = vmax.f32 %v655, 0.0
          %v659 = vmax.f32 %v656, 0.0
          %v660 = vmax.f32 %v657, 0.0
          %661 = vst [vmem:[%s240] sm:$0xff] %v658
          %662 = vst [vmem:[%s240 + $0x8] sm:$0xff] %v659
          %663 = vst [vmem:[%s240 + $0x10] sm:$0xff] %v660
        $region59: #{capsule_net_forward.16} parent=46 // pred_fallthru
          _
        %s664 = smul.u32 3, %s18
        %p665 = scmp.lt.s32.totalorder %s664, 2
        %s666 = scalar_select %p665, %s664, 2
        %p667 = scmp.lt.s32.totalorder %s19, 0
        %s668 = scalar_select %p667, %s19, 0
        %s669 = sadd.s32 %s668, %s666
        %s670 = smul.addr %s669, 8
        %s671 = scalar_lea.vmem %s2, %s670
        // Predicated region
        $region60: #{capsule_net_forward.16} parent=46 // pred_check
          %p672 = pneg %p108
        $region61: #{capsule_net_forward.16} parent=46 // pred_check_branch
          %674 = sbr.rel (%p672) target = $region63
        $region62: #{capsule_net_forward.16} parent=46 // pred_region
          %s675 = smul.u32 3, %s18
        $region63: #{capsule_net_forward.16} parent=46 // pred_fallthru
          _
        // Predicated region
        $region64: #{capsule_net_forward.16} parent=46 // pred_check
          %p676 = pneg %p108
        $region65: #{capsule_net_forward.16} parent=46 // pred_check_branch
          %678 = sbr.rel (%p676) target = $region67
        $region66: #{capsule_net_forward.16} parent=46 // pred_region
          %s679 = smul.u32 3, %s18
          %p680 = scmp.lt.s32.totalorder %s679, 2
          %s681 = scalar_select %p680, %s679, 2
          %p682 = scmp.lt.s32.totalorder %s19, 0
          %s683 = scalar_select %p682, %s19, 0
          %s684 = sadd.s32 %s683, %s681
          %s685 = smul.addr %s684, 8
          %s686 = scalar_lea.vmem %s2, %s685
        $region67: #{capsule_net_forward.16} parent=46 // pred_fallthru
          _
      $region47: #{capsule_net_forward.16} parent=5 // pred_fallthru
        _
      %p687 = scmp.le.s32.totalorder 2, %s8
      // Predicated region
      $region68: #{capsule_net_forward.16} parent=5 // pred_check
        %p688 = pneg %p687
      $region69: #{capsule_net_forward.16} parent=5 // pred_check_branch
        %690 = sbr.rel (%p688) target = $region71
      $region70: #{capsule_net_forward.16} parent=5 // pred_region
        %s691 = ssub.s32 %s8, 2
      $region71: #{capsule_net_forward.16} parent=5 // pred_fallthru
        _
    $region6: #{capsule_net_forward.16} parent=1 // loop_footer
      %s12 = sadd.s32 1, %s8
    $region7: #{capsule_net_forward.16} parent=1 // loop_footer_branch
      %7 = sbr.rel target = $region3
    $region8: #{capsule_net_forward.16} parent=1 // loop_exit
      _

// kernel: capsule_net_forward.17
$region0: #{capsule_net_forward.17}
  #allocation0 [shape = 'u32[]', space=smem, size = 0x4, offset = 0x4, fixed_abs, tag = 'smem constant byte address 0x4 - core index']
  #allocation1 [shape = 'u32[144,128]{1,0:T(1,128)}', space=vmem, size = 0x12000, scoped, tag = 'internal scratch']
  %s0 = inlined_call_operand.vmem [shape: f32[2,16,128], index: 0, kind: input, shape index: {}]
  %s1 = inlined_call_operand.vmem [shape: f32[2,16,32,128], index: 1, kind: input, shape index: {}]
  %s2 = inlined_call_operand.vmem [shape: f32[2,2,32], index: 2, kind: output, shape index: {}]
  %s3 = sld [smem:[#allocation0]]
  $region41: #{capsule_net_forward.17} parent=0
    _
  %s5 = ssub.s32 1, %s3
  %s6 = scalar_select 0, %s5, %s3
  loop: start=0, step=1, limit=4
  $region2: #{capsule_net_forward.17} parent=0 // loop_pre_header
    _
  $region3: #{capsule_net_forward.17} parent=0 // loop_header
    %s8 = sphi 0, %s12
    %p9 = scmp.ge.s32.totalorder %s8, 4
    %s16 = sphi 0, %s16
    %s18 = sphi 0, %s16
    %s19 = sphi 0, %s18
    %s33 = sphi 0, %s19
    %s39 = sphi 0, %s41
    %s42 = sphi 0, %s39
    %s43 = sphi 0, %s42
    %s59 = sphi 0, %s43
    %s65 = sphi 0, %s67
    %s68 = sphi 0, %s65
    %s69 = sphi 0, %s68
    %s85 = sphi 0, %s69
  $region4: #{capsule_net_forward.17} parent=0 // loop_header_branch
    %11 = sbr.rel (%p9) target = $region8
  $region5: #{capsule_net_forward.17} parent=0 // loop_body
    %s13 = ssub.s32 %s8, 1
    %s14 = ssub.s32 %s8, 2
    %s15 = sadd.s32 %s8, 1
    %s17 = sadd.s32 %s16, 1
    %p20 = scmp.eq.s32.totalorder %s8, 1
    %p21 = scmp.ne.s32.totalorder %s16, %s18
    %p22 = scmp.eq.s32.totalorder %s8, 0
    %p23 = por %p21, %p22
    %p24 = scmp.ne.s32.totalorder %s16, %s18
    %p25 = scmp.eq.s32.totalorder %s13, 1
    %p26 = por %p24, %p25
    %p27 = scmp.ne.s32.totalorder %s18, %s19
    %p28 = scmp.eq.s32.totalorder %s13, 0
    %p29 = por %p27, %p28
    %p30 = scmp.ne.s32.totalorder %s18, %s19
    %p31 = scmp.eq.s32.totalorder %s14, 1
    %p32 = por %p30, %p31
    %p34 = scmp.ne.s32.totalorder %s19, %s33
    %p35 = scmp.eq.s32.totalorder %s14, 0
    %p36 = por %p34, %p35
    %s37 = ssub.s32 %s8, %s15
    %p38 = scmp.eq.s32.totalorder %s37, 0
    %s40 = sadd.s32 %s39, 1
    %s41 = scalar_select %p38, %s39, %s40
    %p44 = pneg %p38
    %p45 = scmp.eq.s32.totalorder %s8, 1
    %p46 = por %p44, %p45
    %p47 = scmp.ne.s32.totalorder %s39, %s42
    %p48 = scmp.eq.s32.totalorder %s8, 0
    %p49 = por %p47, %p48
    %p50 = scmp.ne.s32.totalorder %s39, %s42
    %p51 = scmp.eq.s32.totalorder %s13, 1
    %p52 = por %p50, %p51
    %p53 = scmp.ne.s32.totalorder %s42, %s43
    %p54 = scmp.eq.s32.totalorder %s13, 0
    %p55 = por %p53, %p54
    %p56 = scmp.ne.s32.totalorder %s42, %s43
    %p57 = scmp.eq.s32.totalorder %s14, 1
    %p58 = por %p56, %p57
    %p60 = scmp.ne.s32.totalorder %s43, %s59
    %p61 = scmp.eq.s32.totalorder %s14, 0
    %p62 = por %p60, %p61
    %s63 = ssub.s32 %s8, %s15
    %p64 = scmp.eq.s32.totalorder %s63, 0
    %s66 = sadd.s32 %s65, 1
    %s67 = scalar_select %p64, %s65, %s66
    %p70 = pneg %p64
    %p71 = scmp.eq.s32.totalorder %s8, 1
    %p72 = por %p70, %p71
    %p73 = scmp.ne.s32.totalorder %s65, %s68
    %p74 = scmp.eq.s32.totalorder %s8, 0
    %p75 = por %p73, %p74
    %p76 = scmp.ne.s32.totalorder %s65, %s68
    %p77 = scmp.eq.s32.totalorder %s13, 1
    %p78 = por %p76, %p77
    %p79 = scmp.ne.s32.totalorder %s68, %s69
    %p80 = scmp.eq.s32.totalorder %s13, 0
    %p81 = por %p79, %p80
    %p82 = scmp.ne.s32.totalorder %s68, %s69
    %p83 = scmp.eq.s32.totalorder %s14, 1
    %p84 = por %p82, %p83
    %p86 = scmp.ne.s32.totalorder %s69, %s85
    %p87 = scmp.eq.s32.totalorder %s14, 0
    %p88 = por %p86, %p87
    %p89 = scmp.le.s32.totalorder 1, %s8
    %p90 = scmp.lt.s32.totalorder %s8, 3
    %p91 = pnand %p89, %p90
    %p92 = pneg %p91
    // Predicated region
    $region9: #{capsule_net_forward.17} parent=5 // pred_check
      _
    $region10: #{capsule_net_forward.17} parent=5 // pred_check_branch
      %94 = sbr.rel (%p91) target = $region12
    $region11: #{capsule_net_forward.17} parent=5 // pred_region
      %s95 = ssub.s32 %s8, 1
      // Predicated region
      $region13: #{capsule_net_forward.17} parent=11 // pred_check
        %p96 = pneg %p29
      $region14: #{capsule_net_forward.17} parent=11 // pred_check_branch
        %98 = sbr.rel (%p96) target = $region16
      $region15: #{capsule_net_forward.17} parent=11 // pred_region
        _
      $region16: #{capsule_net_forward.17} parent=11 // pred_fallthru
        _
    $region12: #{capsule_net_forward.17} parent=5 // pred_fallthru
      _
    %p99 = scmp.lt.s32.totalorder %s8, 2
    // Predicated region
    $region17: #{capsule_net_forward.17} parent=5 // pred_check
      %p100 = pneg %p99
    $region18: #{capsule_net_forward.17} parent=5 // pred_check_branch
      %102 = sbr.rel (%p100) target = $region20
    $region19: #{capsule_net_forward.17} parent=5 // pred_region
      // Predicated region
      $region21: #{capsule_net_forward.17} parent=19 // pred_check
        %p103 = pneg %p49
      $region22: #{capsule_net_forward.17} parent=19 // pred_check_branch
        %105 = sbr.rel (%p103) target = $region24
      $region23: #{capsule_net_forward.17} parent=19 // pred_region
        %p106 = scmp.lt.s32.totalorder %s8, 1
        %s107 = scalar_select %p106, %s8, 1
        %s108 = smul.addr %s107, 64
        %s109 = smul.addr %s108, 8
        %s110 = scalar_lea.vmem %s1, %s109
      $region24: #{capsule_net_forward.17} parent=19 // pred_fallthru
        _
    $region20: #{capsule_net_forward.17} parent=5 // pred_fallthru
      _
    %p111 = scmp.le.s32.totalorder 1, %s8
    %p112 = scmp.lt.s32.totalorder %s8, 3
    %p113 = pnand %p111, %p112
    %p114 = pneg %p113
    // Predicated region
    $region25: #{capsule_net_forward.17} parent=5 // pred_check
      _
    $region26: #{capsule_net_forward.17} parent=5 // pred_check_branch
      %116 = sbr.rel (%p113) target = $region28
    $region27: #{capsule_net_forward.17} parent=5 // pred_region
      %s117 = ssub.s32 %s8, 1
      %p118 = pneg %p29
      %p119 = pneg %p26
      %p120 = scmp.lt.s32.totalorder %s13, 1
      %s121 = scalar_select %p120, %s13, 1
      %s122 = smul.addr %s121, 64
      %s123 = smul.addr %s122, 8
      %s124 = scalar_lea.vmem %s1, %s123
      %p125 = pneg %p55
      %p126 = pneg %p52
      %p127 = pneg %p81
      %p128 = pneg %p78
      %p129 = scmp.lt.s32.totalorder %s13, 1
      %s130 = scalar_select %p129, %s13, 1
      %s131 = smul.addr %s130, 2
      %s132 = scalar_lea.vmem %s2, %s131
      %p133 = scmp.lt.s32.totalorder %s13, 1
      %s134 = scalar_select %p133, %s13, 1
      %s135 = smul.addr %s134, 64
      %s136 = smul.addr %s135, 8
      %s137 = scalar_lea.vmem %s1, %s136
      %p138 = scmp.lt.s32.totalorder %s13, 1
      %s139 = scalar_select %p138, %s13, 1
      %s140 = smul.addr %s139, 2
      %s141 = scalar_lea.vmem %s2, %s140
      %v142 = vld [vmem:[%s0] sm:$0xff]
      %v143 = vld [vmem:[%s0 + $0x8] sm:$0xff]
      %v144 = vld [vmem:[%s0 + $0x10] sm:$0xff]
      %v145 = vld [vmem:[%s0 + $0x18] sm:$0xff]
      %v146 = vmul.f32 %v142, %v142
      %v147 = vmul.f32 %v143, %v143
      %v148 = vmul.f32 %v144, %v144
      %v149 = vmul.f32 %v145, %v145
      %v150 = vadd.f32 %v146, %v147
      %v151 = vrot.slane %v150, 4
      %v152 = vadd.f32 %v150, %v151
      %v153 = vrot.slane %v152, 2
      %v154 = vadd.f32 %v152, %v153
      %v155 = vrot.slane %v154, 1
      %v156 = vadd.f32 %v154, %v155
      %v157 = vadd.f32 %v148, %v149
      %v158 = vrot.slane %v157, 4
      %v159 = vadd.f32 %v157, %v158
      %v160 = vrot.slane %v159, 2
      %v161 = vadd.f32 %v159, %v160
      %v162 = vrot.slane %v161, 1
      %v163 = vadd.f32 %v161, %v162
      %v164 = vadd.f32 %v156, 1e-08
      %v165 = vadd.f32 %v163, 1e-08
      %v166 = vrsqrt.pop %v164
      %v167 = vmul.f32 %v164, %v166
      %vm168 = vcmp.eq.f32.partialorder %v164, inf
      %v169 = vsel %vm168, %v164, %v167
      %vm170 = vcmp.eq.f32.partialorder %v164, 0.0
      %v171 = vand.u32 %v164, 2147483648
      %v172 = vsel %vm170, %v171, %v169
      %v173 = vrsqrt.pop %v165
      %v174 = vmul.f32 %v165, %v173
      %vm175 = vcmp.eq.f32.partialorder %v165, inf
      %v176 = vsel %vm175, %v165, %v174
      %vm177 = vcmp.eq.f32.partialorder %v165, 0.0
      %v178 = vand.u32 %v165, 2147483648
      %v179 = vsel %vm177, %v178, %v176
      %v180 = vadd.f32 %v164, 1.0
      %v181 = vadd.f32 %v165, 1.0
      %v182 = vrcp.pop %v180
      %v183 = vmul.f32 %v172, %v182
      %v184 = vrcp.pop %v181
      %v185 = vmul.f32 %v179, %v184
      %v186 = vmul.f32 %v142, %v183
      %v187 = vmul.f32 %v143, %v183
      %v188 = vmul.f32 %v144, %v185
      %v189 = vmul.f32 %v145, %v185
      %v190 = vld [vmem:[%s137] sm:$0xff]
      %v191 = vld [vmem:[%s137 + $0x8] sm:$0xff]
      %v192 = vld [vmem:[%s137 + $0x10] sm:$0xff]
      %v193 = vld [vmem:[%s137 + $0x18] sm:$0xff]
      %v194 = vlaneseq
      %v195 = vshrl.u32 %v194, 7
      %v196 = vsub.s32 0, %v195
      %v197 = vrot.slane %v186, %v196
      %v198 = vlaneseq
      %v199 = vshrl.u32 %v198, 7
      %v200 = vsub.s32 0, %v199
      %v201 = vrot.slane %v188, %v200
      %v202 = vmul.f32 %v197, %v190
      %v203 = vmul.f32 %v197, %v191
      %v204 = vmul.f32 %v197, %v192
      %v205 = vmul.f32 %v197, %v193
      %v206 = vmul.f32 %v201, %v190
      %v207 = vmul.f32 %v201, %v191
      %v208 = vmul.f32 %v201, %v192
      %v209 = vmul.f32 %v201, %v193
      %v210 = vadd.f32 %v202, 0.0
      %v211 = vadd.f32 %v203, 0.0
      %v212 = vadd.f32 %v204, 0.0
      %v213 = vadd.f32 %v205, 0.0
      %v214 = vadd.f32 %v206, 0.0
      %v215 = vadd.f32 %v207, 0.0
      %v216 = vadd.f32 %v208, 0.0
      %v217 = vadd.f32 %v209, 0.0
      %s218 = scalar_lea.vmem %s137, 32
      %v219 = vld [vmem:[%s218] sm:$0xff]
      %v220 = vld [vmem:[%s218 + $0x8] sm:$0xff]
      %v221 = vld [vmem:[%s218 + $0x10] sm:$0xff]
      %v222 = vld [vmem:[%s218 + $0x18] sm:$0xff]
      %v223 = vlaneseq
      %v224 = vshrl.u32 %v223, 7
      %v225 = vsub.s32 1, %v224
      %v226 = vrot.slane %v186, %v225
      %v227 = vlaneseq
      %v228 = vshrl.u32 %v227, 7
      %v229 = vsub.s32 1, %v228
      %v230 = vrot.slane %v188, %v229
      %v231 = vmul.f32 %v226, %v219
      %v232 = vmul.f32 %v226, %v220
      %v233 = vmul.f32 %v226, %v221
      %v234 = vmul.f32 %v226, %v222
      %v235 = vmul.f32 %v230, %v219
      %v236 = vmul.f32 %v230, %v220
      %v237 = vmul.f32 %v230, %v221
      %v238 = vmul.f32 %v230, %v222
      %v239 = vadd.f32 %v210, %v231
      %v240 = vadd.f32 %v211, %v232
      %v241 = vadd.f32 %v212, %v233
      %v242 = vadd.f32 %v213, %v234
      %v243 = vadd.f32 %v214, %v235
      %v244 = vadd.f32 %v215, %v236
      %v245 = vadd.f32 %v216, %v237
      %v246 = vadd.f32 %v217, %v238
      %s247 = scalar_lea.vmem %s137, 64
      %v248 = vld [vmem:[%s247] sm:$0xff]
      %v249 = vld [vmem:[%s247 + $0x8] sm:$0xff]
      %v250 = vld [vmem:[%s247 + $0x10] sm:$0xff]
      %v251 = vld [vmem:[%s247 + $0x18] sm:$0xff]
      %v252 = vlaneseq
      %v253 = vshrl.u32 %v252, 7
      %v254 = vsub.s32 2, %v253
      %v255 = vrot.slane %v186, %v254
      %v256 = vlaneseq
      %v257 = vshrl.u32 %v256, 7
      %v258 = vsub.s32 2, %v257
      %v259 = vrot.slane %v188, %v258
      %v260 = vmul.f32 %v255, %v248
      %v261 = vmul.f32 %v255, %v249
      %v262 = vmul.f32 %v255, %v250
      %v263 = vmul.f32 %v255, %v251
      %v264 = vmul.f32 %v259, %v248
      %v265 = vmul.f32 %v259, %v249
      %v266 = vmul.f32 %v259, %v250
      %v267 = vmul.f32 %v259, %v251
      %v268 = vadd.f32 %v239, %v260
      %v269 = vadd.f32 %v240, %v261
      %v270 = vadd.f32 %v241, %v262
      %v271 = vadd.f32 %v242, %v263
      %v272 = vadd.f32 %v243, %v264
      %v273 = vadd.f32 %v244, %v265
      %v274 = vadd.f32 %v245, %v266
      %v275 = vadd.f32 %v246, %v267
      %s276 = scalar_lea.vmem %s137, 96
      %v277 = vld [vmem:[%s276] sm:$0xff]
      %v278 = vld [vmem:[%s276 + $0x8] sm:$0xff]
      %v279 = vld [vmem:[%s276 + $0x10] sm:$0xff]
      %v280 = vld [vmem:[%s276 + $0x18] sm:$0xff]
      %v281 = vlaneseq
      %v282 = vshrl.u32 %v281, 7
      %v283 = vsub.s32 3, %v282
      %v284 = vrot.slane %v186, %v283
      %v285 = vlaneseq
      %v286 = vshrl.u32 %v285, 7
      %v287 = vsub.s32 3, %v286
      %v288 = vrot.slane %v188, %v287
      %v289 = vmul.f32 %v284, %v277
      %v290 = vmul.f32 %v284, %v278
      %v291 = vmul.f32 %v284, %v279
      %v292 = vmul.f32 %v284, %v280
      %v293 = vmul.f32 %v288, %v277
      %v294 = vmul.f32 %v288, %v278
      %v295 = vmul.f32 %v288, %v279
      %v296 = vmul.f32 %v288, %v280
      %v297 = vadd.f32 %v268, %v289
      %v298 = vadd.f32 %v269, %v290
      %v299 = vadd.f32 %v270, %v291
      %v300 = vadd.f32 %v271, %v292
      %v301 = vadd.f32 %v272, %v293
      %v302 = vadd.f32 %v273, %v294
      %v303 = vadd.f32 %v274, %v295
      %v304 = vadd.f32 %v275, %v296
      %s305 = scalar_lea.vmem %s137, 128
      %v306 = vld [vmem:[%s305] sm:$0xff]
      %v307 = vld [vmem:[%s305 + $0x8] sm:$0xff]
      %v308 = vld [vmem:[%s305 + $0x10] sm:$0xff]
      %v309 = vld [vmem:[%s305 + $0x18] sm:$0xff]
      %v310 = vlaneseq
      %v311 = vshrl.u32 %v310, 7
      %v312 = vsub.s32 4, %v311
      %v313 = vrot.slane %v186, %v312
      %v314 = vlaneseq
      %v315 = vshrl.u32 %v314, 7
      %v316 = vsub.s32 4, %v315
      %v317 = vrot.slane %v188, %v316
      %v318 = vmul.f32 %v313, %v306
      %v319 = vmul.f32 %v313, %v307
      %v320 = vmul.f32 %v313, %v308
      %v321 = vmul.f32 %v313, %v309
      %v322 = vmul.f32 %v317, %v306
      %v323 = vmul.f32 %v317, %v307
      %v324 = vmul.f32 %v317, %v308
      %v325 = vmul.f32 %v317, %v309
      %v326 = vadd.f32 %v297, %v318
      %v327 = vadd.f32 %v298, %v319
      %v328 = vadd.f32 %v299, %v320
      %v329 = vadd.f32 %v300, %v321
      %v330 = vadd.f32 %v301, %v322
      %v331 = vadd.f32 %v302, %v323
      %v332 = vadd.f32 %v303, %v324
      %v333 = vadd.f32 %v304, %v325
      %s334 = scalar_lea.vmem %s137, 160
      %v335 = vld [vmem:[%s334] sm:$0xff]
      %v336 = vld [vmem:[%s334 + $0x8] sm:$0xff]
      %v337 = vld [vmem:[%s334 + $0x10] sm:$0xff]
      %v338 = vld [vmem:[%s334 + $0x18] sm:$0xff]
      %v339 = vlaneseq
      %v340 = vshrl.u32 %v339, 7
      %v341 = vsub.s32 5, %v340
      %v342 = vrot.slane %v186, %v341
      %v343 = vlaneseq
      %v344 = vshrl.u32 %v343, 7
      %v345 = vsub.s32 5, %v344
      %v346 = vrot.slane %v188, %v345
      %v347 = vmul.f32 %v342, %v335
      %v348 = vmul.f32 %v342, %v336
      %v349 = vmul.f32 %v342, %v337
      %v350 = vmul.f32 %v342, %v338
      %v351 = vmul.f32 %v346, %v335
      %v352 = vmul.f32 %v346, %v336
      %v353 = vmul.f32 %v346, %v337
      %v354 = vmul.f32 %v346, %v338
      %v355 = vadd.f32 %v326, %v347
      %v356 = vadd.f32 %v327, %v348
      %v357 = vadd.f32 %v328, %v349
      %v358 = vadd.f32 %v329, %v350
      %v359 = vadd.f32 %v330, %v351
      %v360 = vadd.f32 %v331, %v352
      %v361 = vadd.f32 %v332, %v353
      %v362 = vadd.f32 %v333, %v354
      %s363 = scalar_lea.vmem %s137, 192
      %v364 = vld [vmem:[%s363] sm:$0xff]
      %v365 = vld [vmem:[%s363 + $0x8] sm:$0xff]
      %v366 = vld [vmem:[%s363 + $0x10] sm:$0xff]
      %v367 = vld [vmem:[%s363 + $0x18] sm:$0xff]
      %v368 = vlaneseq
      %v369 = vshrl.u32 %v368, 7
      %v370 = vsub.s32 6, %v369
      %v371 = vrot.slane %v186, %v370
      %v372 = vlaneseq
      %v373 = vshrl.u32 %v372, 7
      %v374 = vsub.s32 6, %v373
      %v375 = vrot.slane %v188, %v374
      %v376 = vmul.f32 %v371, %v364
      %v377 = vmul.f32 %v371, %v365
      %v378 = vmul.f32 %v371, %v366
      %v379 = vmul.f32 %v371, %v367
      %v380 = vmul.f32 %v375, %v364
      %v381 = vmul.f32 %v375, %v365
      %v382 = vmul.f32 %v375, %v366
      %v383 = vmul.f32 %v375, %v367
      %v384 = vadd.f32 %v355, %v376
      %v385 = vadd.f32 %v356, %v377
      %v386 = vadd.f32 %v357, %v378
      %v387 = vadd.f32 %v358, %v379
      %v388 = vadd.f32 %v359, %v380
      %v389 = vadd.f32 %v360, %v381
      %v390 = vadd.f32 %v361, %v382
      %v391 = vadd.f32 %v362, %v383
      %s392 = scalar_lea.vmem %s137, 224
      %v393 = vld [vmem:[%s392] sm:$0xff]
      %v394 = vld [vmem:[%s392 + $0x8] sm:$0xff]
      %v395 = vld [vmem:[%s392 + $0x10] sm:$0xff]
      %v396 = vld [vmem:[%s392 + $0x18] sm:$0xff]
      %v397 = vlaneseq
      %v398 = vshrl.u32 %v397, 7
      %v399 = vsub.s32 7, %v398
      %v400 = vrot.slane %v186, %v399
      %v401 = vlaneseq
      %v402 = vshrl.u32 %v401, 7
      %v403 = vsub.s32 7, %v402
      %v404 = vrot.slane %v188, %v403
      %v405 = vmul.f32 %v400, %v393
      %v406 = vmul.f32 %v400, %v394
      %v407 = vmul.f32 %v400, %v395
      %v408 = vmul.f32 %v400, %v396
      %v409 = vmul.f32 %v404, %v393
      %v410 = vmul.f32 %v404, %v394
      %v411 = vmul.f32 %v404, %v395
      %v412 = vmul.f32 %v404, %v396
      %v413 = vadd.f32 %v384, %v405
      %v414 = vadd.f32 %v385, %v406
      %v415 = vadd.f32 %v386, %v407
      %v416 = vadd.f32 %v387, %v408
      %v417 = vadd.f32 %v388, %v409
      %v418 = vadd.f32 %v389, %v410
      %v419 = vadd.f32 %v390, %v411
      %v420 = vadd.f32 %v391, %v412
      %s421 = scalar_lea.vmem %s137, 256
      %v422 = vld [vmem:[%s421] sm:$0xff]
      %v423 = vld [vmem:[%s421 + $0x8] sm:$0xff]
      %v424 = vld [vmem:[%s421 + $0x10] sm:$0xff]
      %v425 = vld [vmem:[%s421 + $0x18] sm:$0xff]
      %v426 = vlaneseq
      %v427 = vshrl.u32 %v426, 7
      %v428 = vsub.s32 0, %v427
      %v429 = vrot.slane %v187, %v428
      %v430 = vlaneseq
      %v431 = vshrl.u32 %v430, 7
      %v432 = vsub.s32 0, %v431
      %v433 = vrot.slane %v189, %v432
      %v434 = vmul.f32 %v429, %v422
      %v435 = vmul.f32 %v429, %v423
      %v436 = vmul.f32 %v429, %v424
      %v437 = vmul.f32 %v429, %v425
      %v438 = vmul.f32 %v433, %v422
      %v439 = vmul.f32 %v433, %v423
      %v440 = vmul.f32 %v433, %v424
      %v441 = vmul.f32 %v433, %v425
      %v442 = vadd.f32 %v413, %v434
      %v443 = vadd.f32 %v414, %v435
      %v444 = vadd.f32 %v415, %v436
      %v445 = vadd.f32 %v416, %v437
      %v446 = vadd.f32 %v417, %v438
      %v447 = vadd.f32 %v418, %v439
      %v448 = vadd.f32 %v419, %v440
      %v449 = vadd.f32 %v420, %v441
      %s450 = scalar_lea.vmem %s137, 288
      %v451 = vld [vmem:[%s450] sm:$0xff]
      %v452 = vld [vmem:[%s450 + $0x8] sm:$0xff]
      %v453 = vld [vmem:[%s450 + $0x10] sm:$0xff]
      %v454 = vld [vmem:[%s450 + $0x18] sm:$0xff]
      %v455 = vlaneseq
      %v456 = vshrl.u32 %v455, 7
      %v457 = vsub.s32 1, %v456
      %v458 = vrot.slane %v187, %v457
      %v459 = vlaneseq
      %v460 = vshrl.u32 %v459, 7
      %v461 = vsub.s32 1, %v460
      %v462 = vrot.slane %v189, %v461
      %v463 = vmul.f32 %v458, %v451
      %v464 = vmul.f32 %v458, %v452
      %v465 = vmul.f32 %v458, %v453
      %v466 = vmul.f32 %v458, %v454
      %v467 = vmul.f32 %v462, %v451
      %v468 = vmul.f32 %v462, %v452
      %v469 = vmul.f32 %v462, %v453
      %v470 = vmul.f32 %v462, %v454
      %v471 = vadd.f32 %v442, %v463
      %v472 = vadd.f32 %v443, %v464
      %v473 = vadd.f32 %v444, %v465
      %v474 = vadd.f32 %v445, %v466
      %v475 = vadd.f32 %v446, %v467
      %v476 = vadd.f32 %v447, %v468
      %v477 = vadd.f32 %v448, %v469
      %v478 = vadd.f32 %v449, %v470
      %s479 = scalar_lea.vmem %s137, 320
      %v480 = vld [vmem:[%s479] sm:$0xff]
      %v481 = vld [vmem:[%s479 + $0x8] sm:$0xff]
      %v482 = vld [vmem:[%s479 + $0x10] sm:$0xff]
      %v483 = vld [vmem:[%s479 + $0x18] sm:$0xff]
      %v484 = vlaneseq
      %v485 = vshrl.u32 %v484, 7
      %v486 = vsub.s32 2, %v485
      %v487 = vrot.slane %v187, %v486
      %v488 = vlaneseq
      %v489 = vshrl.u32 %v488, 7
      %v490 = vsub.s32 2, %v489
      %v491 = vrot.slane %v189, %v490
      %v492 = vmul.f32 %v487, %v480
      %v493 = vmul.f32 %v487, %v481
      %v494 = vmul.f32 %v487, %v482
      %v495 = vmul.f32 %v487, %v483
      %v496 = vmul.f32 %v491, %v480
      %v497 = vmul.f32 %v491, %v481
      %v498 = vmul.f32 %v491, %v482
      %v499 = vmul.f32 %v491, %v483
      %v500 = vadd.f32 %v471, %v492
      %v501 = vadd.f32 %v472, %v493
      %v502 = vadd.f32 %v473, %v494
      %v503 = vadd.f32 %v474, %v495
      %v504 = vadd.f32 %v475, %v496
      %v505 = vadd.f32 %v476, %v497
      %v506 = vadd.f32 %v477, %v498
      %v507 = vadd.f32 %v478, %v499
      %s508 = scalar_lea.vmem %s137, 352
      %v509 = vld [vmem:[%s508] sm:$0xff]
      %v510 = vld [vmem:[%s508 + $0x8] sm:$0xff]
      %v511 = vld [vmem:[%s508 + $0x10] sm:$0xff]
      %v512 = vld [vmem:[%s508 + $0x18] sm:$0xff]
      %v513 = vlaneseq
      %v514 = vshrl.u32 %v513, 7
      %v515 = vsub.s32 3, %v514
      %v516 = vrot.slane %v187, %v515
      %v517 = vlaneseq
      %v518 = vshrl.u32 %v517, 7
      %v519 = vsub.s32 3, %v518
      %v520 = vrot.slane %v189, %v519
      %v521 = vmul.f32 %v516, %v509
      %v522 = vmul.f32 %v516, %v510
      %v523 = vmul.f32 %v516, %v511
      %v524 = vmul.f32 %v516, %v512
      %v525 = vmul.f32 %v520, %v509
      %v526 = vmul.f32 %v520, %v510
      %v527 = vmul.f32 %v520, %v511
      %v528 = vmul.f32 %v520, %v512
      %v529 = vadd.f32 %v500, %v521
      %v530 = vadd.f32 %v501, %v522
      %v531 = vadd.f32 %v502, %v523
      %v532 = vadd.f32 %v503, %v524
      %v533 = vadd.f32 %v504, %v525
      %v534 = vadd.f32 %v505, %v526
      %v535 = vadd.f32 %v506, %v527
      %v536 = vadd.f32 %v507, %v528
      %s537 = scalar_lea.vmem %s137, 384
      %v538 = vld [vmem:[%s537] sm:$0xff]
      %v539 = vld [vmem:[%s537 + $0x8] sm:$0xff]
      %v540 = vld [vmem:[%s537 + $0x10] sm:$0xff]
      %v541 = vld [vmem:[%s537 + $0x18] sm:$0xff]
      %v542 = vlaneseq
      %v543 = vshrl.u32 %v542, 7
      %v544 = vsub.s32 4, %v543
      %v545 = vrot.slane %v187, %v544
      %v546 = vlaneseq
      %v547 = vshrl.u32 %v546, 7
      %v548 = vsub.s32 4, %v547
      %v549 = vrot.slane %v189, %v548
      %v550 = vmul.f32 %v545, %v538
      %v551 = vmul.f32 %v545, %v539
      %v552 = vmul.f32 %v545, %v540
      %v553 = vmul.f32 %v545, %v541
      %v554 = vmul.f32 %v549, %v538
      %v555 = vmul.f32 %v549, %v539
      %v556 = vmul.f32 %v549, %v540
      %v557 = vmul.f32 %v549, %v541
      %v558 = vadd.f32 %v529, %v550
      %v559 = vadd.f32 %v530, %v551
      %v560 = vadd.f32 %v531, %v552
      %v561 = vadd.f32 %v532, %v553
      %v562 = vadd.f32 %v533, %v554
      %v563 = vadd.f32 %v534, %v555
      %v564 = vadd.f32 %v535, %v556
      %v565 = vadd.f32 %v536, %v557
      %s566 = scalar_lea.vmem %s137, 416
      %v567 = vld [vmem:[%s566] sm:$0xff]
      %v568 = vld [vmem:[%s566 + $0x8] sm:$0xff]
      %v569 = vld [vmem:[%s566 + $0x10] sm:$0xff]
      %v570 = vld [vmem:[%s566 + $0x18] sm:$0xff]
      %v571 = vlaneseq
      %v572 = vshrl.u32 %v571, 7
      %v573 = vsub.s32 5, %v572
      %v574 = vrot.slane %v187, %v573
      %v575 = vlaneseq
      %v576 = vshrl.u32 %v575, 7
      %v577 = vsub.s32 5, %v576
      %v578 = vrot.slane %v189, %v577
      %v579 = vmul.f32 %v574, %v567
      %v580 = vmul.f32 %v574, %v568
      %v581 = vmul.f32 %v574, %v569
      %v582 = vmul.f32 %v574, %v570
      %v583 = vmul.f32 %v578, %v567
      %v584 = vmul.f32 %v578, %v568
      %v585 = vmul.f32 %v578, %v569
      %v586 = vmul.f32 %v578, %v570
      %v587 = vadd.f32 %v558, %v579
      %v588 = vadd.f32 %v559, %v580
      %v589 = vadd.f32 %v560, %v581
      %v590 = vadd.f32 %v561, %v582
      %v591 = vadd.f32 %v562, %v583
      %v592 = vadd.f32 %v563, %v584
      %v593 = vadd.f32 %v564, %v585
      %v594 = vadd.f32 %v565, %v586
      %s595 = scalar_lea.vmem %s137, 448
      %v596 = vld [vmem:[%s595] sm:$0xff]
      %v597 = vld [vmem:[%s595 + $0x8] sm:$0xff]
      %v598 = vld [vmem:[%s595 + $0x10] sm:$0xff]
      %v599 = vld [vmem:[%s595 + $0x18] sm:$0xff]
      %v600 = vlaneseq
      %v601 = vshrl.u32 %v600, 7
      %v602 = vsub.s32 6, %v601
      %v603 = vrot.slane %v187, %v602
      %v604 = vlaneseq
      %v605 = vshrl.u32 %v604, 7
      %v606 = vsub.s32 6, %v605
      %v607 = vrot.slane %v189, %v606
      %v608 = vmul.f32 %v603, %v596
      %v609 = vmul.f32 %v603, %v597
      %v610 = vmul.f32 %v603, %v598
      %v611 = vmul.f32 %v603, %v599
      %v612 = vmul.f32 %v607, %v596
      %v613 = vmul.f32 %v607, %v597
      %v614 = vmul.f32 %v607, %v598
      %v615 = vmul.f32 %v607, %v599
      %v616 = vadd.f32 %v587, %v608
      %v617 = vadd.f32 %v588, %v609
      %v618 = vadd.f32 %v589, %v610
      %v619 = vadd.f32 %v590, %v611
      %v620 = vadd.f32 %v591, %v612
      %v621 = vadd.f32 %v592, %v613
      %v622 = vadd.f32 %v593, %v614
      %v623 = vadd.f32 %v594, %v615
      %s624 = scalar_lea.vmem %s137, 480
      %v625 = vld [vmem:[%s624] sm:$0xff]
      %v626 = vld [vmem:[%s624 + $0x8] sm:$0xff]
      %v627 = vld [vmem:[%s624 + $0x10] sm:$0xff]
      %v628 = vld [vmem:[%s624 + $0x18] sm:$0xff]
      %v629 = vlaneseq
      %v630 = vshrl.u32 %v629, 7
      %v631 = vsub.s32 7, %v630
      %v632 = vrot.slane %v187, %v631
      %v633 = vlaneseq
      %v634 = vshrl.u32 %v633, 7
      %v635 = vsub.s32 7, %v634
      %v636 = vrot.slane %v189, %v635
      %v637 = vmul.f32 %v632, %v625
      %v638 = vmul.f32 %v632, %v626
      %v639 = vmul.f32 %v632, %v627
      %v640 = vmul.f32 %v632, %v628
      %v641 = vmul.f32 %v636, %v625
      %v642 = vmul.f32 %v636, %v626
      %v643 = vmul.f32 %v636, %v627
      %v644 = vmul.f32 %v636, %v628
      %v645 = vadd.f32 %v616, %v637
      %v646 = vadd.f32 %v617, %v638
      %v647 = vadd.f32 %v618, %v639
      %v648 = vadd.f32 %v619, %v640
      %v649 = vadd.f32 %v620, %v641
      %v650 = vadd.f32 %v621, %v642
      %v651 = vadd.f32 %v622, %v643
      %v652 = vadd.f32 %v623, %v644
      %v653 = vlaneseq
      %v654 = vand.u32 %v653, 127
      %vm655 = vcmp.lt.s32.totalorder %v654, 36
      %v656 = vsel %vm655, 1, 0
      %v657 = vcvt.s32.f32 %v656
      %vm658 = vcmp.eq.s32.totalorder %v656, 1
      %v659 = vsel %vm658, 0.0, -1e+30
      %660 = vmax.xlane.f32.xlu0 %v659
      %v661 = vpop.xlane.xlu0 %660
      %v662 = vsub.f32 0.0, %v661
      %v663 = vmul.f32 %v662, 1.442695
      %v664 = vpow.pop %v663
      %v665 = vmul.f32 %v664, %v657
      %666 = vadd.xlane.f32.xlu0 %v665
      %v667 = vpop.xlane.xlu0 %666
      %v668 = vrcp.pop %v667
      %v669 = vmul.f32 %v665, %v668
      %v672 = vunpack.c.l.s4 1966171168
      %v673 = vunpack.c.0.s8 %v672
      %v674 = vlaneseq
      %v675 = vshrl.u32 %v674, 7
      %v676 = vsub.s32 %v673, %v675
      %v677 = vrot.slane %v669, %v676
      %v678 = vcombine.high %v677, %v677
      %v680 = vunpack.c.l.s4 1966171168
      %v681 = vunpack.c.0.s8 %v680
      %v682 = vlaneseq
      %v683 = vshrl.u32 %v682, 7
      %v684 = vsub.s32 %v681, %v683
      %v685 = vrot.slane %v677, %v684
      %v687 = vunpack.c.l.s4 1966171168
      %v688 = vunpack.c.0.s8 %v687
      %v689 = vlaneseq
      %v690 = vshrl.u32 %v689, 7
      %v691 = vsub.s32 %v688, %v690
      %v692 = vrot.slane %v678, %v691
      %v693 = vlaneseq
      %v694 = vshrl.u32 %v693, 7
      %v695 = vsub.s32 0, %v694
      %v696 = vrot.slane %v685, %v695
      %v697 = vlaneseq
      %v698 = vshrl.u32 %v697, 7
      %v699 = vsub.s32 0, %v698
      %v700 = vrot.slane %v692, %v699
      %v703 = vmul.f32 %v696, %v645
      %v704 = vmul.f32 %v696, %v646
      %v705 = vmul.f32 %v696, %v647
      %v706 = vmul.f32 %v696, %v648
      %v707 = vmul.f32 %v700, %v649
      %v708 = vmul.f32 %v700, %v650
      %v709 = vmul.f32 %v700, %v651
      %v710 = vmul.f32 %v700, %v652
      %711 = vadd.xlane.f32.xlu0 %v703
      %v712 = vpop.xlane.xlu0 %711
      %713 = vadd.xlane.f32.xlu0 %v704
      %v714 = vpop.xlane.xlu0 %713
      %715 = vadd.xlane.f32.xlu0 %v705
      %v716 = vpop.xlane.xlu0 %715
      %717 = vadd.xlane.f32.xlu0 %v706
      %v718 = vpop.xlane.xlu0 %717
      %719 = vadd.xlane.f32.xlu0 %v707
      %v720 = vpop.xlane.xlu0 %719
      %721 = vadd.xlane.f32.xlu0 %v708
      %v722 = vpop.xlane.xlu0 %721
      %723 = vadd.xlane.f32.xlu0 %v709
      %v724 = vpop.xlane.xlu0 %723
      %725 = vadd.xlane.f32.xlu0 %v710
      %v726 = vpop.xlane.xlu0 %725
      %v727 = vmul.f32 %v712, %v712
      %v728 = vmul.f32 %v714, %v714
      %v729 = vmul.f32 %v716, %v716
      %v730 = vmul.f32 %v718, %v718
      %v731 = vmul.f32 %v720, %v720
      %v732 = vmul.f32 %v722, %v722
      %v733 = vmul.f32 %v724, %v724
      %v734 = vmul.f32 %v726, %v726
      %v743 = vlaneseq
      %v744 = vshrl.u32 %v743, 7
      %v745 = vsub.s32 %v654, %v744
      %v746 = vrot.slane %v727, %v745
      %v747 = vadd.s32 %v654, 4294967288
      %v748 = vlaneseq
      %v749 = vshrl.u32 %v748, 7
      %v750 = vsub.s32 %v747, %v749
      %v751 = vrot.slane %v728, %v750
      %vm752 = vcmask 130112
      %v753 = vsel %vm752, %v751, %v746
      %v754 = vadd.s32 %v654, 4294967280
      %v755 = vlaneseq
      %v756 = vshrl.u32 %v755, 7
      %v757 = vsub.s32 %v754, %v756
      %v758 = vrot.slane %v729, %v757
      %vm759 = vcmask 195712
      %v760 = vsel %vm759, %v758, %v753
      %v761 = vadd.s32 %v654, 4294967272
      %v762 = vlaneseq
      %v763 = vshrl.u32 %v762, 7
      %v764 = vsub.s32 %v761, %v763
      %v765 = vrot.slane %v730, %v764
      %vm766 = vcmask 261312
      %v767 = vsel %vm766, %v765, %v760
      %v768 = vlaneseq
      %v769 = vshrl.u32 %v768, 7
      %v770 = vsub.s32 %v654, %v769
      %v771 = vrot.slane %v731, %v770
      %v772 = vlaneseq
      %v773 = vshrl.u32 %v772, 7
      %v774 = vsub.s32 %v747, %v773
      %v775 = vrot.slane %v732, %v774
      %v776 = vsel %vm752, %v775, %v771
      %v777 = vlaneseq
      %v778 = vshrl.u32 %v777, 7
      %v779 = vsub.s32 %v754, %v778
      %v780 = vrot.slane %v733, %v779
      %v781 = vsel %vm759, %v780, %v776
      %v782 = vlaneseq
      %v783 = vshrl.u32 %v782, 7
      %v784 = vsub.s32 %v761, %v783
      %v785 = vrot.slane %v734, %v784
      %v786 = vsel %vm766, %v785, %v781
      %vm787 = vcmask 1041409
      %v788 = vsel %vm787, %v786, %v767
      %vm790 = vcmask 254976
      %v791 = vsel %vm790, %v788, 0.0
      %792 = vadd.xlane.f32.xlu0 %v791
      %v793 = vpop.xlane.xlu0 %792
      %v794 = vadd.f32 %v793, 1e-08
      %v795 = vrsqrt.pop %v794
      %v796 = vmul.f32 %v794, %v795
      %vm797 = vcmp.eq.f32.partialorder %v794, inf
      %v798 = vsel %vm797, %v794, %v796
      %vm799 = vcmp.eq.f32.partialorder %v794, 0.0
      %v800 = vand.u32 %v794, 2147483648
      %v801 = vsel %vm799, %v800, %v798
      %v802 = vadd.f32 %v794, 1.0
      %v803 = vrcp.pop %v802
      %v804 = vmul.f32 %v801, %v803
      %v806 = vlaneseq
      %v807 = vshrl.u32 %v806, 7
      %v808 = vsub.s32 0, %v807
      %v809 = vrot.slane %v804, %v808
      %v810 = vlaneseq
      %v811 = vshrl.u32 %v810, 7
      %v812 = vsub.s32 1, %v811
      %v813 = vrot.slane %v804, %v812
      %v816 = vmul.f32 %v712, %v809
      %v817 = vmul.f32 %v714, %v809
      %v818 = vmul.f32 %v716, %v809
      %v819 = vmul.f32 %v718, %v809
      %v820 = vmul.f32 %v720, %v813
      %v821 = vmul.f32 %v722, %v813
      %v822 = vmul.f32 %v724, %v813
      %v823 = vmul.f32 %v726, %v813
      %825 = vset.pattern.permute.xlu0 0
      %826 = vperm.xlu0 %825, %v816
      %v827 = vpop.permute.xlu0 %826
      %830 = vset.pattern.permute.xlu0 0
      %831 = vperm.xlu0 %830, %v817
      %v832 = vpop.permute.xlu0 %831
      %835 = vset.pattern.permute.xlu0 0
      %836 = vperm.xlu0 %835, %v818
      %v837 = vpop.permute.xlu0 %836
      %840 = vset.pattern.permute.xlu0 0
      %841 = vperm.xlu0 %840, %v819
      %v842 = vpop.permute.xlu0 %841
      %845 = vset.pattern.permute.xlu0 0
      %846 = vperm.xlu0 %845, %v820
      %v847 = vpop.permute.xlu0 %846
      %850 = vset.pattern.permute.xlu0 0
      %851 = vperm.xlu0 %850, %v821
      %v852 = vpop.permute.xlu0 %851
      %855 = vset.pattern.permute.xlu0 0
      %856 = vperm.xlu0 %855, %v822
      %v857 = vpop.permute.xlu0 %856
      %860 = vset.pattern.permute.xlu0 0
      %861 = vperm.xlu0 %860, %v823
      %v862 = vpop.permute.xlu0 %861
      %v864 = vmul.f32 %v645, %v827
      %v865 = vmul.f32 %v646, %v832
      %v866 = vmul.f32 %v647, %v837
      %v867 = vmul.f32 %v648, %v842
      %v868 = vmul.f32 %v649, %v847
      %v869 = vmul.f32 %v650, %v852
      %v870 = vmul.f32 %v651, %v857
      %v871 = vmul.f32 %v652, %v862
      %v872 = vadd.f32 %v864, %v865
      %v873 = vadd.f32 %v872, %v866
      %v874 = vadd.f32 %v873, %v867
      %v875 = vrot.slane %v874, 4
      %v876 = vadd.f32 %v874, %v875
      %v877 = vrot.slane %v876, 2
      %v878 = vadd.f32 %v876, %v877
      %v879 = vrot.slane %v878, 1
      %v880 = vadd.f32 %v878, %v879
      %v881 = vadd.f32 %v868, %v869
      %v882 = vadd.f32 %v881, %v870
      %v883 = vadd.f32 %v882, %v871
      %v884 = vrot.slane %v883, 4
      %v885 = vadd.f32 %v883, %v884
      %v886 = vrot.slane %v885, 2
      %v887 = vadd.f32 %v885, %v886
      %v888 = vrot.slane %v887, 1
      %v889 = vadd.f32 %v887, %v888
      %v890 = vadd.f32 %v880, 0.0
      %v891 = vadd.f32 %v889, 0.0
      %v894 = vsel %vm787, %v891, %v890
      %v896 = vsel %vm658, %v894, -1e+30
      %vm897 = vcmask 1041408
      %v898 = vsel %vm897, %v896, -inf
      %899 = vmax.xlane.f32.xlu0 %v898
      %v900 = vpop.xlane.xlu0 %899
      %v902 = vrot.slane %v900, 1
      %v905 = vsub.f32 %v890, %v900
      %v906 = vsub.f32 %v891, %v902
      %v907 = vmul.f32 %v905, 1.442695
      %v908 = vpow.pop %v907
      %v909 = vmul.f32 %v906, 1.442695
      %v910 = vpow.pop %v909
      %v911 = vmul.f32 %v908, %v657
      %v912 = vmul.f32 %v910, %v657
      %v915 = vrot.slane %v912, 7
      %v916 = vsel %vm787, %v915, %v911
      %v918 = vsel %vm897, %v916, 0.0
      %919 = vadd.xlane.f32.xlu0 %v918
      %v920 = vpop.xlane.xlu0 %919
      %v922 = vrot.slane %v920, 1
      %v925 = vrcp.pop %v920
      %v926 = vmul.f32 %v911, %v925
      %v927 = vrcp.pop %v922
      %v928 = vmul.f32 %v912, %v927
      %v929 = vlaneseq
      %v930 = vshrl.u32 %v929, 7
      %v931 = vsub.s32 0, %v930
      %v932 = vrot.slane %v926, %v931
      %v933 = vlaneseq
      %v934 = vshrl.u32 %v933, 7
      %v935 = vsub.s32 0, %v934
      %v936 = vrot.slane %v928, %v935
      %v937 = vmul.f32 %v932, %v645
      %v938 = vmul.f32 %v932, %v646
      %v939 = vmul.f32 %v932, %v647
      %v940 = vmul.f32 %v932, %v648
      %v941 = vmul.f32 %v936, %v649
      %v942 = vmul.f32 %v936, %v650
      %v943 = vmul.f32 %v936, %v651
      %v944 = vmul.f32 %v936, %v652
      %945 = vadd.xlane.f32.xlu0 %v937
      %v946 = vpop.xlane.xlu0 %945
      %947 = vadd.xlane.f32.xlu0 %v938
      %v948 = vpop.xlane.xlu0 %947
      %949 = vadd.xlane.f32.xlu0 %v939
      %v950 = vpop.xlane.xlu0 %949
      %951 = vadd.xlane.f32.xlu0 %v940
      %v952 = vpop.xlane.xlu0 %951
      %953 = vadd.xlane.f32.xlu0 %v941
      %v954 = vpop.xlane.xlu0 %953
      %955 = vadd.xlane.f32.xlu0 %v942
      %v956 = vpop.xlane.xlu0 %955
      %957 = vadd.xlane.f32.xlu0 %v943
      %v958 = vpop.xlane.xlu0 %957
      %959 = vadd.xlane.f32.xlu0 %v944
      %v960 = vpop.xlane.xlu0 %959
      %v961 = vmul.f32 %v946, %v946
      %v962 = vmul.f32 %v948, %v948
      %v963 = vmul.f32 %v950, %v950
      %v964 = vmul.f32 %v952, %v952
      %v965 = vmul.f32 %v954, %v954
      %v966 = vmul.f32 %v956, %v956
      %v967 = vmul.f32 %v958, %v958
      %v968 = vmul.f32 %v960, %v960
      %v977 = vlaneseq
      %v978 = vshrl.u32 %v977, 7
      %v979 = vsub.s32 %v654, %v978
      %v980 = vrot.slane %v961, %v979
      %v981 = vlaneseq
      %v982 = vshrl.u32 %v981, 7
      %v983 = vsub.s32 %v747, %v982
      %v984 = vrot.slane %v962, %v983
      %v985 = vsel %vm752, %v984, %v980
      %v986 = vlaneseq
      %v987 = vshrl.u32 %v986, 7
      %v988 = vsub.s32 %v754, %v987
      %v989 = vrot.slane %v963, %v988
      %v990 = vsel %vm759, %v989, %v985
      %v991 = vlaneseq
      %v992 = vshrl.u32 %v991, 7
      %v993 = vsub.s32 %v761, %v992
      %v994 = vrot.slane %v964, %v993
      %v995 = vsel %vm766, %v994, %v990
      %v996 = vlaneseq
      %v997 = vshrl.u32 %v996, 7
      %v998 = vsub.s32 %v654, %v997
      %v999 = vrot.slane %v965, %v998
      %v1000 = vlaneseq
      %v1001 = vshrl.u32 %v1000, 7
      %v1002 = vsub.s32 %v747, %v1001
      %v1003 = vrot.slane %v966, %v1002
      %v1004 = vsel %vm752, %v1003, %v999
      %v1005 = vlaneseq
      %v1006 = vshrl.u32 %v1005, 7
      %v1007 = vsub.s32 %v754, %v1006
      %v1008 = vrot.slane %v967, %v1007
      %v1009 = vsel %vm759, %v1008, %v1004
      %v1010 = vlaneseq
      %v1011 = vshrl.u32 %v1010, 7
      %v1012 = vsub.s32 %v761, %v1011
      %v1013 = vrot.slane %v968, %v1012
      %v1014 = vsel %vm766, %v1013, %v1009
      %v1015 = vsel %vm787, %v1014, %v995
      %v1017 = vsel %vm790, %v1015, 0.0
      %1018 = vadd.xlane.f32.xlu0 %v1017
      %v1019 = vpop.xlane.xlu0 %1018
      %v1020 = vadd.f32 %v1019, 1e-08
      %v1021 = vrsqrt.pop %v1020
      %v1022 = vmul.f32 %v1020, %v1021
      %vm1023 = vcmp.eq.f32.partialorder %v1020, inf
      %v1024 = vsel %vm1023, %v1020, %v1022
      %vm1025 = vcmp.eq.f32.partialorder %v1020, 0.0
      %v1026 = vand.u32 %v1020, 2147483648
      %v1027 = vsel %vm1025, %v1026, %v1024
      %v1028 = vadd.f32 %v1020, 1.0
      %v1029 = vrcp.pop %v1028
      %v1030 = vmul.f32 %v1027, %v1029
      %v1032 = vlaneseq
      %v1033 = vshrl.u32 %v1032, 7
      %v1034 = vsub.s32 0, %v1033
      %v1035 = vrot.slane %v1030, %v1034
      %v1036 = vlaneseq
      %v1037 = vshrl.u32 %v1036, 7
      %v1038 = vsub.s32 1, %v1037
      %v1039 = vrot.slane %v1030, %v1038
      %v1042 = vmul.f32 %v946, %v1035
      %v1043 = vmul.f32 %v948, %v1035
      %v1044 = vmul.f32 %v950, %v1035
      %v1045 = vmul.f32 %v952, %v1035
      %v1046 = vmul.f32 %v954, %v1039
      %v1047 = vmul.f32 %v956, %v1039
      %v1048 = vmul.f32 %v958, %v1039
      %v1049 = vmul.f32 %v960, %v1039
      %1051 = vset.pattern.permute.xlu0 0
      %1052 = vperm.xlu0 %1051, %v1042
      %v1053 = vpop.permute.xlu0 %1052
      %1056 = vset.pattern.permute.xlu0 0
      %1057 = vperm.xlu0 %1056, %v1043
      %v1058 = vpop.permute.xlu0 %1057
      %1061 = vset.pattern.permute.xlu0 0
      %1062 = vperm.xlu0 %1061, %v1044
      %v1063 = vpop.permute.xlu0 %1062
      %1066 = vset.pattern.permute.xlu0 0
      %1067 = vperm.xlu0 %1066, %v1045
      %v1068 = vpop.permute.xlu0 %1067
      %1071 = vset.pattern.permute.xlu0 0
      %1072 = vperm.xlu0 %1071, %v1046
      %v1073 = vpop.permute.xlu0 %1072
      %1076 = vset.pattern.permute.xlu0 0
      %1077 = vperm.xlu0 %1076, %v1047
      %v1078 = vpop.permute.xlu0 %1077
      %1081 = vset.pattern.permute.xlu0 0
      %1082 = vperm.xlu0 %1081, %v1048
      %v1083 = vpop.permute.xlu0 %1082
      %1086 = vset.pattern.permute.xlu0 0
      %1087 = vperm.xlu0 %1086, %v1049
      %v1088 = vpop.permute.xlu0 %1087
      %v1090 = vmul.f32 %v645, %v1053
      %v1091 = vmul.f32 %v646, %v1058
      %v1092 = vmul.f32 %v647, %v1063
      %v1093 = vmul.f32 %v648, %v1068
      %v1094 = vmul.f32 %v649, %v1073
      %v1095 = vmul.f32 %v650, %v1078
      %v1096 = vmul.f32 %v651, %v1083
      %v1097 = vmul.f32 %v652, %v1088
      %v1098 = vadd.f32 %v1090, %v1091
      %v1099 = vadd.f32 %v1098, %v1092
      %v1100 = vadd.f32 %v1099, %v1093
      %v1101 = vrot.slane %v1100, 4
      %v1102 = vadd.f32 %v1100, %v1101
      %v1103 = vrot.slane %v1102, 2
      %v1104 = vadd.f32 %v1102, %v1103
      %v1105 = vrot.slane %v1104, 1
      %v1106 = vadd.f32 %v1104, %v1105
      %v1107 = vadd.f32 %v1094, %v1095
      %v1108 = vadd.f32 %v1107, %v1096
      %v1109 = vadd.f32 %v1108, %v1097
      %v1110 = vrot.slane %v1109, 4
      %v1111 = vadd.f32 %v1109, %v1110
      %v1112 = vrot.slane %v1111, 2
      %v1113 = vadd.f32 %v1111, %v1112
      %v1114 = vrot.slane %v1113, 1
      %v1115 = vadd.f32 %v1113, %v1114
      %v1116 = vadd.f32 %v890, %v1106
      %v1117 = vadd.f32 %v891, %v1115
      %v1120 = vsel %vm787, %v1117, %v1116
      %v1122 = vsel %vm658, %v1120, -1e+30
      %v1123 = vsel %vm897, %v1122, -inf
      %1124 = vmax.xlane.f32.xlu0 %v1123
      %v1125 = vpop.xlane.xlu0 %1124
      %v1127 = vrot.slane %v1125, 1
      %v1130 = vsub.f32 %v1116, %v1125
      %v1131 = vsub.f32 %v1117, %v1127
      %v1132 = vmul.f32 %v1130, 1.442695
      %v1133 = vpow.pop %v1132
      %v1134 = vmul.f32 %v1131, 1.442695
      %v1135 = vpow.pop %v1134
      %v1136 = vmul.f32 %v1133, %v657
      %v1137 = vmul.f32 %v1135, %v657
      %v1140 = vrot.slane %v1137, 7
      %v1141 = vsel %vm787, %v1140, %v1136
      %v1143 = vsel %vm897, %v1141, 0.0
      %1144 = vadd.xlane.f32.xlu0 %v1143
      %v1145 = vpop.xlane.xlu0 %1144
      %v1147 = vrot.slane %v1145, 1
      %v1150 = vrcp.pop %v1145
      %v1151 = vmul.f32 %v1136, %v1150
      %v1152 = vrcp.pop %v1147
      %v1153 = vmul.f32 %v1137, %v1152
      %v1154 = vlaneseq
      %v1155 = vshrl.u32 %v1154, 7
      %v1156 = vsub.s32 0, %v1155
      %v1157 = vrot.slane %v1151, %v1156
      %v1158 = vlaneseq
      %v1159 = vshrl.u32 %v1158, 7
      %v1160 = vsub.s32 0, %v1159
      %v1161 = vrot.slane %v1153, %v1160
      %v1162 = vmul.f32 %v1157, %v645
      %v1163 = vmul.f32 %v1157, %v646
      %v1164 = vmul.f32 %v1157, %v647
      %v1165 = vmul.f32 %v1157, %v648
      %v1166 = vmul.f32 %v1161, %v649
      %v1167 = vmul.f32 %v1161, %v650
      %v1168 = vmul.f32 %v1161, %v651
      %v1169 = vmul.f32 %v1161, %v652
      %1170 = vadd.xlane.f32.xlu0 %v1162
      %v1171 = vpop.xlane.xlu0 %1170
      %1172 = vadd.xlane.f32.xlu0 %v1163
      %v1173 = vpop.xlane.xlu0 %1172
      %1174 = vadd.xlane.f32.xlu0 %v1164
      %v1175 = vpop.xlane.xlu0 %1174
      %1176 = vadd.xlane.f32.xlu0 %v1165
      %v1177 = vpop.xlane.xlu0 %1176
      %1178 = vadd.xlane.f32.xlu0 %v1166
      %v1179 = vpop.xlane.xlu0 %1178
      %1180 = vadd.xlane.f32.xlu0 %v1167
      %v1181 = vpop.xlane.xlu0 %1180
      %1182 = vadd.xlane.f32.xlu0 %v1168
      %v1183 = vpop.xlane.xlu0 %1182
      %1184 = vadd.xlane.f32.xlu0 %v1169
      %v1185 = vpop.xlane.xlu0 %1184
      %v1186 = vmul.f32 %v1171, %v1171
      %v1187 = vmul.f32 %v1173, %v1173
      %v1188 = vmul.f32 %v1175, %v1175
      %v1189 = vmul.f32 %v1177, %v1177
      %v1190 = vmul.f32 %v1179, %v1179
      %v1191 = vmul.f32 %v1181, %v1181
      %v1192 = vmul.f32 %v1183, %v1183
      %v1193 = vmul.f32 %v1185, %v1185
      %v1202 = vlaneseq
      %v1203 = vshrl.u32 %v1202, 7
      %v1204 = vsub.s32 %v654, %v1203
      %v1205 = vrot.slane %v1186, %v1204
      %v1206 = vlaneseq
      %v1207 = vshrl.u32 %v1206, 7
      %v1208 = vsub.s32 %v747, %v1207
      %v1209 = vrot.slane %v1187, %v1208
      %v1210 = vsel %vm752, %v1209, %v1205
      %v1211 = vlaneseq
      %v1212 = vshrl.u32 %v1211, 7
      %v1213 = vsub.s32 %v754, %v1212
      %v1214 = vrot.slane %v1188, %v1213
      %v1215 = vsel %vm759, %v1214, %v1210
      %v1216 = vlaneseq
      %v1217 = vshrl.u32 %v1216, 7
      %v1218 = vsub.s32 %v761, %v1217
      %v1219 = vrot.slane %v1189, %v1218
      %v1220 = vsel %vm766, %v1219, %v1215
      %v1221 = vlaneseq
      %v1222 = vshrl.u32 %v1221, 7
      %v1223 = vsub.s32 %v654, %v1222
      %v1224 = vrot.slane %v1190, %v1223
      %v1225 = vlaneseq
      %v1226 = vshrl.u32 %v1225, 7
      %v1227 = vsub.s32 %v747, %v1226
      %v1228 = vrot.slane %v1191, %v1227
      %v1229 = vsel %vm752, %v1228, %v1224
      %v1230 = vlaneseq
      %v1231 = vshrl.u32 %v1230, 7
      %v1232 = vsub.s32 %v754, %v1231
      %v1233 = vrot.slane %v1192, %v1232
      %v1234 = vsel %vm759, %v1233, %v1229
      %v1235 = vlaneseq
      %v1236 = vshrl.u32 %v1235, 7
      %v1237 = vsub.s32 %v761, %v1236
      %v1238 = vrot.slane %v1193, %v1237
      %v1239 = vsel %vm766, %v1238, %v1234
      %v1240 = vsel %vm787, %v1239, %v1220
      %v1242 = vsel %vm790, %v1240, 0.0
      %1243 = vadd.xlane.f32.xlu0 %v1242
      %v1244 = vpop.xlane.xlu0 %1243
      %v1245 = vadd.f32 %v1244, 1e-08
      %v1246 = vrsqrt.pop %v1245
      %v1247 = vmul.f32 %v1245, %v1246
      %vm1248 = vcmp.eq.f32.partialorder %v1245, inf
      %v1249 = vsel %vm1248, %v1245, %v1247
      %vm1250 = vcmp.eq.f32.partialorder %v1245, 0.0
      %v1251 = vand.u32 %v1245, 2147483648
      %v1252 = vsel %vm1250, %v1251, %v1249
      %v1253 = vadd.f32 %v1245, 1.0
      %v1254 = vrcp.pop %v1253
      %v1255 = vmul.f32 %v1252, %v1254
      %v1257 = vlaneseq
      %v1258 = vshrl.u32 %v1257, 7
      %v1259 = vsub.s32 0, %v1258
      %v1260 = vrot.slane %v1255, %v1259
      %v1261 = vlaneseq
      %v1262 = vshrl.u32 %v1261, 7
      %v1263 = vsub.s32 1, %v1262
      %v1264 = vrot.slane %v1255, %v1263
      %v1267 = vmul.f32 %v1171, %v1260
      %v1268 = vmul.f32 %v1173, %v1260
      %v1269 = vmul.f32 %v1175, %v1260
      %v1270 = vmul.f32 %v1177, %v1260
      %v1271 = vmul.f32 %v1179, %v1264
      %v1272 = vmul.f32 %v1181, %v1264
      %v1273 = vmul.f32 %v1183, %v1264
      %v1274 = vmul.f32 %v1185, %v1264
      %1283 = vset.pattern.permute.xlu0 0
      %1284 = vperm.xlu0 %1283, %v1267
      %v1285 = vpop.permute.xlu0 %1284
      %1286 = vset.pattern.permute.xlu0 0
      %1287 = vperm.xlu0 %1286, %v1268
      %v1288 = vpop.permute.xlu0 %1287
      %1289 = vset.pattern.permute.xlu0 0
      %1290 = vperm.xlu0 %1289, %v1269
      %v1291 = vpop.permute.xlu0 %1290
      %1292 = vset.pattern.permute.xlu0 0
      %1293 = vperm.xlu0 %1292, %v1270
      %v1294 = vpop.permute.xlu0 %1293
      %1295 = vset.pattern.permute.xlu0 0
      %1296 = vperm.xlu0 %1295, %v1271
      %v1297 = vpop.permute.xlu0 %1296
      %1298 = vset.pattern.permute.xlu0 0
      %1299 = vperm.xlu0 %1298, %v1272
      %v1300 = vpop.permute.xlu0 %1299
      %1301 = vset.pattern.permute.xlu0 0
      %1302 = vperm.xlu0 %1301, %v1273
      %v1303 = vpop.permute.xlu0 %1302
      %1304 = vset.pattern.permute.xlu0 0
      %1305 = vperm.xlu0 %1304, %v1274
      %v1306 = vpop.permute.xlu0 %1305
      %v1307 = vlaneseq
      %v1308 = vshrl.u32 %v1307, 7
      %v1309 = vsub.s32 %v654, %v1308
      %v1310 = vrot.slane %v1285, %v1309
      %v1311 = vlaneseq
      %v1312 = vshrl.u32 %v1311, 7
      %v1313 = vsub.s32 %v747, %v1312
      %v1314 = vrot.slane %v1288, %v1313
      %v1315 = vsel %vm752, %v1314, %v1310
      %v1316 = vlaneseq
      %v1317 = vshrl.u32 %v1316, 7
      %v1318 = vsub.s32 %v754, %v1317
      %v1319 = vrot.slane %v1291, %v1318
      %v1320 = vsel %vm759, %v1319, %v1315
      %v1321 = vlaneseq
      %v1322 = vshrl.u32 %v1321, 7
      %v1323 = vsub.s32 %v761, %v1322
      %v1324 = vrot.slane %v1294, %v1323
      %v1325 = vsel %vm766, %v1324, %v1320
      %v1326 = vlaneseq
      %v1327 = vshrl.u32 %v1326, 7
      %v1328 = vsub.s32 %v654, %v1327
      %v1329 = vrot.slane %v1297, %v1328
      %v1330 = vlaneseq
      %v1331 = vshrl.u32 %v1330, 7
      %v1332 = vsub.s32 %v747, %v1331
      %v1333 = vrot.slane %v1300, %v1332
      %v1334 = vsel %vm752, %v1333, %v1329
      %v1335 = vlaneseq
      %v1336 = vshrl.u32 %v1335, 7
      %v1337 = vsub.s32 %v754, %v1336
      %v1338 = vrot.slane %v1303, %v1337
      %v1339 = vsel %vm759, %v1338, %v1334
      %v1340 = vlaneseq
      %v1341 = vshrl.u32 %v1340, 7
      %v1342 = vsub.s32 %v761, %v1341
      %v1343 = vrot.slane %v1306, %v1342
      %v1344 = vsel %vm766, %v1343, %v1339
      %v1345 = vsel %vm787, %v1344, %v1325
      %1347 = vst.msk [vmem:[%s141] sm:$0x3] %vm790, %v1345
      %p1348 = scmp.lt.s32.totalorder %s13, 1
      %s1349 = scalar_select %p1348, %s13, 1
      %s1350 = smul.addr %s1349, 2
      %s1351 = scalar_lea.vmem %s2, %s1350
      // Predicated region
      $region29: #{capsule_net_forward.17} parent=27 // pred_check
        %p1352 = pneg %p78
      $region30: #{capsule_net_forward.17} parent=27 // pred_check_branch
        %1354 = sbr.rel (%p1352) target = $region32
      $region31: #{capsule_net_forward.17} parent=27 // pred_region
        _
      $region32: #{capsule_net_forward.17} parent=27 // pred_fallthru
        _
    $region28: #{capsule_net_forward.17} parent=5 // pred_fallthru
      _
    %p1355 = scmp.le.s32.totalorder 2, %s8
    // Predicated region
    $region33: #{capsule_net_forward.17} parent=5 // pred_check
      %p1356 = pneg %p1355
    $region34: #{capsule_net_forward.17} parent=5 // pred_check_branch
      %1358 = sbr.rel (%p1356) target = $region36
    $region35: #{capsule_net_forward.17} parent=5 // pred_region
      %s1359 = ssub.s32 %s8, 2
      // Predicated region
      $region37: #{capsule_net_forward.17} parent=35 // pred_check
        %p1360 = pneg %p84
      $region38: #{capsule_net_forward.17} parent=35 // pred_check_branch
        %1362 = sbr.rel (%p1360) target = $region40
      $region39: #{capsule_net_forward.17} parent=35 // pred_region
        %p1363 = scmp.lt.s32.totalorder %s14, 1
        %s1364 = scalar_select %p1363, %s14, 1
        %s1365 = smul.addr %s1364, 2
        %s1366 = scalar_lea.vmem %s2, %s1365
      $region40: #{capsule_net_forward.17} parent=35 // pred_fallthru
        _
    $region36: #{capsule_net_forward.17} parent=5 // pred_fallthru
      _
  $region6: #{capsule_net_forward.17} parent=0 // loop_footer
    %s12 = sadd.s32 1, %s8
  $region7: #{capsule_net_forward.17} parent=0 // loop_footer_branch
    %7 = sbr.rel target = $region3
  $region8: #{capsule_net_forward.17} parent=0 // loop_exit
    _

</llo_original>
